<compile_context>
chip_gen: v7x
topology: tpu7x:2x2x1
jax: 0.10.0
libtpu: 0.0.40
codegen_flags: <defaults>
</compile_context>

<pallas_src>
import jax
import jax.numpy as jnp
from jax import lax
from jax.experimental import pallas as pl
from jax.experimental.pallas import tpu as pltpu

# ----------------------------- config ---------------------------------------
VOCAB = 32
EMB = 16
HID = 16                # encoder per-direction hidden size
HD = 2 * HID            # decoder hidden size / encoder bi-output size
GRAPH = 8
ENTITY = 10
RELATION = 6
NUM_LAYERS = 2
USE_POINTER = False

B = 2
T_SRC = 8
M_TRIPLES = 4
T_TRG = 6

NEG_INF = -1.0e12


# ----------------------------- pallas plumbing ------------------------------
def _fullspec(shape):
    nd = len(shape)
    return pl.BlockSpec(shape, lambda i, _nd=nd: (0,) * _nd)


# ----------------------------- shared LSTM gate math ------------------------
def _lstm_gates(gates, c, hsz):
    i_g = jax.nn.sigmoid(gates[:, 0:hsz])
    f_g = jax.nn.sigmoid(gates[:, hsz:2 * hsz])
    g_g = jnp.tanh(gates[:, 2 * hsz:3 * hsz])
    o_g = jax.nn.sigmoid(gates[:, 3 * hsz:4 * hsz])
    c_new = f_g * c + i_g * g_g
    h_new = o_g * jnp.tanh(c_new)
    return h_new, c_new


# ----------------------------- the fused kernel ------------------------------
def _seq2seq_kernel(
        # graph static attention
        head_ref, tail_ref, rela_ref, tmask_ref, wgh_ref, wgt_ref, wgr_ref,
        # encoder sequence inputs / masks (T-major layouts)
        embtag_ref, stepmask_ref, samask_ref, decmask_ref,
        # encoder LSTM layer 0 fwd / bwd (input weights split by source)
        w0f_et_ref, w0f_gh_ref, w0f_gt_ref, whh0f_ref, b0f_ref,
        w0b_et_ref, w0b_gh_ref, w0b_gt_ref, whh0b_ref, b0b_ref,
        # encoder LSTM layer 1 fwd / bwd (input weights split fwd/bwd halves)
        w1f_f_ref, w1f_b_ref, whh1f_ref, b1f_ref,
        w1b_f_ref, w1b_b_ref, whh1b_ref, b1b_ref,
        # encoder post: linear_trans, gated self-attn, decoder encoder_trans
        wtr_ref, btr_ref, wu_q_ref, wu_c_ref, wg_q_ref, wg_c_ref,
        wdt_ref, bdt_ref,
        # decoder
        decemb_ref, wred_e_ref, wred_c_ref, bred_ref,
        dwih0_ref, dwhh0_ref, db0_ref, dwih1_ref, dwhh1_ref, db1_ref,
        wcat_o_ref, wcat_c_ref, bcat_ref, wlog_ref, blog_ref,
        # output
        logits_ref):
    f32 = jnp.float32
    bf16 = jnp.bfloat16

    tb = embtag_ref.shape[0]              # T * B tokens (T-major)
    bsz = decmask_ref.shape[0]
    t = tb // bsz
    m = tmask_ref.shape[0] // tb
    h = whh0f_ref.shape[0]                # per-direction hidden
    hd = dwhh0_ref.shape[0]               # decoder hidden (= 2h)
    steps = decemb_ref.shape[0] // bsz

    def bdot(a, w):                       # bf16 MXU matmul, f32 accumulation
        return jnp.dot(a.astype(bf16), w, preferred_element_type=f32)

    # ---------------- graph static attention (batched over triples) ---------
    head_m = head_ref[...]                # [m*tb, g], embed_mask pre-applied
    tail_m = tail_ref[...]
    rela_m = rela_ref[...]
    hp = bdot(head_m, wgh_ref[...])
    tp = bdot(tail_m, wgt_ref[...])
    rp = bdot(rela_m, wgr_ref[...])
    beta = jnp.sum(rp * jnp.tanh(hp + tp), axis=1, keepdims=True)  # [m*tb, 1]
    beta = jnp.where(tmask_ref[...] != 0.0, NEG_INF, beta)

    betas = [beta[mi * tb:(mi + 1) * tb] for mi in range(m)]
    heads = [head_m[mi * tb:(mi + 1) * tb] for mi in range(m)]
    tails = [tail_m[mi * tb:(mi + 1) * tb] for mi in range(m)]
    bmax = betas[0]
    for mi in range(1, m):
        bmax = jnp.maximum(bmax, betas[mi])
    exps = [jnp.exp(bv - bmax) for bv in betas]
    denom = exps[0]
    for mi in range(1, m):
        denom = denom + exps[mi]
    inv = pl.reciprocal(denom, approx=True)
    ge_h = (exps[0] * inv) * heads[0]
    ge_t = (exps[0] * inv) * tails[0]
    for mi in range(1, m):
        a_mi = exps[mi] * inv
        ge_h = ge_h + a_mi * heads[mi]
        ge_t = ge_t + a_mi * tails[mi]                           # [tb, g] each

    # ---------------- encoder bi-LSTM (hoisted input projections) -----------
    embtag = embtag_ref[...]                                      # [tb, E+3]
    pre0f = (bdot(embtag, w0f_et_ref[...]) + bdot(ge_h, w0f_gh_ref[...])
             + bdot(ge_t, w0f_gt_ref[...]) + b0f_ref[...])        # [tb, 4h]
    pre0b = (bdot(embtag, w0b_et_ref[...]) + bdot(ge_h, w0b_gh_ref[...])
             + bdot(ge_t, w0b_gt_ref[...]) + b0b_ref[...])

    stepm = stepmask_ref[...]                                     # [tb, 1]
    m_steps = [stepm[ti * bsz:(ti + 1) * bsz] for ti in range(t)]

    def run_dir(pre, whh, reverse):
        # packed-sequence semantics via per-step mask gating
        pre_s = [pre[ti * bsz:(ti + 1) * bsz] for ti in range(t)]
        hh = jnp.zeros((bsz, h), f32)
        cc = jnp.zeros((bsz, h), f32)
        outs = [None] * t
        order = range(t - 1, -1, -1) if reverse else range(t)
        for ti in order:
            mk = m_steps[ti]
            gates = pre_s[ti] + jnp.dot(hh.astype(bf16), whh,
                                        preferred_element_type=f32)
            h_new, c_new = _lstm_gates(gates, cc, h)
            hh = mk * h_new + (1.0 - mk) * hh
            cc = mk * c_new + (1.0 - mk) * cc
            outs[ti] = hh * mk
        return outs, hh, cc

    o0f, hf0, cf0 = run_dir(pre0f, whh0f_ref[...], False)
    o0b, hb0, cb0 = run_dir(pre0b, whh0b_ref[...], True)

    o0f_all = jnp.concatenate(o0f, axis=0)                        # [tb, h]
    o0b_all = jnp.concatenate(o0b, axis=0)
    pre1f = (bdot(o0f_all, w1f_f_ref[...]) + bdot(o0b_all, w1f_b_ref[...])
             + b1f_ref[...])
    pre1b = (bdot(o0f_all, w1b_f_ref[...]) + bdot(o0b_all, w1b_b_ref[...])
             + b1b_ref[...])
    o1f, hf1, cf1 = run_dir(pre1f, whh1f_ref[...], False)
    o1b, hb1, cb1 = run_dir(pre1b, whh1b_ref[...], True)

    outputs = jnp.concatenate(
        [jnp.concatenate([o1f[ti], o1b[ti]], axis=1) for ti in range(t)],
        axis=0)                                                   # [tb, hd]

    # ---------------- encoder post: linear_trans + gated self-attention -----
    mem_enc = bdot(outputs, wtr_ref[...]) + btr_ref[...]          # [tb, hd]
    energies = lax.dot_general(outputs, mem_enc, (((1,), (1,)), ((), ())),
                               preferred_element_type=f32)        # [tb, tb]
    energies = jnp.where(samask_ref[...] == 0.0, NEG_INF, energies)
    pexp = jnp.exp(energies - jnp.max(energies, axis=1, keepdims=True))
    scores = pexp * pl.reciprocal(jnp.sum(pexp, axis=1, keepdims=True),
                                  approx=True)
    ctx = jnp.dot(scores, outputs, preferred_element_type=f32)    # [tb, hd]
    f_t = jnp.tanh(bdot(outputs, wu_q_ref[...]) + bdot(ctx, wu_c_ref[...]))
    g_t = jax.nn.sigmoid(bdot(outputs, wg_q_ref[...]) + bdot(ctx, wg_c_ref[...]))
    upd = g_t * f_t + (1.0 - g_t) * outputs
    dec_mem = bdot(upd, wdt_ref[...]) + bdt_ref[...]              # [tb, hd]

    # ---------------- decoder ------------------------------------------------
    decemb = decemb_ref[...]                                      # [steps*b, E]
    pre_red = bdot(decemb, wred_e_ref[...]) + bred_ref[...]       # hoisted
    pre_red_s = [pre_red[i * bsz:(i + 1) * bsz] for i in range(steps)]
    dec_mask = decmask_ref[...]                                   # [b, tb]
    wred_c = wred_c_ref[...]
    dwih0, dwhh0 = dwih0_ref[...], dwhh0_ref[...]
    dwih1, dwhh1 = dwih1_ref[...], dwhh1_ref[...]
    db0 = jnp.broadcast_to(db0_ref[...], (bsz, 4 * hd))           # hoisted
    db1 = jnp.broadcast_to(db1_ref[...], (bsz, 4 * hd))

    # decoder init states straight from the encoder recurrence (no HBM hop)
    h_l0 = jnp.concatenate([hf0, hb0], axis=1)                    # [b, hd]
    h_l1 = jnp.concatenate([hf1, hb1], axis=1)
    c_l0 = jnp.concatenate([cf0, cb0], axis=1)
    c_l1 = jnp.concatenate([cf1, cb1], axis=1)
    prev_ctx = jnp.zeros((bsz, hd), f32)

    outs_dec, ctxs_dec = [], []
    for i in range(steps):
        lstm_in = pre_red_s[i] + jnp.dot(prev_ctx.astype(bf16), wred_c,
                                         preferred_element_type=f32)
        g0 = (jnp.dot(lstm_in.astype(bf16), dwih0, preferred_element_type=f32)
              + jnp.dot(h_l0.astype(bf16), dwhh0, preferred_element_type=f32)
              + db0)
        h_l0, c_l0 = _lstm_gates(g0, c_l0, hd)
        g1 = (jnp.dot(h_l0.astype(bf16), dwih1, preferred_element_type=f32)
              + jnp.dot(h_l1.astype(bf16), dwhh1, preferred_element_type=f32)
              + db1)
        h_l1, c_l1 = _lstm_gates(g1, c_l1, hd)
        # attention over encoder memories (MXU dots, batch handled by mask)
        energy = lax.dot_general(h_l1, dec_mem, (((1,), (1,)), ((), ())),
                                 preferred_element_type=f32)      # [b, tb]
        energy = jnp.where(dec_mask == 0.0, NEG_INF, energy)
        pe = jnp.exp(energy - jnp.max(energy, axis=1, keepdims=True))
        attn = pe * pl.reciprocal(jnp.sum(pe, axis=1, keepdims=True),
                                  approx=True)
        ctx_i = jnp.dot(attn, dec_mem, preferred_element_type=f32)  # [b, hd]
        outs_dec.append(h_l1)
        ctxs_dec.append(ctx_i)
        prev_ctx = ctx_i

    # logit path batched over all steps (outside the sequential region)
    out_all = jnp.concatenate(outs_dec, axis=0)                   # [steps*b, hd]
    ctx_all = jnp.concatenate(ctxs_dec, axis=0)
    logit_in = jnp.tanh(bdot(out_all, wcat_o_ref[...])
                        + bdot(ctx_all, wcat_c_ref[...]) + bcat_ref[...])
    logits = bdot(logit_in, wlog_ref[...]) + blog_ref[...]
    # TODO(synk): config.use_pointer scatter_max copy branch not implemented.
    logits_ref[...] = logits


# ----------------------------- parameters ------------------------------------
def init_params(key):
    ks = iter(jax.random.split(key, 64))

    def u(shape):
        return jax.random.uniform(next(ks), shape, jnp.float32, -0.1, 0.1)

    p = {}
    p['enc_embedding'] = u((VOCAB, EMB))
    p['tag_embedding'] = u((3, 3))
    p['entity_embedding'] = u((ENTITY, GRAPH))
    p['relation_embedding'] = u((RELATION + 1, GRAPH))

    enc_in0 = EMB + 3 + 2 * GRAPH
    enc_lstm = {}
    for layer in range(NUM_LAYERS):
        in_size = enc_in0 if layer == 0 else 2 * HID
        for d in range(2):
            wih = u((4 * HID, in_size))
            whh = u((4 * HID, HID))
            bih = u((4 * HID,))
            bhh = u((4 * HID,))
            enc_lstm[(layer, d)] = (wih.T, whh.T, (bih + bhh).reshape(1, -1))
    p['enc_lstm'] = enc_lstm

    p['linear_trans_w'] = u((HD, HD)).T
    p['linear_trans_b'] = u((HD,)).reshape(1, -1)
    p['update_w'] = u((HD, 2 * HD)).T          # bias=False
    p['gate_w'] = u((HD, 2 * HD)).T            # bias=False
    p['head_graph_w'] = u((GRAPH, GRAPH)).T    # bias=False
    p['rela_graph_w'] = u((GRAPH, GRAPH)).T
    p['tail_graph_w'] = u((GRAPH, GRAPH)).T

    p['dec_embedding'] = u((VOCAB, EMB))
    p['dec_enc_trans_w'] = u((HD, HD)).T
    p['dec_enc_trans_b'] = u((HD,)).reshape(1, -1)
    p['dec_reduce_w'] = u((EMB, EMB + HD)).T
    p['dec_reduce_b'] = u((EMB,)).reshape(1, -1)
    dec_lstm = []
    for layer in range(NUM_LAYERS):
        in_size = EMB if layer == 0 else HD
        wih = u((4 * HD, in_size))
        whh = u((4 * HD, HD))
        bih = u((4 * HD,))
        bhh = u((4 * HD,))
        dec_lstm.append((wih.T, whh.T, (bih + bhh).reshape(1, -1)))
    p['dec_lstm'] = dec_lstm
    p['dec_concat_w'] = u((HD, 2 * HD)).T
    p['dec_concat_b'] = u((HD,)).reshape(1, -1)
    p['dec_logit_w'] = u((VOCAB, HD)).T
    p['dec_logit_b'] = u((VOCAB,)).reshape(1, -1)
    return p


# ----------------------------- full model wrapper ----------------------------
def seq2seq_forward(params, src_seq, tag_seq, cs_seq, mask_seq, embed_mask,
                    ext_src_seq, trg_seq):
    del ext_src_seq  # pointer mechanism disabled (config.use_pointer=False)
    b, t = src_seq.shape
    m = cs_seq.shape[2]
    bf = lambda w: w.astype(jnp.bfloat16)

    enc_mask_f = jnp.sign(src_seq).astype(jnp.float32)            # [b, t]

    # Embedding gathers stay in XLA (irregular gathers); everything else fused.
    emb = jnp.take(params['enc_embedding'], src_seq, axis=0)      # [b,t,EMB]
    tag_emb = jnp.take(params['tag_embedding'], tag_seq, axis=0)  # [b,t,3]
    head_e = jnp.take(params['entity_embedding'], cs_seq[..., 0], axis=0)
    tail_e = jnp.take(params['entity_embedding'], cs_seq[..., 2], axis=0)
    rela_e = jnp.take(params['relation_embedding'], cs_seq[..., 1], axis=0)

    keep = 1.0 - embed_mask.astype(jnp.float32)                   # [b,t,m,1]
    tri = lambda x: jnp.transpose(x * keep, (2, 1, 0, 3)).reshape(m * t * b,
                                                                  GRAPH)
    head_m = tri(head_e)                                          # triple-major
    tail_m = tri(tail_e)
    rela_m = tri(rela_e)
    tmask_f = jnp.transpose(mask_seq.astype(jnp.float32),
                            (2, 1, 0)).reshape(m * t * b, 1)

    embtag = jnp.transpose(jnp.concatenate([emb, tag_emb], axis=2),
                           (1, 0, 2)).reshape(t * b, EMB + 3)     # T-major
    stepmask = jnp.transpose(enc_mask_f, (1, 0)).reshape(t * b, 1)

    # masks that turn the per-batch attentions into single masked attentions
    batch_ids = jnp.tile(jnp.arange(b), t)                        # token i -> b
    col_valid = jnp.transpose(enc_mask_f, (1, 0)).reshape(t * b)
    samask = ((batch_ids[:, None] == batch_ids[None, :]).astype(jnp.float32)
              * col_valid[None, :])                               # [tb, tb]
    decmask = ((jnp.arange(b)[:, None] == batch_ids[None, :])
               .astype(jnp.float32) * col_valid[None, :])         # [b, tb]

    sos_trg = trg_seq[:, :-1]
    steps = sos_trg.shape[1]
    decemb = jnp.transpose(jnp.take(params['dec_embedding'], sos_trg, axis=0),
                           (1, 0, 2)).reshape(steps * b, EMB)     # step-major

    et = EMB + 3
    wih0f, whh0f, b0f = params['enc_lstm'][(0, 0)]
    wih0b, whh0b, b0b = params['enc_lstm'][(0, 1)]
    wih1f, whh1f, b1f = params['enc_lstm'][(1, 0)]
    wih1b, whh1b, b1b = params['enc_lstm'][(1, 1)]

    inputs = [
        # graph attention
        head_m, tail_m, rela_m, tmask_f,
        bf(params['head_graph_w']), bf(params['tail_graph_w']),
        bf(params['rela_graph_w']),
        # encoder sequence inputs / masks
        embtag, stepmask, samask, decmask,
        # encoder LSTM layer 0 fwd / bwd
        bf(wih0f[0:et]), bf(wih0f[et:et + GRAPH]),
        bf(wih0f[et + GRAPH:et + 2 * GRAPH]), bf(whh0f), b0f,
        bf(wih0b[0:et]), bf(wih0b[et:et + GRAPH]),
        bf(wih0b[et + GRAPH:et + 2 * GRAPH]), bf(whh0b), b0b,
        # encoder LSTM layer 1 fwd / bwd
        bf(wih1f[0:HID]), bf(wih1f[HID:2 * HID]), bf(whh1f), b1f,
        bf(wih1b[0:HID]), bf(wih1b[HID:2 * HID]), bf(whh1b), b1b,
        # encoder post
        bf(params['linear_trans_w']), params['linear_trans_b'],
        bf(params['update_w'][0:HD]), bf(params['update_w'][HD:2 * HD]),
        bf(params['gate_w'][0:HD]), bf(params['gate_w'][HD:2 * HD]),
        bf(params['dec_enc_trans_w']), params['dec_enc_trans_b'],
        # decoder
        decemb,
        bf(params['dec_reduce_w'][0:EMB]),
        bf(params['dec_reduce_w'][EMB:EMB + HD]), params['dec_reduce_b'],
        bf(params['dec_lstm'][0][0]), bf(params['dec_lstm'][0][1]),
        params['dec_lstm'][0][2],
        bf(params['dec_lstm'][1][0]), bf(params['dec_lstm'][1][1]),
        params['dec_lstm'][1][2],
        bf(params['dec_concat_w'][0:HD]), bf(params['dec_concat_w'][HD:2 * HD]),
        params['dec_concat_b'],
        bf(params['dec_logit_w']), params['dec_logit_b'],
    ]

    logits_flat = pl.pallas_call(
        _seq2seq_kernel,
        grid=(1,),
        in_specs=[_fullspec(x.shape) for x in inputs],
        out_specs=_fullspec((steps * b, VOCAB)),
        out_shape=jax.ShapeDtypeStruct((steps * b, VOCAB), jnp.float32),
        compiler_params=pltpu.CompilerParams(
            dimension_semantics=("arbitrary",),
            vmem_limit_bytes=32 * 1024 * 1024),
    )(*inputs)

    return jnp.transpose(logits_flat.reshape(steps, b, VOCAB), (1, 0, 2))


# ----------------------------- main ------------------------------------------
if __name__ == "__main__":
    root = jax.random.PRNGKey(0)
    pkey, dkey = jax.random.split(root)
    params = init_params(pkey)

    ik = jax.random.split(dkey, 8)
    src_lens = jnp.array([T_SRC, T_SRC - 3], dtype=jnp.int32)
    pos = jnp.arange(T_SRC)[None, :]
    valid = pos < src_lens[:, None]
    src_seq = jnp.where(valid,
                        jax.random.randint(ik[0], (B, T_SRC), 1, VOCAB), 0)
    src_seq = src_seq.astype(jnp.int32)
    tag_seq = jax.random.randint(ik[1], (B, T_SRC), 0, 3).astype(jnp.int32)
    heads = jax.random.randint(ik[2], (B, T_SRC, M_TRIPLES, 1), 0, ENTITY)
    rels = jax.random.randint(ik[3], (B, T_SRC, M_TRIPLES, 1), 0, RELATION + 1)
    tails = jax.random.randint(ik[4], (B, T_SRC, M_TRIPLES, 1), 0, ENTITY)
    cs_seq = jnp.concatenate([heads, rels, tails], axis=-1).astype(jnp.int32)
    mask_seq = (jax.random.uniform(ik[5], (B, T_SRC, M_TRIPLES)) < 0.3)
    mask_seq = mask_seq.at[:, :, 0].set(False).astype(jnp.int32)
    embed_mask = mask_seq[..., None].astype(bool)
    ext_src_seq = src_seq            # unused: pointer mechanism disabled
    trg_seq = jax.random.randint(ik[6], (B, T_TRG), 1, VOCAB).astype(jnp.int32)

    fwd = jax.jit(seq2seq_forward)
    logits = fwd(params, src_seq, tag_seq, cs_seq, mask_seq, embed_mask,
                 ext_src_seq, trg_seq)
    logits = jax.block_until_ready(logits)

    assert logits.shape == (B, T_TRG - 1, VOCAB), logits.shape
    assert bool(jnp.all(jnp.isfinite(logits)))
    print("KERNEL_OK")
</pallas_src>

<mosaic_0001>
module attributes {stable_mosaic.version = 11 : i64} {
  func.func @_seq2seq_kernel(%arg0: i32, %arg1: memref<64x8xf32, #tpu.memory_space<vmem>>, %arg2: memref<64x8xf32, #tpu.memory_space<vmem>>, %arg3: memref<64x8xf32, #tpu.memory_space<vmem>>, %arg4: memref<64x1xf32, #tpu.memory_space<vmem>>, %arg5: memref<8x8xbf16, #tpu.memory_space<vmem>>, %arg6: memref<8x8xbf16, #tpu.memory_space<vmem>>, %arg7: memref<8x8xbf16, #tpu.memory_space<vmem>>, %arg8: memref<16x19xf32, #tpu.memory_space<vmem>>, %arg9: memref<16x1xf32, #tpu.memory_space<vmem>>, %arg10: memref<16x16xf32, #tpu.memory_space<vmem>>, %arg11: memref<2x16xf32, #tpu.memory_space<vmem>>, %arg12: memref<19x64xbf16, #tpu.memory_space<vmem>>, %arg13: memref<8x64xbf16, #tpu.memory_space<vmem>>, %arg14: memref<8x64xbf16, #tpu.memory_space<vmem>>, %arg15: memref<16x64xbf16, #tpu.memory_space<vmem>>, %arg16: memref<1x64xf32, #tpu.memory_space<vmem>>, %arg17: memref<19x64xbf16, #tpu.memory_space<vmem>>, %arg18: memref<8x64xbf16, #tpu.memory_space<vmem>>, %arg19: memref<8x64xbf16, #tpu.memory_space<vmem>>, %arg20: memref<16x64xbf16, #tpu.memory_space<vmem>>, %arg21: memref<1x64xf32, #tpu.memory_space<vmem>>, %arg22: memref<16x64xbf16, #tpu.memory_space<vmem>>, %arg23: memref<16x64xbf16, #tpu.memory_space<vmem>>, %arg24: memref<16x64xbf16, #tpu.memory_space<vmem>>, %arg25: memref<1x64xf32, #tpu.memory_space<vmem>>, %arg26: memref<16x64xbf16, #tpu.memory_space<vmem>>, %arg27: memref<16x64xbf16, #tpu.memory_space<vmem>>, %arg28: memref<16x64xbf16, #tpu.memory_space<vmem>>, %arg29: memref<1x64xf32, #tpu.memory_space<vmem>>, %arg30: memref<32x32xbf16, #tpu.memory_space<vmem>>, %arg31: memref<1x32xf32, #tpu.memory_space<vmem>>, %arg32: memref<32x32xbf16, #tpu.memory_space<vmem>>, %arg33: memref<32x32xbf16, #tpu.memory_space<vmem>>, %arg34: memref<32x32xbf16, #tpu.memory_space<vmem>>, %arg35: memref<32x32xbf16, #tpu.memory_space<vmem>>, %arg36: memref<32x32xbf16, #tpu.memory_space<vmem>>, %arg37: memref<1x32xf32, #tpu.memory_space<vmem>>, %arg38: memref<10x16xf32, #tpu.memory_space<vmem>>, %arg39: memref<16x16xbf16, #tpu.memory_space<vmem>>, %arg40: memref<32x16xbf16, #tpu.memory_space<vmem>>, %arg41: memref<1x16xf32, #tpu.memory_space<vmem>>, %arg42: memref<16x128xbf16, #tpu.memory_space<vmem>>, %arg43: memref<32x128xbf16, #tpu.memory_space<vmem>>, %arg44: memref<1x128xf32, #tpu.memory_space<vmem>>, %arg45: memref<32x128xbf16, #tpu.memory_space<vmem>>, %arg46: memref<32x128xbf16, #tpu.memory_space<vmem>>, %arg47: memref<1x128xf32, #tpu.memory_space<vmem>>, %arg48: memref<32x32xbf16, #tpu.memory_space<vmem>>, %arg49: memref<32x32xbf16, #tpu.memory_space<vmem>>, %arg50: memref<1x32xf32, #tpu.memory_space<vmem>>, %arg51: memref<32x32xbf16, #tpu.memory_space<vmem>>, %arg52: memref<1x32xf32, #tpu.memory_space<vmem>>, %arg53: memref<10x32xf32, #tpu.memory_space<vmem>>) attributes {dimension_semantics = [#tpu.dimension_semantics<arbitrary>], iteration_bounds = array<i64: 1>, scalar_prefetch = 0 : i64, scratch_operands = 0 : i64, tpu.core_type = #tpu.core_type<tc>, window_params = [{pipeline_mode = #tpu.pipeline_mode<synchronous>, transform_indices = @transform_0, window_bounds = array<i64: 64, 8>}, {pipeline_mode = #tpu.pipeline_mode<synchronous>, transform_indices = @transform_1, window_bounds = array<i64: 64, 8>}, {pipeline_mode = #tpu.pipeline_mode<synchronous>, transform_indices = @transform_2, window_bounds = array<i64: 64, 8>}, {pipeline_mode = #tpu.pipeline_mode<synchronous>, transform_indices = @transform_3, window_bounds = array<i64: 64, 1>}, {pipeline_mode = #tpu.pipeline_mode<synchronous>, transform_indices = @transform_4, window_bounds = array<i64: 8, 8>}, {pipeline_mode = #tpu.pipeline_mode<synchronous>, transform_indices = @transform_5, window_bounds = array<i64: 8, 8>}, {pipeline_mode = #tpu.pipeline_mode<synchronous>, transform_indices = @transform_6, window_bounds = array<i64: 8, 8>}, {pipeline_mode = #tpu.pipeline_mode<synchronous>, transform_indices = @transform_7, window_bounds = array<i64: 16, 19>}, {pipeline_mode = #tpu.pipeline_mode<synchronous>, transform_indices = @transform_8, window_bounds = array<i64: 16, 1>}, {pipeline_mode = #tpu.pipeline_mode<synchronous>, transform_indices = @transform_9, window_bounds = array<i64: 16, 16>}, {pipeline_mode = #tpu.pipeline_mode<synchronous>, transform_indices = @transform_10, window_bounds = array<i64: 2, 16>}, {pipeline_mode = #tpu.pipeline_mode<synchronous>, transform_indices = @transform_11, window_bounds = array<i64: 19, 64>}, {pipeline_mode = #tpu.pipeline_mode<synchronous>, transform_indices = @transform_12, window_bounds = array<i64: 8, 64>}, {pipeline_mode = #tpu.pipeline_mode<synchronous>, transform_indices = @transform_13, window_bounds = array<i64: 8, 64>}, {pipeline_mode = #tpu.pipeline_mode<synchronous>, transform_indices = @transform_14, window_bounds = array<i64: 16, 64>}, {pipeline_mode = #tpu.pipeline_mode<synchronous>, transform_indices = @transform_15, window_bounds = array<i64: 1, 64>}, {pipeline_mode = #tpu.pipeline_mode<synchronous>, transform_indices = @transform_16, window_bounds = array<i64: 19, 64>}, {pipeline_mode = #tpu.pipeline_mode<synchronous>, transform_indices = @transform_17, window_bounds = array<i64: 8, 64>}, {pipeline_mode = #tpu.pipeline_mode<synchronous>, transform_indices = @transform_18, window_bounds = array<i64: 8, 64>}, {pipeline_mode = #tpu.pipeline_mode<synchronous>, transform_indices = @transform_19, window_bounds = array<i64: 16, 64>}, {pipeline_mode = #tpu.pipeline_mode<synchronous>, transform_indices = @transform_20, window_bounds = array<i64: 1, 64>}, {pipeline_mode = #tpu.pipeline_mode<synchronous>, transform_indices = @transform_21, window_bounds = array<i64: 16, 64>}, {pipeline_mode = #tpu.pipeline_mode<synchronous>, transform_indices = @transform_22, window_bounds = array<i64: 16, 64>}, {pipeline_mode = #tpu.pipeline_mode<synchronous>, transform_indices = @transform_23, window_bounds = array<i64: 16, 64>}, {pipeline_mode = #tpu.pipeline_mode<synchronous>, transform_indices = @transform_24, window_bounds = array<i64: 1, 64>}, {pipeline_mode = #tpu.pipeline_mode<synchronous>, transform_indices = @transform_25, window_bounds = array<i64: 16, 64>}, {pipeline_mode = #tpu.pipeline_mode<synchronous>, transform_indices = @transform_26, window_bounds = array<i64: 16, 64>}, {pipeline_mode = #tpu.pipeline_mode<synchronous>, transform_indices = @transform_27, window_bounds = array<i64: 16, 64>}, {pipeline_mode = #tpu.pipeline_mode<synchronous>, transform_indices = @transform_28, window_bounds = array<i64: 1, 64>}, {pipeline_mode = #tpu.pipeline_mode<synchronous>, transform_indices = @transform_29, window_bounds = array<i64: 32, 32>}, {pipeline_mode = #tpu.pipeline_mode<synchronous>, transform_indices = @transform_30, window_bounds = array<i64: 1, 32>}, {pipeline_mode = #tpu.pipeline_mode<synchronous>, transform_indices = @transform_31, window_bounds = array<i64: 32, 32>}, {pipeline_mode = #tpu.pipeline_mode<synchronous>, transform_indices = @transform_32, window_bounds = array<i64: 32, 32>}, {pipeline_mode = #tpu.pipeline_mode<synchronous>, transform_indices = @transform_33, window_bounds = array<i64: 32, 32>}, {pipeline_mode = #tpu.pipeline_mode<synchronous>, transform_indices = @transform_34, window_bounds = array<i64: 32, 32>}, {pipeline_mode = #tpu.pipeline_mode<synchronous>, transform_indices = @transform_35, window_bounds = array<i64: 32, 32>}, {pipeline_mode = #tpu.pipeline_mode<synchronous>, transform_indices = @transform_36, window_bounds = array<i64: 1, 32>}, {pipeline_mode = #tpu.pipeline_mode<synchronous>, transform_indices = @transform_37, window_bounds = array<i64: 10, 16>}, {pipeline_mode = #tpu.pipeline_mode<synchronous>, transform_indices = @transform_38, window_bounds = array<i64: 16, 16>}, {pipeline_mode = #tpu.pipeline_mode<synchronous>, transform_indices = @transform_39, window_bounds = array<i64: 32, 16>}, {pipeline_mode = #tpu.pipeline_mode<synchronous>, transform_indices = @transform_40, window_bounds = array<i64: 1, 16>}, {pipeline_mode = #tpu.pipeline_mode<synchronous>, transform_indices = @transform_41, window_bounds = array<i64: 16, 128>}, {pipeline_mode = #tpu.pipeline_mode<synchronous>, transform_indices = @transform_42, window_bounds = array<i64: 32, 128>}, {pipeline_mode = #tpu.pipeline_mode<synchronous>, transform_indices = @transform_43, window_bounds = array<i64: 1, 128>}, {pipeline_mode = #tpu.pipeline_mode<synchronous>, transform_indices = @transform_44, window_bounds = array<i64: 32, 128>}, {pipeline_mode = #tpu.pipeline_mode<synchronous>, transform_indices = @transform_45, window_bounds = array<i64: 32, 128>}, {pipeline_mode = #tpu.pipeline_mode<synchronous>, transform_indices = @transform_46, window_bounds = array<i64: 1, 128>}, {pipeline_mode = #tpu.pipeline_mode<synchronous>, transform_indices = @transform_47, window_bounds = array<i64: 32, 32>}, {pipeline_mode = #tpu.pipeline_mode<synchronous>, transform_indices = @transform_48, window_bounds = array<i64: 32, 32>}, {pipeline_mode = #tpu.pipeline_mode<synchronous>, transform_indices = @transform_49, window_bounds = array<i64: 1, 32>}, {pipeline_mode = #tpu.pipeline_mode<synchronous>, transform_indices = @transform_50, window_bounds = array<i64: 32, 32>}, {pipeline_mode = #tpu.pipeline_mode<synchronous>, transform_indices = @transform_51, window_bounds = array<i64: 1, 32>}, {pipeline_mode = #tpu.pipeline_mode<synchronous>, transform_indices = @transform_52, window_bounds = array<i64: 10, 32>}]} {
    %c0 = arith.constant 0 : index
    %c0_0 = arith.constant 0 : index
    %0 = vector.load %arg1[%c0, %c0_0] : memref<64x8xf32, #tpu.memory_space<vmem>>, vector<64x8xf32>
    %c0_1 = arith.constant 0 : index
    %c0_2 = arith.constant 0 : index
    %1 = vector.load %arg2[%c0_1, %c0_2] : memref<64x8xf32, #tpu.memory_space<vmem>>, vector<64x8xf32>
    %c0_3 = arith.constant 0 : index
    %c0_4 = arith.constant 0 : index
    %2 = vector.load %arg3[%c0_3, %c0_4] : memref<64x8xf32, #tpu.memory_space<vmem>>, vector<64x8xf32>
    %c0_5 = arith.constant 0 : index
    %c0_6 = arith.constant 0 : index
    %3 = vector.load %arg5[%c0_5, %c0_6] : memref<8x8xbf16, #tpu.memory_space<vmem>>, vector<8x8xbf16>
    %4 = arith.truncf %0 : vector<64x8xf32> to vector<64x8xbf16>
    %cst = arith.constant dense<0.000000e+00> : vector<64x8xf32>
    %5 = tpu.matmul %4, %3, %cst {dimension_numbers = #tpu.dot_dimension_numbers<[1], [0], [0], [1], [0, 0, 1, 1], [], []>} : vector<64x8xbf16>, vector<8x8xbf16>, vector<64x8xf32> -> vector<64x8xf32>
    %c0_7 = arith.constant 0 : index
    %c0_8 = arith.constant 0 : index
    %6 = vector.load %arg6[%c0_7, %c0_8] : memref<8x8xbf16, #tpu.memory_space<vmem>>, vector<8x8xbf16>
    %7 = arith.truncf %1 : vector<64x8xf32> to vector<64x8xbf16>
    %cst_9 = arith.constant dense<0.000000e+00> : vector<64x8xf32>
    %8 = tpu.matmul %7, %6, %cst_9 {dimension_numbers = #tpu.dot_dimension_numbers<[1], [0], [0], [1], [0, 0, 1, 1], [], []>} : vector<64x8xbf16>, vector<8x8xbf16>, vector<64x8xf32> -> vector<64x8xf32>
    %c0_10 = arith.constant 0 : index
    %c0_11 = arith.constant 0 : index
    %9 = vector.load %arg7[%c0_10, %c0_11] : memref<8x8xbf16, #tpu.memory_space<vmem>>, vector<8x8xbf16>
    %10 = arith.truncf %2 : vector<64x8xf32> to vector<64x8xbf16>
    %cst_12 = arith.constant dense<0.000000e+00> : vector<64x8xf32>
    %11 = tpu.matmul %10, %9, %cst_12 {dimension_numbers = #tpu.dot_dimension_numbers<[1], [0], [0], [1], [0, 0, 1, 1], [], []>} : vector<64x8xbf16>, vector<8x8xbf16>, vector<64x8xf32> -> vector<64x8xf32>
    %12 = arith.addf %5, %8 : vector<64x8xf32>
    %13 = math.tanh %12 : vector<64x8xf32>
    %14 = arith.mulf %11, %13 : vector<64x8xf32>
    %cst_13 = arith.constant dense<0.000000e+00> : vector<64xf32>
    %15 = vector.multi_reduction <add>, %14, %cst_13 [1] : vector<64x8xf32> to vector<64xf32>
    %16 = vector.shape_cast %15 : vector<64xf32> to vector<64x1xf32>
    %c0_14 = arith.constant 0 : index
    %c0_15 = arith.constant 0 : index
    %17 = vector.load %arg4[%c0_14, %c0_15] : memref<64x1xf32, #tpu.memory_space<vmem>>, vector<64x1xf32>
    %cst_16 = arith.constant 0.000000e+00 : f32
    %18 = vector.broadcast %cst_16 : f32 to vector<64x1xf32>
    %19 = arith.cmpf one, %17, %18 : vector<64x1xf32>
    %cst_17 = arith.constant -9.99999995E+11 : f32
    %20 = vector.broadcast %cst_17 : f32 to vector<64x1xf32>
    %21 = arith.select %19, %20, %16 : vector<64x1xi1>, vector<64x1xf32>
    %22 = vector.extract_strided_slice %21 {offsets = [0, 0], sizes = [16, 1], strides = [1, 1]} : vector<64x1xf32> to vector<16x1xf32>
    %23 = vector.extract_strided_slice %21 {offsets = [16, 0], sizes = [16, 1], strides = [1, 1]} : vector<64x1xf32> to vector<16x1xf32>
    %24 = vector.extract_strided_slice %21 {offsets = [32, 0], sizes = [16, 1], strides = [1, 1]} : vector<64x1xf32> to vector<16x1xf32>
    %25 = vector.extract_strided_slice %21 {offsets = [48, 0], sizes = [16, 1], strides = [1, 1]} : vector<64x1xf32> to vector<16x1xf32>
    %26 = vector.extract_strided_slice %0 {offsets = [0, 0], sizes = [16, 8], strides = [1, 1]} : vector<64x8xf32> to vector<16x8xf32>
    %27 = vector.extract_strided_slice %0 {offsets = [16, 0], sizes = [16, 8], strides = [1, 1]} : vector<64x8xf32> to vector<16x8xf32>
    %28 = vector.extract_strided_slice %0 {offsets = [32, 0], sizes = [16, 8], strides = [1, 1]} : vector<64x8xf32> to vector<16x8xf32>
    %29 = vector.extract_strided_slice %0 {offsets = [48, 0], sizes = [16, 8], strides = [1, 1]} : vector<64x8xf32> to vector<16x8xf32>
    %30 = vector.extract_strided_slice %1 {offsets = [0, 0], sizes = [16, 8], strides = [1, 1]} : vector<64x8xf32> to vector<16x8xf32>
    %31 = vector.extract_strided_slice %1 {offsets = [16, 0], sizes = [16, 8], strides = [1, 1]} : vector<64x8xf32> to vector<16x8xf32>
    %32 = vector.extract_strided_slice %1 {offsets = [32, 0], sizes = [16, 8], strides = [1, 1]} : vector<64x8xf32> to vector<16x8xf32>
    %33 = vector.extract_strided_slice %1 {offsets = [48, 0], sizes = [16, 8], strides = [1, 1]} : vector<64x8xf32> to vector<16x8xf32>
    %34 = arith.maximumf %22, %23 : vector<16x1xf32>
    %35 = arith.maximumf %34, %24 : vector<16x1xf32>
    %36 = arith.maximumf %35, %25 : vector<16x1xf32>
    %37 = arith.subf %22, %36 : vector<16x1xf32>
    %38 = math.exp %37 : vector<16x1xf32>
    %39 = arith.subf %23, %36 : vector<16x1xf32>
    %40 = math.exp %39 : vector<16x1xf32>
    %41 = arith.subf %24, %36 : vector<16x1xf32>
    %42 = math.exp %41 : vector<16x1xf32>
    %43 = arith.subf %25, %36 : vector<16x1xf32>
    %44 = math.exp %43 : vector<16x1xf32>
    %45 = arith.addf %38, %40 : vector<16x1xf32>
    %46 = arith.addf %45, %42 : vector<16x1xf32>
    %47 = arith.addf %46, %44 : vector<16x1xf32>
    %48 = tpu.reciprocal %47 {approx = true} : vector<16x1xf32> -> vector<16x1xf32>
    %49 = arith.mulf %38, %48 : vector<16x1xf32>
    %50 = vector.broadcast %49 : vector<16x1xf32> to vector<16x8xf32>
    %51 = arith.mulf %50, %26 : vector<16x8xf32>
    %52 = arith.mulf %38, %48 : vector<16x1xf32>
    %53 = vector.broadcast %52 : vector<16x1xf32> to vector<16x8xf32>
    %54 = arith.mulf %53, %30 : vector<16x8xf32>
    %55 = arith.mulf %40, %48 : vector<16x1xf32>
    %56 = vector.broadcast %55 : vector<16x1xf32> to vector<16x8xf32>
    %57 = arith.mulf %56, %27 : vector<16x8xf32>
    %58 = arith.addf %51, %57 : vector<16x8xf32>
    %59 = vector.broadcast %55 : vector<16x1xf32> to vector<16x8xf32>
    %60 = arith.mulf %59, %31 : vector<16x8xf32>
    %61 = arith.addf %54, %60 : vector<16x8xf32>
    %62 = arith.mulf %42, %48 : vector<16x1xf32>
    %63 = vector.broadcast %62 : vector<16x1xf32> to vector<16x8xf32>
    %64 = arith.mulf %63, %28 : vector<16x8xf32>
    %65 = arith.addf %58, %64 : vector<16x8xf32>
    %66 = vector.broadcast %62 : vector<16x1xf32> to vector<16x8xf32>
    %67 = arith.mulf %66, %32 : vector<16x8xf32>
    %68 = arith.addf %61, %67 : vector<16x8xf32>
    %69 = arith.mulf %44, %48 : vector<16x1xf32>
    %70 = vector.broadcast %69 : vector<16x1xf32> to vector<16x8xf32>
    %71 = arith.mulf %70, %29 : vector<16x8xf32>
    %72 = arith.addf %65, %71 : vector<16x8xf32>
    %73 = vector.broadcast %69 : vector<16x1xf32> to vector<16x8xf32>
    %74 = arith.mulf %73, %33 : vector<16x8xf32>
    %75 = arith.addf %68, %74 : vector<16x8xf32>
    %c0_18 = arith.constant 0 : index
    %c0_19 = arith.constant 0 : index
    %76 = vector.load %arg8[%c0_18, %c0_19] : memref<16x19xf32, #tpu.memory_space<vmem>>, vector<16x19xf32>
    %c0_20 = arith.constant 0 : index
    %c0_21 = arith.constant 0 : index
    %77 = vector.load %arg12[%c0_20, %c0_21] : memref<19x64xbf16, #tpu.memory_space<vmem>>, vector<19x64xbf16>
    %78 = arith.truncf %76 : vector<16x19xf32> to vector<16x19xbf16>
    %cst_22 = arith.constant dense<0.000000e+00> : vector<16x64xf32>
    %79 = tpu.matmul %78, %77, %cst_22 {dimension_numbers = #tpu.dot_dimension_numbers<[1], [0], [0], [1], [0, 0, 1, 1], [], []>} : vector<16x19xbf16>, vector<19x64xbf16>, vector<16x64xf32> -> vector<16x64xf32>
    %c0_23 = arith.constant 0 : index
    %c0_24 = arith.constant 0 : index
    %80 = vector.load %arg13[%c0_23, %c0_24] : memref<8x64xbf16, #tpu.memory_space<vmem>>, vector<8x64xbf16>
    %81 = arith.truncf %72 : vector<16x8xf32> to vector<16x8xbf16>
    %cst_25 = arith.constant dense<0.000000e+00> : vector<16x64xf32>
    %82 = tpu.matmul %81, %80, %cst_25 {dimension_numbers = #tpu.dot_dimension_numbers<[1], [0], [0], [1], [0, 0, 1, 1], [], []>} : vector<16x8xbf16>, vector<8x64xbf16>, vector<16x64xf32> -> vector<16x64xf32>
    %83 = arith.addf %79, %82 : vector<16x64xf32>
    %c0_26 = arith.constant 0 : index
    %c0_27 = arith.constant 0 : index
    %84 = vector.load %arg14[%c0_26, %c0_27] : memref<8x64xbf16, #tpu.memory_space<vmem>>, vector<8x64xbf16>
    %85 = arith.truncf %75 : vector<16x8xf32> to vector<16x8xbf16>
    %cst_28 = arith.constant dense<0.000000e+00> : vector<16x64xf32>
    %86 = tpu.matmul %85, %84, %cst_28 {dimension_numbers = #tpu.dot_dimension_numbers<[1], [0], [0], [1], [0, 0, 1, 1], [], []>} : vector<16x8xbf16>, vector<8x64xbf16>, vector<16x64xf32> -> vector<16x64xf32>
    %87 = arith.addf %83, %86 : vector<16x64xf32>
    %c0_29 = arith.constant 0 : index
    %c0_30 = arith.constant 0 : index
    %88 = vector.load %arg16[%c0_29, %c0_30] : memref<1x64xf32, #tpu.memory_space<vmem>>, vector<1x64xf32>
    %89 = vector.broadcast %88 : vector<1x64xf32> to vector<16x64xf32>
    %90 = arith.addf %87, %89 : vector<16x64xf32>
    %c0_31 = arith.constant 0 : index
    %c0_32 = arith.constant 0 : index
    %91 = vector.load %arg17[%c0_31, %c0_32] : memref<19x64xbf16, #tpu.memory_space<vmem>>, vector<19x64xbf16>
    %92 = arith.truncf %76 : vector<16x19xf32> to vector<16x19xbf16>
    %cst_33 = arith.constant dense<0.000000e+00> : vector<16x64xf32>
    %93 = tpu.matmul %92, %91, %cst_33 {dimension_numbers = #tpu.dot_dimension_numbers<[1], [0], [0], [1], [0, 0, 1, 1], [], []>} : vector<16x19xbf16>, vector<19x64xbf16>, vector<16x64xf32> -> vector<16x64xf32>
    %c0_34 = arith.constant 0 : index
    %c0_35 = arith.constant 0 : index
    %94 = vector.load %arg18[%c0_34, %c0_35] : memref<8x64xbf16, #tpu.memory_space<vmem>>, vector<8x64xbf16>
    %95 = arith.truncf %72 : vector<16x8xf32> to vector<16x8xbf16>
    %cst_36 = arith.constant dense<0.000000e+00> : vector<16x64xf32>
    %96 = tpu.matmul %95, %94, %cst_36 {dimension_numbers = #tpu.dot_dimension_numbers<[1], [0], [0], [1], [0, 0, 1, 1], [], []>} : vector<16x8xbf16>, vector<8x64xbf16>, vector<16x64xf32> -> vector<16x64xf32>
    %97 = arith.addf %93, %96 : vector<16x64xf32>
    %c0_37 = arith.constant 0 : index
    %c0_38 = arith.constant 0 : index
    %98 = vector.load %arg19[%c0_37, %c0_38] : memref<8x64xbf16, #tpu.memory_space<vmem>>, vector<8x64xbf16>
    %99 = arith.truncf %75 : vector<16x8xf32> to vector<16x8xbf16>
    %cst_39 = arith.constant dense<0.000000e+00> : vector<16x64xf32>
    %100 = tpu.matmul %99, %98, %cst_39 {dimension_numbers = #tpu.dot_dimension_numbers<[1], [0], [0], [1], [0, 0, 1, 1], [], []>} : vector<16x8xbf16>, vector<8x64xbf16>, vector<16x64xf32> -> vector<16x64xf32>
    %101 = arith.addf %97, %100 : vector<16x64xf32>
    %c0_40 = arith.constant 0 : index
    %c0_41 = arith.constant 0 : index
    %102 = vector.load %arg21[%c0_40, %c0_41] : memref<1x64xf32, #tpu.memory_space<vmem>>, vector<1x64xf32>
    %103 = vector.broadcast %102 : vector<1x64xf32> to vector<16x64xf32>
    %104 = arith.addf %101, %103 : vector<16x64xf32>
    %c0_42 = arith.constant 0 : index
    %c0_43 = arith.constant 0 : index
    %105 = vector.load %arg9[%c0_42, %c0_43] : memref<16x1xf32, #tpu.memory_space<vmem>>, vector<16x1xf32>
    %106 = vector.extract_strided_slice %105 {offsets = [0, 0], sizes = [2, 1], strides = [1, 1]} : vector<16x1xf32> to vector<2x1xf32>
    %107 = vector.extract_strided_slice %105 {offsets = [2, 0], sizes = [2, 1], strides = [1, 1]} : vector<16x1xf32> to vector<2x1xf32>
    %108 = vector.extract_strided_slice %105 {offsets = [4, 0], sizes = [2, 1], strides = [1, 1]} : vector<16x1xf32> to vector<2x1xf32>
    %109 = vector.extract_strided_slice %105 {offsets = [6, 0], sizes = [2, 1], strides = [1, 1]} : vector<16x1xf32> to vector<2x1xf32>
    %110 = vector.extract_strided_slice %105 {offsets = [8, 0], sizes = [2, 1], strides = [1, 1]} : vector<16x1xf32> to vector<2x1xf32>
    %111 = vector.extract_strided_slice %105 {offsets = [10, 0], sizes = [2, 1], strides = [1, 1]} : vector<16x1xf32> to vector<2x1xf32>
    %112 = vector.extract_strided_slice %105 {offsets = [12, 0], sizes = [2, 1], strides = [1, 1]} : vector<16x1xf32> to vector<2x1xf32>
    %113 = vector.extract_strided_slice %105 {offsets = [14, 0], sizes = [2, 1], strides = [1, 1]} : vector<16x1xf32> to vector<2x1xf32>
    %c0_44 = arith.constant 0 : index
    %c0_45 = arith.constant 0 : index
    %114 = vector.load %arg15[%c0_44, %c0_45] : memref<16x64xbf16, #tpu.memory_space<vmem>>, vector<16x64xbf16>
    %115 = vector.extract_strided_slice %90 {offsets = [0, 0], sizes = [2, 64], strides = [1, 1]} : vector<16x64xf32> to vector<2x64xf32>
    %116 = vector.extract_strided_slice %90 {offsets = [2, 0], sizes = [2, 64], strides = [1, 1]} : vector<16x64xf32> to vector<2x64xf32>
    %117 = vector.extract_strided_slice %90 {offsets = [4, 0], sizes = [2, 64], strides = [1, 1]} : vector<16x64xf32> to vector<2x64xf32>
    %118 = vector.extract_strided_slice %90 {offsets = [6, 0], sizes = [2, 64], strides = [1, 1]} : vector<16x64xf32> to vector<2x64xf32>
    %119 = vector.extract_strided_slice %90 {offsets = [8, 0], sizes = [2, 64], strides = [1, 1]} : vector<16x64xf32> to vector<2x64xf32>
    %120 = vector.extract_strided_slice %90 {offsets = [10, 0], sizes = [2, 64], strides = [1, 1]} : vector<16x64xf32> to vector<2x64xf32>
    %121 = vector.extract_strided_slice %90 {offsets = [12, 0], sizes = [2, 64], strides = [1, 1]} : vector<16x64xf32> to vector<2x64xf32>
    %122 = vector.extract_strided_slice %90 {offsets = [14, 0], sizes = [2, 64], strides = [1, 1]} : vector<16x64xf32> to vector<2x64xf32>
    %cst_46 = arith.constant 0.000000e+00 : f32
    %123 = vector.broadcast %cst_46 : f32 to vector<2x16xf32>
    %cst_47 = arith.constant 0.000000e+00 : f32
    %124 = vector.broadcast %cst_47 : f32 to vector<2x16xf32>
    %125 = arith.truncf %123 : vector<2x16xf32> to vector<2x16xbf16>
    %cst_48 = arith.constant dense<0.000000e+00> : vector<2x64xf32>
    %126 = tpu.matmul %125, %114, %cst_48 {dimension_numbers = #tpu.dot_dimension_numbers<[1], [0], [0], [1], [0, 0, 1, 1], [], []>} : vector<2x16xbf16>, vector<16x64xbf16>, vector<2x64xf32> -> vector<2x64xf32>
    %127 = arith.addf %115, %126 : vector<2x64xf32>
    %128 = vector.extract_strided_slice %127 {offsets = [0, 0], sizes = [2, 16], strides = [1, 1]} : vector<2x64xf32> to vector<2x16xf32>
    %129 = arith.negf %128 : vector<2x16xf32>
    %130 = math.exp %129 : vector<2x16xf32>
    %cst_49 = arith.constant 1.000000e+00 : f32
    %131 = vector.broadcast %cst_49 : f32 to vector<2x16xf32>
    %132 = arith.addf %131, %130 : vector<2x16xf32>
    %133 = arith.divf %131, %132 : vector<2x16xf32>
    %134 = vector.extract_strided_slice %127 {offsets = [0, 16], sizes = [2, 16], strides = [1, 1]} : vector<2x64xf32> to vector<2x16xf32>
    %135 = arith.negf %134 : vector<2x16xf32>
    %136 = math.exp %135 : vector<2x16xf32>
    %cst_50 = arith.constant 1.000000e+00 : f32
    %137 = vector.broadcast %cst_50 : f32 to vector<2x16xf32>
    %138 = arith.addf %137, %136 : vector<2x16xf32>
    %139 = arith.divf %137, %138 : vector<2x16xf32>
    %140 = vector.extract_strided_slice %127 {offsets = [0, 32], sizes = [2, 16], strides = [1, 1]} : vector<2x64xf32> to vector<2x16xf32>
    %141 = math.tanh %140 : vector<2x16xf32>
    %142 = vector.extract_strided_slice %127 {offsets = [0, 48], sizes = [2, 16], strides = [1, 1]} : vector<2x64xf32> to vector<2x16xf32>
    %143 = arith.negf %142 : vector<2x16xf32>
    %144 = math.exp %143 : vector<2x16xf32>
    %cst_51 = arith.constant 1.000000e+00 : f32
    %145 = vector.broadcast %cst_51 : f32 to vector<2x16xf32>
    %146 = arith.addf %145, %144 : vector<2x16xf32>
    %147 = arith.divf %145, %146 : vector<2x16xf32>
    %148 = arith.mulf %139, %124 : vector<2x16xf32>
    %149 = arith.mulf %133, %141 : vector<2x16xf32>
    %150 = arith.addf %148, %149 : vector<2x16xf32>
    %151 = math.tanh %150 : vector<2x16xf32>
    %152 = arith.mulf %147, %151 : vector<2x16xf32>
    %153 = vector.broadcast %106 : vector<2x1xf32> to vector<2x16xf32>
    %154 = arith.mulf %153, %152 : vector<2x16xf32>
    %cst_52 = arith.constant 1.000000e+00 : f32
    %155 = vector.broadcast %cst_52 : f32 to vector<2x1xf32>
    %156 = arith.subf %155, %106 : vector<2x1xf32>
    %157 = vector.broadcast %156 : vector<2x1xf32> to vector<2x16xf32>
    %158 = arith.mulf %157, %123 : vector<2x16xf32>
    %159 = arith.addf %154, %158 : vector<2x16xf32>
    %160 = vector.broadcast %106 : vector<2x1xf32> to vector<2x16xf32>
    %161 = arith.mulf %160, %150 : vector<2x16xf32>
    %cst_53 = arith.constant 1.000000e+00 : f32
    %162 = vector.broadcast %cst_53 : f32 to vector<2x1xf32>
    %163 = arith.subf %162, %106 : vector<2x1xf32>
    %164 = vector.broadcast %163 : vector<2x1xf32> to vector<2x16xf32>
    %165 = arith.mulf %164, %124 : vector<2x16xf32>
    %166 = arith.addf %161, %165 : vector<2x16xf32>
    %167 = vector.broadcast %106 : vector<2x1xf32> to vector<2x16xf32>
    %168 = arith.mulf %159, %167 : vector<2x16xf32>
    %169 = arith.truncf %159 : vector<2x16xf32> to vector<2x16xbf16>
    %cst_54 = arith.constant dense<0.000000e+00> : vector<2x64xf32>
    %170 = tpu.matmul %169, %114, %cst_54 {dimension_numbers = #tpu.dot_dimension_numbers<[1], [0], [0], [1], [0, 0, 1, 1], [], []>} : vector<2x16xbf16>, vector<16x64xbf16>, vector<2x64xf32> -> vector<2x64xf32>
    %171 = arith.addf %116, %170 : vector<2x64xf32>
    %172 = vector.extract_strided_slice %171 {offsets = [0, 0], sizes = [2, 16], strides = [1, 1]} : vector<2x64xf32> to vector<2x16xf32>
    %173 = arith.negf %172 : vector<2x16xf32>
    %174 = math.exp %173 : vector<2x16xf32>
    %cst_55 = arith.constant 1.000000e+00 : f32
    %175 = vector.broadcast %cst_55 : f32 to vector<2x16xf32>
    %176 = arith.addf %175, %174 : vector<2x16xf32>
    %177 = arith.divf %175, %176 : vector<2x16xf32>
    %178 = vector.extract_strided_slice %171 {offsets = [0, 16], sizes = [2, 16], strides = [1, 1]} : vector<2x64xf32> to vector<2x16xf32>
    %179 = arith.negf %178 : vector<2x16xf32>
    %180 = math.exp %179 : vector<2x16xf32>
    %cst_56 = arith.constant 1.000000e+00 : f32
    %181 = vector.broadcast %cst_56 : f32 to vector<2x16xf32>
    %182 = arith.addf %181, %180 : vector<2x16xf32>
    %183 = arith.divf %181, %182 : vector<2x16xf32>
    %184 = vector.extract_strided_slice %171 {offsets = [0, 32], sizes = [2, 16], strides = [1, 1]} : vector<2x64xf32> to vector<2x16xf32>
    %185 = math.tanh %184 : vector<2x16xf32>
    %186 = vector.extract_strided_slice %171 {offsets = [0, 48], sizes = [2, 16], strides = [1, 1]} : vector<2x64xf32> to vector<2x16xf32>
    %187 = arith.negf %186 : vector<2x16xf32>
    %188 = math.exp %187 : vector<2x16xf32>
    %cst_57 = arith.constant 1.000000e+00 : f32
    %189 = vector.broadcast %cst_57 : f32 to vector<2x16xf32>
    %190 = arith.addf %189, %188 : vector<2x16xf32>
    %191 = arith.divf %189, %190 : vector<2x16xf32>
    %192 = arith.mulf %183, %166 : vector<2x16xf32>
    %193 = arith.mulf %177, %185 : vector<2x16xf32>
    %194 = arith.addf %192, %193 : vector<2x16xf32>
    %195 = math.tanh %194 : vector<2x16xf32>
    %196 = arith.mulf %191, %195 : vector<2x16xf32>
    %197 = vector.broadcast %107 : vector<2x1xf32> to vector<2x16xf32>
    %198 = arith.mulf %197, %196 : vector<2x16xf32>
    %cst_58 = arith.constant 1.000000e+00 : f32
    %199 = vector.broadcast %cst_58 : f32 to vector<2x1xf32>
    %200 = arith.subf %199, %107 : vector<2x1xf32>
    %201 = vector.broadcast %200 : vector<2x1xf32> to vector<2x16xf32>
    %202 = arith.mulf %201, %159 : vector<2x16xf32>
    %203 = arith.addf %198, %202 : vector<2x16xf32>
    %204 = vector.broadcast %107 : vector<2x1xf32> to vector<2x16xf32>
    %205 = arith.mulf %204, %194 : vector<2x16xf32>
    %cst_59 = arith.constant 1.000000e+00 : f32
    %206 = vector.broadcast %cst_59 : f32 to vector<2x1xf32>
    %207 = arith.subf %206, %107 : vector<2x1xf32>
    %208 = vector.broadcast %207 : vector<2x1xf32> to vector<2x16xf32>
    %209 = arith.mulf %208, %166 : vector<2x16xf32>
    %210 = arith.addf %205, %209 : vector<2x16xf32>
    %211 = vector.broadcast %107 : vector<2x1xf32> to vector<2x16xf32>
    %212 = arith.mulf %203, %211 : vector<2x16xf32>
    %213 = arith.truncf %203 : vector<2x16xf32> to vector<2x16xbf16>
    %cst_60 = arith.constant dense<0.000000e+00> : vector<2x64xf32>
    %214 = tpu.matmul %213, %114, %cst_60 {dimension_numbers = #tpu.dot_dimension_numbers<[1], [0], [0], [1], [0, 0, 1, 1], [], []>} : vector<2x16xbf16>, vector<16x64xbf16>, vector<2x64xf32> -> vector<2x64xf32>
    %215 = arith.addf %117, %214 : vector<2x64xf32>
    %216 = vector.extract_strided_slice %215 {offsets = [0, 0], sizes = [2, 16], strides = [1, 1]} : vector<2x64xf32> to vector<2x16xf32>
    %217 = arith.negf %216 : vector<2x16xf32>
    %218 = math.exp %217 : vector<2x16xf32>
    %cst_61 = arith.constant 1.000000e+00 : f32
    %219 = vector.broadcast %cst_61 : f32 to vector<2x16xf32>
    %220 = arith.addf %219, %218 : vector<2x16xf32>
    %221 = arith.divf %219, %220 : vector<2x16xf32>
    %222 = vector.extract_strided_slice %215 {offsets = [0, 16], sizes = [2, 16], strides = [1, 1]} : vector<2x64xf32> to vector<2x16xf32>
    %223 = arith.negf %222 : vector<2x16xf32>
    %224 = math.exp %223 : vector<2x16xf32>
    %cst_62 = arith.constant 1.000000e+00 : f32
    %225 = vector.broadcast %cst_62 : f32 to vector<2x16xf32>
    %226 = arith.addf %225, %224 : vector<2x16xf32>
    %227 = arith.divf %225, %226 : vector<2x16xf32>
    %228 = vector.extract_strided_slice %215 {offsets = [0, 32], sizes = [2, 16], strides = [1, 1]} : vector<2x64xf32> to vector<2x16xf32>
    %229 = math.tanh %228 : vector<2x16xf32>
    %230 = vector.extract_strided_slice %215 {offsets = [0, 48], sizes = [2, 16], strides = [1, 1]} : vector<2x64xf32> to vector<2x16xf32>
    %231 = arith.negf %230 : vector<2x16xf32>
    %232 = math.exp %231 : vector<2x16xf32>
    %cst_63 = arith.constant 1.000000e+00 : f32
    %233 = vector.broadcast %cst_63 : f32 to vector<2x16xf32>
    %234 = arith.addf %233, %232 : vector<2x16xf32>
    %235 = arith.divf %233, %234 : vector<2x16xf32>
    %236 = arith.mulf %227, %210 : vector<2x16xf32>
    %237 = arith.mulf %221, %229 : vector<2x16xf32>
    %238 = arith.addf %236, %237 : vector<2x16xf32>
    %239 = math.tanh %238 : vector<2x16xf32>
    %240 = arith.mulf %235, %239 : vector<2x16xf32>
    %241 = vector.broadcast %108 : vector<2x1xf32> to vector<2x16xf32>
    %242 = arith.mulf %241, %240 : vector<2x16xf32>
    %cst_64 = arith.constant 1.000000e+00 : f32
    %243 = vector.broadcast %cst_64 : f32 to vector<2x1xf32>
    %244 = arith.subf %243, %108 : vector<2x1xf32>
    %245 = vector.broadcast %244 : vector<2x1xf32> to vector<2x16xf32>
    %246 = arith.mulf %245, %203 : vector<2x16xf32>
    %247 = arith.addf %242, %246 : vector<2x16xf32>
    %248 = vector.broadcast %108 : vector<2x1xf32> to vector<2x16xf32>
    %249 = arith.mulf %248, %238 : vector<2x16xf32>
    %cst_65 = arith.constant 1.000000e+00 : f32
    %250 = vector.broadcast %cst_65 : f32 to vector<2x1xf32>
    %251 = arith.subf %250, %108 : vector<2x1xf32>
    %252 = vector.broadcast %251 : vector<2x1xf32> to vector<2x16xf32>
    %253 = arith.mulf %252, %210 : vector<2x16xf32>
    %254 = arith.addf %249, %253 : vector<2x16xf32>
    %255 = vector.broadcast %108 : vector<2x1xf32> to vector<2x16xf32>
    %256 = arith.mulf %247, %255 : vector<2x16xf32>
    %257 = arith.truncf %247 : vector<2x16xf32> to vector<2x16xbf16>
    %cst_66 = arith.constant dense<0.000000e+00> : vector<2x64xf32>
    %258 = tpu.matmul %257, %114, %cst_66 {dimension_numbers = #tpu.dot_dimension_numbers<[1], [0], [0], [1], [0, 0, 1, 1], [], []>} : vector<2x16xbf16>, vector<16x64xbf16>, vector<2x64xf32> -> vector<2x64xf32>
    %259 = arith.addf %118, %258 : vector<2x64xf32>
    %260 = vector.extract_strided_slice %259 {offsets = [0, 0], sizes = [2, 16], strides = [1, 1]} : vector<2x64xf32> to vector<2x16xf32>
    %261 = arith.negf %260 : vector<2x16xf32>
    %262 = math.exp %261 : vector<2x16xf32>
    %cst_67 = arith.constant 1.000000e+00 : f32
    %263 = vector.broadcast %cst_67 : f32 to vector<2x16xf32>
    %264 = arith.addf %263, %262 : vector<2x16xf32>
    %265 = arith.divf %263, %264 : vector<2x16xf32>
    %266 = vector.extract_strided_slice %259 {offsets = [0, 16], sizes = [2, 16], strides = [1, 1]} : vector<2x64xf32> to vector<2x16xf32>
    %267 = arith.negf %266 : vector<2x16xf32>
    %268 = math.exp %267 : vector<2x16xf32>
    %cst_68 = arith.constant 1.000000e+00 : f32
    %269 = vector.broadcast %cst_68 : f32 to vector<2x16xf32>
    %270 = arith.addf %269, %268 : vector<2x16xf32>
    %271 = arith.divf %269, %270 : vector<2x16xf32>
    %272 = vector.extract_strided_slice %259 {offsets = [0, 32], sizes = [2, 16], strides = [1, 1]} : vector<2x64xf32> to vector<2x16xf32>
    %273 = math.tanh %272 : vector<2x16xf32>
    %274 = vector.extract_strided_slice %259 {offsets = [0, 48], sizes = [2, 16], strides = [1, 1]} : vector<2x64xf32> to vector<2x16xf32>
    %275 = arith.negf %274 : vector<2x16xf32>
    %276 = math.exp %275 : vector<2x16xf32>
    %cst_69 = arith.constant 1.000000e+00 : f32
    %277 = vector.broadcast %cst_69 : f32 to vector<2x16xf32>
    %278 = arith.addf %277, %276 : vector<2x16xf32>
    %279 = arith.divf %277, %278 : vector<2x16xf32>
    %280 = arith.mulf %271, %254 : vector<2x16xf32>
    %281 = arith.mulf %265, %273 : vector<2x16xf32>
    %282 = arith.addf %280, %281 : vector<2x16xf32>
    %283 = math.tanh %282 : vector<2x16xf32>
    %284 = arith.mulf %279, %283 : vector<2x16xf32>
    %285 = vector.broadcast %109 : vector<2x1xf32> to vector<2x16xf32>
    %286 = arith.mulf %285, %284 : vector<2x16xf32>
    %cst_70 = arith.constant 1.000000e+00 : f32
    %287 = vector.broadcast %cst_70 : f32 to vector<2x1xf32>
    %288 = arith.subf %287, %109 : vector<2x1xf32>
    %289 = vector.broadcast %288 : vector<2x1xf32> to vector<2x16xf32>
    %290 = arith.mulf %289, %247 : vector<2x16xf32>
    %291 = arith.addf %286, %290 : vector<2x16xf32>
    %292 = vector.broadcast %109 : vector<2x1xf32> to vector<2x16xf32>
    %293 = arith.mulf %292, %282 : vector<2x16xf32>
    %cst_71 = arith.constant 1.000000e+00 : f32
    %294 = vector.broadcast %cst_71 : f32 to vector<2x1xf32>
    %295 = arith.subf %294, %109 : vector<2x1xf32>
    %296 = vector.broadcast %295 : vector<2x1xf32> to vector<2x16xf32>
    %297 = arith.mulf %296, %254 : vector<2x16xf32>
    %298 = arith.addf %293, %297 : vector<2x16xf32>
    %299 = vector.broadcast %109 : vector<2x1xf32> to vector<2x16xf32>
    %300 = arith.mulf %291, %299 : vector<2x16xf32>
    %301 = arith.truncf %291 : vector<2x16xf32> to vector<2x16xbf16>
    %cst_72 = arith.constant dense<0.000000e+00> : vector<2x64xf32>
    %302 = tpu.matmul %301, %114, %cst_72 {dimension_numbers = #tpu.dot_dimension_numbers<[1], [0], [0], [1], [0, 0, 1, 1], [], []>} : vector<2x16xbf16>, vector<16x64xbf16>, vector<2x64xf32> -> vector<2x64xf32>
    %303 = arith.addf %119, %302 : vector<2x64xf32>
    %304 = vector.extract_strided_slice %303 {offsets = [0, 0], sizes = [2, 16], strides = [1, 1]} : vector<2x64xf32> to vector<2x16xf32>
    %305 = arith.negf %304 : vector<2x16xf32>
    %306 = math.exp %305 : vector<2x16xf32>
    %cst_73 = arith.constant 1.000000e+00 : f32
    %307 = vector.broadcast %cst_73 : f32 to vector<2x16xf32>
    %308 = arith.addf %307, %306 : vector<2x16xf32>
    %309 = arith.divf %307, %308 : vector<2x16xf32>
    %310 = vector.extract_strided_slice %303 {offsets = [0, 16], sizes = [2, 16], strides = [1, 1]} : vector<2x64xf32> to vector<2x16xf32>
    %311 = arith.negf %310 : vector<2x16xf32>
    %312 = math.exp %311 : vector<2x16xf32>
    %cst_74 = arith.constant 1.000000e+00 : f32
    %313 = vector.broadcast %cst_74 : f32 to vector<2x16xf32>
    %314 = arith.addf %313, %312 : vector<2x16xf32>
    %315 = arith.divf %313, %314 : vector<2x16xf32>
    %316 = vector.extract_strided_slice %303 {offsets = [0, 32], sizes = [2, 16], strides = [1, 1]} : vector<2x64xf32> to vector<2x16xf32>
    %317 = math.tanh %316 : vector<2x16xf32>
    %318 = vector.extract_strided_slice %303 {offsets = [0, 48], sizes = [2, 16], strides = [1, 1]} : vector<2x64xf32> to vector<2x16xf32>
    %319 = arith.negf %318 : vector<2x16xf32>
    %320 = math.exp %319 : vector<2x16xf32>
    %cst_75 = arith.constant 1.000000e+00 : f32
    %321 = vector.broadcast %cst_75 : f32 to vector<2x16xf32>
    %322 = arith.addf %321, %320 : vector<2x16xf32>
    %323 = arith.divf %321, %322 : vector<2x16xf32>
    %324 = arith.mulf %315, %298 : vector<2x16xf32>
    %325 = arith.mulf %309, %317 : vector<2x16xf32>
    %326 = arith.addf %324, %325 : vector<2x16xf32>
    %327 = math.tanh %326 : vector<2x16xf32>
    %328 = arith.mulf %323, %327 : vector<2x16xf32>
    %329 = vector.broadcast %110 : vector<2x1xf32> to vector<2x16xf32>
    %330 = arith.mulf %329, %328 : vector<2x16xf32>
    %cst_76 = arith.constant 1.000000e+00 : f32
    %331 = vector.broadcast %cst_76 : f32 to vector<2x1xf32>
    %332 = arith.subf %331, %110 : vector<2x1xf32>
    %333 = vector.broadcast %332 : vector<2x1xf32> to vector<2x16xf32>
    %334 = arith.mulf %333, %291 : vector<2x16xf32>
    %335 = arith.addf %330, %334 : vector<2x16xf32>
    %336 = vector.broadcast %110 : vector<2x1xf32> to vector<2x16xf32>
    %337 = arith.mulf %336, %326 : vector<2x16xf32>
    %cst_77 = arith.constant 1.000000e+00 : f32
    %338 = vector.broadcast %cst_77 : f32 to vector<2x1xf32>
    %339 = arith.subf %338, %110 : vector<2x1xf32>
    %340 = vector.broadcast %339 : vector<2x1xf32> to vector<2x16xf32>
    %341 = arith.mulf %340, %298 : vector<2x16xf32>
    %342 = arith.addf %337, %341 : vector<2x16xf32>
    %343 = vector.broadcast %110 : vector<2x1xf32> to vector<2x16xf32>
    %344 = arith.mulf %335, %343 : vector<2x16xf32>
    %345 = arith.truncf %335 : vector<2x16xf32> to vector<2x16xbf16>
    %cst_78 = arith.constant dense<0.000000e+00> : vector<2x64xf32>
    %346 = tpu.matmul %345, %114, %cst_78 {dimension_numbers = #tpu.dot_dimension_numbers<[1], [0], [0], [1], [0, 0, 1, 1], [], []>} : vector<2x16xbf16>, vector<16x64xbf16>, vector<2x64xf32> -> vector<2x64xf32>
    %347 = arith.addf %120, %346 : vector<2x64xf32>
    %348 = vector.extract_strided_slice %347 {offsets = [0, 0], sizes = [2, 16], strides = [1, 1]} : vector<2x64xf32> to vector<2x16xf32>
    %349 = arith.negf %348 : vector<2x16xf32>
    %350 = math.exp %349 : vector<2x16xf32>
    %cst_79 = arith.constant 1.000000e+00 : f32
    %351 = vector.broadcast %cst_79 : f32 to vector<2x16xf32>
    %352 = arith.addf %351, %350 : vector<2x16xf32>
    %353 = arith.divf %351, %352 : vector<2x16xf32>
    %354 = vector.extract_strided_slice %347 {offsets = [0, 16], sizes = [2, 16], strides = [1, 1]} : vector<2x64xf32> to vector<2x16xf32>
    %355 = arith.negf %354 : vector<2x16xf32>
    %356 = math.exp %355 : vector<2x16xf32>
    %cst_80 = arith.constant 1.000000e+00 : f32
    %357 = vector.broadcast %cst_80 : f32 to vector<2x16xf32>
    %358 = arith.addf %357, %356 : vector<2x16xf32>
    %359 = arith.divf %357, %358 : vector<2x16xf32>
    %360 = vector.extract_strided_slice %347 {offsets = [0, 32], sizes = [2, 16], strides = [1, 1]} : vector<2x64xf32> to vector<2x16xf32>
    %361 = math.tanh %360 : vector<2x16xf32>
    %362 = vector.extract_strided_slice %347 {offsets = [0, 48], sizes = [2, 16], strides = [1, 1]} : vector<2x64xf32> to vector<2x16xf32>
    %363 = arith.negf %362 : vector<2x16xf32>
    %364 = math.exp %363 : vector<2x16xf32>
    %cst_81 = arith.constant 1.000000e+00 : f32
    %365 = vector.broadcast %cst_81 : f32 to vector<2x16xf32>
    %366 = arith.addf %365, %364 : vector<2x16xf32>
    %367 = arith.divf %365, %366 : vector<2x16xf32>
    %368 = arith.mulf %359, %342 : vector<2x16xf32>
    %369 = arith.mulf %353, %361 : vector<2x16xf32>
    %370 = arith.addf %368, %369 : vector<2x16xf32>
    %371 = math.tanh %370 : vector<2x16xf32>
    %372 = arith.mulf %367, %371 : vector<2x16xf32>
    %373 = vector.broadcast %111 : vector<2x1xf32> to vector<2x16xf32>
    %374 = arith.mulf %373, %372 : vector<2x16xf32>
    %cst_82 = arith.constant 1.000000e+00 : f32
    %375 = vector.broadcast %cst_82 : f32 to vector<2x1xf32>
    %376 = arith.subf %375, %111 : vector<2x1xf32>
    %377 = vector.broadcast %376 : vector<2x1xf32> to vector<2x16xf32>
    %378 = arith.mulf %377, %335 : vector<2x16xf32>
    %379 = arith.addf %374, %378 : vector<2x16xf32>
    %380 = vector.broadcast %111 : vector<2x1xf32> to vector<2x16xf32>
    %381 = arith.mulf %380, %370 : vector<2x16xf32>
    %cst_83 = arith.constant 1.000000e+00 : f32
    %382 = vector.broadcast %cst_83 : f32 to vector<2x1xf32>
    %383 = arith.subf %382, %111 : vector<2x1xf32>
    %384 = vector.broadcast %383 : vector<2x1xf32> to vector<2x16xf32>
    %385 = arith.mulf %384, %342 : vector<2x16xf32>
    %386 = arith.addf %381, %385 : vector<2x16xf32>
    %387 = vector.broadcast %111 : vector<2x1xf32> to vector<2x16xf32>
    %388 = arith.mulf %379, %387 : vector<2x16xf32>
    %389 = arith.truncf %379 : vector<2x16xf32> to vector<2x16xbf16>
    %cst_84 = arith.constant dense<0.000000e+00> : vector<2x64xf32>
    %390 = tpu.matmul %389, %114, %cst_84 {dimension_numbers = #tpu.dot_dimension_numbers<[1], [0], [0], [1], [0, 0, 1, 1], [], []>} : vector<2x16xbf16>, vector<16x64xbf16>, vector<2x64xf32> -> vector<2x64xf32>
    %391 = arith.addf %121, %390 : vector<2x64xf32>
    %392 = vector.extract_strided_slice %391 {offsets = [0, 0], sizes = [2, 16], strides = [1, 1]} : vector<2x64xf32> to vector<2x16xf32>
    %393 = arith.negf %392 : vector<2x16xf32>
    %394 = math.exp %393 : vector<2x16xf32>
    %cst_85 = arith.constant 1.000000e+00 : f32
    %395 = vector.broadcast %cst_85 : f32 to vector<2x16xf32>
    %396 = arith.addf %395, %394 : vector<2x16xf32>
    %397 = arith.divf %395, %396 : vector<2x16xf32>
    %398 = vector.extract_strided_slice %391 {offsets = [0, 16], sizes = [2, 16], strides = [1, 1]} : vector<2x64xf32> to vector<2x16xf32>
    %399 = arith.negf %398 : vector<2x16xf32>
    %400 = math.exp %399 : vector<2x16xf32>
    %cst_86 = arith.constant 1.000000e+00 : f32
    %401 = vector.broadcast %cst_86 : f32 to vector<2x16xf32>
    %402 = arith.addf %401, %400 : vector<2x16xf32>
    %403 = arith.divf %401, %402 : vector<2x16xf32>
    %404 = vector.extract_strided_slice %391 {offsets = [0, 32], sizes = [2, 16], strides = [1, 1]} : vector<2x64xf32> to vector<2x16xf32>
    %405 = math.tanh %404 : vector<2x16xf32>
    %406 = vector.extract_strided_slice %391 {offsets = [0, 48], sizes = [2, 16], strides = [1, 1]} : vector<2x64xf32> to vector<2x16xf32>
    %407 = arith.negf %406 : vector<2x16xf32>
    %408 = math.exp %407 : vector<2x16xf32>
    %cst_87 = arith.constant 1.000000e+00 : f32
    %409 = vector.broadcast %cst_87 : f32 to vector<2x16xf32>
    %410 = arith.addf %409, %408 : vector<2x16xf32>
    %411 = arith.divf %409, %410 : vector<2x16xf32>
    %412 = arith.mulf %403, %386 : vector<2x16xf32>
    %413 = arith.mulf %397, %405 : vector<2x16xf32>
    %414 = arith.addf %412, %413 : vector<2x16xf32>
    %415 = math.tanh %414 : vector<2x16xf32>
    %416 = arith.mulf %411, %415 : vector<2x16xf32>
    %417 = vector.broadcast %112 : vector<2x1xf32> to vector<2x16xf32>
    %418 = arith.mulf %417, %416 : vector<2x16xf32>
    %cst_88 = arith.constant 1.000000e+00 : f32
    %419 = vector.broadcast %cst_88 : f32 to vector<2x1xf32>
    %420 = arith.subf %419, %112 : vector<2x1xf32>
    %421 = vector.broadcast %420 : vector<2x1xf32> to vector<2x16xf32>
    %422 = arith.mulf %421, %379 : vector<2x16xf32>
    %423 = arith.addf %418, %422 : vector<2x16xf32>
    %424 = vector.broadcast %112 : vector<2x1xf32> to vector<2x16xf32>
    %425 = arith.mulf %424, %414 : vector<2x16xf32>
    %cst_89 = arith.constant 1.000000e+00 : f32
    %426 = vector.broadcast %cst_89 : f32 to vector<2x1xf32>
    %427 = arith.subf %426, %112 : vector<2x1xf32>
    %428 = vector.broadcast %427 : vector<2x1xf32> to vector<2x16xf32>
    %429 = arith.mulf %428, %386 : vector<2x16xf32>
    %430 = arith.addf %425, %429 : vector<2x16xf32>
    %431 = vector.broadcast %112 : vector<2x1xf32> to vector<2x16xf32>
    %432 = arith.mulf %423, %431 : vector<2x16xf32>
    %433 = arith.truncf %423 : vector<2x16xf32> to vector<2x16xbf16>
    %cst_90 = arith.constant dense<0.000000e+00> : vector<2x64xf32>
    %434 = tpu.matmul %433, %114, %cst_90 {dimension_numbers = #tpu.dot_dimension_numbers<[1], [0], [0], [1], [0, 0, 1, 1], [], []>} : vector<2x16xbf16>, vector<16x64xbf16>, vector<2x64xf32> -> vector<2x64xf32>
    %435 = arith.addf %122, %434 : vector<2x64xf32>
    %436 = vector.extract_strided_slice %435 {offsets = [0, 0], sizes = [2, 16], strides = [1, 1]} : vector<2x64xf32> to vector<2x16xf32>
    %437 = arith.negf %436 : vector<2x16xf32>
    %438 = math.exp %437 : vector<2x16xf32>
    %cst_91 = arith.constant 1.000000e+00 : f32
    %439 = vector.broadcast %cst_91 : f32 to vector<2x16xf32>
    %440 = arith.addf %439, %438 : vector<2x16xf32>
    %441 = arith.divf %439, %440 : vector<2x16xf32>
    %442 = vector.extract_strided_slice %435 {offsets = [0, 16], sizes = [2, 16], strides = [1, 1]} : vector<2x64xf32> to vector<2x16xf32>
    %443 = arith.negf %442 : vector<2x16xf32>
    %444 = math.exp %443 : vector<2x16xf32>
    %cst_92 = arith.constant 1.000000e+00 : f32
    %445 = vector.broadcast %cst_92 : f32 to vector<2x16xf32>
    %446 = arith.addf %445, %444 : vector<2x16xf32>
    %447 = arith.divf %445, %446 : vector<2x16xf32>
    %448 = vector.extract_strided_slice %435 {offsets = [0, 32], sizes = [2, 16], strides = [1, 1]} : vector<2x64xf32> to vector<2x16xf32>
    %449 = math.tanh %448 : vector<2x16xf32>
    %450 = vector.extract_strided_slice %435 {offsets = [0, 48], sizes = [2, 16], strides = [1, 1]} : vector<2x64xf32> to vector<2x16xf32>
    %451 = arith.negf %450 : vector<2x16xf32>
    %452 = math.exp %451 : vector<2x16xf32>
    %cst_93 = arith.constant 1.000000e+00 : f32
    %453 = vector.broadcast %cst_93 : f32 to vector<2x16xf32>
    %454 = arith.addf %453, %452 : vector<2x16xf32>
    %455 = arith.divf %453, %454 : vector<2x16xf32>
    %456 = arith.mulf %447, %430 : vector<2x16xf32>
    %457 = arith.mulf %441, %449 : vector<2x16xf32>
    %458 = arith.addf %456, %457 : vector<2x16xf32>
    %459 = math.tanh %458 : vector<2x16xf32>
    %460 = arith.mulf %455, %459 : vector<2x16xf32>
    %461 = vector.broadcast %113 : vector<2x1xf32> to vector<2x16xf32>
    %462 = arith.mulf %461, %460 : vector<2x16xf32>
    %cst_94 = arith.constant 1.000000e+00 : f32
    %463 = vector.broadcast %cst_94 : f32 to vector<2x1xf32>
    %464 = arith.subf %463, %113 : vector<2x1xf32>
    %465 = vector.broadcast %464 : vector<2x1xf32> to vector<2x16xf32>
    %466 = arith.mulf %465, %423 : vector<2x16xf32>
    %467 = arith.addf %462, %466 : vector<2x16xf32>
    %468 = vector.broadcast %113 : vector<2x1xf32> to vector<2x16xf32>
    %469 = arith.mulf %468, %458 : vector<2x16xf32>
    %cst_95 = arith.constant 1.000000e+00 : f32
    %470 = vector.broadcast %cst_95 : f32 to vector<2x1xf32>
    %471 = arith.subf %470, %113 : vector<2x1xf32>
    %472 = vector.broadcast %471 : vector<2x1xf32> to vector<2x16xf32>
    %473 = arith.mulf %472, %430 : vector<2x16xf32>
    %474 = arith.addf %469, %473 : vector<2x16xf32>
    %475 = vector.broadcast %113 : vector<2x1xf32> to vector<2x16xf32>
    %476 = arith.mulf %467, %475 : vector<2x16xf32>
    %c0_96 = arith.constant 0 : index
    %c0_97 = arith.constant 0 : index
    %477 = vector.load %arg20[%c0_96, %c0_97] : memref<16x64xbf16, #tpu.memory_space<vmem>>, vector<16x64xbf16>
    %478 = vector.extract_strided_slice %104 {offsets = [0, 0], sizes = [2, 64], strides = [1, 1]} : vector<16x64xf32> to vector<2x64xf32>
    %479 = vector.extract_strided_slice %104 {offsets = [2, 0], sizes = [2, 64], strides = [1, 1]} : vector<16x64xf32> to vector<2x64xf32>
    %480 = vector.extract_strided_slice %104 {offsets = [4, 0], sizes = [2, 64], strides = [1, 1]} : vector<16x64xf32> to vector<2x64xf32>
    %481 = vector.extract_strided_slice %104 {offsets = [6, 0], sizes = [2, 64], strides = [1, 1]} : vector<16x64xf32> to vector<2x64xf32>
    %482 = vector.extract_strided_slice %104 {offsets = [8, 0], sizes = [2, 64], strides = [1, 1]} : vector<16x64xf32> to vector<2x64xf32>
    %483 = vector.extract_strided_slice %104 {offsets = [10, 0], sizes = [2, 64], strides = [1, 1]} : vector<16x64xf32> to vector<2x64xf32>
    %484 = vector.extract_strided_slice %104 {offsets = [12, 0], sizes = [2, 64], strides = [1, 1]} : vector<16x64xf32> to vector<2x64xf32>
    %485 = vector.extract_strided_slice %104 {offsets = [14, 0], sizes = [2, 64], strides = [1, 1]} : vector<16x64xf32> to vector<2x64xf32>
    %cst_98 = arith.constant 0.000000e+00 : f32
    %486 = vector.broadcast %cst_98 : f32 to vector<2x16xf32>
    %cst_99 = arith.constant 0.000000e+00 : f32
    %487 = vector.broadcast %cst_99 : f32 to vector<2x16xf32>
    %488 = arith.truncf %486 : vector<2x16xf32> to vector<2x16xbf16>
    %cst_100 = arith.constant dense<0.000000e+00> : vector<2x64xf32>
    %489 = tpu.matmul %488, %477, %cst_100 {dimension_numbers = #tpu.dot_dimension_numbers<[1], [0], [0], [1], [0, 0, 1, 1], [], []>} : vector<2x16xbf16>, vector<16x64xbf16>, vector<2x64xf32> -> vector<2x64xf32>
    %490 = arith.addf %485, %489 : vector<2x64xf32>
    %491 = vector.extract_strided_slice %490 {offsets = [0, 0], sizes = [2, 16], strides = [1, 1]} : vector<2x64xf32> to vector<2x16xf32>
    %492 = arith.negf %491 : vector<2x16xf32>
    %493 = math.exp %492 : vector<2x16xf32>
    %cst_101 = arith.constant 1.000000e+00 : f32
    %494 = vector.broadcast %cst_101 : f32 to vector<2x16xf32>
    %495 = arith.addf %494, %493 : vector<2x16xf32>
    %496 = arith.divf %494, %495 : vector<2x16xf32>
    %497 = vector.extract_strided_slice %490 {offsets = [0, 16], sizes = [2, 16], strides = [1, 1]} : vector<2x64xf32> to vector<2x16xf32>
    %498 = arith.negf %497 : vector<2x16xf32>
    %499 = math.exp %498 : vector<2x16xf32>
    %cst_102 = arith.constant 1.000000e+00 : f32
    %500 = vector.broadcast %cst_102 : f32 to vector<2x16xf32>
    %501 = arith.addf %500, %499 : vector<2x16xf32>
    %502 = arith.divf %500, %501 : vector<2x16xf32>
    %503 = vector.extract_strided_slice %490 {offsets = [0, 32], sizes = [2, 16], strides = [1, 1]} : vector<2x64xf32> to vector<2x16xf32>
    %504 = math.tanh %503 : vector<2x16xf32>
    %505 = vector.extract_strided_slice %490 {offsets = [0, 48], sizes = [2, 16], strides = [1, 1]} : vector<2x64xf32> to vector<2x16xf32>
    %506 = arith.negf %505 : vector<2x16xf32>
    %507 = math.exp %506 : vector<2x16xf32>
    %cst_103 = arith.constant 1.000000e+00 : f32
    %508 = vector.broadcast %cst_103 : f32 to vector<2x16xf32>
    %509 = arith.addf %508, %507 : vector<2x16xf32>
    %510 = arith.divf %508, %509 : vector<2x16xf32>
    %511 = arith.mulf %502, %487 : vector<2x16xf32>
    %512 = arith.mulf %496, %504 : vector<2x16xf32>
    %513 = arith.addf %511, %512 : vector<2x16xf32>
    %514 = math.tanh %513 : vector<2x16xf32>
    %515 = arith.mulf %510, %514 : vector<2x16xf32>
    %516 = vector.broadcast %113 : vector<2x1xf32> to vector<2x16xf32>
    %517 = arith.mulf %516, %515 : vector<2x16xf32>
    %cst_104 = arith.constant 1.000000e+00 : f32
    %518 = vector.broadcast %cst_104 : f32 to vector<2x1xf32>
    %519 = arith.subf %518, %113 : vector<2x1xf32>
    %520 = vector.broadcast %519 : vector<2x1xf32> to vector<2x16xf32>
    %521 = arith.mulf %520, %486 : vector<2x16xf32>
    %522 = arith.addf %517, %521 : vector<2x16xf32>
    %523 = vector.broadcast %113 : vector<2x1xf32> to vector<2x16xf32>
    %524 = arith.mulf %523, %513 : vector<2x16xf32>
    %cst_105 = arith.constant 1.000000e+00 : f32
    %525 = vector.broadcast %cst_105 : f32 to vector<2x1xf32>
    %526 = arith.subf %525, %113 : vector<2x1xf32>
    %527 = vector.broadcast %526 : vector<2x1xf32> to vector<2x16xf32>
    %528 = arith.mulf %527, %487 : vector<2x16xf32>
    %529 = arith.addf %524, %528 : vector<2x16xf32>
    %530 = vector.broadcast %113 : vector<2x1xf32> to vector<2x16xf32>
    %531 = arith.mulf %522, %530 : vector<2x16xf32>
    %532 = arith.truncf %522 : vector<2x16xf32> to vector<2x16xbf16>
    %cst_106 = arith.constant dense<0.000000e+00> : vector<2x64xf32>
    %533 = tpu.matmul %532, %477, %cst_106 {dimension_numbers = #tpu.dot_dimension_numbers<[1], [0], [0], [1], [0, 0, 1, 1], [], []>} : vector<2x16xbf16>, vector<16x64xbf16>, vector<2x64xf32> -> vector<2x64xf32>
    %534 = arith.addf %484, %533 : vector<2x64xf32>
    %535 = vector.extract_strided_slice %534 {offsets = [0, 0], sizes = [2, 16], strides = [1, 1]} : vector<2x64xf32> to vector<2x16xf32>
    %536 = arith.negf %535 : vector<2x16xf32>
    %537 = math.exp %536 : vector<2x16xf32>
    %cst_107 = arith.constant 1.000000e+00 : f32
    %538 = vector.broadcast %cst_107 : f32 to vector<2x16xf32>
    %539 = arith.addf %538, %537 : vector<2x16xf32>
    %540 = arith.divf %538, %539 : vector<2x16xf32>
    %541 = vector.extract_strided_slice %534 {offsets = [0, 16], sizes = [2, 16], strides = [1, 1]} : vector<2x64xf32> to vector<2x16xf32>
    %542 = arith.negf %541 : vector<2x16xf32>
    %543 = math.exp %542 : vector<2x16xf32>
    %cst_108 = arith.constant 1.000000e+00 : f32
    %544 = vector.broadcast %cst_108 : f32 to vector<2x16xf32>
    %545 = arith.addf %544, %543 : vector<2x16xf32>
    %546 = arith.divf %544, %545 : vector<2x16xf32>
    %547 = vector.extract_strided_slice %534 {offsets = [0, 32], sizes = [2, 16], strides = [1, 1]} : vector<2x64xf32> to vector<2x16xf32>
    %548 = math.tanh %547 : vector<2x16xf32>
    %549 = vector.extract_strided_slice %534 {offsets = [0, 48], sizes = [2, 16], strides = [1, 1]} : vector<2x64xf32> to vector<2x16xf32>
    %550 = arith.negf %549 : vector<2x16xf32>
    %551 = math.exp %550 : vector<2x16xf32>
    %cst_109 = arith.constant 1.000000e+00 : f32
    %552 = vector.broadcast %cst_109 : f32 to vector<2x16xf32>
    %553 = arith.addf %552, %551 : vector<2x16xf32>
    %554 = arith.divf %552, %553 : vector<2x16xf32>
    %555 = arith.mulf %546, %529 : vector<2x16xf32>
    %556 = arith.mulf %540, %548 : vector<2x16xf32>
    %557 = arith.addf %555, %556 : vector<2x16xf32>
    %558 = math.tanh %557 : vector<2x16xf32>
    %559 = arith.mulf %554, %558 : vector<2x16xf32>
    %560 = vector.broadcast %112 : vector<2x1xf32> to vector<2x16xf32>
    %561 = arith.mulf %560, %559 : vector<2x16xf32>
    %cst_110 = arith.constant 1.000000e+00 : f32
    %562 = vector.broadcast %cst_110 : f32 to vector<2x1xf32>
    %563 = arith.subf %562, %112 : vector<2x1xf32>
    %564 = vector.broadcast %563 : vector<2x1xf32> to vector<2x16xf32>
    %565 = arith.mulf %564, %522 : vector<2x16xf32>
    %566 = arith.addf %561, %565 : vector<2x16xf32>
    %567 = vector.broadcast %112 : vector<2x1xf32> to vector<2x16xf32>
    %568 = arith.mulf %567, %557 : vector<2x16xf32>
    %cst_111 = arith.constant 1.000000e+00 : f32
    %569 = vector.broadcast %cst_111 : f32 to vector<2x1xf32>
    %570 = arith.subf %569, %112 : vector<2x1xf32>
    %571 = vector.broadcast %570 : vector<2x1xf32> to vector<2x16xf32>
    %572 = arith.mulf %571, %529 : vector<2x16xf32>
    %573 = arith.addf %568, %572 : vector<2x16xf32>
    %574 = vector.broadcast %112 : vector<2x1xf32> to vector<2x16xf32>
    %575 = arith.mulf %566, %574 : vector<2x16xf32>
    %576 = arith.truncf %566 : vector<2x16xf32> to vector<2x16xbf16>
    %cst_112 = arith.constant dense<0.000000e+00> : vector<2x64xf32>
    %577 = tpu.matmul %576, %477, %cst_112 {dimension_numbers = #tpu.dot_dimension_numbers<[1], [0], [0], [1], [0, 0, 1, 1], [], []>} : vector<2x16xbf16>, vector<16x64xbf16>, vector<2x64xf32> -> vector<2x64xf32>
    %578 = arith.addf %483, %577 : vector<2x64xf32>
    %579 = vector.extract_strided_slice %578 {offsets = [0, 0], sizes = [2, 16], strides = [1, 1]} : vector<2x64xf32> to vector<2x16xf32>
    %580 = arith.negf %579 : vector<2x16xf32>
    %581 = math.exp %580 : vector<2x16xf32>
    %cst_113 = arith.constant 1.000000e+00 : f32
    %582 = vector.broadcast %cst_113 : f32 to vector<2x16xf32>
    %583 = arith.addf %582, %581 : vector<2x16xf32>
    %584 = arith.divf %582, %583 : vector<2x16xf32>
    %585 = vector.extract_strided_slice %578 {offsets = [0, 16], sizes = [2, 16], strides = [1, 1]} : vector<2x64xf32> to vector<2x16xf32>
    %586 = arith.negf %585 : vector<2x16xf32>
    %587 = math.exp %586 : vector<2x16xf32>
    %cst_114 = arith.constant 1.000000e+00 : f32
    %588 = vector.broadcast %cst_114 : f32 to vector<2x16xf32>
    %589 = arith.addf %588, %587 : vector<2x16xf32>
    %590 = arith.divf %588, %589 : vector<2x16xf32>
    %591 = vector.extract_strided_slice %578 {offsets = [0, 32], sizes = [2, 16], strides = [1, 1]} : vector<2x64xf32> to vector<2x16xf32>
    %592 = math.tanh %591 : vector<2x16xf32>
    %593 = vector.extract_strided_slice %578 {offsets = [0, 48], sizes = [2, 16], strides = [1, 1]} : vector<2x64xf32> to vector<2x16xf32>
    %594 = arith.negf %593 : vector<2x16xf32>
    %595 = math.exp %594 : vector<2x16xf32>
    %cst_115 = arith.constant 1.000000e+00 : f32
    %596 = vector.broadcast %cst_115 : f32 to vector<2x16xf32>
    %597 = arith.addf %596, %595 : vector<2x16xf32>
    %598 = arith.divf %596, %597 : vector<2x16xf32>
    %599 = arith.mulf %590, %573 : vector<2x16xf32>
    %600 = arith.mulf %584, %592 : vector<2x16xf32>
    %601 = arith.addf %599, %600 : vector<2x16xf32>
    %602 = math.tanh %601 : vector<2x16xf32>
    %603 = arith.mulf %598, %602 : vector<2x16xf32>
    %604 = vector.broadcast %111 : vector<2x1xf32> to vector<2x16xf32>
    %605 = arith.mulf %604, %603 : vector<2x16xf32>
    %cst_116 = arith.constant 1.000000e+00 : f32
    %606 = vector.broadcast %cst_116 : f32 to vector<2x1xf32>
    %607 = arith.subf %606, %111 : vector<2x1xf32>
    %608 = vector.broadcast %607 : vector<2x1xf32> to vector<2x16xf32>
    %609 = arith.mulf %608, %566 : vector<2x16xf32>
    %610 = arith.addf %605, %609 : vector<2x16xf32>
    %611 = vector.broadcast %111 : vector<2x1xf32> to vector<2x16xf32>
    %612 = arith.mulf %611, %601 : vector<2x16xf32>
    %cst_117 = arith.constant 1.000000e+00 : f32
    %613 = vector.broadcast %cst_117 : f32 to vector<2x1xf32>
    %614 = arith.subf %613, %111 : vector<2x1xf32>
    %615 = vector.broadcast %614 : vector<2x1xf32> to vector<2x16xf32>
    %616 = arith.mulf %615, %573 : vector<2x16xf32>
    %617 = arith.addf %612, %616 : vector<2x16xf32>
    %618 = vector.broadcast %111 : vector<2x1xf32> to vector<2x16xf32>
    %619 = arith.mulf %610, %618 : vector<2x16xf32>
    %620 = arith.truncf %610 : vector<2x16xf32> to vector<2x16xbf16>
    %cst_118 = arith.constant dense<0.000000e+00> : vector<2x64xf32>
    %621 = tpu.matmul %620, %477, %cst_118 {dimension_numbers = #tpu.dot_dimension_numbers<[1], [0], [0], [1], [0, 0, 1, 1], [], []>} : vector<2x16xbf16>, vector<16x64xbf16>, vector<2x64xf32> -> vector<2x64xf32>
    %622 = arith.addf %482, %621 : vector<2x64xf32>
    %623 = vector.extract_strided_slice %622 {offsets = [0, 0], sizes = [2, 16], strides = [1, 1]} : vector<2x64xf32> to vector<2x16xf32>
    %624 = arith.negf %623 : vector<2x16xf32>
    %625 = math.exp %624 : vector<2x16xf32>
    %cst_119 = arith.constant 1.000000e+00 : f32
    %626 = vector.broadcast %cst_119 : f32 to vector<2x16xf32>
    %627 = arith.addf %626, %625 : vector<2x16xf32>
    %628 = arith.divf %626, %627 : vector<2x16xf32>
    %629 = vector.extract_strided_slice %622 {offsets = [0, 16], sizes = [2, 16], strides = [1, 1]} : vector<2x64xf32> to vector<2x16xf32>
    %630 = arith.negf %629 : vector<2x16xf32>
    %631 = math.exp %630 : vector<2x16xf32>
    %cst_120 = arith.constant 1.000000e+00 : f32
    %632 = vector.broadcast %cst_120 : f32 to vector<2x16xf32>
    %633 = arith.addf %632, %631 : vector<2x16xf32>
    %634 = arith.divf %632, %633 : vector<2x16xf32>
    %635 = vector.extract_strided_slice %622 {offsets = [0, 32], sizes = [2, 16], strides = [1, 1]} : vector<2x64xf32> to vector<2x16xf32>
    %636 = math.tanh %635 : vector<2x16xf32>
    %637 = vector.extract_strided_slice %622 {offsets = [0, 48], sizes = [2, 16], strides = [1, 1]} : vector<2x64xf32> to vector<2x16xf32>
    %638 = arith.negf %637 : vector<2x16xf32>
    %639 = math.exp %638 : vector<2x16xf32>
    %cst_121 = arith.constant 1.000000e+00 : f32
    %640 = vector.broadcast %cst_121 : f32 to vector<2x16xf32>
    %641 = arith.addf %640, %639 : vector<2x16xf32>
    %642 = arith.divf %640, %641 : vector<2x16xf32>
    %643 = arith.mulf %634, %617 : vector<2x16xf32>
    %644 = arith.mulf %628, %636 : vector<2x16xf32>
    %645 = arith.addf %643, %644 : vector<2x16xf32>
    %646 = math.tanh %645 : vector<2x16xf32>
    %647 = arith.mulf %642, %646 : vector<2x16xf32>
    %648 = vector.broadcast %110 : vector<2x1xf32> to vector<2x16xf32>
    %649 = arith.mulf %648, %647 : vector<2x16xf32>
    %cst_122 = arith.constant 1.000000e+00 : f32
    %650 = vector.broadcast %cst_122 : f32 to vector<2x1xf32>
    %651 = arith.subf %650, %110 : vector<2x1xf32>
    %652 = vector.broadcast %651 : vector<2x1xf32> to vector<2x16xf32>
    %653 = arith.mulf %652, %610 : vector<2x16xf32>
    %654 = arith.addf %649, %653 : vector<2x16xf32>
    %655 = vector.broadcast %110 : vector<2x1xf32> to vector<2x16xf32>
    %656 = arith.mulf %655, %645 : vector<2x16xf32>
    %cst_123 = arith.constant 1.000000e+00 : f32
    %657 = vector.broadcast %cst_123 : f32 to vector<2x1xf32>
    %658 = arith.subf %657, %110 : vector<2x1xf32>
    %659 = vector.broadcast %658 : vector<2x1xf32> to vector<2x16xf32>
    %660 = arith.mulf %659, %617 : vector<2x16xf32>
    %661 = arith.addf %656, %660 : vector<2x16xf32>
    %662 = vector.broadcast %110 : vector<2x1xf32> to vector<2x16xf32>
    %663 = arith.mulf %654, %662 : vector<2x16xf32>
    %664 = arith.truncf %654 : vector<2x16xf32> to vector<2x16xbf16>
    %cst_124 = arith.constant dense<0.000000e+00> : vector<2x64xf32>
    %665 = tpu.matmul %664, %477, %cst_124 {dimension_numbers = #tpu.dot_dimension_numbers<[1], [0], [0], [1], [0, 0, 1, 1], [], []>} : vector<2x16xbf16>, vector<16x64xbf16>, vector<2x64xf32> -> vector<2x64xf32>
    %666 = arith.addf %481, %665 : vector<2x64xf32>
    %667 = vector.extract_strided_slice %666 {offsets = [0, 0], sizes = [2, 16], strides = [1, 1]} : vector<2x64xf32> to vector<2x16xf32>
    %668 = arith.negf %667 : vector<2x16xf32>
    %669 = math.exp %668 : vector<2x16xf32>
    %cst_125 = arith.constant 1.000000e+00 : f32
    %670 = vector.broadcast %cst_125 : f32 to vector<2x16xf32>
    %671 = arith.addf %670, %669 : vector<2x16xf32>
    %672 = arith.divf %670, %671 : vector<2x16xf32>
    %673 = vector.extract_strided_slice %666 {offsets = [0, 16], sizes = [2, 16], strides = [1, 1]} : vector<2x64xf32> to vector<2x16xf32>
    %674 = arith.negf %673 : vector<2x16xf32>
    %675 = math.exp %674 : vector<2x16xf32>
    %cst_126 = arith.constant 1.000000e+00 : f32
    %676 = vector.broadcast %cst_126 : f32 to vector<2x16xf32>
    %677 = arith.addf %676, %675 : vector<2x16xf32>
    %678 = arith.divf %676, %677 : vector<2x16xf32>
    %679 = vector.extract_strided_slice %666 {offsets = [0, 32], sizes = [2, 16], strides = [1, 1]} : vector<2x64xf32> to vector<2x16xf32>
    %680 = math.tanh %679 : vector<2x16xf32>
    %681 = vector.extract_strided_slice %666 {offsets = [0, 48], sizes = [2, 16], strides = [1, 1]} : vector<2x64xf32> to vector<2x16xf32>
    %682 = arith.negf %681 : vector<2x16xf32>
    %683 = math.exp %682 : vector<2x16xf32>
    %cst_127 = arith.constant 1.000000e+00 : f32
    %684 = vector.broadcast %cst_127 : f32 to vector<2x16xf32>
    %685 = arith.addf %684, %683 : vector<2x16xf32>
    %686 = arith.divf %684, %685 : vector<2x16xf32>
    %687 = arith.mulf %678, %661 : vector<2x16xf32>
    %688 = arith.mulf %672, %680 : vector<2x16xf32>
    %689 = arith.addf %687, %688 : vector<2x16xf32>
    %690 = math.tanh %689 : vector<2x16xf32>
    %691 = arith.mulf %686, %690 : vector<2x16xf32>
    %692 = vector.broadcast %109 : vector<2x1xf32> to vector<2x16xf32>
    %693 = arith.mulf %692, %691 : vector<2x16xf32>
    %cst_128 = arith.constant 1.000000e+00 : f32
    %694 = vector.broadcast %cst_128 : f32 to vector<2x1xf32>
    %695 = arith.subf %694, %109 : vector<2x1xf32>
    %696 = vector.broadcast %695 : vector<2x1xf32> to vector<2x16xf32>
    %697 = arith.mulf %696, %654 : vector<2x16xf32>
    %698 = arith.addf %693, %697 : vector<2x16xf32>
    %699 = vector.broadcast %109 : vector<2x1xf32> to vector<2x16xf32>
    %700 = arith.mulf %699, %689 : vector<2x16xf32>
    %cst_129 = arith.constant 1.000000e+00 : f32
    %701 = vector.broadcast %cst_129 : f32 to vector<2x1xf32>
    %702 = arith.subf %701, %109 : vector<2x1xf32>
    %703 = vector.broadcast %702 : vector<2x1xf32> to vector<2x16xf32>
    %704 = arith.mulf %703, %661 : vector<2x16xf32>
    %705 = arith.addf %700, %704 : vector<2x16xf32>
    %706 = vector.broadcast %109 : vector<2x1xf32> to vector<2x16xf32>
    %707 = arith.mulf %698, %706 : vector<2x16xf32>
    %708 = arith.truncf %698 : vector<2x16xf32> to vector<2x16xbf16>
    %cst_130 = arith.constant dense<0.000000e+00> : vector<2x64xf32>
    %709 = tpu.matmul %708, %477, %cst_130 {dimension_numbers = #tpu.dot_dimension_numbers<[1], [0], [0], [1], [0, 0, 1, 1], [], []>} : vector<2x16xbf16>, vector<16x64xbf16>, vector<2x64xf32> -> vector<2x64xf32>
    %710 = arith.addf %480, %709 : vector<2x64xf32>
    %711 = vector.extract_strided_slice %710 {offsets = [0, 0], sizes = [2, 16], strides = [1, 1]} : vector<2x64xf32> to vector<2x16xf32>
    %712 = arith.negf %711 : vector<2x16xf32>
    %713 = math.exp %712 : vector<2x16xf32>
    %cst_131 = arith.constant 1.000000e+00 : f32
    %714 = vector.broadcast %cst_131 : f32 to vector<2x16xf32>
    %715 = arith.addf %714, %713 : vector<2x16xf32>
    %716 = arith.divf %714, %715 : vector<2x16xf32>
    %717 = vector.extract_strided_slice %710 {offsets = [0, 16], sizes = [2, 16], strides = [1, 1]} : vector<2x64xf32> to vector<2x16xf32>
    %718 = arith.negf %717 : vector<2x16xf32>
    %719 = math.exp %718 : vector<2x16xf32>
    %cst_132 = arith.constant 1.000000e+00 : f32
    %720 = vector.broadcast %cst_132 : f32 to vector<2x16xf32>
    %721 = arith.addf %720, %719 : vector<2x16xf32>
    %722 = arith.divf %720, %721 : vector<2x16xf32>
    %723 = vector.extract_strided_slice %710 {offsets = [0, 32], sizes = [2, 16], strides = [1, 1]} : vector<2x64xf32> to vector<2x16xf32>
    %724 = math.tanh %723 : vector<2x16xf32>
    %725 = vector.extract_strided_slice %710 {offsets = [0, 48], sizes = [2, 16], strides = [1, 1]} : vector<2x64xf32> to vector<2x16xf32>
    %726 = arith.negf %725 : vector<2x16xf32>
    %727 = math.exp %726 : vector<2x16xf32>
    %cst_133 = arith.constant 1.000000e+00 : f32
    %728 = vector.broadcast %cst_133 : f32 to vector<2x16xf32>
    %729 = arith.addf %728, %727 : vector<2x16xf32>
    %730 = arith.divf %728, %729 : vector<2x16xf32>
    %731 = arith.mulf %722, %705 : vector<2x16xf32>
    %732 = arith.mulf %716, %724 : vector<2x16xf32>
    %733 = arith.addf %731, %732 : vector<2x16xf32>
    %734 = math.tanh %733 : vector<2x16xf32>
    %735 = arith.mulf %730, %734 : vector<2x16xf32>
    %736 = vector.broadcast %108 : vector<2x1xf32> to vector<2x16xf32>
    %737 = arith.mulf %736, %735 : vector<2x16xf32>
    %cst_134 = arith.constant 1.000000e+00 : f32
    %738 = vector.broadcast %cst_134 : f32 to vector<2x1xf32>
    %739 = arith.subf %738, %108 : vector<2x1xf32>
    %740 = vector.broadcast %739 : vector<2x1xf32> to vector<2x16xf32>
    %741 = arith.mulf %740, %698 : vector<2x16xf32>
    %742 = arith.addf %737, %741 : vector<2x16xf32>
    %743 = vector.broadcast %108 : vector<2x1xf32> to vector<2x16xf32>
    %744 = arith.mulf %743, %733 : vector<2x16xf32>
    %cst_135 = arith.constant 1.000000e+00 : f32
    %745 = vector.broadcast %cst_135 : f32 to vector<2x1xf32>
    %746 = arith.subf %745, %108 : vector<2x1xf32>
    %747 = vector.broadcast %746 : vector<2x1xf32> to vector<2x16xf32>
    %748 = arith.mulf %747, %705 : vector<2x16xf32>
    %749 = arith.addf %744, %748 : vector<2x16xf32>
    %750 = vector.broadcast %108 : vector<2x1xf32> to vector<2x16xf32>
    %751 = arith.mulf %742, %750 : vector<2x16xf32>
    %752 = arith.truncf %742 : vector<2x16xf32> to vector<2x16xbf16>
    %cst_136 = arith.constant dense<0.000000e+00> : vector<2x64xf32>
    %753 = tpu.matmul %752, %477, %cst_136 {dimension_numbers = #tpu.dot_dimension_numbers<[1], [0], [0], [1], [0, 0, 1, 1], [], []>} : vector<2x16xbf16>, vector<16x64xbf16>, vector<2x64xf32> -> vector<2x64xf32>
    %754 = arith.addf %479, %753 : vector<2x64xf32>
    %755 = vector.extract_strided_slice %754 {offsets = [0, 0], sizes = [2, 16], strides = [1, 1]} : vector<2x64xf32> to vector<2x16xf32>
    %756 = arith.negf %755 : vector<2x16xf32>
    %757 = math.exp %756 : vector<2x16xf32>
    %cst_137 = arith.constant 1.000000e+00 : f32
    %758 = vector.broadcast %cst_137 : f32 to vector<2x16xf32>
    %759 = arith.addf %758, %757 : vector<2x16xf32>
    %760 = arith.divf %758, %759 : vector<2x16xf32>
    %761 = vector.extract_strided_slice %754 {offsets = [0, 16], sizes = [2, 16], strides = [1, 1]} : vector<2x64xf32> to vector<2x16xf32>
    %762 = arith.negf %761 : vector<2x16xf32>
    %763 = math.exp %762 : vector<2x16xf32>
    %cst_138 = arith.constant 1.000000e+00 : f32
    %764 = vector.broadcast %cst_138 : f32 to vector<2x16xf32>
    %765 = arith.addf %764, %763 : vector<2x16xf32>
    %766 = arith.divf %764, %765 : vector<2x16xf32>
    %767 = vector.extract_strided_slice %754 {offsets = [0, 32], sizes = [2, 16], strides = [1, 1]} : vector<2x64xf32> to vector<2x16xf32>
    %768 = math.tanh %767 : vector<2x16xf32>
    %769 = vector.extract_strided_slice %754 {offsets = [0, 48], sizes = [2, 16], strides = [1, 1]} : vector<2x64xf32> to vector<2x16xf32>
    %770 = arith.negf %769 : vector<2x16xf32>
    %771 = math.exp %770 : vector<2x16xf32>
    %cst_139 = arith.constant 1.000000e+00 : f32
    %772 = vector.broadcast %cst_139 : f32 to vector<2x16xf32>
    %773 = arith.addf %772, %771 : vector<2x16xf32>
    %774 = arith.divf %772, %773 : vector<2x16xf32>
    %775 = arith.mulf %766, %749 : vector<2x16xf32>
    %776 = arith.mulf %760, %768 : vector<2x16xf32>
    %777 = arith.addf %775, %776 : vector<2x16xf32>
    %778 = math.tanh %777 : vector<2x16xf32>
    %779 = arith.mulf %774, %778 : vector<2x16xf32>
    %780 = vector.broadcast %107 : vector<2x1xf32> to vector<2x16xf32>
    %781 = arith.mulf %780, %779 : vector<2x16xf32>
    %cst_140 = arith.constant 1.000000e+00 : f32
    %782 = vector.broadcast %cst_140 : f32 to vector<2x1xf32>
    %783 = arith.subf %782, %107 : vector<2x1xf32>
    %784 = vector.broadcast %783 : vector<2x1xf32> to vector<2x16xf32>
    %785 = arith.mulf %784, %742 : vector<2x16xf32>
    %786 = arith.addf %781, %785 : vector<2x16xf32>
    %787 = vector.broadcast %107 : vector<2x1xf32> to vector<2x16xf32>
    %788 = arith.mulf %787, %777 : vector<2x16xf32>
    %cst_141 = arith.constant 1.000000e+00 : f32
    %789 = vector.broadcast %cst_141 : f32 to vector<2x1xf32>
    %790 = arith.subf %789, %107 : vector<2x1xf32>
    %791 = vector.broadcast %790 : vector<2x1xf32> to vector<2x16xf32>
    %792 = arith.mulf %791, %749 : vector<2x16xf32>
    %793 = arith.addf %788, %792 : vector<2x16xf32>
    %794 = vector.broadcast %107 : vector<2x1xf32> to vector<2x16xf32>
    %795 = arith.mulf %786, %794 : vector<2x16xf32>
    %796 = arith.truncf %786 : vector<2x16xf32> to vector<2x16xbf16>
    %cst_142 = arith.constant dense<0.000000e+00> : vector<2x64xf32>
    %797 = tpu.matmul %796, %477, %cst_142 {dimension_numbers = #tpu.dot_dimension_numbers<[1], [0], [0], [1], [0, 0, 1, 1], [], []>} : vector<2x16xbf16>, vector<16x64xbf16>, vector<2x64xf32> -> vector<2x64xf32>
    %798 = arith.addf %478, %797 : vector<2x64xf32>
    %799 = vector.extract_strided_slice %798 {offsets = [0, 0], sizes = [2, 16], strides = [1, 1]} : vector<2x64xf32> to vector<2x16xf32>
    %800 = arith.negf %799 : vector<2x16xf32>
    %801 = math.exp %800 : vector<2x16xf32>
    %cst_143 = arith.constant 1.000000e+00 : f32
    %802 = vector.broadcast %cst_143 : f32 to vector<2x16xf32>
    %803 = arith.addf %802, %801 : vector<2x16xf32>
    %804 = arith.divf %802, %803 : vector<2x16xf32>
    %805 = vector.extract_strided_slice %798 {offsets = [0, 16], sizes = [2, 16], strides = [1, 1]} : vector<2x64xf32> to vector<2x16xf32>
    %806 = arith.negf %805 : vector<2x16xf32>
    %807 = math.exp %806 : vector<2x16xf32>
    %cst_144 = arith.constant 1.000000e+00 : f32
    %808 = vector.broadcast %cst_144 : f32 to vector<2x16xf32>
    %809 = arith.addf %808, %807 : vector<2x16xf32>
    %810 = arith.divf %808, %809 : vector<2x16xf32>
    %811 = vector.extract_strided_slice %798 {offsets = [0, 32], sizes = [2, 16], strides = [1, 1]} : vector<2x64xf32> to vector<2x16xf32>
    %812 = math.tanh %811 : vector<2x16xf32>
    %813 = vector.extract_strided_slice %798 {offsets = [0, 48], sizes = [2, 16], strides = [1, 1]} : vector<2x64xf32> to vector<2x16xf32>
    %814 = arith.negf %813 : vector<2x16xf32>
    %815 = math.exp %814 : vector<2x16xf32>
    %cst_145 = arith.constant 1.000000e+00 : f32
    %816 = vector.broadcast %cst_145 : f32 to vector<2x16xf32>
    %817 = arith.addf %816, %815 : vector<2x16xf32>
    %818 = arith.divf %816, %817 : vector<2x16xf32>
    %819 = arith.mulf %810, %793 : vector<2x16xf32>
    %820 = arith.mulf %804, %812 : vector<2x16xf32>
    %821 = arith.addf %819, %820 : vector<2x16xf32>
    %822 = math.tanh %821 : vector<2x16xf32>
    %823 = arith.mulf %818, %822 : vector<2x16xf32>
    %824 = vector.broadcast %106 : vector<2x1xf32> to vector<2x16xf32>
    %825 = arith.mulf %824, %823 : vector<2x16xf32>
    %cst_146 = arith.constant 1.000000e+00 : f32
    %826 = vector.broadcast %cst_146 : f32 to vector<2x1xf32>
    %827 = arith.subf %826, %106 : vector<2x1xf32>
    %828 = vector.broadcast %827 : vector<2x1xf32> to vector<2x16xf32>
    %829 = arith.mulf %828, %786 : vector<2x16xf32>
    %830 = arith.addf %825, %829 : vector<2x16xf32>
    %831 = vector.broadcast %106 : vector<2x1xf32> to vector<2x16xf32>
    %832 = arith.mulf %831, %821 : vector<2x16xf32>
    %cst_147 = arith.constant 1.000000e+00 : f32
    %833 = vector.broadcast %cst_147 : f32 to vector<2x1xf32>
    %834 = arith.subf %833, %106 : vector<2x1xf32>
    %835 = vector.broadcast %834 : vector<2x1xf32> to vector<2x16xf32>
    %836 = arith.mulf %835, %793 : vector<2x16xf32>
    %837 = arith.addf %832, %836 : vector<2x16xf32>
    %838 = vector.broadcast %106 : vector<2x1xf32> to vector<2x16xf32>
    %839 = arith.mulf %830, %838 : vector<2x16xf32>
    %840 = tpu.concatenate %168, %212, %256, %300, %344, %388, %432, %476 in 0 : vector<2x16xf32>, vector<2x16xf32>, vector<2x16xf32>, vector<2x16xf32>, vector<2x16xf32>, vector<2x16xf32>, vector<2x16xf32>, vector<2x16xf32> -> vector<16x16xf32>
    %841 = tpu.concatenate %839, %795, %751, %707, %663, %619, %575, %531 in 0 : vector<2x16xf32>, vector<2x16xf32>, vector<2x16xf32>, vector<2x16xf32>, vector<2x16xf32>, vector<2x16xf32>, vector<2x16xf32>, vector<2x16xf32> -> vector<16x16xf32>
    %c0_148 = arith.constant 0 : index
    %c0_149 = arith.constant 0 : index
    %842 = vector.load %arg22[%c0_148, %c0_149] : memref<16x64xbf16, #tpu.memory_space<vmem>>, vector<16x64xbf16>
    %843 = arith.truncf %840 : vector<16x16xf32> to vector<16x16xbf16>
    %cst_150 = arith.constant dense<0.000000e+00> : vector<16x64xf32>
    %844 = tpu.matmul %843, %842, %cst_150 {dimension_numbers = #tpu.dot_dimension_numbers<[1], [0], [0], [1], [0, 0, 1, 1], [], []>} : vector<16x16xbf16>, vector<16x64xbf16>, vector<16x64xf32> -> vector<16x64xf32>
    %c0_151 = arith.constant 0 : index
    %c0_152 = arith.constant 0 : index
    %845 = vector.load %arg23[%c0_151, %c0_152] : memref<16x64xbf16, #tpu.memory_space<vmem>>, vector<16x64xbf16>
    %846 = arith.truncf %841 : vector<16x16xf32> to vector<16x16xbf16>
    %cst_153 = arith.constant dense<0.000000e+00> : vector<16x64xf32>
    %847 = tpu.matmul %846, %845, %cst_153 {dimension_numbers = #tpu.dot_dimension_numbers<[1], [0], [0], [1], [0, 0, 1, 1], [], []>} : vector<16x16xbf16>, vector<16x64xbf16>, vector<16x64xf32> -> vector<16x64xf32>
    %848 = arith.addf %844, %847 : vector<16x64xf32>
    %c0_154 = arith.constant 0 : index
    %c0_155 = arith.constant 0 : index
    %849 = vector.load %arg25[%c0_154, %c0_155] : memref<1x64xf32, #tpu.memory_space<vmem>>, vector<1x64xf32>
    %850 = vector.broadcast %849 : vector<1x64xf32> to vector<16x64xf32>
    %851 = arith.addf %848, %850 : vector<16x64xf32>
    %c0_156 = arith.constant 0 : index
    %c0_157 = arith.constant 0 : index
    %852 = vector.load %arg26[%c0_156, %c0_157] : memref<16x64xbf16, #tpu.memory_space<vmem>>, vector<16x64xbf16>
    %853 = arith.truncf %840 : vector<16x16xf32> to vector<16x16xbf16>
    %cst_158 = arith.constant dense<0.000000e+00> : vector<16x64xf32>
    %854 = tpu.matmul %853, %852, %cst_158 {dimension_numbers = #tpu.dot_dimension_numbers<[1], [0], [0], [1], [0, 0, 1, 1], [], []>} : vector<16x16xbf16>, vector<16x64xbf16>, vector<16x64xf32> -> vector<16x64xf32>
    %c0_159 = arith.constant 0 : index
    %c0_160 = arith.constant 0 : index
    %855 = vector.load %arg27[%c0_159, %c0_160] : memref<16x64xbf16, #tpu.memory_space<vmem>>, vector<16x64xbf16>
    %856 = arith.truncf %841 : vector<16x16xf32> to vector<16x16xbf16>
    %cst_161 = arith.constant dense<0.000000e+00> : vector<16x64xf32>
    %857 = tpu.matmul %856, %855, %cst_161 {dimension_numbers = #tpu.dot_dimension_numbers<[1], [0], [0], [1], [0, 0, 1, 1], [], []>} : vector<16x16xbf16>, vector<16x64xbf16>, vector<16x64xf32> -> vector<16x64xf32>
    %858 = arith.addf %854, %857 : vector<16x64xf32>
    %c0_162 = arith.constant 0 : index
    %c0_163 = arith.constant 0 : index
    %859 = vector.load %arg29[%c0_162, %c0_163] : memref<1x64xf32, #tpu.memory_space<vmem>>, vector<1x64xf32>
    %860 = vector.broadcast %859 : vector<1x64xf32> to vector<16x64xf32>
    %861 = arith.addf %858, %860 : vector<16x64xf32>
    %c0_164 = arith.constant 0 : index
    %c0_165 = arith.constant 0 : index
    %862 = vector.load %arg24[%c0_164, %c0_165] : memref<16x64xbf16, #tpu.memory_space<vmem>>, vector<16x64xbf16>
    %863 = vector.extract_strided_slice %851 {offsets = [0, 0], sizes = [2, 64], strides = [1, 1]} : vector<16x64xf32> to vector<2x64xf32>
    %864 = vector.extract_strided_slice %851 {offsets = [2, 0], sizes = [2, 64], strides = [1, 1]} : vector<16x64xf32> to vector<2x64xf32>
    %865 = vector.extract_strided_slice %851 {offsets = [4, 0], sizes = [2, 64], strides = [1, 1]} : vector<16x64xf32> to vector<2x64xf32>
    %866 = vector.extract_strided_slice %851 {offsets = [6, 0], sizes = [2, 64], strides = [1, 1]} : vector<16x64xf32> to vector<2x64xf32>
    %867 = vector.extract_strided_slice %851 {offsets = [8, 0], sizes = [2, 64], strides = [1, 1]} : vector<16x64xf32> to vector<2x64xf32>
    %868 = vector.extract_strided_slice %851 {offsets = [10, 0], sizes = [2, 64], strides = [1, 1]} : vector<16x64xf32> to vector<2x64xf32>
    %869 = vector.extract_strided_slice %851 {offsets = [12, 0], sizes = [2, 64], strides = [1, 1]} : vector<16x64xf32> to vector<2x64xf32>
    %870 = vector.extract_strided_slice %851 {offsets = [14, 0], sizes = [2, 64], strides = [1, 1]} : vector<16x64xf32> to vector<2x64xf32>
    %cst_166 = arith.constant 0.000000e+00 : f32
    %871 = vector.broadcast %cst_166 : f32 to vector<2x16xf32>
    %cst_167 = arith.constant 0.000000e+00 : f32
    %872 = vector.broadcast %cst_167 : f32 to vector<2x16xf32>
    %873 = arith.truncf %871 : vector<2x16xf32> to vector<2x16xbf16>
    %cst_168 = arith.constant dense<0.000000e+00> : vector<2x64xf32>
    %874 = tpu.matmul %873, %862, %cst_168 {dimension_numbers = #tpu.dot_dimension_numbers<[1], [0], [0], [1], [0, 0, 1, 1], [], []>} : vector<2x16xbf16>, vector<16x64xbf16>, vector<2x64xf32> -> vector<2x64xf32>
    %875 = arith.addf %863, %874 : vector<2x64xf32>
    %876 = vector.extract_strided_slice %875 {offsets = [0, 0], sizes = [2, 16], strides = [1, 1]} : vector<2x64xf32> to vector<2x16xf32>
    %877 = arith.negf %876 : vector<2x16xf32>
    %878 = math.exp %877 : vector<2x16xf32>
    %cst_169 = arith.constant 1.000000e+00 : f32
    %879 = vector.broadcast %cst_169 : f32 to vector<2x16xf32>
    %880 = arith.addf %879, %878 : vector<2x16xf32>
    %881 = arith.divf %879, %880 : vector<2x16xf32>
    %882 = vector.extract_strided_slice %875 {offsets = [0, 16], sizes = [2, 16], strides = [1, 1]} : vector<2x64xf32> to vector<2x16xf32>
    %883 = arith.negf %882 : vector<2x16xf32>
    %884 = math.exp %883 : vector<2x16xf32>
    %cst_170 = arith.constant 1.000000e+00 : f32
    %885 = vector.broadcast %cst_170 : f32 to vector<2x16xf32>
    %886 = arith.addf %885, %884 : vector<2x16xf32>
    %887 = arith.divf %885, %886 : vector<2x16xf32>
    %888 = vector.extract_strided_slice %875 {offsets = [0, 32], sizes = [2, 16], strides = [1, 1]} : vector<2x64xf32> to vector<2x16xf32>
    %889 = math.tanh %888 : vector<2x16xf32>
    %890 = vector.extract_strided_slice %875 {offsets = [0, 48], sizes = [2, 16], strides = [1, 1]} : vector<2x64xf32> to vector<2x16xf32>
    %891 = arith.negf %890 : vector<2x16xf32>
    %892 = math.exp %891 : vector<2x16xf32>
    %cst_171 = arith.constant 1.000000e+00 : f32
    %893 = vector.broadcast %cst_171 : f32 to vector<2x16xf32>
    %894 = arith.addf %893, %892 : vector<2x16xf32>
    %895 = arith.divf %893, %894 : vector<2x16xf32>
    %896 = arith.mulf %887, %872 : vector<2x16xf32>
    %897 = arith.mulf %881, %889 : vector<2x16xf32>
    %898 = arith.addf %896, %897 : vector<2x16xf32>
    %899 = math.tanh %898 : vector<2x16xf32>
    %900 = arith.mulf %895, %899 : vector<2x16xf32>
    %901 = vector.broadcast %106 : vector<2x1xf32> to vector<2x16xf32>
    %902 = arith.mulf %901, %900 : vector<2x16xf32>
    %cst_172 = arith.constant 1.000000e+00 : f32
    %903 = vector.broadcast %cst_172 : f32 to vector<2x1xf32>
    %904 = arith.subf %903, %106 : vector<2x1xf32>
    %905 = vector.broadcast %904 : vector<2x1xf32> to vector<2x16xf32>
    %906 = arith.mulf %905, %871 : vector<2x16xf32>
    %907 = arith.addf %902, %906 : vector<2x16xf32>
    %908 = vector.broadcast %106 : vector<2x1xf32> to vector<2x16xf32>
    %909 = arith.mulf %908, %898 : vector<2x16xf32>
    %cst_173 = arith.constant 1.000000e+00 : f32
    %910 = vector.broadcast %cst_173 : f32 to vector<2x1xf32>
    %911 = arith.subf %910, %106 : vector<2x1xf32>
    %912 = vector.broadcast %911 : vector<2x1xf32> to vector<2x16xf32>
    %913 = arith.mulf %912, %872 : vector<2x16xf32>
    %914 = arith.addf %909, %913 : vector<2x16xf32>
    %915 = vector.broadcast %106 : vector<2x1xf32> to vector<2x16xf32>
    %916 = arith.mulf %907, %915 : vector<2x16xf32>
    %917 = arith.truncf %907 : vector<2x16xf32> to vector<2x16xbf16>
    %cst_174 = arith.constant dense<0.000000e+00> : vector<2x64xf32>
    %918 = tpu.matmul %917, %862, %cst_174 {dimension_numbers = #tpu.dot_dimension_numbers<[1], [0], [0], [1], [0, 0, 1, 1], [], []>} : vector<2x16xbf16>, vector<16x64xbf16>, vector<2x64xf32> -> vector<2x64xf32>
    %919 = arith.addf %864, %918 : vector<2x64xf32>
    %920 = vector.extract_strided_slice %919 {offsets = [0, 0], sizes = [2, 16], strides = [1, 1]} : vector<2x64xf32> to vector<2x16xf32>
    %921 = arith.negf %920 : vector<2x16xf32>
    %922 = math.exp %921 : vector<2x16xf32>
    %cst_175 = arith.constant 1.000000e+00 : f32
    %923 = vector.broadcast %cst_175 : f32 to vector<2x16xf32>
    %924 = arith.addf %923, %922 : vector<2x16xf32>
    %925 = arith.divf %923, %924 : vector<2x16xf32>
    %926 = vector.extract_strided_slice %919 {offsets = [0, 16], sizes = [2, 16], strides = [1, 1]} : vector<2x64xf32> to vector<2x16xf32>
    %927 = arith.negf %926 : vector<2x16xf32>
    %928 = math.exp %927 : vector<2x16xf32>
    %cst_176 = arith.constant 1.000000e+00 : f32
    %929 = vector.broadcast %cst_176 : f32 to vector<2x16xf32>
    %930 = arith.addf %929, %928 : vector<2x16xf32>
    %931 = arith.divf %929, %930 : vector<2x16xf32>
    %932 = vector.extract_strided_slice %919 {offsets = [0, 32], sizes = [2, 16], strides = [1, 1]} : vector<2x64xf32> to vector<2x16xf32>
    %933 = math.tanh %932 : vector<2x16xf32>
    %934 = vector.extract_strided_slice %919 {offsets = [0, 48], sizes = [2, 16], strides = [1, 1]} : vector<2x64xf32> to vector<2x16xf32>
    %935 = arith.negf %934 : vector<2x16xf32>
    %936 = math.exp %935 : vector<2x16xf32>
    %cst_177 = arith.constant 1.000000e+00 : f32
    %937 = vector.broadcast %cst_177 : f32 to vector<2x16xf32>
    %938 = arith.addf %937, %936 : vector<2x16xf32>
    %939 = arith.divf %937, %938 : vector<2x16xf32>
    %940 = arith.mulf %931, %914 : vector<2x16xf32>
    %941 = arith.mulf %925, %933 : vector<2x16xf32>
    %942 = arith.addf %940, %941 : vector<2x16xf32>
    %943 = math.tanh %942 : vector<2x16xf32>
    %944 = arith.mulf %939, %943 : vector<2x16xf32>
    %945 = vector.broadcast %107 : vector<2x1xf32> to vector<2x16xf32>
    %946 = arith.mulf %945, %944 : vector<2x16xf32>
    %cst_178 = arith.constant 1.000000e+00 : f32
    %947 = vector.broadcast %cst_178 : f32 to vector<2x1xf32>
    %948 = arith.subf %947, %107 : vector<2x1xf32>
    %949 = vector.broadcast %948 : vector<2x1xf32> to vector<2x16xf32>
    %950 = arith.mulf %949, %907 : vector<2x16xf32>
    %951 = arith.addf %946, %950 : vector<2x16xf32>
    %952 = vector.broadcast %107 : vector<2x1xf32> to vector<2x16xf32>
    %953 = arith.mulf %952, %942 : vector<2x16xf32>
    %cst_179 = arith.constant 1.000000e+00 : f32
    %954 = vector.broadcast %cst_179 : f32 to vector<2x1xf32>
    %955 = arith.subf %954, %107 : vector<2x1xf32>
    %956 = vector.broadcast %955 : vector<2x1xf32> to vector<2x16xf32>
    %957 = arith.mulf %956, %914 : vector<2x16xf32>
    %958 = arith.addf %953, %957 : vector<2x16xf32>
    %959 = vector.broadcast %107 : vector<2x1xf32> to vector<2x16xf32>
    %960 = arith.mulf %951, %959 : vector<2x16xf32>
    %961 = arith.truncf %951 : vector<2x16xf32> to vector<2x16xbf16>
    %cst_180 = arith.constant dense<0.000000e+00> : vector<2x64xf32>
    %962 = tpu.matmul %961, %862, %cst_180 {dimension_numbers = #tpu.dot_dimension_numbers<[1], [0], [0], [1], [0, 0, 1, 1], [], []>} : vector<2x16xbf16>, vector<16x64xbf16>, vector<2x64xf32> -> vector<2x64xf32>
    %963 = arith.addf %865, %962 : vector<2x64xf32>
    %964 = vector.extract_strided_slice %963 {offsets = [0, 0], sizes = [2, 16], strides = [1, 1]} : vector<2x64xf32> to vector<2x16xf32>
    %965 = arith.negf %964 : vector<2x16xf32>
    %966 = math.exp %965 : vector<2x16xf32>
    %cst_181 = arith.constant 1.000000e+00 : f32
    %967 = vector.broadcast %cst_181 : f32 to vector<2x16xf32>
    %968 = arith.addf %967, %966 : vector<2x16xf32>
    %969 = arith.divf %967, %968 : vector<2x16xf32>
    %970 = vector.extract_strided_slice %963 {offsets = [0, 16], sizes = [2, 16], strides = [1, 1]} : vector<2x64xf32> to vector<2x16xf32>
    %971 = arith.negf %970 : vector<2x16xf32>
    %972 = math.exp %971 : vector<2x16xf32>
    %cst_182 = arith.constant 1.000000e+00 : f32
    %973 = vector.broadcast %cst_182 : f32 to vector<2x16xf32>
    %974 = arith.addf %973, %972 : vector<2x16xf32>
    %975 = arith.divf %973, %974 : vector<2x16xf32>
    %976 = vector.extract_strided_slice %963 {offsets = [0, 32], sizes = [2, 16], strides = [1, 1]} : vector<2x64xf32> to vector<2x16xf32>
    %977 = math.tanh %976 : vector<2x16xf32>
    %978 = vector.extract_strided_slice %963 {offsets = [0, 48], sizes = [2, 16], strides = [1, 1]} : vector<2x64xf32> to vector<2x16xf32>
    %979 = arith.negf %978 : vector<2x16xf32>
    %980 = math.exp %979 : vector<2x16xf32>
    %cst_183 = arith.constant 1.000000e+00 : f32
    %981 = vector.broadcast %cst_183 : f32 to vector<2x16xf32>
    %982 = arith.addf %981, %980 : vector<2x16xf32>
    %983 = arith.divf %981, %982 : vector<2x16xf32>
    %984 = arith.mulf %975, %958 : vector<2x16xf32>
    %985 = arith.mulf %969, %977 : vector<2x16xf32>
    %986 = arith.addf %984, %985 : vector<2x16xf32>
    %987 = math.tanh %986 : vector<2x16xf32>
    %988 = arith.mulf %983, %987 : vector<2x16xf32>
    %989 = vector.broadcast %108 : vector<2x1xf32> to vector<2x16xf32>
    %990 = arith.mulf %989, %988 : vector<2x16xf32>
    %cst_184 = arith.constant 1.000000e+00 : f32
    %991 = vector.broadcast %cst_184 : f32 to vector<2x1xf32>
    %992 = arith.subf %991, %108 : vector<2x1xf32>
    %993 = vector.broadcast %992 : vector<2x1xf32> to vector<2x16xf32>
    %994 = arith.mulf %993, %951 : vector<2x16xf32>
    %995 = arith.addf %990, %994 : vector<2x16xf32>
    %996 = vector.broadcast %108 : vector<2x1xf32> to vector<2x16xf32>
    %997 = arith.mulf %996, %986 : vector<2x16xf32>
    %cst_185 = arith.constant 1.000000e+00 : f32
    %998 = vector.broadcast %cst_185 : f32 to vector<2x1xf32>
    %999 = arith.subf %998, %108 : vector<2x1xf32>
    %1000 = vector.broadcast %999 : vector<2x1xf32> to vector<2x16xf32>
    %1001 = arith.mulf %1000, %958 : vector<2x16xf32>
    %1002 = arith.addf %997, %1001 : vector<2x16xf32>
    %1003 = vector.broadcast %108 : vector<2x1xf32> to vector<2x16xf32>
    %1004 = arith.mulf %995, %1003 : vector<2x16xf32>
    %1005 = arith.truncf %995 : vector<2x16xf32> to vector<2x16xbf16>
    %cst_186 = arith.constant dense<0.000000e+00> : vector<2x64xf32>
    %1006 = tpu.matmul %1005, %862, %cst_186 {dimension_numbers = #tpu.dot_dimension_numbers<[1], [0], [0], [1], [0, 0, 1, 1], [], []>} : vector<2x16xbf16>, vector<16x64xbf16>, vector<2x64xf32> -> vector<2x64xf32>
    %1007 = arith.addf %866, %1006 : vector<2x64xf32>
    %1008 = vector.extract_strided_slice %1007 {offsets = [0, 0], sizes = [2, 16], strides = [1, 1]} : vector<2x64xf32> to vector<2x16xf32>
    %1009 = arith.negf %1008 : vector<2x16xf32>
    %1010 = math.exp %1009 : vector<2x16xf32>
    %cst_187 = arith.constant 1.000000e+00 : f32
    %1011 = vector.broadcast %cst_187 : f32 to vector<2x16xf32>
    %1012 = arith.addf %1011, %1010 : vector<2x16xf32>
    %1013 = arith.divf %1011, %1012 : vector<2x16xf32>
    %1014 = vector.extract_strided_slice %1007 {offsets = [0, 16], sizes = [2, 16], strides = [1, 1]} : vector<2x64xf32> to vector<2x16xf32>
    %1015 = arith.negf %1014 : vector<2x16xf32>
    %1016 = math.exp %1015 : vector<2x16xf32>
    %cst_188 = arith.constant 1.000000e+00 : f32
    %1017 = vector.broadcast %cst_188 : f32 to vector<2x16xf32>
    %1018 = arith.addf %1017, %1016 : vector<2x16xf32>
    %1019 = arith.divf %1017, %1018 : vector<2x16xf32>
    %1020 = vector.extract_strided_slice %1007 {offsets = [0, 32], sizes = [2, 16], strides = [1, 1]} : vector<2x64xf32> to vector<2x16xf32>
    %1021 = math.tanh %1020 : vector<2x16xf32>
    %1022 = vector.extract_strided_slice %1007 {offsets = [0, 48], sizes = [2, 16], strides = [1, 1]} : vector<2x64xf32> to vector<2x16xf32>
    %1023 = arith.negf %1022 : vector<2x16xf32>
    %1024 = math.exp %1023 : vector<2x16xf32>
    %cst_189 = arith.constant 1.000000e+00 : f32
    %1025 = vector.broadcast %cst_189 : f32 to vector<2x16xf32>
    %1026 = arith.addf %1025, %1024 : vector<2x16xf32>
    %1027 = arith.divf %1025, %1026 : vector<2x16xf32>
    %1028 = arith.mulf %1019, %1002 : vector<2x16xf32>
    %1029 = arith.mulf %1013, %1021 : vector<2x16xf32>
    %1030 = arith.addf %1028, %1029 : vector<2x16xf32>
    %1031 = math.tanh %1030 : vector<2x16xf32>
    %1032 = arith.mulf %1027, %1031 : vector<2x16xf32>
    %1033 = vector.broadcast %109 : vector<2x1xf32> to vector<2x16xf32>
    %1034 = arith.mulf %1033, %1032 : vector<2x16xf32>
    %cst_190 = arith.constant 1.000000e+00 : f32
    %1035 = vector.broadcast %cst_190 : f32 to vector<2x1xf32>
    %1036 = arith.subf %1035, %109 : vector<2x1xf32>
    %1037 = vector.broadcast %1036 : vector<2x1xf32> to vector<2x16xf32>
    %1038 = arith.mulf %1037, %995 : vector<2x16xf32>
    %1039 = arith.addf %1034, %1038 : vector<2x16xf32>
    %1040 = vector.broadcast %109 : vector<2x1xf32> to vector<2x16xf32>
    %1041 = arith.mulf %1040, %1030 : vector<2x16xf32>
    %cst_191 = arith.constant 1.000000e+00 : f32
    %1042 = vector.broadcast %cst_191 : f32 to vector<2x1xf32>
    %1043 = arith.subf %1042, %109 : vector<2x1xf32>
    %1044 = vector.broadcast %1043 : vector<2x1xf32> to vector<2x16xf32>
    %1045 = arith.mulf %1044, %1002 : vector<2x16xf32>
    %1046 = arith.addf %1041, %1045 : vector<2x16xf32>
    %1047 = vector.broadcast %109 : vector<2x1xf32> to vector<2x16xf32>
    %1048 = arith.mulf %1039, %1047 : vector<2x16xf32>
    %1049 = arith.truncf %1039 : vector<2x16xf32> to vector<2x16xbf16>
    %cst_192 = arith.constant dense<0.000000e+00> : vector<2x64xf32>
    %1050 = tpu.matmul %1049, %862, %cst_192 {dimension_numbers = #tpu.dot_dimension_numbers<[1], [0], [0], [1], [0, 0, 1, 1], [], []>} : vector<2x16xbf16>, vector<16x64xbf16>, vector<2x64xf32> -> vector<2x64xf32>
    %1051 = arith.addf %867, %1050 : vector<2x64xf32>
    %1052 = vector.extract_strided_slice %1051 {offsets = [0, 0], sizes = [2, 16], strides = [1, 1]} : vector<2x64xf32> to vector<2x16xf32>
    %1053 = arith.negf %1052 : vector<2x16xf32>
    %1054 = math.exp %1053 : vector<2x16xf32>
    %cst_193 = arith.constant 1.000000e+00 : f32
    %1055 = vector.broadcast %cst_193 : f32 to vector<2x16xf32>
    %1056 = arith.addf %1055, %1054 : vector<2x16xf32>
    %1057 = arith.divf %1055, %1056 : vector<2x16xf32>
    %1058 = vector.extract_strided_slice %1051 {offsets = [0, 16], sizes = [2, 16], strides = [1, 1]} : vector<2x64xf32> to vector<2x16xf32>
    %1059 = arith.negf %1058 : vector<2x16xf32>
    %1060 = math.exp %1059 : vector<2x16xf32>
    %cst_194 = arith.constant 1.000000e+00 : f32
    %1061 = vector.broadcast %cst_194 : f32 to vector<2x16xf32>
    %1062 = arith.addf %1061, %1060 : vector<2x16xf32>
    %1063 = arith.divf %1061, %1062 : vector<2x16xf32>
    %1064 = vector.extract_strided_slice %1051 {offsets = [0, 32], sizes = [2, 16], strides = [1, 1]} : vector<2x64xf32> to vector<2x16xf32>
    %1065 = math.tanh %1064 : vector<2x16xf32>
    %1066 = vector.extract_strided_slice %1051 {offsets = [0, 48], sizes = [2, 16], strides = [1, 1]} : vector<2x64xf32> to vector<2x16xf32>
    %1067 = arith.negf %1066 : vector<2x16xf32>
    %1068 = math.exp %1067 : vector<2x16xf32>
    %cst_195 = arith.constant 1.000000e+00 : f32
    %1069 = vector.broadcast %cst_195 : f32 to vector<2x16xf32>
    %1070 = arith.addf %1069, %1068 : vector<2x16xf32>
    %1071 = arith.divf %1069, %1070 : vector<2x16xf32>
    %1072 = arith.mulf %1063, %1046 : vector<2x16xf32>
    %1073 = arith.mulf %1057, %1065 : vector<2x16xf32>
    %1074 = arith.addf %1072, %1073 : vector<2x16xf32>
    %1075 = math.tanh %1074 : vector<2x16xf32>
    %1076 = arith.mulf %1071, %1075 : vector<2x16xf32>
    %1077 = vector.broadcast %110 : vector<2x1xf32> to vector<2x16xf32>
    %1078 = arith.mulf %1077, %1076 : vector<2x16xf32>
    %cst_196 = arith.constant 1.000000e+00 : f32
    %1079 = vector.broadcast %cst_196 : f32 to vector<2x1xf32>
    %1080 = arith.subf %1079, %110 : vector<2x1xf32>
    %1081 = vector.broadcast %1080 : vector<2x1xf32> to vector<2x16xf32>
    %1082 = arith.mulf %1081, %1039 : vector<2x16xf32>
    %1083 = arith.addf %1078, %1082 : vector<2x16xf32>
    %1084 = vector.broadcast %110 : vector<2x1xf32> to vector<2x16xf32>
    %1085 = arith.mulf %1084, %1074 : vector<2x16xf32>
    %cst_197 = arith.constant 1.000000e+00 : f32
    %1086 = vector.broadcast %cst_197 : f32 to vector<2x1xf32>
    %1087 = arith.subf %1086, %110 : vector<2x1xf32>
    %1088 = vector.broadcast %1087 : vector<2x1xf32> to vector<2x16xf32>
    %1089 = arith.mulf %1088, %1046 : vector<2x16xf32>
    %1090 = arith.addf %1085, %1089 : vector<2x16xf32>
    %1091 = vector.broadcast %110 : vector<2x1xf32> to vector<2x16xf32>
    %1092 = arith.mulf %1083, %1091 : vector<2x16xf32>
    %1093 = arith.truncf %1083 : vector<2x16xf32> to vector<2x16xbf16>
    %cst_198 = arith.constant dense<0.000000e+00> : vector<2x64xf32>
    %1094 = tpu.matmul %1093, %862, %cst_198 {dimension_numbers = #tpu.dot_dimension_numbers<[1], [0], [0], [1], [0, 0, 1, 1], [], []>} : vector<2x16xbf16>, vector<16x64xbf16>, vector<2x64xf32> -> vector<2x64xf32>
    %1095 = arith.addf %868, %1094 : vector<2x64xf32>
    %1096 = vector.extract_strided_slice %1095 {offsets = [0, 0], sizes = [2, 16], strides = [1, 1]} : vector<2x64xf32> to vector<2x16xf32>
    %1097 = arith.negf %1096 : vector<2x16xf32>
    %1098 = math.exp %1097 : vector<2x16xf32>
    %cst_199 = arith.constant 1.000000e+00 : f32
    %1099 = vector.broadcast %cst_199 : f32 to vector<2x16xf32>
    %1100 = arith.addf %1099, %1098 : vector<2x16xf32>
    %1101 = arith.divf %1099, %1100 : vector<2x16xf32>
    %1102 = vector.extract_strided_slice %1095 {offsets = [0, 16], sizes = [2, 16], strides = [1, 1]} : vector<2x64xf32> to vector<2x16xf32>
    %1103 = arith.negf %1102 : vector<2x16xf32>
    %1104 = math.exp %1103 : vector<2x16xf32>
    %cst_200 = arith.constant 1.000000e+00 : f32
    %1105 = vector.broadcast %cst_200 : f32 to vector<2x16xf32>
    %1106 = arith.addf %1105, %1104 : vector<2x16xf32>
    %1107 = arith.divf %1105, %1106 : vector<2x16xf32>
    %1108 = vector.extract_strided_slice %1095 {offsets = [0, 32], sizes = [2, 16], strides = [1, 1]} : vector<2x64xf32> to vector<2x16xf32>
    %1109 = math.tanh %1108 : vector<2x16xf32>
    %1110 = vector.extract_strided_slice %1095 {offsets = [0, 48], sizes = [2, 16], strides = [1, 1]} : vector<2x64xf32> to vector<2x16xf32>
    %1111 = arith.negf %1110 : vector<2x16xf32>
    %1112 = math.exp %1111 : vector<2x16xf32>
    %cst_201 = arith.constant 1.000000e+00 : f32
    %1113 = vector.broadcast %cst_201 : f32 to vector<2x16xf32>
    %1114 = arith.addf %1113, %1112 : vector<2x16xf32>
    %1115 = arith.divf %1113, %1114 : vector<2x16xf32>
    %1116 = arith.mulf %1107, %1090 : vector<2x16xf32>
    %1117 = arith.mulf %1101, %1109 : vector<2x16xf32>
    %1118 = arith.addf %1116, %1117 : vector<2x16xf32>
    %1119 = math.tanh %1118 : vector<2x16xf32>
    %1120 = arith.mulf %1115, %1119 : vector<2x16xf32>
    %1121 = vector.broadcast %111 : vector<2x1xf32> to vector<2x16xf32>
    %1122 = arith.mulf %1121, %1120 : vector<2x16xf32>
    %cst_202 = arith.constant 1.000000e+00 : f32
    %1123 = vector.broadcast %cst_202 : f32 to vector<2x1xf32>
    %1124 = arith.subf %1123, %111 : vector<2x1xf32>
    %1125 = vector.broadcast %1124 : vector<2x1xf32> to vector<2x16xf32>
    %1126 = arith.mulf %1125, %1083 : vector<2x16xf32>
    %1127 = arith.addf %1122, %1126 : vector<2x16xf32>
    %1128 = vector.broadcast %111 : vector<2x1xf32> to vector<2x16xf32>
    %1129 = arith.mulf %1128, %1118 : vector<2x16xf32>
    %cst_203 = arith.constant 1.000000e+00 : f32
    %1130 = vector.broadcast %cst_203 : f32 to vector<2x1xf32>
    %1131 = arith.subf %1130, %111 : vector<2x1xf32>
    %1132 = vector.broadcast %1131 : vector<2x1xf32> to vector<2x16xf32>
    %1133 = arith.mulf %1132, %1090 : vector<2x16xf32>
    %1134 = arith.addf %1129, %1133 : vector<2x16xf32>
    %1135 = vector.broadcast %111 : vector<2x1xf32> to vector<2x16xf32>
    %1136 = arith.mulf %1127, %1135 : vector<2x16xf32>
    %1137 = arith.truncf %1127 : vector<2x16xf32> to vector<2x16xbf16>
    %cst_204 = arith.constant dense<0.000000e+00> : vector<2x64xf32>
    %1138 = tpu.matmul %1137, %862, %cst_204 {dimension_numbers = #tpu.dot_dimension_numbers<[1], [0], [0], [1], [0, 0, 1, 1], [], []>} : vector<2x16xbf16>, vector<16x64xbf16>, vector<2x64xf32> -> vector<2x64xf32>
    %1139 = arith.addf %869, %1138 : vector<2x64xf32>
    %1140 = vector.extract_strided_slice %1139 {offsets = [0, 0], sizes = [2, 16], strides = [1, 1]} : vector<2x64xf32> to vector<2x16xf32>
    %1141 = arith.negf %1140 : vector<2x16xf32>
    %1142 = math.exp %1141 : vector<2x16xf32>
    %cst_205 = arith.constant 1.000000e+00 : f32
    %1143 = vector.broadcast %cst_205 : f32 to vector<2x16xf32>
    %1144 = arith.addf %1143, %1142 : vector<2x16xf32>
    %1145 = arith.divf %1143, %1144 : vector<2x16xf32>
    %1146 = vector.extract_strided_slice %1139 {offsets = [0, 16], sizes = [2, 16], strides = [1, 1]} : vector<2x64xf32> to vector<2x16xf32>
    %1147 = arith.negf %1146 : vector<2x16xf32>
    %1148 = math.exp %1147 : vector<2x16xf32>
    %cst_206 = arith.constant 1.000000e+00 : f32
    %1149 = vector.broadcast %cst_206 : f32 to vector<2x16xf32>
    %1150 = arith.addf %1149, %1148 : vector<2x16xf32>
    %1151 = arith.divf %1149, %1150 : vector<2x16xf32>
    %1152 = vector.extract_strided_slice %1139 {offsets = [0, 32], sizes = [2, 16], strides = [1, 1]} : vector<2x64xf32> to vector<2x16xf32>
    %1153 = math.tanh %1152 : vector<2x16xf32>
    %1154 = vector.extract_strided_slice %1139 {offsets = [0, 48], sizes = [2, 16], strides = [1, 1]} : vector<2x64xf32> to vector<2x16xf32>
    %1155 = arith.negf %1154 : vector<2x16xf32>
    %1156 = math.exp %1155 : vector<2x16xf32>
    %cst_207 = arith.constant 1.000000e+00 : f32
    %1157 = vector.broadcast %cst_207 : f32 to vector<2x16xf32>
    %1158 = arith.addf %1157, %1156 : vector<2x16xf32>
    %1159 = arith.divf %1157, %1158 : vector<2x16xf32>
    %1160 = arith.mulf %1151, %1134 : vector<2x16xf32>
    %1161 = arith.mulf %1145, %1153 : vector<2x16xf32>
    %1162 = arith.addf %1160, %1161 : vector<2x16xf32>
    %1163 = math.tanh %1162 : vector<2x16xf32>
    %1164 = arith.mulf %1159, %1163 : vector<2x16xf32>
    %1165 = vector.broadcast %112 : vector<2x1xf32> to vector<2x16xf32>
    %1166 = arith.mulf %1165, %1164 : vector<2x16xf32>
    %cst_208 = arith.constant 1.000000e+00 : f32
    %1167 = vector.broadcast %cst_208 : f32 to vector<2x1xf32>
    %1168 = arith.subf %1167, %112 : vector<2x1xf32>
    %1169 = vector.broadcast %1168 : vector<2x1xf32> to vector<2x16xf32>
    %1170 = arith.mulf %1169, %1127 : vector<2x16xf32>
    %1171 = arith.addf %1166, %1170 : vector<2x16xf32>
    %1172 = vector.broadcast %112 : vector<2x1xf32> to vector<2x16xf32>
    %1173 = arith.mulf %1172, %1162 : vector<2x16xf32>
    %cst_209 = arith.constant 1.000000e+00 : f32
    %1174 = vector.broadcast %cst_209 : f32 to vector<2x1xf32>
    %1175 = arith.subf %1174, %112 : vector<2x1xf32>
    %1176 = vector.broadcast %1175 : vector<2x1xf32> to vector<2x16xf32>
    %1177 = arith.mulf %1176, %1134 : vector<2x16xf32>
    %1178 = arith.addf %1173, %1177 : vector<2x16xf32>
    %1179 = vector.broadcast %112 : vector<2x1xf32> to vector<2x16xf32>
    %1180 = arith.mulf %1171, %1179 : vector<2x16xf32>
    %1181 = arith.truncf %1171 : vector<2x16xf32> to vector<2x16xbf16>
    %cst_210 = arith.constant dense<0.000000e+00> : vector<2x64xf32>
    %1182 = tpu.matmul %1181, %862, %cst_210 {dimension_numbers = #tpu.dot_dimension_numbers<[1], [0], [0], [1], [0, 0, 1, 1], [], []>} : vector<2x16xbf16>, vector<16x64xbf16>, vector<2x64xf32> -> vector<2x64xf32>
    %1183 = arith.addf %870, %1182 : vector<2x64xf32>
    %1184 = vector.extract_strided_slice %1183 {offsets = [0, 0], sizes = [2, 16], strides = [1, 1]} : vector<2x64xf32> to vector<2x16xf32>
    %1185 = arith.negf %1184 : vector<2x16xf32>
    %1186 = math.exp %1185 : vector<2x16xf32>
    %cst_211 = arith.constant 1.000000e+00 : f32
    %1187 = vector.broadcast %cst_211 : f32 to vector<2x16xf32>
    %1188 = arith.addf %1187, %1186 : vector<2x16xf32>
    %1189 = arith.divf %1187, %1188 : vector<2x16xf32>
    %1190 = vector.extract_strided_slice %1183 {offsets = [0, 16], sizes = [2, 16], strides = [1, 1]} : vector<2x64xf32> to vector<2x16xf32>
    %1191 = arith.negf %1190 : vector<2x16xf32>
    %1192 = math.exp %1191 : vector<2x16xf32>
    %cst_212 = arith.constant 1.000000e+00 : f32
    %1193 = vector.broadcast %cst_212 : f32 to vector<2x16xf32>
    %1194 = arith.addf %1193, %1192 : vector<2x16xf32>
    %1195 = arith.divf %1193, %1194 : vector<2x16xf32>
    %1196 = vector.extract_strided_slice %1183 {offsets = [0, 32], sizes = [2, 16], strides = [1, 1]} : vector<2x64xf32> to vector<2x16xf32>
    %1197 = math.tanh %1196 : vector<2x16xf32>
    %1198 = vector.extract_strided_slice %1183 {offsets = [0, 48], sizes = [2, 16], strides = [1, 1]} : vector<2x64xf32> to vector<2x16xf32>
    %1199 = arith.negf %1198 : vector<2x16xf32>
    %1200 = math.exp %1199 : vector<2x16xf32>
    %cst_213 = arith.constant 1.000000e+00 : f32
    %1201 = vector.broadcast %cst_213 : f32 to vector<2x16xf32>
    %1202 = arith.addf %1201, %1200 : vector<2x16xf32>
    %1203 = arith.divf %1201, %1202 : vector<2x16xf32>
    %1204 = arith.mulf %1195, %1178 : vector<2x16xf32>
    %1205 = arith.mulf %1189, %1197 : vector<2x16xf32>
    %1206 = arith.addf %1204, %1205 : vector<2x16xf32>
    %1207 = math.tanh %1206 : vector<2x16xf32>
    %1208 = arith.mulf %1203, %1207 : vector<2x16xf32>
    %1209 = vector.broadcast %113 : vector<2x1xf32> to vector<2x16xf32>
    %1210 = arith.mulf %1209, %1208 : vector<2x16xf32>
    %cst_214 = arith.constant 1.000000e+00 : f32
    %1211 = vector.broadcast %cst_214 : f32 to vector<2x1xf32>
    %1212 = arith.subf %1211, %113 : vector<2x1xf32>
    %1213 = vector.broadcast %1212 : vector<2x1xf32> to vector<2x16xf32>
    %1214 = arith.mulf %1213, %1171 : vector<2x16xf32>
    %1215 = arith.addf %1210, %1214 : vector<2x16xf32>
    %1216 = vector.broadcast %113 : vector<2x1xf32> to vector<2x16xf32>
    %1217 = arith.mulf %1216, %1206 : vector<2x16xf32>
    %cst_215 = arith.constant 1.000000e+00 : f32
    %1218 = vector.broadcast %cst_215 : f32 to vector<2x1xf32>
    %1219 = arith.subf %1218, %113 : vector<2x1xf32>
    %1220 = vector.broadcast %1219 : vector<2x1xf32> to vector<2x16xf32>
    %1221 = arith.mulf %1220, %1178 : vector<2x16xf32>
    %1222 = arith.addf %1217, %1221 : vector<2x16xf32>
    %1223 = vector.broadcast %113 : vector<2x1xf32> to vector<2x16xf32>
    %1224 = arith.mulf %1215, %1223 : vector<2x16xf32>
    %c0_216 = arith.constant 0 : index
    %c0_217 = arith.constant 0 : index
    %1225 = vector.load %arg28[%c0_216, %c0_217] : memref<16x64xbf16, #tpu.memory_space<vmem>>, vector<16x64xbf16>
    %1226 = vector.extract_strided_slice %861 {offsets = [0, 0], sizes = [2, 64], strides = [1, 1]} : vector<16x64xf32> to vector<2x64xf32>
    %1227 = vector.extract_strided_slice %861 {offsets = [2, 0], sizes = [2, 64], strides = [1, 1]} : vector<16x64xf32> to vector<2x64xf32>
    %1228 = vector.extract_strided_slice %861 {offsets = [4, 0], sizes = [2, 64], strides = [1, 1]} : vector<16x64xf32> to vector<2x64xf32>
    %1229 = vector.extract_strided_slice %861 {offsets = [6, 0], sizes = [2, 64], strides = [1, 1]} : vector<16x64xf32> to vector<2x64xf32>
    %1230 = vector.extract_strided_slice %861 {offsets = [8, 0], sizes = [2, 64], strides = [1, 1]} : vector<16x64xf32> to vector<2x64xf32>
    %1231 = vector.extract_strided_slice %861 {offsets = [10, 0], sizes = [2, 64], strides = [1, 1]} : vector<16x64xf32> to vector<2x64xf32>
    %1232 = vector.extract_strided_slice %861 {offsets = [12, 0], sizes = [2, 64], strides = [1, 1]} : vector<16x64xf32> to vector<2x64xf32>
    %1233 = vector.extract_strided_slice %861 {offsets = [14, 0], sizes = [2, 64], strides = [1, 1]} : vector<16x64xf32> to vector<2x64xf32>
    %cst_218 = arith.constant 0.000000e+00 : f32
    %1234 = vector.broadcast %cst_218 : f32 to vector<2x16xf32>
    %cst_219 = arith.constant 0.000000e+00 : f32
    %1235 = vector.broadcast %cst_219 : f32 to vector<2x16xf32>
    %1236 = arith.truncf %1234 : vector<2x16xf32> to vector<2x16xbf16>
    %cst_220 = arith.constant dense<0.000000e+00> : vector<2x64xf32>
    %1237 = tpu.matmul %1236, %1225, %cst_220 {dimension_numbers = #tpu.dot_dimension_numbers<[1], [0], [0], [1], [0, 0, 1, 1], [], []>} : vector<2x16xbf16>, vector<16x64xbf16>, vector<2x64xf32> -> vector<2x64xf32>
    %1238 = arith.addf %1233, %1237 : vector<2x64xf32>
    %1239 = vector.extract_strided_slice %1238 {offsets = [0, 0], sizes = [2, 16], strides = [1, 1]} : vector<2x64xf32> to vector<2x16xf32>
    %1240 = arith.negf %1239 : vector<2x16xf32>
    %1241 = math.exp %1240 : vector<2x16xf32>
    %cst_221 = arith.constant 1.000000e+00 : f32
    %1242 = vector.broadcast %cst_221 : f32 to vector<2x16xf32>
    %1243 = arith.addf %1242, %1241 : vector<2x16xf32>
    %1244 = arith.divf %1242, %1243 : vector<2x16xf32>
    %1245 = vector.extract_strided_slice %1238 {offsets = [0, 16], sizes = [2, 16], strides = [1, 1]} : vector<2x64xf32> to vector<2x16xf32>
    %1246 = arith.negf %1245 : vector<2x16xf32>
    %1247 = math.exp %1246 : vector<2x16xf32>
    %cst_222 = arith.constant 1.000000e+00 : f32
    %1248 = vector.broadcast %cst_222 : f32 to vector<2x16xf32>
    %1249 = arith.addf %1248, %1247 : vector<2x16xf32>
    %1250 = arith.divf %1248, %1249 : vector<2x16xf32>
    %1251 = vector.extract_strided_slice %1238 {offsets = [0, 32], sizes = [2, 16], strides = [1, 1]} : vector<2x64xf32> to vector<2x16xf32>
    %1252 = math.tanh %1251 : vector<2x16xf32>
    %1253 = vector.extract_strided_slice %1238 {offsets = [0, 48], sizes = [2, 16], strides = [1, 1]} : vector<2x64xf32> to vector<2x16xf32>
    %1254 = arith.negf %1253 : vector<2x16xf32>
    %1255 = math.exp %1254 : vector<2x16xf32>
    %cst_223 = arith.constant 1.000000e+00 : f32
    %1256 = vector.broadcast %cst_223 : f32 to vector<2x16xf32>
    %1257 = arith.addf %1256, %1255 : vector<2x16xf32>
    %1258 = arith.divf %1256, %1257 : vector<2x16xf32>
    %1259 = arith.mulf %1250, %1235 : vector<2x16xf32>
    %1260 = arith.mulf %1244, %1252 : vector<2x16xf32>
    %1261 = arith.addf %1259, %1260 : vector<2x16xf32>
    %1262 = math.tanh %1261 : vector<2x16xf32>
    %1263 = arith.mulf %1258, %1262 : vector<2x16xf32>
    %1264 = vector.broadcast %113 : vector<2x1xf32> to vector<2x16xf32>
    %1265 = arith.mulf %1264, %1263 : vector<2x16xf32>
    %cst_224 = arith.constant 1.000000e+00 : f32
    %1266 = vector.broadcast %cst_224 : f32 to vector<2x1xf32>
    %1267 = arith.subf %1266, %113 : vector<2x1xf32>
    %1268 = vector.broadcast %1267 : vector<2x1xf32> to vector<2x16xf32>
    %1269 = arith.mulf %1268, %1234 : vector<2x16xf32>
    %1270 = arith.addf %1265, %1269 : vector<2x16xf32>
    %1271 = vector.broadcast %113 : vector<2x1xf32> to vector<2x16xf32>
    %1272 = arith.mulf %1271, %1261 : vector<2x16xf32>
    %cst_225 = arith.constant 1.000000e+00 : f32
    %1273 = vector.broadcast %cst_225 : f32 to vector<2x1xf32>
    %1274 = arith.subf %1273, %113 : vector<2x1xf32>
    %1275 = vector.broadcast %1274 : vector<2x1xf32> to vector<2x16xf32>
    %1276 = arith.mulf %1275, %1235 : vector<2x16xf32>
    %1277 = arith.addf %1272, %1276 : vector<2x16xf32>
    %1278 = vector.broadcast %113 : vector<2x1xf32> to vector<2x16xf32>
    %1279 = arith.mulf %1270, %1278 : vector<2x16xf32>
    %1280 = arith.truncf %1270 : vector<2x16xf32> to vector<2x16xbf16>
    %cst_226 = arith.constant dense<0.000000e+00> : vector<2x64xf32>
    %1281 = tpu.matmul %1280, %1225, %cst_226 {dimension_numbers = #tpu.dot_dimension_numbers<[1], [0], [0], [1], [0, 0, 1, 1], [], []>} : vector<2x16xbf16>, vector<16x64xbf16>, vector<2x64xf32> -> vector<2x64xf32>
    %1282 = arith.addf %1232, %1281 : vector<2x64xf32>
    %1283 = vector.extract_strided_slice %1282 {offsets = [0, 0], sizes = [2, 16], strides = [1, 1]} : vector<2x64xf32> to vector<2x16xf32>
    %1284 = arith.negf %1283 : vector<2x16xf32>
    %1285 = math.exp %1284 : vector<2x16xf32>
    %cst_227 = arith.constant 1.000000e+00 : f32
    %1286 = vector.broadcast %cst_227 : f32 to vector<2x16xf32>
    %1287 = arith.addf %1286, %1285 : vector<2x16xf32>
    %1288 = arith.divf %1286, %1287 : vector<2x16xf32>
    %1289 = vector.extract_strided_slice %1282 {offsets = [0, 16], sizes = [2, 16], strides = [1, 1]} : vector<2x64xf32> to vector<2x16xf32>
    %1290 = arith.negf %1289 : vector<2x16xf32>
    %1291 = math.exp %1290 : vector<2x16xf32>
    %cst_228 = arith.constant 1.000000e+00 : f32
    %1292 = vector.broadcast %cst_228 : f32 to vector<2x16xf32>
    %1293 = arith.addf %1292, %1291 : vector<2x16xf32>
    %1294 = arith.divf %1292, %1293 : vector<2x16xf32>
    %1295 = vector.extract_strided_slice %1282 {offsets = [0, 32], sizes = [2, 16], strides = [1, 1]} : vector<2x64xf32> to vector<2x16xf32>
    %1296 = math.tanh %1295 : vector<2x16xf32>
    %1297 = vector.extract_strided_slice %1282 {offsets = [0, 48], sizes = [2, 16], strides = [1, 1]} : vector<2x64xf32> to vector<2x16xf32>
    %1298 = arith.negf %1297 : vector<2x16xf32>
    %1299 = math.exp %1298 : vector<2x16xf32>
    %cst_229 = arith.constant 1.000000e+00 : f32
    %1300 = vector.broadcast %cst_229 : f32 to vector<2x16xf32>
    %1301 = arith.addf %1300, %1299 : vector<2x16xf32>
    %1302 = arith.divf %1300, %1301 : vector<2x16xf32>
    %1303 = arith.mulf %1294, %1277 : vector<2x16xf32>
    %1304 = arith.mulf %1288, %1296 : vector<2x16xf32>
    %1305 = arith.addf %1303, %1304 : vector<2x16xf32>
    %1306 = math.tanh %1305 : vector<2x16xf32>
    %1307 = arith.mulf %1302, %1306 : vector<2x16xf32>
    %1308 = vector.broadcast %112 : vector<2x1xf32> to vector<2x16xf32>
    %1309 = arith.mulf %1308, %1307 : vector<2x16xf32>
    %cst_230 = arith.constant 1.000000e+00 : f32
    %1310 = vector.broadcast %cst_230 : f32 to vector<2x1xf32>
    %1311 = arith.subf %1310, %112 : vector<2x1xf32>
    %1312 = vector.broadcast %1311 : vector<2x1xf32> to vector<2x16xf32>
    %1313 = arith.mulf %1312, %1270 : vector<2x16xf32>
    %1314 = arith.addf %1309, %1313 : vector<2x16xf32>
    %1315 = vector.broadcast %112 : vector<2x1xf32> to vector<2x16xf32>
    %1316 = arith.mulf %1315, %1305 : vector<2x16xf32>
    %cst_231 = arith.constant 1.000000e+00 : f32
    %1317 = vector.broadcast %cst_231 : f32 to vector<2x1xf32>
    %1318 = arith.subf %1317, %112 : vector<2x1xf32>
    %1319 = vector.broadcast %1318 : vector<2x1xf32> to vector<2x16xf32>
    %1320 = arith.mulf %1319, %1277 : vector<2x16xf32>
    %1321 = arith.addf %1316, %1320 : vector<2x16xf32>
    %1322 = vector.broadcast %112 : vector<2x1xf32> to vector<2x16xf32>
    %1323 = arith.mulf %1314, %1322 : vector<2x16xf32>
    %1324 = arith.truncf %1314 : vector<2x16xf32> to vector<2x16xbf16>
    %cst_232 = arith.constant dense<0.000000e+00> : vector<2x64xf32>
    %1325 = tpu.matmul %1324, %1225, %cst_232 {dimension_numbers = #tpu.dot_dimension_numbers<[1], [0], [0], [1], [0, 0, 1, 1], [], []>} : vector<2x16xbf16>, vector<16x64xbf16>, vector<2x64xf32> -> vector<2x64xf32>
    %1326 = arith.addf %1231, %1325 : vector<2x64xf32>
    %1327 = vector.extract_strided_slice %1326 {offsets = [0, 0], sizes = [2, 16], strides = [1, 1]} : vector<2x64xf32> to vector<2x16xf32>
    %1328 = arith.negf %1327 : vector<2x16xf32>
    %1329 = math.exp %1328 : vector<2x16xf32>
    %cst_233 = arith.constant 1.000000e+00 : f32
    %1330 = vector.broadcast %cst_233 : f32 to vector<2x16xf32>
    %1331 = arith.addf %1330, %1329 : vector<2x16xf32>
    %1332 = arith.divf %1330, %1331 : vector<2x16xf32>
    %1333 = vector.extract_strided_slice %1326 {offsets = [0, 16], sizes = [2, 16], strides = [1, 1]} : vector<2x64xf32> to vector<2x16xf32>
    %1334 = arith.negf %1333 : vector<2x16xf32>
    %1335 = math.exp %1334 : vector<2x16xf32>
    %cst_234 = arith.constant 1.000000e+00 : f32
    %1336 = vector.broadcast %cst_234 : f32 to vector<2x16xf32>
    %1337 = arith.addf %1336, %1335 : vector<2x16xf32>
    %1338 = arith.divf %1336, %1337 : vector<2x16xf32>
    %1339 = vector.extract_strided_slice %1326 {offsets = [0, 32], sizes = [2, 16], strides = [1, 1]} : vector<2x64xf32> to vector<2x16xf32>
    %1340 = math.tanh %1339 : vector<2x16xf32>
    %1341 = vector.extract_strided_slice %1326 {offsets = [0, 48], sizes = [2, 16], strides = [1, 1]} : vector<2x64xf32> to vector<2x16xf32>
    %1342 = arith.negf %1341 : vector<2x16xf32>
    %1343 = math.exp %1342 : vector<2x16xf32>
    %cst_235 = arith.constant 1.000000e+00 : f32
    %1344 = vector.broadcast %cst_235 : f32 to vector<2x16xf32>
    %1345 = arith.addf %1344, %1343 : vector<2x16xf32>
    %1346 = arith.divf %1344, %1345 : vector<2x16xf32>
    %1347 = arith.mulf %1338, %1321 : vector<2x16xf32>
    %1348 = arith.mulf %1332, %1340 : vector<2x16xf32>
    %1349 = arith.addf %1347, %1348 : vector<2x16xf32>
    %1350 = math.tanh %1349 : vector<2x16xf32>
    %1351 = arith.mulf %1346, %1350 : vector<2x16xf32>
    %1352 = vector.broadcast %111 : vector<2x1xf32> to vector<2x16xf32>
    %1353 = arith.mulf %1352, %1351 : vector<2x16xf32>
    %cst_236 = arith.constant 1.000000e+00 : f32
    %1354 = vector.broadcast %cst_236 : f32 to vector<2x1xf32>
    %1355 = arith.subf %1354, %111 : vector<2x1xf32>
    %1356 = vector.broadcast %1355 : vector<2x1xf32> to vector<2x16xf32>
    %1357 = arith.mulf %1356, %1314 : vector<2x16xf32>
    %1358 = arith.addf %1353, %1357 : vector<2x16xf32>
    %1359 = vector.broadcast %111 : vector<2x1xf32> to vector<2x16xf32>
    %1360 = arith.mulf %1359, %1349 : vector<2x16xf32>
    %cst_237 = arith.constant 1.000000e+00 : f32
    %1361 = vector.broadcast %cst_237 : f32 to vector<2x1xf32>
    %1362 = arith.subf %1361, %111 : vector<2x1xf32>
    %1363 = vector.broadcast %1362 : vector<2x1xf32> to vector<2x16xf32>
    %1364 = arith.mulf %1363, %1321 : vector<2x16xf32>
    %1365 = arith.addf %1360, %1364 : vector<2x16xf32>
    %1366 = vector.broadcast %111 : vector<2x1xf32> to vector<2x16xf32>
    %1367 = arith.mulf %1358, %1366 : vector<2x16xf32>
    %1368 = arith.truncf %1358 : vector<2x16xf32> to vector<2x16xbf16>
    %cst_238 = arith.constant dense<0.000000e+00> : vector<2x64xf32>
    %1369 = tpu.matmul %1368, %1225, %cst_238 {dimension_numbers = #tpu.dot_dimension_numbers<[1], [0], [0], [1], [0, 0, 1, 1], [], []>} : vector<2x16xbf16>, vector<16x64xbf16>, vector<2x64xf32> -> vector<2x64xf32>
    %1370 = arith.addf %1230, %1369 : vector<2x64xf32>
    %1371 = vector.extract_strided_slice %1370 {offsets = [0, 0], sizes = [2, 16], strides = [1, 1]} : vector<2x64xf32> to vector<2x16xf32>
    %1372 = arith.negf %1371 : vector<2x16xf32>
    %1373 = math.exp %1372 : vector<2x16xf32>
    %cst_239 = arith.constant 1.000000e+00 : f32
    %1374 = vector.broadcast %cst_239 : f32 to vector<2x16xf32>
    %1375 = arith.addf %1374, %1373 : vector<2x16xf32>
    %1376 = arith.divf %1374, %1375 : vector<2x16xf32>
    %1377 = vector.extract_strided_slice %1370 {offsets = [0, 16], sizes = [2, 16], strides = [1, 1]} : vector<2x64xf32> to vector<2x16xf32>
    %1378 = arith.negf %1377 : vector<2x16xf32>
    %1379 = math.exp %1378 : vector<2x16xf32>
    %cst_240 = arith.constant 1.000000e+00 : f32
    %1380 = vector.broadcast %cst_240 : f32 to vector<2x16xf32>
    %1381 = arith.addf %1380, %1379 : vector<2x16xf32>
    %1382 = arith.divf %1380, %1381 : vector<2x16xf32>
    %1383 = vector.extract_strided_slice %1370 {offsets = [0, 32], sizes = [2, 16], strides = [1, 1]} : vector<2x64xf32> to vector<2x16xf32>
    %1384 = math.tanh %1383 : vector<2x16xf32>
    %1385 = vector.extract_strided_slice %1370 {offsets = [0, 48], sizes = [2, 16], strides = [1, 1]} : vector<2x64xf32> to vector<2x16xf32>
    %1386 = arith.negf %1385 : vector<2x16xf32>
    %1387 = math.exp %1386 : vector<2x16xf32>
    %cst_241 = arith.constant 1.000000e+00 : f32
    %1388 = vector.broadcast %cst_241 : f32 to vector<2x16xf32>
    %1389 = arith.addf %1388, %1387 : vector<2x16xf32>
    %1390 = arith.divf %1388, %1389 : vector<2x16xf32>
    %1391 = arith.mulf %1382, %1365 : vector<2x16xf32>
    %1392 = arith.mulf %1376, %1384 : vector<2x16xf32>
    %1393 = arith.addf %1391, %1392 : vector<2x16xf32>
    %1394 = math.tanh %1393 : vector<2x16xf32>
    %1395 = arith.mulf %1390, %1394 : vector<2x16xf32>
    %1396 = vector.broadcast %110 : vector<2x1xf32> to vector<2x16xf32>
    %1397 = arith.mulf %1396, %1395 : vector<2x16xf32>
    %cst_242 = arith.constant 1.000000e+00 : f32
    %1398 = vector.broadcast %cst_242 : f32 to vector<2x1xf32>
    %1399 = arith.subf %1398, %110 : vector<2x1xf32>
    %1400 = vector.broadcast %1399 : vector<2x1xf32> to vector<2x16xf32>
    %1401 = arith.mulf %1400, %1358 : vector<2x16xf32>
    %1402 = arith.addf %1397, %1401 : vector<2x16xf32>
    %1403 = vector.broadcast %110 : vector<2x1xf32> to vector<2x16xf32>
    %1404 = arith.mulf %1403, %1393 : vector<2x16xf32>
    %cst_243 = arith.constant 1.000000e+00 : f32
    %1405 = vector.broadcast %cst_243 : f32 to vector<2x1xf32>
    %1406 = arith.subf %1405, %110 : vector<2x1xf32>
    %1407 = vector.broadcast %1406 : vector<2x1xf32> to vector<2x16xf32>
    %1408 = arith.mulf %1407, %1365 : vector<2x16xf32>
    %1409 = arith.addf %1404, %1408 : vector<2x16xf32>
    %1410 = vector.broadcast %110 : vector<2x1xf32> to vector<2x16xf32>
    %1411 = arith.mulf %1402, %1410 : vector<2x16xf32>
    %1412 = arith.truncf %1402 : vector<2x16xf32> to vector<2x16xbf16>
    %cst_244 = arith.constant dense<0.000000e+00> : vector<2x64xf32>
    %1413 = tpu.matmul %1412, %1225, %cst_244 {dimension_numbers = #tpu.dot_dimension_numbers<[1], [0], [0], [1], [0, 0, 1, 1], [], []>} : vector<2x16xbf16>, vector<16x64xbf16>, vector<2x64xf32> -> vector<2x64xf32>
    %1414 = arith.addf %1229, %1413 : vector<2x64xf32>
    %1415 = vector.extract_strided_slice %1414 {offsets = [0, 0], sizes = [2, 16], strides = [1, 1]} : vector<2x64xf32> to vector<2x16xf32>
    %1416 = arith.negf %1415 : vector<2x16xf32>
    %1417 = math.exp %1416 : vector<2x16xf32>
    %cst_245 = arith.constant 1.000000e+00 : f32
    %1418 = vector.broadcast %cst_245 : f32 to vector<2x16xf32>
    %1419 = arith.addf %1418, %1417 : vector<2x16xf32>
    %1420 = arith.divf %1418, %1419 : vector<2x16xf32>
    %1421 = vector.extract_strided_slice %1414 {offsets = [0, 16], sizes = [2, 16], strides = [1, 1]} : vector<2x64xf32> to vector<2x16xf32>
    %1422 = arith.negf %1421 : vector<2x16xf32>
    %1423 = math.exp %1422 : vector<2x16xf32>
    %cst_246 = arith.constant 1.000000e+00 : f32
    %1424 = vector.broadcast %cst_246 : f32 to vector<2x16xf32>
    %1425 = arith.addf %1424, %1423 : vector<2x16xf32>
    %1426 = arith.divf %1424, %1425 : vector<2x16xf32>
    %1427 = vector.extract_strided_slice %1414 {offsets = [0, 32], sizes = [2, 16], strides = [1, 1]} : vector<2x64xf32> to vector<2x16xf32>
    %1428 = math.tanh %1427 : vector<2x16xf32>
    %1429 = vector.extract_strided_slice %1414 {offsets = [0, 48], sizes = [2, 16], strides = [1, 1]} : vector<2x64xf32> to vector<2x16xf32>
    %1430 = arith.negf %1429 : vector<2x16xf32>
    %1431 = math.exp %1430 : vector<2x16xf32>
    %cst_247 = arith.constant 1.000000e+00 : f32
    %1432 = vector.broadcast %cst_247 : f32 to vector<2x16xf32>
    %1433 = arith.addf %1432, %1431 : vector<2x16xf32>
    %1434 = arith.divf %1432, %1433 : vector<2x16xf32>
    %1435 = arith.mulf %1426, %1409 : vector<2x16xf32>
    %1436 = arith.mulf %1420, %1428 : vector<2x16xf32>
    %1437 = arith.addf %1435, %1436 : vector<2x16xf32>
    %1438 = math.tanh %1437 : vector<2x16xf32>
    %1439 = arith.mulf %1434, %1438 : vector<2x16xf32>
    %1440 = vector.broadcast %109 : vector<2x1xf32> to vector<2x16xf32>
    %1441 = arith.mulf %1440, %1439 : vector<2x16xf32>
    %cst_248 = arith.constant 1.000000e+00 : f32
    %1442 = vector.broadcast %cst_248 : f32 to vector<2x1xf32>
    %1443 = arith.subf %1442, %109 : vector<2x1xf32>
    %1444 = vector.broadcast %1443 : vector<2x1xf32> to vector<2x16xf32>
    %1445 = arith.mulf %1444, %1402 : vector<2x16xf32>
    %1446 = arith.addf %1441, %1445 : vector<2x16xf32>
    %1447 = vector.broadcast %109 : vector<2x1xf32> to vector<2x16xf32>
    %1448 = arith.mulf %1447, %1437 : vector<2x16xf32>
    %cst_249 = arith.constant 1.000000e+00 : f32
    %1449 = vector.broadcast %cst_249 : f32 to vector<2x1xf32>
    %1450 = arith.subf %1449, %109 : vector<2x1xf32>
    %1451 = vector.broadcast %1450 : vector<2x1xf32> to vector<2x16xf32>
    %1452 = arith.mulf %1451, %1409 : vector<2x16xf32>
    %1453 = arith.addf %1448, %1452 : vector<2x16xf32>
    %1454 = vector.broadcast %109 : vector<2x1xf32> to vector<2x16xf32>
    %1455 = arith.mulf %1446, %1454 : vector<2x16xf32>
    %1456 = arith.truncf %1446 : vector<2x16xf32> to vector<2x16xbf16>
    %cst_250 = arith.constant dense<0.000000e+00> : vector<2x64xf32>
    %1457 = tpu.matmul %1456, %1225, %cst_250 {dimension_numbers = #tpu.dot_dimension_numbers<[1], [0], [0], [1], [0, 0, 1, 1], [], []>} : vector<2x16xbf16>, vector<16x64xbf16>, vector<2x64xf32> -> vector<2x64xf32>
    %1458 = arith.addf %1228, %1457 : vector<2x64xf32>
    %1459 = vector.extract_strided_slice %1458 {offsets = [0, 0], sizes = [2, 16], strides = [1, 1]} : vector<2x64xf32> to vector<2x16xf32>
    %1460 = arith.negf %1459 : vector<2x16xf32>
    %1461 = math.exp %1460 : vector<2x16xf32>
    %cst_251 = arith.constant 1.000000e+00 : f32
    %1462 = vector.broadcast %cst_251 : f32 to vector<2x16xf32>
    %1463 = arith.addf %1462, %1461 : vector<2x16xf32>
    %1464 = arith.divf %1462, %1463 : vector<2x16xf32>
    %1465 = vector.extract_strided_slice %1458 {offsets = [0, 16], sizes = [2, 16], strides = [1, 1]} : vector<2x64xf32> to vector<2x16xf32>
    %1466 = arith.negf %1465 : vector<2x16xf32>
    %1467 = math.exp %1466 : vector<2x16xf32>
    %cst_252 = arith.constant 1.000000e+00 : f32
    %1468 = vector.broadcast %cst_252 : f32 to vector<2x16xf32>
    %1469 = arith.addf %1468, %1467 : vector<2x16xf32>
    %1470 = arith.divf %1468, %1469 : vector<2x16xf32>
    %1471 = vector.extract_strided_slice %1458 {offsets = [0, 32], sizes = [2, 16], strides = [1, 1]} : vector<2x64xf32> to vector<2x16xf32>
    %1472 = math.tanh %1471 : vector<2x16xf32>
    %1473 = vector.extract_strided_slice %1458 {offsets = [0, 48], sizes = [2, 16], strides = [1, 1]} : vector<2x64xf32> to vector<2x16xf32>
    %1474 = arith.negf %1473 : vector<2x16xf32>
    %1475 = math.exp %1474 : vector<2x16xf32>
    %cst_253 = arith.constant 1.000000e+00 : f32
    %1476 = vector.broadcast %cst_253 : f32 to vector<2x16xf32>
    %1477 = arith.addf %1476, %1475 : vector<2x16xf32>
    %1478 = arith.divf %1476, %1477 : vector<2x16xf32>
    %1479 = arith.mulf %1470, %1453 : vector<2x16xf32>
    %1480 = arith.mulf %1464, %1472 : vector<2x16xf32>
    %1481 = arith.addf %1479, %1480 : vector<2x16xf32>
    %1482 = math.tanh %1481 : vector<2x16xf32>
    %1483 = arith.mulf %1478, %1482 : vector<2x16xf32>
    %1484 = vector.broadcast %108 : vector<2x1xf32> to vector<2x16xf32>
    %1485 = arith.mulf %1484, %1483 : vector<2x16xf32>
    %cst_254 = arith.constant 1.000000e+00 : f32
    %1486 = vector.broadcast %cst_254 : f32 to vector<2x1xf32>
    %1487 = arith.subf %1486, %108 : vector<2x1xf32>
    %1488 = vector.broadcast %1487 : vector<2x1xf32> to vector<2x16xf32>
    %1489 = arith.mulf %1488, %1446 : vector<2x16xf32>
    %1490 = arith.addf %1485, %1489 : vector<2x16xf32>
    %1491 = vector.broadcast %108 : vector<2x1xf32> to vector<2x16xf32>
    %1492 = arith.mulf %1491, %1481 : vector<2x16xf32>
    %cst_255 = arith.constant 1.000000e+00 : f32
    %1493 = vector.broadcast %cst_255 : f32 to vector<2x1xf32>
    %1494 = arith.subf %1493, %108 : vector<2x1xf32>
    %1495 = vector.broadcast %1494 : vector<2x1xf32> to vector<2x16xf32>
    %1496 = arith.mulf %1495, %1453 : vector<2x16xf32>
    %1497 = arith.addf %1492, %1496 : vector<2x16xf32>
    %1498 = vector.broadcast %108 : vector<2x1xf32> to vector<2x16xf32>
    %1499 = arith.mulf %1490, %1498 : vector<2x16xf32>
    %1500 = arith.truncf %1490 : vector<2x16xf32> to vector<2x16xbf16>
    %cst_256 = arith.constant dense<0.000000e+00> : vector<2x64xf32>
    %1501 = tpu.matmul %1500, %1225, %cst_256 {dimension_numbers = #tpu.dot_dimension_numbers<[1], [0], [0], [1], [0, 0, 1, 1], [], []>} : vector<2x16xbf16>, vector<16x64xbf16>, vector<2x64xf32> -> vector<2x64xf32>
    %1502 = arith.addf %1227, %1501 : vector<2x64xf32>
    %1503 = vector.extract_strided_slice %1502 {offsets = [0, 0], sizes = [2, 16], strides = [1, 1]} : vector<2x64xf32> to vector<2x16xf32>
    %1504 = arith.negf %1503 : vector<2x16xf32>
    %1505 = math.exp %1504 : vector<2x16xf32>
    %cst_257 = arith.constant 1.000000e+00 : f32
    %1506 = vector.broadcast %cst_257 : f32 to vector<2x16xf32>
    %1507 = arith.addf %1506, %1505 : vector<2x16xf32>
    %1508 = arith.divf %1506, %1507 : vector<2x16xf32>
    %1509 = vector.extract_strided_slice %1502 {offsets = [0, 16], sizes = [2, 16], strides = [1, 1]} : vector<2x64xf32> to vector<2x16xf32>
    %1510 = arith.negf %1509 : vector<2x16xf32>
    %1511 = math.exp %1510 : vector<2x16xf32>
    %cst_258 = arith.constant 1.000000e+00 : f32
    %1512 = vector.broadcast %cst_258 : f32 to vector<2x16xf32>
    %1513 = arith.addf %1512, %1511 : vector<2x16xf32>
    %1514 = arith.divf %1512, %1513 : vector<2x16xf32>
    %1515 = vector.extract_strided_slice %1502 {offsets = [0, 32], sizes = [2, 16], strides = [1, 1]} : vector<2x64xf32> to vector<2x16xf32>
    %1516 = math.tanh %1515 : vector<2x16xf32>
    %1517 = vector.extract_strided_slice %1502 {offsets = [0, 48], sizes = [2, 16], strides = [1, 1]} : vector<2x64xf32> to vector<2x16xf32>
    %1518 = arith.negf %1517 : vector<2x16xf32>
    %1519 = math.exp %1518 : vector<2x16xf32>
    %cst_259 = arith.constant 1.000000e+00 : f32
    %1520 = vector.broadcast %cst_259 : f32 to vector<2x16xf32>
    %1521 = arith.addf %1520, %1519 : vector<2x16xf32>
    %1522 = arith.divf %1520, %1521 : vector<2x16xf32>
    %1523 = arith.mulf %1514, %1497 : vector<2x16xf32>
    %1524 = arith.mulf %1508, %1516 : vector<2x16xf32>
    %1525 = arith.addf %1523, %1524 : vector<2x16xf32>
    %1526 = math.tanh %1525 : vector<2x16xf32>
    %1527 = arith.mulf %1522, %1526 : vector<2x16xf32>
    %1528 = vector.broadcast %107 : vector<2x1xf32> to vector<2x16xf32>
    %1529 = arith.mulf %1528, %1527 : vector<2x16xf32>
    %cst_260 = arith.constant 1.000000e+00 : f32
    %1530 = vector.broadcast %cst_260 : f32 to vector<2x1xf32>
    %1531 = arith.subf %1530, %107 : vector<2x1xf32>
    %1532 = vector.broadcast %1531 : vector<2x1xf32> to vector<2x16xf32>
    %1533 = arith.mulf %1532, %1490 : vector<2x16xf32>
    %1534 = arith.addf %1529, %1533 : vector<2x16xf32>
    %1535 = vector.broadcast %107 : vector<2x1xf32> to vector<2x16xf32>
    %1536 = arith.mulf %1535, %1525 : vector<2x16xf32>
    %cst_261 = arith.constant 1.000000e+00 : f32
    %1537 = vector.broadcast %cst_261 : f32 to vector<2x1xf32>
    %1538 = arith.subf %1537, %107 : vector<2x1xf32>
    %1539 = vector.broadcast %1538 : vector<2x1xf32> to vector<2x16xf32>
    %1540 = arith.mulf %1539, %1497 : vector<2x16xf32>
    %1541 = arith.addf %1536, %1540 : vector<2x16xf32>
    %1542 = vector.broadcast %107 : vector<2x1xf32> to vector<2x16xf32>
    %1543 = arith.mulf %1534, %1542 : vector<2x16xf32>
    %1544 = arith.truncf %1534 : vector<2x16xf32> to vector<2x16xbf16>
    %cst_262 = arith.constant dense<0.000000e+00> : vector<2x64xf32>
    %1545 = tpu.matmul %1544, %1225, %cst_262 {dimension_numbers = #tpu.dot_dimension_numbers<[1], [0], [0], [1], [0, 0, 1, 1], [], []>} : vector<2x16xbf16>, vector<16x64xbf16>, vector<2x64xf32> -> vector<2x64xf32>
    %1546 = arith.addf %1226, %1545 : vector<2x64xf32>
    %1547 = vector.extract_strided_slice %1546 {offsets = [0, 0], sizes = [2, 16], strides = [1, 1]} : vector<2x64xf32> to vector<2x16xf32>
    %1548 = arith.negf %1547 : vector<2x16xf32>
    %1549 = math.exp %1548 : vector<2x16xf32>
    %cst_263 = arith.constant 1.000000e+00 : f32
    %1550 = vector.broadcast %cst_263 : f32 to vector<2x16xf32>
    %1551 = arith.addf %1550, %1549 : vector<2x16xf32>
    %1552 = arith.divf %1550, %1551 : vector<2x16xf32>
    %1553 = vector.extract_strided_slice %1546 {offsets = [0, 16], sizes = [2, 16], strides = [1, 1]} : vector<2x64xf32> to vector<2x16xf32>
    %1554 = arith.negf %1553 : vector<2x16xf32>
    %1555 = math.exp %1554 : vector<2x16xf32>
    %cst_264 = arith.constant 1.000000e+00 : f32
    %1556 = vector.broadcast %cst_264 : f32 to vector<2x16xf32>
    %1557 = arith.addf %1556, %1555 : vector<2x16xf32>
    %1558 = arith.divf %1556, %1557 : vector<2x16xf32>
    %1559 = vector.extract_strided_slice %1546 {offsets = [0, 32], sizes = [2, 16], strides = [1, 1]} : vector<2x64xf32> to vector<2x16xf32>
    %1560 = math.tanh %1559 : vector<2x16xf32>
    %1561 = vector.extract_strided_slice %1546 {offsets = [0, 48], sizes = [2, 16], strides = [1, 1]} : vector<2x64xf32> to vector<2x16xf32>
    %1562 = arith.negf %1561 : vector<2x16xf32>
    %1563 = math.exp %1562 : vector<2x16xf32>
    %cst_265 = arith.constant 1.000000e+00 : f32
    %1564 = vector.broadcast %cst_265 : f32 to vector<2x16xf32>
    %1565 = arith.addf %1564, %1563 : vector<2x16xf32>
    %1566 = arith.divf %1564, %1565 : vector<2x16xf32>
    %1567 = arith.mulf %1558, %1541 : vector<2x16xf32>
    %1568 = arith.mulf %1552, %1560 : vector<2x16xf32>
    %1569 = arith.addf %1567, %1568 : vector<2x16xf32>
    %1570 = math.tanh %1569 : vector<2x16xf32>
    %1571 = arith.mulf %1566, %1570 : vector<2x16xf32>
    %1572 = vector.broadcast %106 : vector<2x1xf32> to vector<2x16xf32>
    %1573 = arith.mulf %1572, %1571 : vector<2x16xf32>
    %cst_266 = arith.constant 1.000000e+00 : f32
    %1574 = vector.broadcast %cst_266 : f32 to vector<2x1xf32>
    %1575 = arith.subf %1574, %106 : vector<2x1xf32>
    %1576 = vector.broadcast %1575 : vector<2x1xf32> to vector<2x16xf32>
    %1577 = arith.mulf %1576, %1534 : vector<2x16xf32>
    %1578 = arith.addf %1573, %1577 : vector<2x16xf32>
    %1579 = vector.broadcast %106 : vector<2x1xf32> to vector<2x16xf32>
    %1580 = arith.mulf %1579, %1569 : vector<2x16xf32>
    %cst_267 = arith.constant 1.000000e+00 : f32
    %1581 = vector.broadcast %cst_267 : f32 to vector<2x1xf32>
    %1582 = arith.subf %1581, %106 : vector<2x1xf32>
    %1583 = vector.broadcast %1582 : vector<2x1xf32> to vector<2x16xf32>
    %1584 = arith.mulf %1583, %1541 : vector<2x16xf32>
    %1585 = arith.addf %1580, %1584 : vector<2x16xf32>
    %1586 = vector.broadcast %106 : vector<2x1xf32> to vector<2x16xf32>
    %1587 = arith.mulf %1578, %1586 : vector<2x16xf32>
    %1588 = tpu.concatenate %916, %1587 in 1 : vector<2x16xf32>, vector<2x16xf32> -> vector<2x32xf32>
    %1589 = tpu.concatenate %960, %1543 in 1 : vector<2x16xf32>, vector<2x16xf32> -> vector<2x32xf32>
    %1590 = tpu.concatenate %1004, %1499 in 1 : vector<2x16xf32>, vector<2x16xf32> -> vector<2x32xf32>
    %1591 = tpu.concatenate %1048, %1455 in 1 : vector<2x16xf32>, vector<2x16xf32> -> vector<2x32xf32>
    %1592 = tpu.concatenate %1092, %1411 in 1 : vector<2x16xf32>, vector<2x16xf32> -> vector<2x32xf32>
    %1593 = tpu.concatenate %1136, %1367 in 1 : vector<2x16xf32>, vector<2x16xf32> -> vector<2x32xf32>
    %1594 = tpu.concatenate %1180, %1323 in 1 : vector<2x16xf32>, vector<2x16xf32> -> vector<2x32xf32>
    %1595 = tpu.concatenate %1224, %1279 in 1 : vector<2x16xf32>, vector<2x16xf32> -> vector<2x32xf32>
    %1596 = tpu.concatenate %1588, %1589, %1590, %1591, %1592, %1593, %1594, %1595 in 0 : vector<2x32xf32>, vector<2x32xf32>, vector<2x32xf32>, vector<2x32xf32>, vector<2x32xf32>, vector<2x32xf32>, vector<2x32xf32>, vector<2x32xf32> -> vector<16x32xf32>
    %c0_268 = arith.constant 0 : index
    %c0_269 = arith.constant 0 : index
    %1597 = vector.load %arg30[%c0_268, %c0_269] : memref<32x32xbf16, #tpu.memory_space<vmem>>, vector<32x32xbf16>
    %1598 = arith.truncf %1596 : vector<16x32xf32> to vector<16x32xbf16>
    %cst_270 = arith.constant dense<0.000000e+00> : vector<16x32xf32>
    %1599 = tpu.matmul %1598, %1597, %cst_270 {dimension_numbers = #tpu.dot_dimension_numbers<[1], [0], [0], [1], [0, 0, 1, 1], [], []>} : vector<16x32xbf16>, vector<32x32xbf16>, vector<16x32xf32> -> vector<16x32xf32>
    %c0_271 = arith.constant 0 : index
    %c0_272 = arith.constant 0 : index
    %1600 = vector.load %arg31[%c0_271, %c0_272] : memref<1x32xf32, #tpu.memory_space<vmem>>, vector<1x32xf32>
    %1601 = vector.broadcast %1600 : vector<1x32xf32> to vector<16x32xf32>
    %1602 = arith.addf %1599, %1601 : vector<16x32xf32>
    %cst_273 = arith.constant dense<0.000000e+00> : vector<16x16xf32>
    %1603 = tpu.matmul %1596, %1602, %cst_273 {dimension_numbers = #tpu.dot_dimension_numbers<[1], [1], [0], [0], [0, 0, 1, 0], [], []>} : vector<16x32xf32>, vector<16x32xf32>, vector<16x16xf32> -> vector<16x16xf32>
    %c0_274 = arith.constant 0 : index
    %c0_275 = arith.constant 0 : index
    %1604 = vector.load %arg10[%c0_274, %c0_275] : memref<16x16xf32, #tpu.memory_space<vmem>>, vector<16x16xf32>
    %cst_276 = arith.constant 0.000000e+00 : f32
    %1605 = vector.broadcast %cst_276 : f32 to vector<16x16xf32>
    %1606 = arith.cmpf oeq, %1604, %1605 : vector<16x16xf32>
    %cst_277 = arith.constant -9.99999995E+11 : f32
    %1607 = vector.broadcast %cst_277 : f32 to vector<16x16xf32>
    %1608 = arith.select %1606, %1607, %1603 : vector<16x16xi1>, vector<16x16xf32>
    %cst_278 = arith.constant dense<0xFF800000> : vector<16xf32>
    %1609 = vector.multi_reduction <maximumf>, %1608, %cst_278 [1] : vector<16x16xf32> to vector<16xf32>
    %1610 = vector.shape_cast %1609 : vector<16xf32> to vector<16x1xf32>
    %1611 = vector.broadcast %1610 : vector<16x1xf32> to vector<16x16xf32>
    %1612 = arith.subf %1608, %1611 : vector<16x16xf32>
    %1613 = math.exp %1612 : vector<16x16xf32>
    %cst_279 = arith.constant dense<0.000000e+00> : vector<16xf32>
    %1614 = vector.multi_reduction <add>, %1613, %cst_279 [1] : vector<16x16xf32> to vector<16xf32>
    %1615 = vector.shape_cast %1614 : vector<16xf32> to vector<16x1xf32>
    %1616 = tpu.reciprocal %1615 {approx = true} : vector<16x1xf32> -> vector<16x1xf32>
    %1617 = vector.broadcast %1616 : vector<16x1xf32> to vector<16x16xf32>
    %1618 = arith.mulf %1613, %1617 : vector<16x16xf32>
    %cst_280 = arith.constant dense<0.000000e+00> : vector<16x32xf32>
    %1619 = tpu.matmul %1618, %1596, %cst_280 {dimension_numbers = #tpu.dot_dimension_numbers<[1], [0], [0], [1], [0, 0, 1, 1], [], []>} : vector<16x16xf32>, vector<16x32xf32>, vector<16x32xf32> -> vector<16x32xf32>
    %c0_281 = arith.constant 0 : index
    %c0_282 = arith.constant 0 : index
    %1620 = vector.load %arg32[%c0_281, %c0_282] : memref<32x32xbf16, #tpu.memory_space<vmem>>, vector<32x32xbf16>
    %1621 = arith.truncf %1596 : vector<16x32xf32> to vector<16x32xbf16>
    %cst_283 = arith.constant dense<0.000000e+00> : vector<16x32xf32>
    %1622 = tpu.matmul %1621, %1620, %cst_283 {dimension_numbers = #tpu.dot_dimension_numbers<[1], [0], [0], [1], [0, 0, 1, 1], [], []>} : vector<16x32xbf16>, vector<32x32xbf16>, vector<16x32xf32> -> vector<16x32xf32>
    %c0_284 = arith.constant 0 : index
    %c0_285 = arith.constant 0 : index
    %1623 = vector.load %arg33[%c0_284, %c0_285] : memref<32x32xbf16, #tpu.memory_space<vmem>>, vector<32x32xbf16>
    %1624 = arith.truncf %1619 : vector<16x32xf32> to vector<16x32xbf16>
    %cst_286 = arith.constant dense<0.000000e+00> : vector<16x32xf32>
    %1625 = tpu.matmul %1624, %1623, %cst_286 {dimension_numbers = #tpu.dot_dimension_numbers<[1], [0], [0], [1], [0, 0, 1, 1], [], []>} : vector<16x32xbf16>, vector<32x32xbf16>, vector<16x32xf32> -> vector<16x32xf32>
    %1626 = arith.addf %1622, %1625 : vector<16x32xf32>
    %1627 = math.tanh %1626 : vector<16x32xf32>
    %c0_287 = arith.constant 0 : index
    %c0_288 = arith.constant 0 : index
    %1628 = vector.load %arg34[%c0_287, %c0_288] : memref<32x32xbf16, #tpu.memory_space<vmem>>, vector<32x32xbf16>
    %1629 = arith.truncf %1596 : vector<16x32xf32> to vector<16x32xbf16>
    %cst_289 = arith.constant dense<0.000000e+00> : vector<16x32xf32>
    %1630 = tpu.matmul %1629, %1628, %cst_289 {dimension_numbers = #tpu.dot_dimension_numbers<[1], [0], [0], [1], [0, 0, 1, 1], [], []>} : vector<16x32xbf16>, vector<32x32xbf16>, vector<16x32xf32> -> vector<16x32xf32>
    %c0_290 = arith.constant 0 : index
    %c0_291 = arith.constant 0 : index
    %1631 = vector.load %arg35[%c0_290, %c0_291] : memref<32x32xbf16, #tpu.memory_space<vmem>>, vector<32x32xbf16>
    %1632 = arith.truncf %1619 : vector<16x32xf32> to vector<16x32xbf16>
    %cst_292 = arith.constant dense<0.000000e+00> : vector<16x32xf32>
    %1633 = tpu.matmul %1632, %1631, %cst_292 {dimension_numbers = #tpu.dot_dimension_numbers<[1], [0], [0], [1], [0, 0, 1, 1], [], []>} : vector<16x32xbf16>, vector<32x32xbf16>, vector<16x32xf32> -> vector<16x32xf32>
    %1634 = arith.addf %1630, %1633 : vector<16x32xf32>
    %1635 = arith.negf %1634 : vector<16x32xf32>
    %1636 = math.exp %1635 : vector<16x32xf32>
    %cst_293 = arith.constant 1.000000e+00 : f32
    %1637 = vector.broadcast %cst_293 : f32 to vector<16x32xf32>
    %1638 = arith.addf %1637, %1636 : vector<16x32xf32>
    %1639 = arith.divf %1637, %1638 : vector<16x32xf32>
    %1640 = arith.mulf %1639, %1627 : vector<16x32xf32>
    %cst_294 = arith.constant 1.000000e+00 : f32
    %1641 = vector.broadcast %cst_294 : f32 to vector<16x32xf32>
    %1642 = arith.subf %1641, %1639 : vector<16x32xf32>
    %1643 = arith.mulf %1642, %1596 : vector<16x32xf32>
    %1644 = arith.addf %1640, %1643 : vector<16x32xf32>
    %c0_295 = arith.constant 0 : index
    %c0_296 = arith.constant 0 : index
    %1645 = vector.load %arg36[%c0_295, %c0_296] : memref<32x32xbf16, #tpu.memory_space<vmem>>, vector<32x32xbf16>
    %1646 = arith.truncf %1644 : vector<16x32xf32> to vector<16x32xbf16>
    %cst_297 = arith.constant dense<0.000000e+00> : vector<16x32xf32>
    %1647 = tpu.matmul %1646, %1645, %cst_297 {dimension_numbers = #tpu.dot_dimension_numbers<[1], [0], [0], [1], [0, 0, 1, 1], [], []>} : vector<16x32xbf16>, vector<32x32xbf16>, vector<16x32xf32> -> vector<16x32xf32>
    %c0_298 = arith.constant 0 : index
    %c0_299 = arith.constant 0 : index
    %1648 = vector.load %arg37[%c0_298, %c0_299] : memref<1x32xf32, #tpu.memory_space<vmem>>, vector<1x32xf32>
    %1649 = vector.broadcast %1648 : vector<1x32xf32> to vector<16x32xf32>
    %1650 = arith.addf %1647, %1649 : vector<16x32xf32>
    %c0_300 = arith.constant 0 : index
    %c0_301 = arith.constant 0 : index
    %1651 = vector.load %arg38[%c0_300, %c0_301] : memref<10x16xf32, #tpu.memory_space<vmem>>, vector<10x16xf32>
    %c0_302 = arith.constant 0 : index
    %c0_303 = arith.constant 0 : index
    %1652 = vector.load %arg39[%c0_302, %c0_303] : memref<16x16xbf16, #tpu.memory_space<vmem>>, vector<16x16xbf16>
    %1653 = arith.truncf %1651 : vector<10x16xf32> to vector<10x16xbf16>
    %cst_304 = arith.constant dense<0.000000e+00> : vector<10x16xf32>
    %1654 = tpu.matmul %1653, %1652, %cst_304 {dimension_numbers = #tpu.dot_dimension_numbers<[1], [0], [0], [1], [0, 0, 1, 1], [], []>} : vector<10x16xbf16>, vector<16x16xbf16>, vector<10x16xf32> -> vector<10x16xf32>
    %c0_305 = arith.constant 0 : index
    %c0_306 = arith.constant 0 : index
    %1655 = vector.load %arg41[%c0_305, %c0_306] : memref<1x16xf32, #tpu.memory_space<vmem>>, vector<1x16xf32>
    %1656 = vector.broadcast %1655 : vector<1x16xf32> to vector<10x16xf32>
    %1657 = arith.addf %1654, %1656 : vector<10x16xf32>
    %1658 = vector.extract_strided_slice %1657 {offsets = [0, 0], sizes = [2, 16], strides = [1, 1]} : vector<10x16xf32> to vector<2x16xf32>
    %1659 = vector.extract_strided_slice %1657 {offsets = [2, 0], sizes = [2, 16], strides = [1, 1]} : vector<10x16xf32> to vector<2x16xf32>
    %1660 = vector.extract_strided_slice %1657 {offsets = [4, 0], sizes = [2, 16], strides = [1, 1]} : vector<10x16xf32> to vector<2x16xf32>
    %1661 = vector.extract_strided_slice %1657 {offsets = [6, 0], sizes = [2, 16], strides = [1, 1]} : vector<10x16xf32> to vector<2x16xf32>
    %1662 = vector.extract_strided_slice %1657 {offsets = [8, 0], sizes = [2, 16], strides = [1, 1]} : vector<10x16xf32> to vector<2x16xf32>
    %c0_307 = arith.constant 0 : index
    %c0_308 = arith.constant 0 : index
    %1663 = vector.load %arg11[%c0_307, %c0_308] : memref<2x16xf32, #tpu.memory_space<vmem>>, vector<2x16xf32>
    %c0_309 = arith.constant 0 : index
    %c0_310 = arith.constant 0 : index
    %1664 = vector.load %arg40[%c0_309, %c0_310] : memref<32x16xbf16, #tpu.memory_space<vmem>>, vector<32x16xbf16>
    %c0_311 = arith.constant 0 : index
    %c0_312 = arith.constant 0 : index
    %1665 = vector.load %arg42[%c0_311, %c0_312] : memref<16x128xbf16, #tpu.memory_space<vmem>>, vector<16x128xbf16>
    %c0_313 = arith.constant 0 : index
    %c0_314 = arith.constant 0 : index
    %1666 = vector.load %arg43[%c0_313, %c0_314] : memref<32x128xbf16, #tpu.memory_space<vmem>>, vector<32x128xbf16>
    %c0_315 = arith.constant 0 : index
    %c0_316 = arith.constant 0 : index
    %1667 = vector.load %arg45[%c0_315, %c0_316] : memref<32x128xbf16, #tpu.memory_space<vmem>>, vector<32x128xbf16>
    %c0_317 = arith.constant 0 : index
    %c0_318 = arith.constant 0 : index
    %1668 = vector.load %arg46[%c0_317, %c0_318] : memref<32x128xbf16, #tpu.memory_space<vmem>>, vector<32x128xbf16>
    %c0_319 = arith.constant 0 : index
    %c0_320 = arith.constant 0 : index
    %1669 = vector.load %arg44[%c0_319, %c0_320] : memref<1x128xf32, #tpu.memory_space<vmem>>, vector<1x128xf32>
    %1670 = vector.shape_cast %1669 : vector<1x128xf32> to vector<1x128xf32>
    %1671 = vector.broadcast %1670 : vector<1x128xf32> to vector<2x128xf32>
    %c0_321 = arith.constant 0 : index
    %c0_322 = arith.constant 0 : index
    %1672 = vector.load %arg47[%c0_321, %c0_322] : memref<1x128xf32, #tpu.memory_space<vmem>>, vector<1x128xf32>
    %1673 = vector.shape_cast %1672 : vector<1x128xf32> to vector<1x128xf32>
    %1674 = vector.broadcast %1673 : vector<1x128xf32> to vector<2x128xf32>
    %1675 = tpu.concatenate %467, %830 in 1 : vector<2x16xf32>, vector<2x16xf32> -> vector<2x32xf32>
    %1676 = tpu.concatenate %1215, %1578 in 1 : vector<2x16xf32>, vector<2x16xf32> -> vector<2x32xf32>
    %1677 = tpu.concatenate %474, %837 in 1 : vector<2x16xf32>, vector<2x16xf32> -> vector<2x32xf32>
    %1678 = tpu.concatenate %1222, %1585 in 1 : vector<2x16xf32>, vector<2x16xf32> -> vector<2x32xf32>
    %cst_323 = arith.constant 0.000000e+00 : f32
    %1679 = vector.broadcast %cst_323 : f32 to vector<2x32xf32>
    %1680 = arith.truncf %1679 : vector<2x32xf32> to vector<2x32xbf16>
    %cst_324 = arith.constant dense<0.000000e+00> : vector<2x16xf32>
    %1681 = tpu.matmul %1680, %1664, %cst_324 {dimension_numbers = #tpu.dot_dimension_numbers<[1], [0], [0], [1], [0, 0, 1, 1], [], []>} : vector<2x32xbf16>, vector<32x16xbf16>, vector<2x16xf32> -> vector<2x16xf32>
    %1682 = arith.addf %1658, %1681 : vector<2x16xf32>
    %1683 = arith.truncf %1682 : vector<2x16xf32> to vector<2x16xbf16>
    %cst_325 = arith.constant dense<0.000000e+00> : vector<2x128xf32>
    %1684 = tpu.matmul %1683, %1665, %cst_325 {dimension_numbers = #tpu.dot_dimension_numbers<[1], [0], [0], [1], [0, 0, 1, 1], [], []>} : vector<2x16xbf16>, vector<16x128xbf16>, vector<2x128xf32> -> vector<2x128xf32>
    %1685 = arith.truncf %1675 : vector<2x32xf32> to vector<2x32xbf16>
    %cst_326 = arith.constant dense<0.000000e+00> : vector<2x128xf32>
    %1686 = tpu.matmul %1685, %1666, %cst_326 {dimension_numbers = #tpu.dot_dimension_numbers<[1], [0], [0], [1], [0, 0, 1, 1], [], []>} : vector<2x32xbf16>, vector<32x128xbf16>, vector<2x128xf32> -> vector<2x128xf32>
    %1687 = arith.addf %1684, %1686 : vector<2x128xf32>
    %1688 = arith.addf %1687, %1671 : vector<2x128xf32>
    %1689 = vector.extract_strided_slice %1688 {offsets = [0, 0], sizes = [2, 32], strides = [1, 1]} : vector<2x128xf32> to vector<2x32xf32>
    %1690 = arith.negf %1689 : vector<2x32xf32>
    %1691 = math.exp %1690 : vector<2x32xf32>
    %cst_327 = arith.constant 1.000000e+00 : f32
    %1692 = vector.broadcast %cst_327 : f32 to vector<2x32xf32>
    %1693 = arith.addf %1692, %1691 : vector<2x32xf32>
    %1694 = arith.divf %1692, %1693 : vector<2x32xf32>
    %1695 = vector.extract_strided_slice %1688 {offsets = [0, 32], sizes = [2, 32], strides = [1, 1]} : vector<2x128xf32> to vector<2x32xf32>
    %1696 = arith.negf %1695 : vector<2x32xf32>
    %1697 = math.exp %1696 : vector<2x32xf32>
    %cst_328 = arith.constant 1.000000e+00 : f32
    %1698 = vector.broadcast %cst_328 : f32 to vector<2x32xf32>
    %1699 = arith.addf %1698, %1697 : vector<2x32xf32>
    %1700 = arith.divf %1698, %1699 : vector<2x32xf32>
    %1701 = vector.extract_strided_slice %1688 {offsets = [0, 64], sizes = [2, 32], strides = [1, 1]} : vector<2x128xf32> to vector<2x32xf32>
    %1702 = math.tanh %1701 : vector<2x32xf32>
    %1703 = vector.extract_strided_slice %1688 {offsets = [0, 96], sizes = [2, 32], strides = [1, 1]} : vector<2x128xf32> to vector<2x32xf32>
    %1704 = arith.negf %1703 : vector<2x32xf32>
    %1705 = math.exp %1704 : vector<2x32xf32>
    %cst_329 = arith.constant 1.000000e+00 : f32
    %1706 = vector.broadcast %cst_329 : f32 to vector<2x32xf32>
    %1707 = arith.addf %1706, %1705 : vector<2x32xf32>
    %1708 = arith.divf %1706, %1707 : vector<2x32xf32>
    %1709 = arith.mulf %1700, %1677 : vector<2x32xf32>
    %1710 = arith.mulf %1694, %1702 : vector<2x32xf32>
    %1711 = arith.addf %1709, %1710 : vector<2x32xf32>
    %1712 = math.tanh %1711 : vector<2x32xf32>
    %1713 = arith.mulf %1708, %1712 : vector<2x32xf32>
    %1714 = arith.truncf %1713 : vector<2x32xf32> to vector<2x32xbf16>
    %cst_330 = arith.constant dense<0.000000e+00> : vector<2x128xf32>
    %1715 = tpu.matmul %1714, %1667, %cst_330 {dimension_numbers = #tpu.dot_dimension_numbers<[1], [0], [0], [1], [0, 0, 1, 1], [], []>} : vector<2x32xbf16>, vector<32x128xbf16>, vector<2x128xf32> -> vector<2x128xf32>
    %1716 = arith.truncf %1676 : vector<2x32xf32> to vector<2x32xbf16>
    %cst_331 = arith.constant dense<0.000000e+00> : vector<2x128xf32>
    %1717 = tpu.matmul %1716, %1668, %cst_331 {dimension_numbers = #tpu.dot_dimension_numbers<[1], [0], [0], [1], [0, 0, 1, 1], [], []>} : vector<2x32xbf16>, vector<32x128xbf16>, vector<2x128xf32> -> vector<2x128xf32>
    %1718 = arith.addf %1715, %1717 : vector<2x128xf32>
    %1719 = arith.addf %1718, %1674 : vector<2x128xf32>
    %1720 = vector.extract_strided_slice %1719 {offsets = [0, 0], sizes = [2, 32], strides = [1, 1]} : vector<2x128xf32> to vector<2x32xf32>
    %1721 = arith.negf %1720 : vector<2x32xf32>
    %1722 = math.exp %1721 : vector<2x32xf32>
    %cst_332 = arith.constant 1.000000e+00 : f32
    %1723 = vector.broadcast %cst_332 : f32 to vector<2x32xf32>
    %1724 = arith.addf %1723, %1722 : vector<2x32xf32>
    %1725 = arith.divf %1723, %1724 : vector<2x32xf32>
    %1726 = vector.extract_strided_slice %1719 {offsets = [0, 32], sizes = [2, 32], strides = [1, 1]} : vector<2x128xf32> to vector<2x32xf32>
    %1727 = arith.negf %1726 : vector<2x32xf32>
    %1728 = math.exp %1727 : vector<2x32xf32>
    %cst_333 = arith.constant 1.000000e+00 : f32
    %1729 = vector.broadcast %cst_333 : f32 to vector<2x32xf32>
    %1730 = arith.addf %1729, %1728 : vector<2x32xf32>
    %1731 = arith.divf %1729, %1730 : vector<2x32xf32>
    %1732 = vector.extract_strided_slice %1719 {offsets = [0, 64], sizes = [2, 32], strides = [1, 1]} : vector<2x128xf32> to vector<2x32xf32>
    %1733 = math.tanh %1732 : vector<2x32xf32>
    %1734 = vector.extract_strided_slice %1719 {offsets = [0, 96], sizes = [2, 32], strides = [1, 1]} : vector<2x128xf32> to vector<2x32xf32>
    %1735 = arith.negf %1734 : vector<2x32xf32>
    %1736 = math.exp %1735 : vector<2x32xf32>
    %cst_334 = arith.constant 1.000000e+00 : f32
    %1737 = vector.broadcast %cst_334 : f32 to vector<2x32xf32>
    %1738 = arith.addf %1737, %1736 : vector<2x32xf32>
    %1739 = arith.divf %1737, %1738 : vector<2x32xf32>
    %1740 = arith.mulf %1731, %1678 : vector<2x32xf32>
    %1741 = arith.mulf %1725, %1733 : vector<2x32xf32>
    %1742 = arith.addf %1740, %1741 : vector<2x32xf32>
    %1743 = math.tanh %1742 : vector<2x32xf32>
    %1744 = arith.mulf %1739, %1743 : vector<2x32xf32>
    %cst_335 = arith.constant dense<0.000000e+00> : vector<2x16xf32>
    %1745 = tpu.matmul %1744, %1650, %cst_335 {dimension_numbers = #tpu.dot_dimension_numbers<[1], [1], [0], [0], [0, 0, 1, 0], [], []>} : vector<2x32xf32>, vector<16x32xf32>, vector<2x16xf32> -> vector<2x16xf32>
    %cst_336 = arith.constant 0.000000e+00 : f32
    %1746 = vector.broadcast %cst_336 : f32 to vector<2x16xf32>
    %1747 = arith.cmpf oeq, %1663, %1746 : vector<2x16xf32>
    %cst_337 = arith.constant -9.99999995E+11 : f32
    %1748 = vector.broadcast %cst_337 : f32 to vector<2x16xf32>
    %1749 = arith.select %1747, %1748, %1745 : vector<2x16xi1>, vector<2x16xf32>
    %cst_338 = arith.constant dense<0xFF800000> : vector<2xf32>
    %1750 = vector.multi_reduction <maximumf>, %1749, %cst_338 [1] : vector<2x16xf32> to vector<2xf32>
    %1751 = vector.shape_cast %1750 : vector<2xf32> to vector<2x1xf32>
    %1752 = vector.broadcast %1751 : vector<2x1xf32> to vector<2x16xf32>
    %1753 = arith.subf %1749, %1752 : vector<2x16xf32>
    %1754 = math.exp %1753 : vector<2x16xf32>
    %cst_339 = arith.constant dense<0.000000e+00> : vector<2xf32>
    %1755 = vector.multi_reduction <add>, %1754, %cst_339 [1] : vector<2x16xf32> to vector<2xf32>
    %1756 = vector.shape_cast %1755 : vector<2xf32> to vector<2x1xf32>
    %1757 = tpu.reciprocal %1756 {approx = true} : vector<2x1xf32> -> vector<2x1xf32>
    %1758 = vector.broadcast %1757 : vector<2x1xf32> to vector<2x16xf32>
    %1759 = arith.mulf %1754, %1758 : vector<2x16xf32>
    %cst_340 = arith.constant dense<0.000000e+00> : vector<2x32xf32>
    %1760 = tpu.matmul %1759, %1650, %cst_340 {dimension_numbers = #tpu.dot_dimension_numbers<[1], [0], [0], [1], [0, 0, 1, 1], [], []>} : vector<2x16xf32>, vector<16x32xf32>, vector<2x32xf32> -> vector<2x32xf32>
    %1761 = arith.truncf %1760 : vector<2x32xf32> to vector<2x32xbf16>
    %cst_341 = arith.constant dense<0.000000e+00> : vector<2x16xf32>
    %1762 = tpu.matmul %1761, %1664, %cst_341 {dimension_numbers = #tpu.dot_dimension_numbers<[1], [0], [0], [1], [0, 0, 1, 1], [], []>} : vector<2x32xbf16>, vector<32x16xbf16>, vector<2x16xf32> -> vector<2x16xf32>
    %1763 = arith.addf %1659, %1762 : vector<2x16xf32>
    %1764 = arith.truncf %1763 : vector<2x16xf32> to vector<2x16xbf16>
    %cst_342 = arith.constant dense<0.000000e+00> : vector<2x128xf32>
    %1765 = tpu.matmul %1764, %1665, %cst_342 {dimension_numbers = #tpu.dot_dimension_numbers<[1], [0], [0], [1], [0, 0, 1, 1], [], []>} : vector<2x16xbf16>, vector<16x128xbf16>, vector<2x128xf32> -> vector<2x128xf32>
    %1766 = arith.truncf %1713 : vector<2x32xf32> to vector<2x32xbf16>
    %cst_343 = arith.constant dense<0.000000e+00> : vector<2x128xf32>
    %1767 = tpu.matmul %1766, %1666, %cst_343 {dimension_numbers = #tpu.dot_dimension_numbers<[1], [0], [0], [1], [0, 0, 1, 1], [], []>} : vector<2x32xbf16>, vector<32x128xbf16>, vector<2x128xf32> -> vector<2x128xf32>
    %1768 = arith.addf %1765, %1767 : vector<2x128xf32>
    %1769 = arith.addf %1768, %1671 : vector<2x128xf32>
    %1770 = vector.extract_strided_slice %1769 {offsets = [0, 0], sizes = [2, 32], strides = [1, 1]} : vector<2x128xf32> to vector<2x32xf32>
    %1771 = arith.negf %1770 : vector<2x32xf32>
    %1772 = math.exp %1771 : vector<2x32xf32>
    %cst_344 = arith.constant 1.000000e+00 : f32
    %1773 = vector.broadcast %cst_344 : f32 to vector<2x32xf32>
    %1774 = arith.addf %1773, %1772 : vector<2x32xf32>
    %1775 = arith.divf %1773, %1774 : vector<2x32xf32>
    %1776 = vector.extract_strided_slice %1769 {offsets = [0, 32], sizes = [2, 32], strides = [1, 1]} : vector<2x128xf32> to vector<2x32xf32>
    %1777 = arith.negf %1776 : vector<2x32xf32>
    %1778 = math.exp %1777 : vector<2x32xf32>
    %cst_345 = arith.constant 1.000000e+00 : f32
    %1779 = vector.broadcast %cst_345 : f32 to vector<2x32xf32>
    %1780 = arith.addf %1779, %1778 : vector<2x32xf32>
    %1781 = arith.divf %1779, %1780 : vector<2x32xf32>
    %1782 = vector.extract_strided_slice %1769 {offsets = [0, 64], sizes = [2, 32], strides = [1, 1]} : vector<2x128xf32> to vector<2x32xf32>
    %1783 = math.tanh %1782 : vector<2x32xf32>
    %1784 = vector.extract_strided_slice %1769 {offsets = [0, 96], sizes = [2, 32], strides = [1, 1]} : vector<2x128xf32> to vector<2x32xf32>
    %1785 = arith.negf %1784 : vector<2x32xf32>
    %1786 = math.exp %1785 : vector<2x32xf32>
    %cst_346 = arith.constant 1.000000e+00 : f32
    %1787 = vector.broadcast %cst_346 : f32 to vector<2x32xf32>
    %1788 = arith.addf %1787, %1786 : vector<2x32xf32>
    %1789 = arith.divf %1787, %1788 : vector<2x32xf32>
    %1790 = arith.mulf %1781, %1711 : vector<2x32xf32>
    %1791 = arith.mulf %1775, %1783 : vector<2x32xf32>
    %1792 = arith.addf %1790, %1791 : vector<2x32xf32>
    %1793 = math.tanh %1792 : vector<2x32xf32>
    %1794 = arith.mulf %1789, %1793 : vector<2x32xf32>
    %1795 = arith.truncf %1794 : vector<2x32xf32> to vector<2x32xbf16>
    %cst_347 = arith.constant dense<0.000000e+00> : vector<2x128xf32>
    %1796 = tpu.matmul %1795, %1667, %cst_347 {dimension_numbers = #tpu.dot_dimension_numbers<[1], [0], [0], [1], [0, 0, 1, 1], [], []>} : vector<2x32xbf16>, vector<32x128xbf16>, vector<2x128xf32> -> vector<2x128xf32>
    %1797 = arith.truncf %1744 : vector<2x32xf32> to vector<2x32xbf16>
    %cst_348 = arith.constant dense<0.000000e+00> : vector<2x128xf32>
    %1798 = tpu.matmul %1797, %1668, %cst_348 {dimension_numbers = #tpu.dot_dimension_numbers<[1], [0], [0], [1], [0, 0, 1, 1], [], []>} : vector<2x32xbf16>, vector<32x128xbf16>, vector<2x128xf32> -> vector<2x128xf32>
    %1799 = arith.addf %1796, %1798 : vector<2x128xf32>
    %1800 = arith.addf %1799, %1674 : vector<2x128xf32>
    %1801 = vector.extract_strided_slice %1800 {offsets = [0, 0], sizes = [2, 32], strides = [1, 1]} : vector<2x128xf32> to vector<2x32xf32>
    %1802 = arith.negf %1801 : vector<2x32xf32>
    %1803 = math.exp %1802 : vector<2x32xf32>
    %cst_349 = arith.constant 1.000000e+00 : f32
    %1804 = vector.broadcast %cst_349 : f32 to vector<2x32xf32>
    %1805 = arith.addf %1804, %1803 : vector<2x32xf32>
    %1806 = arith.divf %1804, %1805 : vector<2x32xf32>
    %1807 = vector.extract_strided_slice %1800 {offsets = [0, 32], sizes = [2, 32], strides = [1, 1]} : vector<2x128xf32> to vector<2x32xf32>
    %1808 = arith.negf %1807 : vector<2x32xf32>
    %1809 = math.exp %1808 : vector<2x32xf32>
    %cst_350 = arith.constant 1.000000e+00 : f32
    %1810 = vector.broadcast %cst_350 : f32 to vector<2x32xf32>
    %1811 = arith.addf %1810, %1809 : vector<2x32xf32>
    %1812 = arith.divf %1810, %1811 : vector<2x32xf32>
    %1813 = vector.extract_strided_slice %1800 {offsets = [0, 64], sizes = [2, 32], strides = [1, 1]} : vector<2x128xf32> to vector<2x32xf32>
    %1814 = math.tanh %1813 : vector<2x32xf32>
    %1815 = vector.extract_strided_slice %1800 {offsets = [0, 96], sizes = [2, 32], strides = [1, 1]} : vector<2x128xf32> to vector<2x32xf32>
    %1816 = arith.negf %1815 : vector<2x32xf32>
    %1817 = math.exp %1816 : vector<2x32xf32>
    %cst_351 = arith.constant 1.000000e+00 : f32
    %1818 = vector.broadcast %cst_351 : f32 to vector<2x32xf32>
    %1819 = arith.addf %1818, %1817 : vector<2x32xf32>
    %1820 = arith.divf %1818, %1819 : vector<2x32xf32>
    %1821 = arith.mulf %1812, %1742 : vector<2x32xf32>
    %1822 = arith.mulf %1806, %1814 : vector<2x32xf32>
    %1823 = arith.addf %1821, %1822 : vector<2x32xf32>
    %1824 = math.tanh %1823 : vector<2x32xf32>
    %1825 = arith.mulf %1820, %1824 : vector<2x32xf32>
    %cst_352 = arith.constant dense<0.000000e+00> : vector<2x16xf32>
    %1826 = tpu.matmul %1825, %1650, %cst_352 {dimension_numbers = #tpu.dot_dimension_numbers<[1], [1], [0], [0], [0, 0, 1, 0], [], []>} : vector<2x32xf32>, vector<16x32xf32>, vector<2x16xf32> -> vector<2x16xf32>
    %cst_353 = arith.constant 0.000000e+00 : f32
    %1827 = vector.broadcast %cst_353 : f32 to vector<2x16xf32>
    %1828 = arith.cmpf oeq, %1663, %1827 : vector<2x16xf32>
    %cst_354 = arith.constant -9.99999995E+11 : f32
    %1829 = vector.broadcast %cst_354 : f32 to vector<2x16xf32>
    %1830 = arith.select %1828, %1829, %1826 : vector<2x16xi1>, vector<2x16xf32>
    %cst_355 = arith.constant dense<0xFF800000> : vector<2xf32>
    %1831 = vector.multi_reduction <maximumf>, %1830, %cst_355 [1] : vector<2x16xf32> to vector<2xf32>
    %1832 = vector.shape_cast %1831 : vector<2xf32> to vector<2x1xf32>
    %1833 = vector.broadcast %1832 : vector<2x1xf32> to vector<2x16xf32>
    %1834 = arith.subf %1830, %1833 : vector<2x16xf32>
    %1835 = math.exp %1834 : vector<2x16xf32>
    %cst_356 = arith.constant dense<0.000000e+00> : vector<2xf32>
    %1836 = vector.multi_reduction <add>, %1835, %cst_356 [1] : vector<2x16xf32> to vector<2xf32>
    %1837 = vector.shape_cast %1836 : vector<2xf32> to vector<2x1xf32>
    %1838 = tpu.reciprocal %1837 {approx = true} : vector<2x1xf32> -> vector<2x1xf32>
    %1839 = vector.broadcast %1838 : vector<2x1xf32> to vector<2x16xf32>
    %1840 = arith.mulf %1835, %1839 : vector<2x16xf32>
    %cst_357 = arith.constant dense<0.000000e+00> : vector<2x32xf32>
    %1841 = tpu.matmul %1840, %1650, %cst_357 {dimension_numbers = #tpu.dot_dimension_numbers<[1], [0], [0], [1], [0, 0, 1, 1], [], []>} : vector<2x16xf32>, vector<16x32xf32>, vector<2x32xf32> -> vector<2x32xf32>
    %1842 = arith.truncf %1841 : vector<2x32xf32> to vector<2x32xbf16>
    %cst_358 = arith.constant dense<0.000000e+00> : vector<2x16xf32>
    %1843 = tpu.matmul %1842, %1664, %cst_358 {dimension_numbers = #tpu.dot_dimension_numbers<[1], [0], [0], [1], [0, 0, 1, 1], [], []>} : vector<2x32xbf16>, vector<32x16xbf16>, vector<2x16xf32> -> vector<2x16xf32>
    %1844 = arith.addf %1660, %1843 : vector<2x16xf32>
    %1845 = arith.truncf %1844 : vector<2x16xf32> to vector<2x16xbf16>
    %cst_359 = arith.constant dense<0.000000e+00> : vector<2x128xf32>
    %1846 = tpu.matmul %1845, %1665, %cst_359 {dimension_numbers = #tpu.dot_dimension_numbers<[1], [0], [0], [1], [0, 0, 1, 1], [], []>} : vector<2x16xbf16>, vector<16x128xbf16>, vector<2x128xf32> -> vector<2x128xf32>
    %1847 = arith.truncf %1794 : vector<2x32xf32> to vector<2x32xbf16>
    %cst_360 = arith.constant dense<0.000000e+00> : vector<2x128xf32>
    %1848 = tpu.matmul %1847, %1666, %cst_360 {dimension_numbers = #tpu.dot_dimension_numbers<[1], [0], [0], [1], [0, 0, 1, 1], [], []>} : vector<2x32xbf16>, vector<32x128xbf16>, vector<2x128xf32> -> vector<2x128xf32>
    %1849 = arith.addf %1846, %1848 : vector<2x128xf32>
    %1850 = arith.addf %1849, %1671 : vector<2x128xf32>
    %1851 = vector.extract_strided_slice %1850 {offsets = [0, 0], sizes = [2, 32], strides = [1, 1]} : vector<2x128xf32> to vector<2x32xf32>
    %1852 = arith.negf %1851 : vector<2x32xf32>
    %1853 = math.exp %1852 : vector<2x32xf32>
    %cst_361 = arith.constant 1.000000e+00 : f32
    %1854 = vector.broadcast %cst_361 : f32 to vector<2x32xf32>
    %1855 = arith.addf %1854, %1853 : vector<2x32xf32>
    %1856 = arith.divf %1854, %1855 : vector<2x32xf32>
    %1857 = vector.extract_strided_slice %1850 {offsets = [0, 32], sizes = [2, 32], strides = [1, 1]} : vector<2x128xf32> to vector<2x32xf32>
    %1858 = arith.negf %1857 : vector<2x32xf32>
    %1859 = math.exp %1858 : vector<2x32xf32>
    %cst_362 = arith.constant 1.000000e+00 : f32
    %1860 = vector.broadcast %cst_362 : f32 to vector<2x32xf32>
    %1861 = arith.addf %1860, %1859 : vector<2x32xf32>
    %1862 = arith.divf %1860, %1861 : vector<2x32xf32>
    %1863 = vector.extract_strided_slice %1850 {offsets = [0, 64], sizes = [2, 32], strides = [1, 1]} : vector<2x128xf32> to vector<2x32xf32>
    %1864 = math.tanh %1863 : vector<2x32xf32>
    %1865 = vector.extract_strided_slice %1850 {offsets = [0, 96], sizes = [2, 32], strides = [1, 1]} : vector<2x128xf32> to vector<2x32xf32>
    %1866 = arith.negf %1865 : vector<2x32xf32>
    %1867 = math.exp %1866 : vector<2x32xf32>
    %cst_363 = arith.constant 1.000000e+00 : f32
    %1868 = vector.broadcast %cst_363 : f32 to vector<2x32xf32>
    %1869 = arith.addf %1868, %1867 : vector<2x32xf32>
    %1870 = arith.divf %1868, %1869 : vector<2x32xf32>
    %1871 = arith.mulf %1862, %1792 : vector<2x32xf32>
    %1872 = arith.mulf %1856, %1864 : vector<2x32xf32>
    %1873 = arith.addf %1871, %1872 : vector<2x32xf32>
    %1874 = math.tanh %1873 : vector<2x32xf32>
    %1875 = arith.mulf %1870, %1874 : vector<2x32xf32>
    %1876 = arith.truncf %1875 : vector<2x32xf32> to vector<2x32xbf16>
    %cst_364 = arith.constant dense<0.000000e+00> : vector<2x128xf32>
    %1877 = tpu.matmul %1876, %1667, %cst_364 {dimension_numbers = #tpu.dot_dimension_numbers<[1], [0], [0], [1], [0, 0, 1, 1], [], []>} : vector<2x32xbf16>, vector<32x128xbf16>, vector<2x128xf32> -> vector<2x128xf32>
    %1878 = arith.truncf %1825 : vector<2x32xf32> to vector<2x32xbf16>
    %cst_365 = arith.constant dense<0.000000e+00> : vector<2x128xf32>
    %1879 = tpu.matmul %1878, %1668, %cst_365 {dimension_numbers = #tpu.dot_dimension_numbers<[1], [0], [0], [1], [0, 0, 1, 1], [], []>} : vector<2x32xbf16>, vector<32x128xbf16>, vector<2x128xf32> -> vector<2x128xf32>
    %1880 = arith.addf %1877, %1879 : vector<2x128xf32>
    %1881 = arith.addf %1880, %1674 : vector<2x128xf32>
    %1882 = vector.extract_strided_slice %1881 {offsets = [0, 0], sizes = [2, 32], strides = [1, 1]} : vector<2x128xf32> to vector<2x32xf32>
    %1883 = arith.negf %1882 : vector<2x32xf32>
    %1884 = math.exp %1883 : vector<2x32xf32>
    %cst_366 = arith.constant 1.000000e+00 : f32
    %1885 = vector.broadcast %cst_366 : f32 to vector<2x32xf32>
    %1886 = arith.addf %1885, %1884 : vector<2x32xf32>
    %1887 = arith.divf %1885, %1886 : vector<2x32xf32>
    %1888 = vector.extract_strided_slice %1881 {offsets = [0, 32], sizes = [2, 32], strides = [1, 1]} : vector<2x128xf32> to vector<2x32xf32>
    %1889 = arith.negf %1888 : vector<2x32xf32>
    %1890 = math.exp %1889 : vector<2x32xf32>
    %cst_367 = arith.constant 1.000000e+00 : f32
    %1891 = vector.broadcast %cst_367 : f32 to vector<2x32xf32>
    %1892 = arith.addf %1891, %1890 : vector<2x32xf32>
    %1893 = arith.divf %1891, %1892 : vector<2x32xf32>
    %1894 = vector.extract_strided_slice %1881 {offsets = [0, 64], sizes = [2, 32], strides = [1, 1]} : vector<2x128xf32> to vector<2x32xf32>
    %1895 = math.tanh %1894 : vector<2x32xf32>
    %1896 = vector.extract_strided_slice %1881 {offsets = [0, 96], sizes = [2, 32], strides = [1, 1]} : vector<2x128xf32> to vector<2x32xf32>
    %1897 = arith.negf %1896 : vector<2x32xf32>
    %1898 = math.exp %1897 : vector<2x32xf32>
    %cst_368 = arith.constant 1.000000e+00 : f32
    %1899 = vector.broadcast %cst_368 : f32 to vector<2x32xf32>
    %1900 = arith.addf %1899, %1898 : vector<2x32xf32>
    %1901 = arith.divf %1899, %1900 : vector<2x32xf32>
    %1902 = arith.mulf %1893, %1823 : vector<2x32xf32>
    %1903 = arith.mulf %1887, %1895 : vector<2x32xf32>
    %1904 = arith.addf %1902, %1903 : vector<2x32xf32>
    %1905 = math.tanh %1904 : vector<2x32xf32>
    %1906 = arith.mulf %1901, %1905 : vector<2x32xf32>
    %cst_369 = arith.constant dense<0.000000e+00> : vector<2x16xf32>
    %1907 = tpu.matmul %1906, %1650, %cst_369 {dimension_numbers = #tpu.dot_dimension_numbers<[1], [1], [0], [0], [0, 0, 1, 0], [], []>} : vector<2x32xf32>, vector<16x32xf32>, vector<2x16xf32> -> vector<2x16xf32>
    %cst_370 = arith.constant 0.000000e+00 : f32
    %1908 = vector.broadcast %cst_370 : f32 to vector<2x16xf32>
    %1909 = arith.cmpf oeq, %1663, %1908 : vector<2x16xf32>
    %cst_371 = arith.constant -9.99999995E+11 : f32
    %1910 = vector.broadcast %cst_371 : f32 to vector<2x16xf32>
    %1911 = arith.select %1909, %1910, %1907 : vector<2x16xi1>, vector<2x16xf32>
    %cst_372 = arith.constant dense<0xFF800000> : vector<2xf32>
    %1912 = vector.multi_reduction <maximumf>, %1911, %cst_372 [1] : vector<2x16xf32> to vector<2xf32>
    %1913 = vector.shape_cast %1912 : vector<2xf32> to vector<2x1xf32>
    %1914 = vector.broadcast %1913 : vector<2x1xf32> to vector<2x16xf32>
    %1915 = arith.subf %1911, %1914 : vector<2x16xf32>
    %1916 = math.exp %1915 : vector<2x16xf32>
    %cst_373 = arith.constant dense<0.000000e+00> : vector<2xf32>
    %1917 = vector.multi_reduction <add>, %1916, %cst_373 [1] : vector<2x16xf32> to vector<2xf32>
    %1918 = vector.shape_cast %1917 : vector<2xf32> to vector<2x1xf32>
    %1919 = tpu.reciprocal %1918 {approx = true} : vector<2x1xf32> -> vector<2x1xf32>
    %1920 = vector.broadcast %1919 : vector<2x1xf32> to vector<2x16xf32>
    %1921 = arith.mulf %1916, %1920 : vector<2x16xf32>
    %cst_374 = arith.constant dense<0.000000e+00> : vector<2x32xf32>
    %1922 = tpu.matmul %1921, %1650, %cst_374 {dimension_numbers = #tpu.dot_dimension_numbers<[1], [0], [0], [1], [0, 0, 1, 1], [], []>} : vector<2x16xf32>, vector<16x32xf32>, vector<2x32xf32> -> vector<2x32xf32>
    %1923 = arith.truncf %1922 : vector<2x32xf32> to vector<2x32xbf16>
    %cst_375 = arith.constant dense<0.000000e+00> : vector<2x16xf32>
    %1924 = tpu.matmul %1923, %1664, %cst_375 {dimension_numbers = #tpu.dot_dimension_numbers<[1], [0], [0], [1], [0, 0, 1, 1], [], []>} : vector<2x32xbf16>, vector<32x16xbf16>, vector<2x16xf32> -> vector<2x16xf32>
    %1925 = arith.addf %1661, %1924 : vector<2x16xf32>
    %1926 = arith.truncf %1925 : vector<2x16xf32> to vector<2x16xbf16>
    %cst_376 = arith.constant dense<0.000000e+00> : vector<2x128xf32>
    %1927 = tpu.matmul %1926, %1665, %cst_376 {dimension_numbers = #tpu.dot_dimension_numbers<[1], [0], [0], [1], [0, 0, 1, 1], [], []>} : vector<2x16xbf16>, vector<16x128xbf16>, vector<2x128xf32> -> vector<2x128xf32>
    %1928 = arith.truncf %1875 : vector<2x32xf32> to vector<2x32xbf16>
    %cst_377 = arith.constant dense<0.000000e+00> : vector<2x128xf32>
    %1929 = tpu.matmul %1928, %1666, %cst_377 {dimension_numbers = #tpu.dot_dimension_numbers<[1], [0], [0], [1], [0, 0, 1, 1], [], []>} : vector<2x32xbf16>, vector<32x128xbf16>, vector<2x128xf32> -> vector<2x128xf32>
    %1930 = arith.addf %1927, %1929 : vector<2x128xf32>
    %1931 = arith.addf %1930, %1671 : vector<2x128xf32>
    %1932 = vector.extract_strided_slice %1931 {offsets = [0, 0], sizes = [2, 32], strides = [1, 1]} : vector<2x128xf32> to vector<2x32xf32>
    %1933 = arith.negf %1932 : vector<2x32xf32>
    %1934 = math.exp %1933 : vector<2x32xf32>
    %cst_378 = arith.constant 1.000000e+00 : f32
    %1935 = vector.broadcast %cst_378 : f32 to vector<2x32xf32>
    %1936 = arith.addf %1935, %1934 : vector<2x32xf32>
    %1937 = arith.divf %1935, %1936 : vector<2x32xf32>
    %1938 = vector.extract_strided_slice %1931 {offsets = [0, 32], sizes = [2, 32], strides = [1, 1]} : vector<2x128xf32> to vector<2x32xf32>
    %1939 = arith.negf %1938 : vector<2x32xf32>
    %1940 = math.exp %1939 : vector<2x32xf32>
    %cst_379 = arith.constant 1.000000e+00 : f32
    %1941 = vector.broadcast %cst_379 : f32 to vector<2x32xf32>
    %1942 = arith.addf %1941, %1940 : vector<2x32xf32>
    %1943 = arith.divf %1941, %1942 : vector<2x32xf32>
    %1944 = vector.extract_strided_slice %1931 {offsets = [0, 64], sizes = [2, 32], strides = [1, 1]} : vector<2x128xf32> to vector<2x32xf32>
    %1945 = math.tanh %1944 : vector<2x32xf32>
    %1946 = vector.extract_strided_slice %1931 {offsets = [0, 96], sizes = [2, 32], strides = [1, 1]} : vector<2x128xf32> to vector<2x32xf32>
    %1947 = arith.negf %1946 : vector<2x32xf32>
    %1948 = math.exp %1947 : vector<2x32xf32>
    %cst_380 = arith.constant 1.000000e+00 : f32
    %1949 = vector.broadcast %cst_380 : f32 to vector<2x32xf32>
    %1950 = arith.addf %1949, %1948 : vector<2x32xf32>
    %1951 = arith.divf %1949, %1950 : vector<2x32xf32>
    %1952 = arith.mulf %1943, %1873 : vector<2x32xf32>
    %1953 = arith.mulf %1937, %1945 : vector<2x32xf32>
    %1954 = arith.addf %1952, %1953 : vector<2x32xf32>
    %1955 = math.tanh %1954 : vector<2x32xf32>
    %1956 = arith.mulf %1951, %1955 : vector<2x32xf32>
    %1957 = arith.truncf %1956 : vector<2x32xf32> to vector<2x32xbf16>
    %cst_381 = arith.constant dense<0.000000e+00> : vector<2x128xf32>
    %1958 = tpu.matmul %1957, %1667, %cst_381 {dimension_numbers = #tpu.dot_dimension_numbers<[1], [0], [0], [1], [0, 0, 1, 1], [], []>} : vector<2x32xbf16>, vector<32x128xbf16>, vector<2x128xf32> -> vector<2x128xf32>
    %1959 = arith.truncf %1906 : vector<2x32xf32> to vector<2x32xbf16>
    %cst_382 = arith.constant dense<0.000000e+00> : vector<2x128xf32>
    %1960 = tpu.matmul %1959, %1668, %cst_382 {dimension_numbers = #tpu.dot_dimension_numbers<[1], [0], [0], [1], [0, 0, 1, 1], [], []>} : vector<2x32xbf16>, vector<32x128xbf16>, vector<2x128xf32> -> vector<2x128xf32>
    %1961 = arith.addf %1958, %1960 : vector<2x128xf32>
    %1962 = arith.addf %1961, %1674 : vector<2x128xf32>
    %1963 = vector.extract_strided_slice %1962 {offsets = [0, 0], sizes = [2, 32], strides = [1, 1]} : vector<2x128xf32> to vector<2x32xf32>
    %1964 = arith.negf %1963 : vector<2x32xf32>
    %1965 = math.exp %1964 : vector<2x32xf32>
    %cst_383 = arith.constant 1.000000e+00 : f32
    %1966 = vector.broadcast %cst_383 : f32 to vector<2x32xf32>
    %1967 = arith.addf %1966, %1965 : vector<2x32xf32>
    %1968 = arith.divf %1966, %1967 : vector<2x32xf32>
    %1969 = vector.extract_strided_slice %1962 {offsets = [0, 32], sizes = [2, 32], strides = [1, 1]} : vector<2x128xf32> to vector<2x32xf32>
    %1970 = arith.negf %1969 : vector<2x32xf32>
    %1971 = math.exp %1970 : vector<2x32xf32>
    %cst_384 = arith.constant 1.000000e+00 : f32
    %1972 = vector.broadcast %cst_384 : f32 to vector<2x32xf32>
    %1973 = arith.addf %1972, %1971 : vector<2x32xf32>
    %1974 = arith.divf %1972, %1973 : vector<2x32xf32>
    %1975 = vector.extract_strided_slice %1962 {offsets = [0, 64], sizes = [2, 32], strides = [1, 1]} : vector<2x128xf32> to vector<2x32xf32>
    %1976 = math.tanh %1975 : vector<2x32xf32>
    %1977 = vector.extract_strided_slice %1962 {offsets = [0, 96], sizes = [2, 32], strides = [1, 1]} : vector<2x128xf32> to vector<2x32xf32>
    %1978 = arith.negf %1977 : vector<2x32xf32>
    %1979 = math.exp %1978 : vector<2x32xf32>
    %cst_385 = arith.constant 1.000000e+00 : f32
    %1980 = vector.broadcast %cst_385 : f32 to vector<2x32xf32>
    %1981 = arith.addf %1980, %1979 : vector<2x32xf32>
    %1982 = arith.divf %1980, %1981 : vector<2x32xf32>
    %1983 = arith.mulf %1974, %1904 : vector<2x32xf32>
    %1984 = arith.mulf %1968, %1976 : vector<2x32xf32>
    %1985 = arith.addf %1983, %1984 : vector<2x32xf32>
    %1986 = math.tanh %1985 : vector<2x32xf32>
    %1987 = arith.mulf %1982, %1986 : vector<2x32xf32>
    %cst_386 = arith.constant dense<0.000000e+00> : vector<2x16xf32>
    %1988 = tpu.matmul %1987, %1650, %cst_386 {dimension_numbers = #tpu.dot_dimension_numbers<[1], [1], [0], [0], [0, 0, 1, 0], [], []>} : vector<2x32xf32>, vector<16x32xf32>, vector<2x16xf32> -> vector<2x16xf32>
    %cst_387 = arith.constant 0.000000e+00 : f32
    %1989 = vector.broadcast %cst_387 : f32 to vector<2x16xf32>
    %1990 = arith.cmpf oeq, %1663, %1989 : vector<2x16xf32>
    %cst_388 = arith.constant -9.99999995E+11 : f32
    %1991 = vector.broadcast %cst_388 : f32 to vector<2x16xf32>
    %1992 = arith.select %1990, %1991, %1988 : vector<2x16xi1>, vector<2x16xf32>
    %cst_389 = arith.constant dense<0xFF800000> : vector<2xf32>
    %1993 = vector.multi_reduction <maximumf>, %1992, %cst_389 [1] : vector<2x16xf32> to vector<2xf32>
    %1994 = vector.shape_cast %1993 : vector<2xf32> to vector<2x1xf32>
    %1995 = vector.broadcast %1994 : vector<2x1xf32> to vector<2x16xf32>
    %1996 = arith.subf %1992, %1995 : vector<2x16xf32>
    %1997 = math.exp %1996 : vector<2x16xf32>
    %cst_390 = arith.constant dense<0.000000e+00> : vector<2xf32>
    %1998 = vector.multi_reduction <add>, %1997, %cst_390 [1] : vector<2x16xf32> to vector<2xf32>
    %1999 = vector.shape_cast %1998 : vector<2xf32> to vector<2x1xf32>
    %2000 = tpu.reciprocal %1999 {approx = true} : vector<2x1xf32> -> vector<2x1xf32>
    %2001 = vector.broadcast %2000 : vector<2x1xf32> to vector<2x16xf32>
    %2002 = arith.mulf %1997, %2001 : vector<2x16xf32>
    %cst_391 = arith.constant dense<0.000000e+00> : vector<2x32xf32>
    %2003 = tpu.matmul %2002, %1650, %cst_391 {dimension_numbers = #tpu.dot_dimension_numbers<[1], [0], [0], [1], [0, 0, 1, 1], [], []>} : vector<2x16xf32>, vector<16x32xf32>, vector<2x32xf32> -> vector<2x32xf32>
    %2004 = arith.truncf %2003 : vector<2x32xf32> to vector<2x32xbf16>
    %cst_392 = arith.constant dense<0.000000e+00> : vector<2x16xf32>
    %2005 = tpu.matmul %2004, %1664, %cst_392 {dimension_numbers = #tpu.dot_dimension_numbers<[1], [0], [0], [1], [0, 0, 1, 1], [], []>} : vector<2x32xbf16>, vector<32x16xbf16>, vector<2x16xf32> -> vector<2x16xf32>
    %2006 = arith.addf %1662, %2005 : vector<2x16xf32>
    %2007 = arith.truncf %2006 : vector<2x16xf32> to vector<2x16xbf16>
    %cst_393 = arith.constant dense<0.000000e+00> : vector<2x128xf32>
    %2008 = tpu.matmul %2007, %1665, %cst_393 {dimension_numbers = #tpu.dot_dimension_numbers<[1], [0], [0], [1], [0, 0, 1, 1], [], []>} : vector<2x16xbf16>, vector<16x128xbf16>, vector<2x128xf32> -> vector<2x128xf32>
    %2009 = arith.truncf %1956 : vector<2x32xf32> to vector<2x32xbf16>
    %cst_394 = arith.constant dense<0.000000e+00> : vector<2x128xf32>
    %2010 = tpu.matmul %2009, %1666, %cst_394 {dimension_numbers = #tpu.dot_dimension_numbers<[1], [0], [0], [1], [0, 0, 1, 1], [], []>} : vector<2x32xbf16>, vector<32x128xbf16>, vector<2x128xf32> -> vector<2x128xf32>
    %2011 = arith.addf %2008, %2010 : vector<2x128xf32>
    %2012 = arith.addf %2011, %1671 : vector<2x128xf32>
    %2013 = vector.extract_strided_slice %2012 {offsets = [0, 0], sizes = [2, 32], strides = [1, 1]} : vector<2x128xf32> to vector<2x32xf32>
    %2014 = arith.negf %2013 : vector<2x32xf32>
    %2015 = math.exp %2014 : vector<2x32xf32>
    %cst_395 = arith.constant 1.000000e+00 : f32
    %2016 = vector.broadcast %cst_395 : f32 to vector<2x32xf32>
    %2017 = arith.addf %2016, %2015 : vector<2x32xf32>
    %2018 = arith.divf %2016, %2017 : vector<2x32xf32>
    %2019 = vector.extract_strided_slice %2012 {offsets = [0, 32], sizes = [2, 32], strides = [1, 1]} : vector<2x128xf32> to vector<2x32xf32>
    %2020 = arith.negf %2019 : vector<2x32xf32>
    %2021 = math.exp %2020 : vector<2x32xf32>
    %cst_396 = arith.constant 1.000000e+00 : f32
    %2022 = vector.broadcast %cst_396 : f32 to vector<2x32xf32>
    %2023 = arith.addf %2022, %2021 : vector<2x32xf32>
    %2024 = arith.divf %2022, %2023 : vector<2x32xf32>
    %2025 = vector.extract_strided_slice %2012 {offsets = [0, 64], sizes = [2, 32], strides = [1, 1]} : vector<2x128xf32> to vector<2x32xf32>
    %2026 = math.tanh %2025 : vector<2x32xf32>
    %2027 = vector.extract_strided_slice %2012 {offsets = [0, 96], sizes = [2, 32], strides = [1, 1]} : vector<2x128xf32> to vector<2x32xf32>
    %2028 = arith.negf %2027 : vector<2x32xf32>
    %2029 = math.exp %2028 : vector<2x32xf32>
    %cst_397 = arith.constant 1.000000e+00 : f32
    %2030 = vector.broadcast %cst_397 : f32 to vector<2x32xf32>
    %2031 = arith.addf %2030, %2029 : vector<2x32xf32>
    %2032 = arith.divf %2030, %2031 : vector<2x32xf32>
    %2033 = arith.mulf %2024, %1954 : vector<2x32xf32>
    %2034 = arith.mulf %2018, %2026 : vector<2x32xf32>
    %2035 = arith.addf %2033, %2034 : vector<2x32xf32>
    %2036 = math.tanh %2035 : vector<2x32xf32>
    %2037 = arith.mulf %2032, %2036 : vector<2x32xf32>
    %2038 = arith.truncf %2037 : vector<2x32xf32> to vector<2x32xbf16>
    %cst_398 = arith.constant dense<0.000000e+00> : vector<2x128xf32>
    %2039 = tpu.matmul %2038, %1667, %cst_398 {dimension_numbers = #tpu.dot_dimension_numbers<[1], [0], [0], [1], [0, 0, 1, 1], [], []>} : vector<2x32xbf16>, vector<32x128xbf16>, vector<2x128xf32> -> vector<2x128xf32>
    %2040 = arith.truncf %1987 : vector<2x32xf32> to vector<2x32xbf16>
    %cst_399 = arith.constant dense<0.000000e+00> : vector<2x128xf32>
    %2041 = tpu.matmul %2040, %1668, %cst_399 {dimension_numbers = #tpu.dot_dimension_numbers<[1], [0], [0], [1], [0, 0, 1, 1], [], []>} : vector<2x32xbf16>, vector<32x128xbf16>, vector<2x128xf32> -> vector<2x128xf32>
    %2042 = arith.addf %2039, %2041 : vector<2x128xf32>
    %2043 = arith.addf %2042, %1674 : vector<2x128xf32>
    %2044 = vector.extract_strided_slice %2043 {offsets = [0, 0], sizes = [2, 32], strides = [1, 1]} : vector<2x128xf32> to vector<2x32xf32>
    %2045 = arith.negf %2044 : vector<2x32xf32>
    %2046 = math.exp %2045 : vector<2x32xf32>
    %cst_400 = arith.constant 1.000000e+00 : f32
    %2047 = vector.broadcast %cst_400 : f32 to vector<2x32xf32>
    %2048 = arith.addf %2047, %2046 : vector<2x32xf32>
    %2049 = arith.divf %2047, %2048 : vector<2x32xf32>
    %2050 = vector.extract_strided_slice %2043 {offsets = [0, 32], sizes = [2, 32], strides = [1, 1]} : vector<2x128xf32> to vector<2x32xf32>
    %2051 = arith.negf %2050 : vector<2x32xf32>
    %2052 = math.exp %2051 : vector<2x32xf32>
    %cst_401 = arith.constant 1.000000e+00 : f32
    %2053 = vector.broadcast %cst_401 : f32 to vector<2x32xf32>
    %2054 = arith.addf %2053, %2052 : vector<2x32xf32>
    %2055 = arith.divf %2053, %2054 : vector<2x32xf32>
    %2056 = vector.extract_strided_slice %2043 {offsets = [0, 64], sizes = [2, 32], strides = [1, 1]} : vector<2x128xf32> to vector<2x32xf32>
    %2057 = math.tanh %2056 : vector<2x32xf32>
    %2058 = vector.extract_strided_slice %2043 {offsets = [0, 96], sizes = [2, 32], strides = [1, 1]} : vector<2x128xf32> to vector<2x32xf32>
    %2059 = arith.negf %2058 : vector<2x32xf32>
    %2060 = math.exp %2059 : vector<2x32xf32>
    %cst_402 = arith.constant 1.000000e+00 : f32
    %2061 = vector.broadcast %cst_402 : f32 to vector<2x32xf32>
    %2062 = arith.addf %2061, %2060 : vector<2x32xf32>
    %2063 = arith.divf %2061, %2062 : vector<2x32xf32>
    %2064 = arith.mulf %2055, %1985 : vector<2x32xf32>
    %2065 = arith.mulf %2049, %2057 : vector<2x32xf32>
    %2066 = arith.addf %2064, %2065 : vector<2x32xf32>
    %2067 = math.tanh %2066 : vector<2x32xf32>
    %2068 = arith.mulf %2063, %2067 : vector<2x32xf32>
    %cst_403 = arith.constant dense<0.000000e+00> : vector<2x16xf32>
    %2069 = tpu.matmul %2068, %1650, %cst_403 {dimension_numbers = #tpu.dot_dimension_numbers<[1], [1], [0], [0], [0, 0, 1, 0], [], []>} : vector<2x32xf32>, vector<16x32xf32>, vector<2x16xf32> -> vector<2x16xf32>
    %cst_404 = arith.constant 0.000000e+00 : f32
    %2070 = vector.broadcast %cst_404 : f32 to vector<2x16xf32>
    %2071 = arith.cmpf oeq, %1663, %2070 : vector<2x16xf32>
    %cst_405 = arith.constant -9.99999995E+11 : f32
    %2072 = vector.broadcast %cst_405 : f32 to vector<2x16xf32>
    %2073 = arith.select %2071, %2072, %2069 : vector<2x16xi1>, vector<2x16xf32>
    %cst_406 = arith.constant dense<0xFF800000> : vector<2xf32>
    %2074 = vector.multi_reduction <maximumf>, %2073, %cst_406 [1] : vector<2x16xf32> to vector<2xf32>
    %2075 = vector.shape_cast %2074 : vector<2xf32> to vector<2x1xf32>
    %2076 = vector.broadcast %2075 : vector<2x1xf32> to vector<2x16xf32>
    %2077 = arith.subf %2073, %2076 : vector<2x16xf32>
    %2078 = math.exp %2077 : vector<2x16xf32>
    %cst_407 = arith.constant dense<0.000000e+00> : vector<2xf32>
    %2079 = vector.multi_reduction <add>, %2078, %cst_407 [1] : vector<2x16xf32> to vector<2xf32>
    %2080 = vector.shape_cast %2079 : vector<2xf32> to vector<2x1xf32>
    %2081 = tpu.reciprocal %2080 {approx = true} : vector<2x1xf32> -> vector<2x1xf32>
    %2082 = vector.broadcast %2081 : vector<2x1xf32> to vector<2x16xf32>
    %2083 = arith.mulf %2078, %2082 : vector<2x16xf32>
    %cst_408 = arith.constant dense<0.000000e+00> : vector<2x32xf32>
    %2084 = tpu.matmul %2083, %1650, %cst_408 {dimension_numbers = #tpu.dot_dimension_numbers<[1], [0], [0], [1], [0, 0, 1, 1], [], []>} : vector<2x16xf32>, vector<16x32xf32>, vector<2x32xf32> -> vector<2x32xf32>
    %2085 = tpu.concatenate %1744, %1825, %1906, %1987, %2068 in 0 : vector<2x32xf32>, vector<2x32xf32>, vector<2x32xf32>, vector<2x32xf32>, vector<2x32xf32> -> vector<10x32xf32>
    %2086 = tpu.concatenate %1760, %1841, %1922, %2003, %2084 in 0 : vector<2x32xf32>, vector<2x32xf32>, vector<2x32xf32>, vector<2x32xf32>, vector<2x32xf32> -> vector<10x32xf32>
    %c0_409 = arith.constant 0 : index
    %c0_410 = arith.constant 0 : index
    %2087 = vector.load %arg48[%c0_409, %c0_410] : memref<32x32xbf16, #tpu.memory_space<vmem>>, vector<32x32xbf16>
    %2088 = arith.truncf %2085 : vector<10x32xf32> to vector<10x32xbf16>
    %cst_411 = arith.constant dense<0.000000e+00> : vector<10x32xf32>
    %2089 = tpu.matmul %2088, %2087, %cst_411 {dimension_numbers = #tpu.dot_dimension_numbers<[1], [0], [0], [1], [0, 0, 1, 1], [], []>} : vector<10x32xbf16>, vector<32x32xbf16>, vector<10x32xf32> -> vector<10x32xf32>
    %c0_412 = arith.constant 0 : index
    %c0_413 = arith.constant 0 : index
    %2090 = vector.load %arg49[%c0_412, %c0_413] : memref<32x32xbf16, #tpu.memory_space<vmem>>, vector<32x32xbf16>
    %2091 = arith.truncf %2086 : vector<10x32xf32> to vector<10x32xbf16>
    %cst_414 = arith.constant dense<0.000000e+00> : vector<10x32xf32>
    %2092 = tpu.matmul %2091, %2090, %cst_414 {dimension_numbers = #tpu.dot_dimension_numbers<[1], [0], [0], [1], [0, 0, 1, 1], [], []>} : vector<10x32xbf16>, vector<32x32xbf16>, vector<10x32xf32> -> vector<10x32xf32>
    %2093 = arith.addf %2089, %2092 : vector<10x32xf32>
    %c0_415 = arith.constant 0 : index
    %c0_416 = arith.constant 0 : index
    %2094 = vector.load %arg50[%c0_415, %c0_416] : memref<1x32xf32, #tpu.memory_space<vmem>>, vector<1x32xf32>
    %2095 = vector.broadcast %2094 : vector<1x32xf32> to vector<10x32xf32>
    %2096 = arith.addf %2093, %2095 : vector<10x32xf32>
    %2097 = math.tanh %2096 : vector<10x32xf32>
    %c0_417 = arith.constant 0 : index
    %c0_418 = arith.constant 0 : index
    %2098 = vector.load %arg51[%c0_417, %c0_418] : memref<32x32xbf16, #tpu.memory_space<vmem>>, vector<32x32xbf16>
    %2099 = arith.truncf %2097 : vector<10x32xf32> to vector<10x32xbf16>
    %cst_419 = arith.constant dense<0.000000e+00> : vector<10x32xf32>
    %2100 = tpu.matmul %2099, %2098, %cst_419 {dimension_numbers = #tpu.dot_dimension_numbers<[1], [0], [0], [1], [0, 0, 1, 1], [], []>} : vector<10x32xbf16>, vector<32x32xbf16>, vector<10x32xf32> -> vector<10x32xf32>
    %c0_420 = arith.constant 0 : index
    %c0_421 = arith.constant 0 : index
    %2101 = vector.load %arg52[%c0_420, %c0_421] : memref<1x32xf32, #tpu.memory_space<vmem>>, vector<1x32xf32>
    %2102 = vector.broadcast %2101 : vector<1x32xf32> to vector<10x32xf32>
    %2103 = arith.addf %2100, %2102 : vector<10x32xf32>
    %c0_422 = arith.constant 0 : index
    %c0_423 = arith.constant 0 : index
    %2104 = vector.load %arg53[%c0_422, %c0_423] : memref<10x32xf32, #tpu.memory_space<vmem>>, vector<10x32xf32>
    tpu.vector_store %arg53[%c0_422, %c0_423], %2103 {strides = array<i32>} : memref<10x32xf32, #tpu.memory_space<vmem>>, vector<10x32xf32>,
    return
  }
  func.func @transform_0(%arg0: i32) -> (i32, i32) {
    %c0_i32 = arith.constant 0 : i32
    %c0_i32_0 = arith.constant 0 : i32
    %c0_i32_1 = arith.constant 0 : i32
    return %c0_i32, %c0_i32_0 : i32, i32
  }
  func.func @transform_1(%arg0: i32) -> (i32, i32) {
    %c0_i32 = arith.constant 0 : i32
    %c0_i32_0 = arith.constant 0 : i32
    %c0_i32_1 = arith.constant 0 : i32
    return %c0_i32, %c0_i32_0 : i32, i32
  }
  func.func @transform_2(%arg0: i32) -> (i32, i32) {
    %c0_i32 = arith.constant 0 : i32
    %c0_i32_0 = arith.constant 0 : i32
    %c0_i32_1 = arith.constant 0 : i32
    return %c0_i32, %c0_i32_0 : i32, i32
  }
  func.func @transform_3(%arg0: i32) -> (i32, i32) {
    %c0_i32 = arith.constant 0 : i32
    %c0_i32_0 = arith.constant 0 : i32
    %c0_i32_1 = arith.constant 0 : i32
    return %c0_i32, %c0_i32_0 : i32, i32
  }
  func.func @transform_4(%arg0: i32) -> (i32, i32) {
    %c0_i32 = arith.constant 0 : i32
    %c0_i32_0 = arith.constant 0 : i32
    %c0_i32_1 = arith.constant 0 : i32
    return %c0_i32, %c0_i32_0 : i32, i32
  }
  func.func @transform_5(%arg0: i32) -> (i32, i32) {
    %c0_i32 = arith.constant 0 : i32
    %c0_i32_0 = arith.constant 0 : i32
    %c0_i32_1 = arith.constant 0 : i32
    return %c0_i32, %c0_i32_0 : i32, i32
  }
  func.func @transform_6(%arg0: i32) -> (i32, i32) {
    %c0_i32 = arith.constant 0 : i32
    %c0_i32_0 = arith.constant 0 : i32
    %c0_i32_1 = arith.constant 0 : i32
    return %c0_i32, %c0_i32_0 : i32, i32
  }
  func.func @transform_7(%arg0: i32) -> (i32, i32) {
    %c0_i32 = arith.constant 0 : i32
    %c0_i32_0 = arith.constant 0 : i32
    %c0_i32_1 = arith.constant 0 : i32
    return %c0_i32, %c0_i32_0 : i32, i32
  }
  func.func @transform_8(%arg0: i32) -> (i32, i32) {
    %c0_i32 = arith.constant 0 : i32
    %c0_i32_0 = arith.constant 0 : i32
    %c0_i32_1 = arith.constant 0 : i32
    return %c0_i32, %c0_i32_0 : i32, i32
  }
  func.func @transform_9(%arg0: i32) -> (i32, i32) {
    %c0_i32 = arith.constant 0 : i32
    %c0_i32_0 = arith.constant 0 : i32
    %c0_i32_1 = arith.constant 0 : i32
    return %c0_i32, %c0_i32_0 : i32, i32
  }
  func.func @transform_10(%arg0: i32) -> (i32, i32) {
    %c0_i32 = arith.constant 0 : i32
    %c0_i32_0 = arith.constant 0 : i32
    %c0_i32_1 = arith.constant 0 : i32
    return %c0_i32, %c0_i32_0 : i32, i32
  }
  func.func @transform_11(%arg0: i32) -> (i32, i32) {
    %c0_i32 = arith.constant 0 : i32
    %c0_i32_0 = arith.constant 0 : i32
    %c0_i32_1 = arith.constant 0 : i32
    return %c0_i32, %c0_i32_0 : i32, i32
  }
  func.func @transform_12(%arg0: i32) -> (i32, i32) {
    %c0_i32 = arith.constant 0 : i32
    %c0_i32_0 = arith.constant 0 : i32
    %c0_i32_1 = arith.constant 0 : i32
    return %c0_i32, %c0_i32_0 : i32, i32
  }
  func.func @transform_13(%arg0: i32) -> (i32, i32) {
    %c0_i32 = arith.constant 0 : i32
    %c0_i32_0 = arith.constant 0 : i32
    %c0_i32_1 = arith.constant 0 : i32
    return %c0_i32, %c0_i32_0 : i32, i32
  }
  func.func @transform_14(%arg0: i32) -> (i32, i32) {
    %c0_i32 = arith.constant 0 : i32
    %c0_i32_0 = arith.constant 0 : i32
    %c0_i32_1 = arith.constant 0 : i32
    return %c0_i32, %c0_i32_0 : i32, i32
  }
  func.func @transform_15(%arg0: i32) -> (i32, i32) {
    %c0_i32 = arith.constant 0 : i32
    %c0_i32_0 = arith.constant 0 : i32
    %c0_i32_1 = arith.constant 0 : i32
    return %c0_i32, %c0_i32_0 : i32, i32
  }
  func.func @transform_16(%arg0: i32) -> (i32, i32) {
    %c0_i32 = arith.constant 0 : i32
    %c0_i32_0 = arith.constant 0 : i32
    %c0_i32_1 = arith.constant 0 : i32
    return %c0_i32, %c0_i32_0 : i32, i32
  }
  func.func @transform_17(%arg0: i32) -> (i32, i32) {
    %c0_i32 = arith.constant 0 : i32
    %c0_i32_0 = arith.constant 0 : i32
    %c0_i32_1 = arith.constant 0 : i32
    return %c0_i32, %c0_i32_0 : i32, i32
  }
  func.func @transform_18(%arg0: i32) -> (i32, i32) {
    %c0_i32 = arith.constant 0 : i32
    %c0_i32_0 = arith.constant 0 : i32
    %c0_i32_1 = arith.constant 0 : i32
    return %c0_i32, %c0_i32_0 : i32, i32
  }
  func.func @transform_19(%arg0: i32) -> (i32, i32) {
    %c0_i32 = arith.constant 0 : i32
    %c0_i32_0 = arith.constant 0 : i32
    %c0_i32_1 = arith.constant 0 : i32
    return %c0_i32, %c0_i32_0 : i32, i32
  }
  func.func @transform_20(%arg0: i32) -> (i32, i32) {
    %c0_i32 = arith.constant 0 : i32
    %c0_i32_0 = arith.constant 0 : i32
    %c0_i32_1 = arith.constant 0 : i32
    return %c0_i32, %c0_i32_0 : i32, i32
  }
  func.func @transform_21(%arg0: i32) -> (i32, i32) {
    %c0_i32 = arith.constant 0 : i32
    %c0_i32_0 = arith.constant 0 : i32
    %c0_i32_1 = arith.constant 0 : i32
    return %c0_i32, %c0_i32_0 : i32, i32
  }
  func.func @transform_22(%arg0: i32) -> (i32, i32) {
    %c0_i32 = arith.constant 0 : i32
    %c0_i32_0 = arith.constant 0 : i32
    %c0_i32_1 = arith.constant 0 : i32
    return %c0_i32, %c0_i32_0 : i32, i32
  }
  func.func @transform_23(%arg0: i32) -> (i32, i32) {
    %c0_i32 = arith.constant 0 : i32
    %c0_i32_0 = arith.constant 0 : i32
    %c0_i32_1 = arith.constant 0 : i32
    return %c0_i32, %c0_i32_0 : i32, i32
  }
  func.func @transform_24(%arg0: i32) -> (i32, i32) {
    %c0_i32 = arith.constant 0 : i32
    %c0_i32_0 = arith.constant 0 : i32
    %c0_i32_1 = arith.constant 0 : i32
    return %c0_i32, %c0_i32_0 : i32, i32
  }
  func.func @transform_25(%arg0: i32) -> (i32, i32) {
    %c0_i32 = arith.constant 0 : i32
    %c0_i32_0 = arith.constant 0 : i32
    %c0_i32_1 = arith.constant 0 : i32
    return %c0_i32, %c0_i32_0 : i32, i32
  }
  func.func @transform_26(%arg0: i32) -> (i32, i32) {
    %c0_i32 = arith.constant 0 : i32
    %c0_i32_0 = arith.constant 0 : i32
    %c0_i32_1 = arith.constant 0 : i32
    return %c0_i32, %c0_i32_0 : i32, i32
  }
  func.func @transform_27(%arg0: i32) -> (i32, i32) {
    %c0_i32 = arith.constant 0 : i32
    %c0_i32_0 = arith.constant 0 : i32
    %c0_i32_1 = arith.constant 0 : i32
    return %c0_i32, %c0_i32_0 : i32, i32
  }
  func.func @transform_28(%arg0: i32) -> (i32, i32) {
    %c0_i32 = arith.constant 0 : i32
    %c0_i32_0 = arith.constant 0 : i32
    %c0_i32_1 = arith.constant 0 : i32
    return %c0_i32, %c0_i32_0 : i32, i32
  }
  func.func @transform_29(%arg0: i32) -> (i32, i32) {
    %c0_i32 = arith.constant 0 : i32
    %c0_i32_0 = arith.constant 0 : i32
    %c0_i32_1 = arith.constant 0 : i32
    return %c0_i32, %c0_i32_0 : i32, i32
  }
  func.func @transform_30(%arg0: i32) -> (i32, i32) {
    %c0_i32 = arith.constant 0 : i32
    %c0_i32_0 = arith.constant 0 : i32
    %c0_i32_1 = arith.constant 0 : i32
    return %c0_i32, %c0_i32_0 : i32, i32
  }
  func.func @transform_31(%arg0: i32) -> (i32, i32) {
    %c0_i32 = arith.constant 0 : i32
    %c0_i32_0 = arith.constant 0 : i32
    %c0_i32_1 = arith.constant 0 : i32
    return %c0_i32, %c0_i32_0 : i32, i32
  }
  func.func @transform_32(%arg0: i32) -> (i32, i32) {
    %c0_i32 = arith.constant 0 : i32
    %c0_i32_0 = arith.constant 0 : i32
    %c0_i32_1 = arith.constant 0 : i32
    return %c0_i32, %c0_i32_0 : i32, i32
  }
  func.func @transform_33(%arg0: i32) -> (i32, i32) {
    %c0_i32 = arith.constant 0 : i32
    %c0_i32_0 = arith.constant 0 : i32
    %c0_i32_1 = arith.constant 0 : i32
    return %c0_i32, %c0_i32_0 : i32, i32
  }
  func.func @transform_34(%arg0: i32) -> (i32, i32) {
    %c0_i32 = arith.constant 0 : i32
    %c0_i32_0 = arith.constant 0 : i32
    %c0_i32_1 = arith.constant 0 : i32
    return %c0_i32, %c0_i32_0 : i32, i32
  }
  func.func @transform_35(%arg0: i32) -> (i32, i32) {
    %c0_i32 = arith.constant 0 : i32
    %c0_i32_0 = arith.constant 0 : i32
    %c0_i32_1 = arith.constant 0 : i32
    return %c0_i32, %c0_i32_0 : i32, i32
  }
  func.func @transform_36(%arg0: i32) -> (i32, i32) {
    %c0_i32 = arith.constant 0 : i32
    %c0_i32_0 = arith.constant 0 : i32
    %c0_i32_1 = arith.constant 0 : i32
    return %c0_i32, %c0_i32_0 : i32, i32
  }
  func.func @transform_37(%arg0: i32) -> (i32, i32) {
    %c0_i32 = arith.constant 0 : i32
    %c0_i32_0 = arith.constant 0 : i32
    %c0_i32_1 = arith.constant 0 : i32
    return %c0_i32, %c0_i32_0 : i32, i32
  }
  func.func @transform_38(%arg0: i32) -> (i32, i32) {
    %c0_i32 = arith.constant 0 : i32
    %c0_i32_0 = arith.constant 0 : i32
    %c0_i32_1 = arith.constant 0 : i32
    return %c0_i32, %c0_i32_0 : i32, i32
  }
  func.func @transform_39(%arg0: i32) -> (i32, i32) {
    %c0_i32 = arith.constant 0 : i32
    %c0_i32_0 = arith.constant 0 : i32
    %c0_i32_1 = arith.constant 0 : i32
    return %c0_i32, %c0_i32_0 : i32, i32
  }
  func.func @transform_40(%arg0: i32) -> (i32, i32) {
    %c0_i32 = arith.constant 0 : i32
    %c0_i32_0 = arith.constant 0 : i32
    %c0_i32_1 = arith.constant 0 : i32
    return %c0_i32, %c0_i32_0 : i32, i32
  }
  func.func @transform_41(%arg0: i32) -> (i32, i32) {
    %c0_i32 = arith.constant 0 : i32
    %c0_i32_0 = arith.constant 0 : i32
    %c0_i32_1 = arith.constant 0 : i32
    return %c0_i32, %c0_i32_0 : i32, i32
  }
  func.func @transform_42(%arg0: i32) -> (i32, i32) {
    %c0_i32 = arith.constant 0 : i32
    %c0_i32_0 = arith.constant 0 : i32
    %c0_i32_1 = arith.constant 0 : i32
    return %c0_i32, %c0_i32_0 : i32, i32
  }
  func.func @transform_43(%arg0: i32) -> (i32, i32) {
    %c0_i32 = arith.constant 0 : i32
    %c0_i32_0 = arith.constant 0 : i32
    %c0_i32_1 = arith.constant 0 : i32
    return %c0_i32, %c0_i32_0 : i32, i32
  }
  func.func @transform_44(%arg0: i32) -> (i32, i32) {
    %c0_i32 = arith.constant 0 : i32
    %c0_i32_0 = arith.constant 0 : i32
    %c0_i32_1 = arith.constant 0 : i32
    return %c0_i32, %c0_i32_0 : i32, i32
  }
  func.func @transform_45(%arg0: i32) -> (i32, i32) {
    %c0_i32 = arith.constant 0 : i32
    %c0_i32_0 = arith.constant 0 : i32
    %c0_i32_1 = arith.constant 0 : i32
    return %c0_i32, %c0_i32_0 : i32, i32
  }
  func.func @transform_46(%arg0: i32) -> (i32, i32) {
    %c0_i32 = arith.constant 0 : i32
    %c0_i32_0 = arith.constant 0 : i32
    %c0_i32_1 = arith.constant 0 : i32
    return %c0_i32, %c0_i32_0 : i32, i32
  }
  func.func @transform_47(%arg0: i32) -> (i32, i32) {
    %c0_i32 = arith.constant 0 : i32
    %c0_i32_0 = arith.constant 0 : i32
    %c0_i32_1 = arith.constant 0 : i32
    return %c0_i32, %c0_i32_0 : i32, i32
  }
  func.func @transform_48(%arg0: i32) -> (i32, i32) {
    %c0_i32 = arith.constant 0 : i32
    %c0_i32_0 = arith.constant 0 : i32
    %c0_i32_1 = arith.constant 0 : i32
    return %c0_i32, %c0_i32_0 : i32, i32
  }
  func.func @transform_49(%arg0: i32) -> (i32, i32) {
    %c0_i32 = arith.constant 0 : i32
    %c0_i32_0 = arith.constant 0 : i32
    %c0_i32_1 = arith.constant 0 : i32
    return %c0_i32, %c0_i32_0 : i32, i32
  }
  func.func @transform_50(%arg0: i32) -> (i32, i32) {
    %c0_i32 = arith.constant 0 : i32
    %c0_i32_0 = arith.constant 0 : i32
    %c0_i32_1 = arith.constant 0 : i32
    return %c0_i32, %c0_i32_0 : i32, i32
  }
  func.func @transform_51(%arg0: i32) -> (i32, i32) {
    %c0_i32 = arith.constant 0 : i32
    %c0_i32_0 = arith.constant 0 : i32
    %c0_i32_1 = arith.constant 0 : i32
    return %c0_i32, %c0_i32_0 : i32, i32
  }
  func.func @transform_52(%arg0: i32) -> (i32, i32) {
    %c0_i32 = arith.constant 0 : i32
    %c0_i32_0 = arith.constant 0 : i32
    %c0_i32_1 = arith.constant 0 : i32
    return %c0_i32, %c0_i32_0 : i32, i32
  }
}

</mosaic_0001>

<llo_original>
// kernel: mul.33
$region0: #{mul.33}
  %s0 = inlined_call_operand.vmem [shape: f32[8,2], index: 0, kind: input, shape index: {}]
  %s1 = inlined_call_operand.vmem [shape: f32[16], index: 1, kind: output, shape index: {}]
  $region1: #{mul.33} parent=0
    #allocation0 [shape = 'u8[4096]{0}', space=vmem, size = 0x1000, scoped, tag = 'scoped mem for output reshape']
    %v2 = vld [vmem:[%s0] sm:$0x1]
    %vm3 = vcmask 15360
    %4 = vst.msk [vmem:[#allocation0] sm:$0x1] %vm3, %v2
    %s5 = scalar_lea.vmem %s0, 7
    %v6 = vld [vmem:[%s5] sm:$0x1]
    %7 = vrot.lane.b32.xlu0 %v6, 14
    %v8 = vpop.permute.xlu0 %7
    %vm9 = vcmask 130160
    %10 = vst.msk [vmem:[#allocation0] sm:$0x1] %vm9, %v8
    %s11 = scalar_lea.vmem %s0, 6
    %v12 = vld [vmem:[%s11] sm:$0x1]
    %13 = vrot.lane.b32.xlu0 %v12, 12
    %v14 = vpop.permute.xlu0 %13
    %vm15 = vcmask 113760
    %16 = vst.msk [vmem:[#allocation0] sm:$0x1] %vm15, %v14
    %s17 = scalar_lea.vmem %s0, 5
    %v18 = vld [vmem:[%s17] sm:$0x1]
    %19 = vrot.lane.b32.xlu0 %v18, 10
    %v20 = vpop.permute.xlu0 %19
    %vm21 = vcmask 97360
    %22 = vst.msk [vmem:[#allocation0] sm:$0x1] %vm21, %v20
    %s23 = scalar_lea.vmem %s0, 4
    %v24 = vld [vmem:[%s23] sm:$0x1]
    %25 = vrot.lane.b32.xlu0 %v24, 8
    %v26 = vpop.permute.xlu0 %25
    %vm27 = vcmask 80960
    %28 = vst.msk [vmem:[#allocation0] sm:$0x1] %vm27, %v26
    %s29 = scalar_lea.vmem %s0, 3
    %v30 = vld [vmem:[%s29] sm:$0x1]
    %31 = vrot.lane.b32.xlu0 %v30, 6
    %v32 = vpop.permute.xlu0 %31
    %vm33 = vcmask 64560
    %34 = vst.msk [vmem:[#allocation0] sm:$0x1] %vm33, %v32
    %s35 = scalar_lea.vmem %s0, 2
    %v36 = vld [vmem:[%s35] sm:$0x1]
    %37 = vrot.lane.b32.xlu0 %v36, 4
    %v38 = vpop.permute.xlu0 %37
    %vm39 = vcmask 48160
    %40 = vst.msk [vmem:[#allocation0] sm:$0x1] %vm39, %v38
    %s41 = scalar_lea.vmem %s0, 1
    %v42 = vld [vmem:[%s41] sm:$0x1]
    %43 = vrot.lane.b32.xlu0 %v42, 2
    %v44 = vpop.permute.xlu0 %43
    %vm45 = vcmask 31760
    %46 = vst.msk [vmem:[#allocation0] sm:$0x1] %vm45, %v44
    %s48 = sshllo.u32 0, 1
    %v50 = vld [vmem:[#allocation0] sm:%s48]
    %s51 = sshllo.u32 0, 1
    %52 = vst [vmem:[%s1] sm:%s51] %v50

// kernel: eq.15
$region0: #{eq.15}
  %s0 = inlined_call_operand.vmem [shape: s32[8,2], index: 0, kind: input, shape index: {}]
  %s1 = inlined_call_operand.vmem [shape: s32[16], index: 1, kind: output, shape index: {}]
  $region1: #{eq.15} parent=0
    #allocation0 [shape = 'u8[4096]{0}', space=vmem, size = 0x1000, scoped, tag = 'scoped mem for output reshape']
    %v2 = vld [vmem:[%s0] sm:$0x1]
    %vm3 = vcmask 15360
    %4 = vst.msk [vmem:[#allocation0] sm:$0x1] %vm3, %v2
    %s5 = scalar_lea.vmem %s0, 7
    %v6 = vld [vmem:[%s5] sm:$0x1]
    %7 = vrot.lane.b32.xlu0 %v6, 14
    %v8 = vpop.permute.xlu0 %7
    %vm9 = vcmask 130160
    %10 = vst.msk [vmem:[#allocation0] sm:$0x1] %vm9, %v8
    %s11 = scalar_lea.vmem %s0, 6
    %v12 = vld [vmem:[%s11] sm:$0x1]
    %13 = vrot.lane.b32.xlu0 %v12, 12
    %v14 = vpop.permute.xlu0 %13
    %vm15 = vcmask 113760
    %16 = vst.msk [vmem:[#allocation0] sm:$0x1] %vm15, %v14
    %s17 = scalar_lea.vmem %s0, 5
    %v18 = vld [vmem:[%s17] sm:$0x1]
    %19 = vrot.lane.b32.xlu0 %v18, 10
    %v20 = vpop.permute.xlu0 %19
    %vm21 = vcmask 97360
    %22 = vst.msk [vmem:[#allocation0] sm:$0x1] %vm21, %v20
    %s23 = scalar_lea.vmem %s0, 4
    %v24 = vld [vmem:[%s23] sm:$0x1]
    %25 = vrot.lane.b32.xlu0 %v24, 8
    %v26 = vpop.permute.xlu0 %25
    %vm27 = vcmask 80960
    %28 = vst.msk [vmem:[#allocation0] sm:$0x1] %vm27, %v26
    %s29 = scalar_lea.vmem %s0, 3
    %v30 = vld [vmem:[%s29] sm:$0x1]
    %31 = vrot.lane.b32.xlu0 %v30, 6
    %v32 = vpop.permute.xlu0 %31
    %vm33 = vcmask 64560
    %34 = vst.msk [vmem:[#allocation0] sm:$0x1] %vm33, %v32
    %s35 = scalar_lea.vmem %s0, 2
    %v36 = vld [vmem:[%s35] sm:$0x1]
    %37 = vrot.lane.b32.xlu0 %v36, 4
    %v38 = vpop.permute.xlu0 %37
    %vm39 = vcmask 48160
    %40 = vst.msk [vmem:[#allocation0] sm:$0x1] %vm39, %v38
    %s41 = scalar_lea.vmem %s0, 1
    %v42 = vld [vmem:[%s41] sm:$0x1]
    %43 = vrot.lane.b32.xlu0 %v42, 2
    %v44 = vpop.permute.xlu0 %43
    %vm45 = vcmask 31760
    %46 = vst.msk [vmem:[#allocation0] sm:$0x1] %vm45, %v44
    %s48 = sshllo.u32 0, 1
    %v50 = vld [vmem:[#allocation0] sm:%s48]
    %s51 = sshllo.u32 0, 1
    %52 = vst [vmem:[%s1] sm:%s51] %v50

// kernel: seq2seq_forward.1
$region0: #{seq2seq_forward.1}
  #allocation0 [shape = 'u32[]', space=smem, size = 0x4, offset = 0x4, fixed_abs, tag = 'smem constant byte address 0x4 - core index']
  #allocation1 [shape = 'u32[144,128]{1,0:T(1,128)}', space=vmem, size = 0x12000, scoped, tag = 'internal scratch']
  %s0 = inlined_call_operand.smem [shape: u32[53], index: -1, kind: input, shape index: {}]
  %s1 = sld [smem:[%s0]]
  %s2 = scalar_lea.smem %s0, 1
  %s3 = sld [smem:[%s2]]
  %s4 = scalar_lea.smem %s0, 2
  %s5 = sld [smem:[%s4]]
  %s6 = scalar_lea.smem %s0, 3
  %s7 = sld [smem:[%s6]]
  %s8 = scalar_lea.smem %s0, 4
  %s9 = sld [smem:[%s8]]
  %s10 = scalar_lea.smem %s0, 5
  %s11 = sld [smem:[%s10]]
  %s12 = scalar_lea.smem %s0, 6
  %s13 = sld [smem:[%s12]]
  %s14 = scalar_lea.smem %s0, 7
  %s15 = sld [smem:[%s14]]
  %s16 = scalar_lea.smem %s0, 8
  %s17 = sld [smem:[%s16]]
  %s18 = scalar_lea.smem %s0, 9
  %s19 = sld [smem:[%s18]]
  %s20 = scalar_lea.smem %s0, 10
  %s21 = sld [smem:[%s20]]
  %s22 = scalar_lea.smem %s0, 11
  %s23 = sld [smem:[%s22]]
  %s24 = scalar_lea.smem %s0, 12
  %s25 = sld [smem:[%s24]]
  %s26 = scalar_lea.smem %s0, 13
  %s27 = sld [smem:[%s26]]
  %s28 = scalar_lea.smem %s0, 14
  %s29 = sld [smem:[%s28]]
  %s30 = scalar_lea.smem %s0, 15
  %s31 = sld [smem:[%s30]]
  %s32 = scalar_lea.smem %s0, 16
  %s33 = sld [smem:[%s32]]
  %s34 = scalar_lea.smem %s0, 17
  %s35 = sld [smem:[%s34]]
  %s36 = scalar_lea.smem %s0, 18
  %s37 = sld [smem:[%s36]]
  %s38 = scalar_lea.smem %s0, 19
  %s39 = sld [smem:[%s38]]
  %s40 = scalar_lea.smem %s0, 20
  %s41 = sld [smem:[%s40]]
  %s42 = scalar_lea.smem %s0, 21
  %s43 = sld [smem:[%s42]]
  %s44 = scalar_lea.smem %s0, 22
  %s45 = sld [smem:[%s44]]
  %s46 = scalar_lea.smem %s0, 23
  %s47 = sld [smem:[%s46]]
  %s48 = scalar_lea.smem %s0, 24
  %s49 = sld [smem:[%s48]]
  %s50 = scalar_lea.smem %s0, 25
  %s51 = sld [smem:[%s50]]
  %s52 = scalar_lea.smem %s0, 26
  %s53 = sld [smem:[%s52]]
  %s54 = scalar_lea.smem %s0, 27
  %s55 = sld [smem:[%s54]]
  %s56 = scalar_lea.smem %s0, 28
  %s57 = sld [smem:[%s56]]
  %s58 = scalar_lea.smem %s0, 29
  %s59 = sld [smem:[%s58]]
  %s60 = scalar_lea.smem %s0, 30
  %s61 = sld [smem:[%s60]]
  %s62 = scalar_lea.smem %s0, 31
  %s63 = sld [smem:[%s62]]
  %s64 = scalar_lea.smem %s0, 32
  %s65 = sld [smem:[%s64]]
  %s66 = scalar_lea.smem %s0, 33
  %s67 = sld [smem:[%s66]]
  %s68 = scalar_lea.smem %s0, 34
  %s69 = sld [smem:[%s68]]
  %s70 = scalar_lea.smem %s0, 35
  %s71 = sld [smem:[%s70]]
  %s72 = scalar_lea.smem %s0, 36
  %s73 = sld [smem:[%s72]]
  %s74 = scalar_lea.smem %s0, 37
  %s75 = sld [smem:[%s74]]
  %s76 = scalar_lea.smem %s0, 38
  %s77 = sld [smem:[%s76]]
  %s78 = scalar_lea.smem %s0, 39
  %s79 = sld [smem:[%s78]]
  %s80 = scalar_lea.smem %s0, 40
  %s81 = sld [smem:[%s80]]
  %s82 = scalar_lea.smem %s0, 41
  %s83 = sld [smem:[%s82]]
  %s84 = scalar_lea.smem %s0, 42
  %s85 = sld [smem:[%s84]]
  %s86 = scalar_lea.smem %s0, 43
  %s87 = sld [smem:[%s86]]
  %s88 = scalar_lea.smem %s0, 44
  %s89 = sld [smem:[%s88]]
  %s90 = scalar_lea.smem %s0, 45
  %s91 = sld [smem:[%s90]]
  %s92 = scalar_lea.smem %s0, 46
  %s93 = sld [smem:[%s92]]
  %s94 = scalar_lea.smem %s0, 47
  %s95 = sld [smem:[%s94]]
  %s96 = scalar_lea.smem %s0, 48
  %s97 = sld [smem:[%s96]]
  %s98 = scalar_lea.smem %s0, 49
  %s99 = sld [smem:[%s98]]
  %s100 = scalar_lea.smem %s0, 50
  %s101 = sld [smem:[%s100]]
  %s102 = scalar_lea.smem %s0, 51
  %s103 = sld [smem:[%s102]]
  %s104 = scalar_lea.smem %s0, 52
  %s105 = sld [smem:[%s104]]
  %s106 = sld [smem:[#allocation0]]
  $region218: #{seq2seq_forward.1} parent=0
    _
  %s108 = ssub.s32 1, %s106
  %s109 = scalar_select 0, %s108, %s106
  // Predicated region
  $region2: #{seq2seq_forward.1} parent=0 // pred_check
    _
  $region3: #{seq2seq_forward.1} parent=0 // pred_check_branch
    %111 = sbr.rel (0) target = $region5
  $region4: #{seq2seq_forward.1} parent=0 // pred_region
    _
  $region5: #{seq2seq_forward.1} parent=0 // pred_fallthru
    _
  // Predicated region
  $region6: #{seq2seq_forward.1} parent=0 // pred_check
    _
  $region7: #{seq2seq_forward.1} parent=0 // pred_check_branch
    %113 = sbr.rel (0) target = $region9
  $region8: #{seq2seq_forward.1} parent=0 // pred_region
    _
  $region9: #{seq2seq_forward.1} parent=0 // pred_fallthru
    _
  // Predicated region
  $region10: #{seq2seq_forward.1} parent=0 // pred_check
    _
  $region11: #{seq2seq_forward.1} parent=0 // pred_check_branch
    %115 = sbr.rel (0) target = $region13
  $region12: #{seq2seq_forward.1} parent=0 // pred_region
    _
  $region13: #{seq2seq_forward.1} parent=0 // pred_fallthru
    _
  // Predicated region
  $region14: #{seq2seq_forward.1} parent=0 // pred_check
    _
  $region15: #{seq2seq_forward.1} parent=0 // pred_check_branch
    %117 = sbr.rel (0) target = $region17
  $region16: #{seq2seq_forward.1} parent=0 // pred_region
    _
  $region17: #{seq2seq_forward.1} parent=0 // pred_fallthru
    _
  // Predicated region
  $region18: #{seq2seq_forward.1} parent=0 // pred_check
    _
  $region19: #{seq2seq_forward.1} parent=0 // pred_check_branch
    %119 = sbr.rel (0) target = $region21
  $region20: #{seq2seq_forward.1} parent=0 // pred_region
    _
  $region21: #{seq2seq_forward.1} parent=0 // pred_fallthru
    _
  // Predicated region
  $region22: #{seq2seq_forward.1} parent=0 // pred_check
    _
  $region23: #{seq2seq_forward.1} parent=0 // pred_check_branch
    %121 = sbr.rel (0) target = $region25
  $region24: #{seq2seq_forward.1} parent=0 // pred_region
    _
  $region25: #{seq2seq_forward.1} parent=0 // pred_fallthru
    _
  // Predicated region
  $region26: #{seq2seq_forward.1} parent=0 // pred_check
    _
  $region27: #{seq2seq_forward.1} parent=0 // pred_check_branch
    %123 = sbr.rel (0) target = $region29
  $region28: #{seq2seq_forward.1} parent=0 // pred_region
    _
  $region29: #{seq2seq_forward.1} parent=0 // pred_fallthru
    _
  // Predicated region
  $region30: #{seq2seq_forward.1} parent=0 // pred_check
    _
  $region31: #{seq2seq_forward.1} parent=0 // pred_check_branch
    %125 = sbr.rel (0) target = $region33
  $region32: #{seq2seq_forward.1} parent=0 // pred_region
    _
  $region33: #{seq2seq_forward.1} parent=0 // pred_fallthru
    _
  // Predicated region
  $region34: #{seq2seq_forward.1} parent=0 // pred_check
    _
  $region35: #{seq2seq_forward.1} parent=0 // pred_check_branch
    %127 = sbr.rel (0) target = $region37
  $region36: #{seq2seq_forward.1} parent=0 // pred_region
    _
  $region37: #{seq2seq_forward.1} parent=0 // pred_fallthru
    _
  // Predicated region
  $region38: #{seq2seq_forward.1} parent=0 // pred_check
    _
  $region39: #{seq2seq_forward.1} parent=0 // pred_check_branch
    %129 = sbr.rel (0) target = $region41
  $region40: #{seq2seq_forward.1} parent=0 // pred_region
    _
  $region41: #{seq2seq_forward.1} parent=0 // pred_fallthru
    _
  // Predicated region
  $region42: #{seq2seq_forward.1} parent=0 // pred_check
    _
  $region43: #{seq2seq_forward.1} parent=0 // pred_check_branch
    %131 = sbr.rel (0) target = $region45
  $region44: #{seq2seq_forward.1} parent=0 // pred_region
    _
  $region45: #{seq2seq_forward.1} parent=0 // pred_fallthru
    _
  // Predicated region
  $region46: #{seq2seq_forward.1} parent=0 // pred_check
    _
  $region47: #{seq2seq_forward.1} parent=0 // pred_check_branch
    %133 = sbr.rel (0) target = $region49
  $region48: #{seq2seq_forward.1} parent=0 // pred_region
    _
  $region49: #{seq2seq_forward.1} parent=0 // pred_fallthru
    _
  // Predicated region
  $region50: #{seq2seq_forward.1} parent=0 // pred_check
    _
  $region51: #{seq2seq_forward.1} parent=0 // pred_check_branch
    %135 = sbr.rel (0) target = $region53
  $region52: #{seq2seq_forward.1} parent=0 // pred_region
    _
  $region53: #{seq2seq_forward.1} parent=0 // pred_fallthru
    _
  // Predicated region
  $region54: #{seq2seq_forward.1} parent=0 // pred_check
    _
  $region55: #{seq2seq_forward.1} parent=0 // pred_check_branch
    %137 = sbr.rel (0) target = $region57
  $region56: #{seq2seq_forward.1} parent=0 // pred_region
    _
  $region57: #{seq2seq_forward.1} parent=0 // pred_fallthru
    _
  // Predicated region
  $region58: #{seq2seq_forward.1} parent=0 // pred_check
    _
  $region59: #{seq2seq_forward.1} parent=0 // pred_check_branch
    %139 = sbr.rel (0) target = $region61
  $region60: #{seq2seq_forward.1} parent=0 // pred_region
    _
  $region61: #{seq2seq_forward.1} parent=0 // pred_fallthru
    _
  // Predicated region
  $region62: #{seq2seq_forward.1} parent=0 // pred_check
    _
  $region63: #{seq2seq_forward.1} parent=0 // pred_check_branch
    %141 = sbr.rel (0) target = $region65
  $region64: #{seq2seq_forward.1} parent=0 // pred_region
    _
  $region65: #{seq2seq_forward.1} parent=0 // pred_fallthru
    _
  // Predicated region
  $region66: #{seq2seq_forward.1} parent=0 // pred_check
    _
  $region67: #{seq2seq_forward.1} parent=0 // pred_check_branch
    %143 = sbr.rel (0) target = $region69
  $region68: #{seq2seq_forward.1} parent=0 // pred_region
    _
  $region69: #{seq2seq_forward.1} parent=0 // pred_fallthru
    _
  // Predicated region
  $region70: #{seq2seq_forward.1} parent=0 // pred_check
    _
  $region71: #{seq2seq_forward.1} parent=0 // pred_check_branch
    %145 = sbr.rel (0) target = $region73
  $region72: #{seq2seq_forward.1} parent=0 // pred_region
    _
  $region73: #{seq2seq_forward.1} parent=0 // pred_fallthru
    _
  // Predicated region
  $region74: #{seq2seq_forward.1} parent=0 // pred_check
    _
  $region75: #{seq2seq_forward.1} parent=0 // pred_check_branch
    %147 = sbr.rel (0) target = $region77
  $region76: #{seq2seq_forward.1} parent=0 // pred_region
    _
  $region77: #{seq2seq_forward.1} parent=0 // pred_fallthru
    _
  // Predicated region
  $region78: #{seq2seq_forward.1} parent=0 // pred_check
    _
  $region79: #{seq2seq_forward.1} parent=0 // pred_check_branch
    %149 = sbr.rel (0) target = $region81
  $region80: #{seq2seq_forward.1} parent=0 // pred_region
    _
  $region81: #{seq2seq_forward.1} parent=0 // pred_fallthru
    _
  // Predicated region
  $region82: #{seq2seq_forward.1} parent=0 // pred_check
    _
  $region83: #{seq2seq_forward.1} parent=0 // pred_check_branch
    %151 = sbr.rel (0) target = $region85
  $region84: #{seq2seq_forward.1} parent=0 // pred_region
    _
  $region85: #{seq2seq_forward.1} parent=0 // pred_fallthru
    _
  // Predicated region
  $region86: #{seq2seq_forward.1} parent=0 // pred_check
    _
  $region87: #{seq2seq_forward.1} parent=0 // pred_check_branch
    %153 = sbr.rel (0) target = $region89
  $region88: #{seq2seq_forward.1} parent=0 // pred_region
    _
  $region89: #{seq2seq_forward.1} parent=0 // pred_fallthru
    _
  // Predicated region
  $region90: #{seq2seq_forward.1} parent=0 // pred_check
    _
  $region91: #{seq2seq_forward.1} parent=0 // pred_check_branch
    %155 = sbr.rel (0) target = $region93
  $region92: #{seq2seq_forward.1} parent=0 // pred_region
    _
  $region93: #{seq2seq_forward.1} parent=0 // pred_fallthru
    _
  // Predicated region
  $region94: #{seq2seq_forward.1} parent=0 // pred_check
    _
  $region95: #{seq2seq_forward.1} parent=0 // pred_check_branch
    %157 = sbr.rel (0) target = $region97
  $region96: #{seq2seq_forward.1} parent=0 // pred_region
    _
  $region97: #{seq2seq_forward.1} parent=0 // pred_fallthru
    _
  // Predicated region
  $region98: #{seq2seq_forward.1} parent=0 // pred_check
    _
  $region99: #{seq2seq_forward.1} parent=0 // pred_check_branch
    %159 = sbr.rel (0) target = $region101
  $region100: #{seq2seq_forward.1} parent=0 // pred_region
    _
  $region101: #{seq2seq_forward.1} parent=0 // pred_fallthru
    _
  // Predicated region
  $region102: #{seq2seq_forward.1} parent=0 // pred_check
    _
  $region103: #{seq2seq_forward.1} parent=0 // pred_check_branch
    %161 = sbr.rel (0) target = $region105
  $region104: #{seq2seq_forward.1} parent=0 // pred_region
    _
  $region105: #{seq2seq_forward.1} parent=0 // pred_fallthru
    _
  // Predicated region
  $region106: #{seq2seq_forward.1} parent=0 // pred_check
    _
  $region107: #{seq2seq_forward.1} parent=0 // pred_check_branch
    %163 = sbr.rel (0) target = $region109
  $region108: #{seq2seq_forward.1} parent=0 // pred_region
    _
  $region109: #{seq2seq_forward.1} parent=0 // pred_fallthru
    _
  // Predicated region
  $region110: #{seq2seq_forward.1} parent=0 // pred_check
    _
  $region111: #{seq2seq_forward.1} parent=0 // pred_check_branch
    %165 = sbr.rel (0) target = $region113
  $region112: #{seq2seq_forward.1} parent=0 // pred_region
    _
  $region113: #{seq2seq_forward.1} parent=0 // pred_fallthru
    _
  // Predicated region
  $region114: #{seq2seq_forward.1} parent=0 // pred_check
    _
  $region115: #{seq2seq_forward.1} parent=0 // pred_check_branch
    %167 = sbr.rel (0) target = $region117
  $region116: #{seq2seq_forward.1} parent=0 // pred_region
    _
  $region117: #{seq2seq_forward.1} parent=0 // pred_fallthru
    _
  // Predicated region
  $region118: #{seq2seq_forward.1} parent=0 // pred_check
    _
  $region119: #{seq2seq_forward.1} parent=0 // pred_check_branch
    %169 = sbr.rel (0) target = $region121
  $region120: #{seq2seq_forward.1} parent=0 // pred_region
    _
  $region121: #{seq2seq_forward.1} parent=0 // pred_fallthru
    _
  // Predicated region
  $region122: #{seq2seq_forward.1} parent=0 // pred_check
    _
  $region123: #{seq2seq_forward.1} parent=0 // pred_check_branch
    %171 = sbr.rel (0) target = $region125
  $region124: #{seq2seq_forward.1} parent=0 // pred_region
    _
  $region125: #{seq2seq_forward.1} parent=0 // pred_fallthru
    _
  // Predicated region
  $region126: #{seq2seq_forward.1} parent=0 // pred_check
    _
  $region127: #{seq2seq_forward.1} parent=0 // pred_check_branch
    %173 = sbr.rel (0) target = $region129
  $region128: #{seq2seq_forward.1} parent=0 // pred_region
    _
  $region129: #{seq2seq_forward.1} parent=0 // pred_fallthru
    _
  // Predicated region
  $region130: #{seq2seq_forward.1} parent=0 // pred_check
    _
  $region131: #{seq2seq_forward.1} parent=0 // pred_check_branch
    %175 = sbr.rel (0) target = $region133
  $region132: #{seq2seq_forward.1} parent=0 // pred_region
    _
  $region133: #{seq2seq_forward.1} parent=0 // pred_fallthru
    _
  // Predicated region
  $region134: #{seq2seq_forward.1} parent=0 // pred_check
    _
  $region135: #{seq2seq_forward.1} parent=0 // pred_check_branch
    %177 = sbr.rel (0) target = $region137
  $region136: #{seq2seq_forward.1} parent=0 // pred_region
    _
  $region137: #{seq2seq_forward.1} parent=0 // pred_fallthru
    _
  // Predicated region
  $region138: #{seq2seq_forward.1} parent=0 // pred_check
    _
  $region139: #{seq2seq_forward.1} parent=0 // pred_check_branch
    %179 = sbr.rel (0) target = $region141
  $region140: #{seq2seq_forward.1} parent=0 // pred_region
    _
  $region141: #{seq2seq_forward.1} parent=0 // pred_fallthru
    _
  // Predicated region
  $region142: #{seq2seq_forward.1} parent=0 // pred_check
    _
  $region143: #{seq2seq_forward.1} parent=0 // pred_check_branch
    %181 = sbr.rel (0) target = $region145
  $region144: #{seq2seq_forward.1} parent=0 // pred_region
    _
  $region145: #{seq2seq_forward.1} parent=0 // pred_fallthru
    _
  // Predicated region
  $region146: #{seq2seq_forward.1} parent=0 // pred_check
    _
  $region147: #{seq2seq_forward.1} parent=0 // pred_check_branch
    %183 = sbr.rel (0) target = $region149
  $region148: #{seq2seq_forward.1} parent=0 // pred_region
    _
  $region149: #{seq2seq_forward.1} parent=0 // pred_fallthru
    _
  // Predicated region
  $region150: #{seq2seq_forward.1} parent=0 // pred_check
    _
  $region151: #{seq2seq_forward.1} parent=0 // pred_check_branch
    %185 = sbr.rel (0) target = $region153
  $region152: #{seq2seq_forward.1} parent=0 // pred_region
    _
  $region153: #{seq2seq_forward.1} parent=0 // pred_fallthru
    _
  // Predicated region
  $region154: #{seq2seq_forward.1} parent=0 // pred_check
    _
  $region155: #{seq2seq_forward.1} parent=0 // pred_check_branch
    %187 = sbr.rel (0) target = $region157
  $region156: #{seq2seq_forward.1} parent=0 // pred_region
    _
  $region157: #{seq2seq_forward.1} parent=0 // pred_fallthru
    _
  // Predicated region
  $region158: #{seq2seq_forward.1} parent=0 // pred_check
    _
  $region159: #{seq2seq_forward.1} parent=0 // pred_check_branch
    %189 = sbr.rel (0) target = $region161
  $region160: #{seq2seq_forward.1} parent=0 // pred_region
    _
  $region161: #{seq2seq_forward.1} parent=0 // pred_fallthru
    _
  // Predicated region
  $region162: #{seq2seq_forward.1} parent=0 // pred_check
    _
  $region163: #{seq2seq_forward.1} parent=0 // pred_check_branch
    %191 = sbr.rel (0) target = $region165
  $region164: #{seq2seq_forward.1} parent=0 // pred_region
    _
  $region165: #{seq2seq_forward.1} parent=0 // pred_fallthru
    _
  // Predicated region
  $region166: #{seq2seq_forward.1} parent=0 // pred_check
    _
  $region167: #{seq2seq_forward.1} parent=0 // pred_check_branch
    %193 = sbr.rel (0) target = $region169
  $region168: #{seq2seq_forward.1} parent=0 // pred_region
    _
  $region169: #{seq2seq_forward.1} parent=0 // pred_fallthru
    _
  // Predicated region
  $region170: #{seq2seq_forward.1} parent=0 // pred_check
    _
  $region171: #{seq2seq_forward.1} parent=0 // pred_check_branch
    %195 = sbr.rel (0) target = $region173
  $region172: #{seq2seq_forward.1} parent=0 // pred_region
    _
  $region173: #{seq2seq_forward.1} parent=0 // pred_fallthru
    _
  // Predicated region
  $region174: #{seq2seq_forward.1} parent=0 // pred_check
    _
  $region175: #{seq2seq_forward.1} parent=0 // pred_check_branch
    %197 = sbr.rel (0) target = $region177
  $region176: #{seq2seq_forward.1} parent=0 // pred_region
    _
  $region177: #{seq2seq_forward.1} parent=0 // pred_fallthru
    _
  // Predicated region
  $region178: #{seq2seq_forward.1} parent=0 // pred_check
    _
  $region179: #{seq2seq_forward.1} parent=0 // pred_check_branch
    %199 = sbr.rel (0) target = $region181
  $region180: #{seq2seq_forward.1} parent=0 // pred_region
    _
  $region181: #{seq2seq_forward.1} parent=0 // pred_fallthru
    _
  // Predicated region
  $region182: #{seq2seq_forward.1} parent=0 // pred_check
    _
  $region183: #{seq2seq_forward.1} parent=0 // pred_check_branch
    %201 = sbr.rel (0) target = $region185
  $region184: #{seq2seq_forward.1} parent=0 // pred_region
    _
  $region185: #{seq2seq_forward.1} parent=0 // pred_fallthru
    _
  // Predicated region
  $region186: #{seq2seq_forward.1} parent=0 // pred_check
    _
  $region187: #{seq2seq_forward.1} parent=0 // pred_check_branch
    %203 = sbr.rel (0) target = $region189
  $region188: #{seq2seq_forward.1} parent=0 // pred_region
    _
  $region189: #{seq2seq_forward.1} parent=0 // pred_fallthru
    _
  // Predicated region
  $region190: #{seq2seq_forward.1} parent=0 // pred_check
    _
  $region191: #{seq2seq_forward.1} parent=0 // pred_check_branch
    %205 = sbr.rel (0) target = $region193
  $region192: #{seq2seq_forward.1} parent=0 // pred_region
    _
  $region193: #{seq2seq_forward.1} parent=0 // pred_fallthru
    _
  // Predicated region
  $region194: #{seq2seq_forward.1} parent=0 // pred_check
    _
  $region195: #{seq2seq_forward.1} parent=0 // pred_check_branch
    %207 = sbr.rel (0) target = $region197
  $region196: #{seq2seq_forward.1} parent=0 // pred_region
    _
  $region197: #{seq2seq_forward.1} parent=0 // pred_fallthru
    _
  // Predicated region
  $region198: #{seq2seq_forward.1} parent=0 // pred_check
    _
  $region199: #{seq2seq_forward.1} parent=0 // pred_check_branch
    %209 = sbr.rel (0) target = $region201
  $region200: #{seq2seq_forward.1} parent=0 // pred_region
    _
  $region201: #{seq2seq_forward.1} parent=0 // pred_fallthru
    _
  // Predicated region
  $region202: #{seq2seq_forward.1} parent=0 // pred_check
    _
  $region203: #{seq2seq_forward.1} parent=0 // pred_check_branch
    %211 = sbr.rel (0) target = $region205
  $region204: #{seq2seq_forward.1} parent=0 // pred_region
    _
  $region205: #{seq2seq_forward.1} parent=0 // pred_fallthru
    _
  // Predicated region
  $region206: #{seq2seq_forward.1} parent=0 // pred_check
    _
  $region207: #{seq2seq_forward.1} parent=0 // pred_check_branch
    %213 = sbr.rel (0) target = $region209
  $region208: #{seq2seq_forward.1} parent=0 // pred_region
    _
  $region209: #{seq2seq_forward.1} parent=0 // pred_fallthru
    _
  %v215 = vld [vmem:[%s1] sm:$0xff]
  %v216 = vld [vmem:[%s1 + $0x8] sm:$0xff]
  %v217 = vld [vmem:[%s1 + $0x10] sm:$0xff]
  %v218 = vld [vmem:[%s1 + $0x18] sm:$0xff]
  %v219 = vld [vmem:[%s1 + $0x20] sm:$0xff]
  %v220 = vld [vmem:[%s1 + $0x28] sm:$0xff]
  %v221 = vld [vmem:[%s1 + $0x30] sm:$0xff]
  %v222 = vld [vmem:[%s1 + $0x38] sm:$0xff]
  %v223 = vld [vmem:[%s3] sm:$0xff]
  %v224 = vld [vmem:[%s3 + $0x8] sm:$0xff]
  %v225 = vld [vmem:[%s3 + $0x10] sm:$0xff]
  %v226 = vld [vmem:[%s3 + $0x18] sm:$0xff]
  %v227 = vld [vmem:[%s3 + $0x20] sm:$0xff]
  %v228 = vld [vmem:[%s3 + $0x28] sm:$0xff]
  %v229 = vld [vmem:[%s3 + $0x30] sm:$0xff]
  %v230 = vld [vmem:[%s3 + $0x38] sm:$0xff]
  %v231 = vld [vmem:[%s5] sm:$0xff]
  %v232 = vld [vmem:[%s5 + $0x8] sm:$0xff]
  %v233 = vld [vmem:[%s5 + $0x10] sm:$0xff]
  %v234 = vld [vmem:[%s5 + $0x18] sm:$0xff]
  %v235 = vld [vmem:[%s5 + $0x20] sm:$0xff]
  %v236 = vld [vmem:[%s5 + $0x28] sm:$0xff]
  %v237 = vld [vmem:[%s5 + $0x30] sm:$0xff]
  %v238 = vld [vmem:[%s5 + $0x38] sm:$0xff]
  %v239 = vld [vmem:[%s9] sm:$0xf]
  %v240 = vpack.c.bf16 %v216, %v215
  %v241 = vpack.c.bf16 %v218, %v217
  %v242 = vpack.c.bf16 %v220, %v219
  %v243 = vpack.c.bf16 %v222, %v221
  %v244 = vld [vmem:[%s11] sm:$0xf]
  %v245 = vpack.c.bf16 %v224, %v223
  %v246 = vpack.c.bf16 %v226, %v225
  %v247 = vpack.c.bf16 %v228, %v227
  %v248 = vpack.c.bf16 %v230, %v229
  %vm249 = vcmask 64512
  %v251 = vsel %vm249, %v245, 0
  %v254 = vsel %vm249, %v246, 0
  %v257 = vsel %vm249, %v247, 0
  %v260 = vsel %vm249, %v248, 0
  %vm262 = vcmask 1043456
  %v264 = vsel %vm262, %v244, 0
  %266 = vmatprep.subr.bf16.mxu0 0
  %267 = vmatpush1.bf16.msra.mxu0 %v264
  %268 = vmatprep.subr.bf16.mxu0 0
  %269 = vmatpush1.bf16.msra.mxu0 0
  %270 = vmatprep.subr.bf16.mxu0 0
  %271 = vmatpush1.bf16.msra.mxu0 0
  %272 = vmatprep.subr.bf16.mxu0 0
  %273 = vmatpush1.bf16.msra.mxu0 0
  %274 = vmatprep.subr.bf16.mxu0 0
  %275 = vmatpush1.bf16.msra.mxu0 0
  %276 = vmatprep.subr.bf16.mxu0 0
  %277 = vmatpush1.bf16.msra.mxu0 0
  %278 = vmatprep.subr.bf16.mxu0 0
  %279 = vmatpush1.bf16.msra.mxu0 0
  %280 = vmatprep.subr.bf16.mxu0 0
  %281 = vmatpush1.bf16.msra.mxu0 0
  %282 = vmatprep.subr.bf16.mxu0 0
  %283 = vmatpush1.bf16.msra.mxu0 0
  %284 = vmatprep.subr.bf16.mxu0 0
  %285 = vmatpush1.bf16.msra.mxu0 0
  %286 = vmatprep.subr.bf16.mxu0 0
  %287 = vmatpush1.bf16.msra.mxu0 0
  %288 = vmatprep.subr.bf16.mxu0 0
  %289 = vmatpush1.bf16.msra.mxu0 0
  %290 = vmatprep.subr.bf16.mxu0 0
  %291 = vmatpush1.bf16.msra.mxu0 0
  %292 = vmatprep.subr.bf16.mxu0 0
  %293 = vmatpush1.bf16.msra.mxu0 0
  %294 = vmatprep.subr.bf16.mxu0 0
  %295 = vmatpush1.bf16.msra.mxu0 0
  %296 = vmatprep.subr.bf16.mxu0 0
  %297 = vmatpush1.bf16.msra.mxu0 0
  %298 = vmatprep.mubr.bf16.mxu0 0
  %299 = vmatmul.mubr.bf16.gmra.mrb[0].mxu0 %v251
  %v300 = vpop.f32.mrb[0].mxu0
  %v301 = vadd.f32 0.0, %v300
  %v302 = vpop.f32.mrb[0].mxu0
  %v303 = vpop.f32.mrb[0].mxu0
  %v304 = vadd.f32 0.0, %v303
  %v305 = vpop.f32.mrb[0].mxu0
  %306 = vmatprep.mubr.bf16.mxu0 0
  %307 = vmatmul.mubr.bf16.gmra.mrb[0].mxu0 %v254
  %v308 = vpop.f32.mrb[0].mxu0
  %v309 = vadd.f32 0.0, %v308
  %v310 = vpop.f32.mrb[0].mxu0
  %v311 = vpop.f32.mrb[0].mxu0
  %v312 = vadd.f32 0.0, %v311
  %v313 = vpop.f32.mrb[0].mxu0
  %314 = vmatprep.mubr.bf16.mxu0 0
  %315 = vmatmul.mubr.bf16.gmra.mrb[0].mxu0 %v257
  %v316 = vpop.f32.mrb[0].mxu0
  %v317 = vadd.f32 0.0, %v316
  %v318 = vpop.f32.mrb[0].mxu0
  %v319 = vpop.f32.mrb[0].mxu0
  %v320 = vadd.f32 0.0, %v319
  %v321 = vpop.f32.mrb[0].mxu0
  %322 = vmatprep.mubr.bf16.mxu0 0
  %323 = vmatmul.mubr.bf16.gmra.mrb[0].mxu0 %v260
  %v324 = vpop.f32.mrb[0].mxu0
  %v325 = vadd.f32 0.0, %v324
  %v326 = vpop.f32.mrb[0].mxu0
  %v327 = vpop.f32.mrb[0].mxu0
  %v328 = vadd.f32 0.0, %v327
  %v329 = vpop.f32.mrb[0].mxu0
  %330 = vdwg.mxu0
  %v331 = vld [vmem:[%s13] sm:$0xf]
  %v332 = vpack.c.bf16 %v232, %v231
  %v333 = vpack.c.bf16 %v234, %v233
  %v334 = vpack.c.bf16 %v236, %v235
  %v335 = vpack.c.bf16 %v238, %v237
  %v337 = vsel %vm249, %v332, 0
  %v340 = vsel %vm249, %v333, 0
  %v343 = vsel %vm249, %v334, 0
  %v346 = vsel %vm249, %v335, 0
  %v349 = vsel %vm262, %v331, 0
  %351 = vmatprep.subr.bf16.mxu0 0
  %352 = vmatpush1.bf16.msra.mxu0 %v349
  %353 = vmatprep.subr.bf16.mxu0 0
  %354 = vmatpush1.bf16.msra.mxu0 0
  %355 = vmatprep.subr.bf16.mxu0 0
  %356 = vmatpush1.bf16.msra.mxu0 0
  %357 = vmatprep.subr.bf16.mxu0 0
  %358 = vmatpush1.bf16.msra.mxu0 0
  %359 = vmatprep.subr.bf16.mxu0 0
  %360 = vmatpush1.bf16.msra.mxu0 0
  %361 = vmatprep.subr.bf16.mxu0 0
  %362 = vmatpush1.bf16.msra.mxu0 0
  %363 = vmatprep.subr.bf16.mxu0 0
  %364 = vmatpush1.bf16.msra.mxu0 0
  %365 = vmatprep.subr.bf16.mxu0 0
  %366 = vmatpush1.bf16.msra.mxu0 0
  %367 = vmatprep.subr.bf16.mxu0 0
  %368 = vmatpush1.bf16.msra.mxu0 0
  %369 = vmatprep.subr.bf16.mxu0 0
  %370 = vmatpush1.bf16.msra.mxu0 0
  %371 = vmatprep.subr.bf16.mxu0 0
  %372 = vmatpush1.bf16.msra.mxu0 0
  %373 = vmatprep.subr.bf16.mxu0 0
  %374 = vmatpush1.bf16.msra.mxu0 0
  %375 = vmatprep.subr.bf16.mxu0 0
  %376 = vmatpush1.bf16.msra.mxu0 0
  %377 = vmatprep.subr.bf16.mxu0 0
  %378 = vmatpush1.bf16.msra.mxu0 0
  %379 = vmatprep.subr.bf16.mxu0 0
  %380 = vmatpush1.bf16.msra.mxu0 0
  %381 = vmatprep.subr.bf16.mxu0 0
  %382 = vmatpush1.bf16.msra.mxu0 0
  %383 = vmatprep.mubr.bf16.mxu0 0
  %384 = vmatmul.mubr.bf16.gmra.mrb[0].mxu0 %v337
  %v385 = vpop.f32.mrb[0].mxu0
  %v386 = vadd.f32 0.0, %v385
  %v387 = vpop.f32.mrb[0].mxu0
  %v388 = vpop.f32.mrb[0].mxu0
  %v389 = vadd.f32 0.0, %v388
  %v390 = vpop.f32.mrb[0].mxu0
  %391 = vmatprep.mubr.bf16.mxu0 0
  %392 = vmatmul.mubr.bf16.gmra.mrb[0].mxu0 %v340
  %v393 = vpop.f32.mrb[0].mxu0
  %v394 = vadd.f32 0.0, %v393
  %v395 = vpop.f32.mrb[0].mxu0
  %v396 = vpop.f32.mrb[0].mxu0
  %v397 = vadd.f32 0.0, %v396
  %v398 = vpop.f32.mrb[0].mxu0
  %399 = vmatprep.mubr.bf16.mxu0 0
  %400 = vmatmul.mubr.bf16.gmra.mrb[0].mxu0 %v343
  %v401 = vpop.f32.mrb[0].mxu0
  %v402 = vadd.f32 0.0, %v401
  %v403 = vpop.f32.mrb[0].mxu0
  %v404 = vpop.f32.mrb[0].mxu0
  %v405 = vadd.f32 0.0, %v404
  %v406 = vpop.f32.mrb[0].mxu0
  %407 = vmatprep.mubr.bf16.mxu0 0
  %408 = vmatmul.mubr.bf16.gmra.mrb[0].mxu0 %v346
  %v409 = vpop.f32.mrb[0].mxu0
  %v410 = vadd.f32 0.0, %v409
  %v411 = vpop.f32.mrb[0].mxu0
  %v412 = vpop.f32.mrb[0].mxu0
  %v413 = vadd.f32 0.0, %v412
  %v414 = vpop.f32.mrb[0].mxu0
  %415 = vdwg.mxu0
  %v417 = vsel %vm249, %v240, 0
  %v420 = vsel %vm249, %v241, 0
  %v423 = vsel %vm249, %v242, 0
  %v426 = vsel %vm249, %v243, 0
  %v429 = vsel %vm262, %v239, 0
  %431 = vmatprep.subr.bf16.mxu0 0
  %432 = vmatpush1.bf16.msra.mxu0 %v429
  %433 = vmatprep.subr.bf16.mxu0 0
  %434 = vmatpush1.bf16.msra.mxu0 0
  %435 = vmatprep.subr.bf16.mxu0 0
  %436 = vmatpush1.bf16.msra.mxu0 0
  %437 = vmatprep.subr.bf16.mxu0 0
  %438 = vmatpush1.bf16.msra.mxu0 0
  %439 = vmatprep.subr.bf16.mxu0 0
  %440 = vmatpush1.bf16.msra.mxu0 0
  %441 = vmatprep.subr.bf16.mxu0 0
  %442 = vmatpush1.bf16.msra.mxu0 0
  %443 = vmatprep.subr.bf16.mxu0 0
  %444 = vmatpush1.bf16.msra.mxu0 0
  %445 = vmatprep.subr.bf16.mxu0 0
  %446 = vmatpush1.bf16.msra.mxu0 0
  %447 = vmatprep.subr.bf16.mxu0 0
  %448 = vmatpush1.bf16.msra.mxu0 0
  %449 = vmatprep.subr.bf16.mxu0 0
  %450 = vmatpush1.bf16.msra.mxu0 0
  %451 = vmatprep.subr.bf16.mxu0 0
  %452 = vmatpush1.bf16.msra.mxu0 0
  %453 = vmatprep.subr.bf16.mxu0 0
  %454 = vmatpush1.bf16.msra.mxu0 0
  %455 = vmatprep.subr.bf16.mxu0 0
  %456 = vmatpush1.bf16.msra.mxu0 0
  %457 = vmatprep.subr.bf16.mxu0 0
  %458 = vmatpush1.bf16.msra.mxu0 0
  %459 = vmatprep.subr.bf16.mxu0 0
  %460 = vmatpush1.bf16.msra.mxu0 0
  %461 = vmatprep.subr.bf16.mxu0 0
  %462 = vmatpush1.bf16.msra.mxu0 0
  %463 = vmatprep.mubr.bf16.mxu0 0
  %464 = vmatmul.mubr.bf16.gmra.mrb[0].mxu0 %v417
  %v465 = vpop.f32.mrb[0].mxu0
  %v466 = vadd.f32 %v301, %v465
  %v467 = vpop.f32.mrb[0].mxu0
  %v468 = vpop.f32.mrb[0].mxu0
  %v469 = vadd.f32 %v304, %v468
  %v470 = vpop.f32.mrb[0].mxu0
  %471 = vmatprep.mubr.bf16.mxu0 0
  %472 = vmatmul.mubr.bf16.gmra.mrb[0].mxu0 %v420
  %v473 = vpop.f32.mrb[0].mxu0
  %v474 = vadd.f32 %v309, %v473
  %v475 = vpop.f32.mrb[0].mxu0
  %v476 = vpop.f32.mrb[0].mxu0
  %v477 = vadd.f32 %v312, %v476
  %v478 = vpop.f32.mrb[0].mxu0
  %479 = vmatprep.mubr.bf16.mxu0 0
  %480 = vmatmul.mubr.bf16.gmra.mrb[0].mxu0 %v423
  %v481 = vpop.f32.mrb[0].mxu0
  %v482 = vadd.f32 %v317, %v481
  %v483 = vpop.f32.mrb[0].mxu0
  %v484 = vpop.f32.mrb[0].mxu0
  %v485 = vadd.f32 %v320, %v484
  %v486 = vpop.f32.mrb[0].mxu0
  %487 = vmatprep.mubr.bf16.mxu0 0
  %488 = vmatmul.mubr.bf16.gmra.mrb[0].mxu0 %v426
  %v489 = vpop.f32.mrb[0].mxu0
  %v490 = vadd.f32 %v325, %v489
  %v491 = vpop.f32.mrb[0].mxu0
  %v492 = vpop.f32.mrb[0].mxu0
  %v493 = vadd.f32 %v328, %v492
  %v494 = vpop.f32.mrb[0].mxu0
  %495 = vdwg.mxu0
  %v496 = vtanh.pop %v466
  %v497 = vtanh.pop %v469
  %v498 = vtanh.pop %v474
  %v499 = vtanh.pop %v477
  %v500 = vtanh.pop %v482
  %v501 = vtanh.pop %v485
  %v502 = vtanh.pop %v490
  %v503 = vtanh.pop %v493
  %v504 = vmul.f32 %v386, %v496
  %v505 = vmul.f32 %v389, %v497
  %v506 = vmul.f32 %v394, %v498
  %v507 = vmul.f32 %v397, %v499
  %v508 = vmul.f32 %v402, %v500
  %v509 = vmul.f32 %v405, %v501
  %v510 = vmul.f32 %v410, %v502
  %v511 = vmul.f32 %v413, %v503
  %v512 = vsel %vm249, %v504, 0.0
  %513 = vadd.xlane.f32.xlu0 %v512
  %v514 = vpop.xlane.xlu0 %513
  %v515 = vsel %vm249, %v505, 0.0
  %516 = vadd.xlane.f32.xlu0 %v515
  %v517 = vpop.xlane.xlu0 %516
  %v518 = vsel %vm249, %v506, 0.0
  %519 = vadd.xlane.f32.xlu0 %v518
  %v520 = vpop.xlane.xlu0 %519
  %v521 = vsel %vm249, %v507, 0.0
  %522 = vadd.xlane.f32.xlu0 %v521
  %v523 = vpop.xlane.xlu0 %522
  %v524 = vsel %vm249, %v508, 0.0
  %525 = vadd.xlane.f32.xlu0 %v524
  %v526 = vpop.xlane.xlu0 %525
  %v527 = vsel %vm249, %v509, 0.0
  %528 = vadd.xlane.f32.xlu0 %v527
  %v529 = vpop.xlane.xlu0 %528
  %v530 = vsel %vm249, %v510, 0.0
  %531 = vadd.xlane.f32.xlu0 %v530
  %v532 = vpop.xlane.xlu0 %531
  %v533 = vsel %vm249, %v511, 0.0
  %534 = vadd.xlane.f32.xlu0 %v533
  %v535 = vpop.xlane.xlu0 %534
  %v536 = vld [vmem:[%s7] sm:$0xff]
  %v537 = vld [vmem:[%s7 + $0x8] sm:$0xff]
  %v538 = vld [vmem:[%s7 + $0x10] sm:$0xff]
  %v539 = vld [vmem:[%s7 + $0x18] sm:$0xff]
  %v540 = vld [vmem:[%s7 + $0x20] sm:$0xff]
  %v541 = vld [vmem:[%s7 + $0x28] sm:$0xff]
  %v542 = vld [vmem:[%s7 + $0x30] sm:$0xff]
  %v543 = vld [vmem:[%s7 + $0x38] sm:$0xff]
  %vm544 = vcmp.ne.f32.partialorder %v536, 0.0
  %vm545 = vcmp.ne.f32.partialorder %v537, 0.0
  %vm546 = vcmp.ne.f32.partialorder %v538, 0.0
  %vm547 = vcmp.ne.f32.partialorder %v539, 0.0
  %vm548 = vcmp.ne.f32.partialorder %v540, 0.0
  %vm549 = vcmp.ne.f32.partialorder %v541, 0.0
  %vm550 = vcmp.ne.f32.partialorder %v542, 0.0
  %vm551 = vcmp.ne.f32.partialorder %v543, 0.0
  %v552 = vsel %vm544, -1e+12, %v514
  %v553 = vsel %vm545, -1e+12, %v517
  %v554 = vsel %vm546, -1e+12, %v520
  %v555 = vsel %vm547, -1e+12, %v523
  %v556 = vsel %vm548, -1e+12, %v526
  %v557 = vsel %vm549, -1e+12, %v529
  %v558 = vsel %vm550, -1e+12, %v532
  %v559 = vsel %vm551, -1e+12, %v535
  %v560 = vmax.f32 %v552, %v554
  %v561 = vmax.f32 %v553, %v555
  %v562 = vmax.f32 %v560, %v556
  %v563 = vmax.f32 %v561, %v557
  %v564 = vmax.f32 %v562, %v558
  %v565 = vmax.f32 %v563, %v559
  %v566 = vsub.f32 %v552, %v564
  %v567 = vsub.f32 %v553, %v565
  %v568 = vmul.f32 %v566, 1.442695
  %v569 = vpow.pop %v568
  %v570 = vmul.f32 %v567, 1.442695
  %v571 = vpow.pop %v570
  %v572 = vsub.f32 %v554, %v564
  %v573 = vsub.f32 %v555, %v565
  %v574 = vmul.f32 %v572, 1.442695
  %v575 = vpow.pop %v574
  %v576 = vmul.f32 %v573, 1.442695
  %v577 = vpow.pop %v576
  %v578 = vsub.f32 %v556, %v564
  %v579 = vsub.f32 %v557, %v565
  %v580 = vmul.f32 %v578, 1.442695
  %v581 = vpow.pop %v580
  %v582 = vmul.f32 %v579, 1.442695
  %v583 = vpow.pop %v582
  %v584 = vsub.f32 %v558, %v564
  %v585 = vsub.f32 %v559, %v565
  %v586 = vmul.f32 %v584, 1.442695
  %v587 = vpow.pop %v586
  %v588 = vmul.f32 %v585, 1.442695
  %v589 = vpow.pop %v588
  %v590 = vadd.f32 %v569, %v575
  %v591 = vadd.f32 %v571, %v577
  %v592 = vadd.f32 %v590, %v581
  %v593 = vadd.f32 %v591, %v583
  %v594 = vadd.f32 %v592, %v587
  %v595 = vadd.f32 %v593, %v589
  %v596 = vrcp.pop %v594
  %v597 = vrcp.pop %v595
  %v598 = vmul.f32 %v569, %v596
  %v599 = vmul.f32 %v571, %v597
  %601 = vset.pattern.permute.xlu0 0
  %602 = vperm.xlu0 %601, %v598
  %v603 = vpop.permute.xlu0 %602
  %606 = vset.pattern.permute.xlu0 0
  %607 = vperm.xlu0 %606, %v599
  %v608 = vpop.permute.xlu0 %607
  %v610 = vmul.f32 %v603, %v215
  %v611 = vmul.f32 %v608, %v216
  %v612 = vmul.f32 %v603, %v223
  %v613 = vmul.f32 %v608, %v224
  %v614 = vmul.f32 %v575, %v596
  %v615 = vmul.f32 %v577, %v597
  %617 = vset.pattern.permute.xlu0 0
  %618 = vperm.xlu0 %617, %v614
  %v619 = vpop.permute.xlu0 %618
  %622 = vset.pattern.permute.xlu0 0
  %623 = vperm.xlu0 %622, %v615
  %v624 = vpop.permute.xlu0 %623
  %v626 = vmul.f32 %v619, %v217
  %v627 = vmul.f32 %v624, %v218
  %v628 = vadd.f32 %v610, %v626
  %v629 = vadd.f32 %v611, %v627
  %v630 = vmul.f32 %v619, %v225
  %v631 = vmul.f32 %v624, %v226
  %v632 = vadd.f32 %v612, %v630
  %v633 = vadd.f32 %v613, %v631
  %v634 = vmul.f32 %v581, %v596
  %v635 = vmul.f32 %v583, %v597
  %637 = vset.pattern.permute.xlu0 0
  %638 = vperm.xlu0 %637, %v634
  %v639 = vpop.permute.xlu0 %638
  %642 = vset.pattern.permute.xlu0 0
  %643 = vperm.xlu0 %642, %v635
  %v644 = vpop.permute.xlu0 %643
  %v646 = vmul.f32 %v639, %v219
  %v647 = vmul.f32 %v644, %v220
  %v648 = vadd.f32 %v628, %v646
  %v649 = vadd.f32 %v629, %v647
  %v650 = vmul.f32 %v639, %v227
  %v651 = vmul.f32 %v644, %v228
  %v652 = vadd.f32 %v632, %v650
  %v653 = vadd.f32 %v633, %v651
  %v654 = vmul.f32 %v587, %v596
  %v655 = vmul.f32 %v589, %v597
  %657 = vset.pattern.permute.xlu0 0
  %658 = vperm.xlu0 %657, %v654
  %v659 = vpop.permute.xlu0 %658
  %662 = vset.pattern.permute.xlu0 0
  %663 = vperm.xlu0 %662, %v655
  %v664 = vpop.permute.xlu0 %663
  %v666 = vmul.f32 %v659, %v221
  %v667 = vmul.f32 %v664, %v222
  %v668 = vadd.f32 %v648, %v666
  %v669 = vadd.f32 %v649, %v667
  %v670 = vmul.f32 %v659, %v229
  %v671 = vmul.f32 %v664, %v230
  %v672 = vadd.f32 %v652, %v670
  %v673 = vadd.f32 %v653, %v671
  %v674 = vld [vmem:[%s15] sm:$0xff]
  %v675 = vld [vmem:[%s15 + $0x8] sm:$0xff]
  %v676 = vld [vmem:[%s23] sm:$0xf]
  %v677 = vld [vmem:[%s23 + $0x4] sm:$0xf]
  %v678 = vld [vmem:[%s23 + $0x8] sm:$0x3]
  %v679 = vpack.c.bf16 %v675, %v674
  %v680 = vld [vmem:[%s25] sm:$0xf]
  %v681 = vpack.c.bf16 %v669, %v668
  %v683 = vsel %vm249, %v681, 0
  %v686 = vsel %vm262, %v680, 0
  %688 = vmatprep.subr.bf16.mxu0 0
  %689 = vmatpush1.bf16.msra.mxu0 %v686
  %690 = vmatprep.subr.bf16.mxu0 0
  %691 = vmatpush1.bf16.msra.mxu0 0
  %692 = vmatprep.subr.bf16.mxu0 0
  %693 = vmatpush1.bf16.msra.mxu0 0
  %694 = vmatprep.subr.bf16.mxu0 0
  %695 = vmatpush1.bf16.msra.mxu0 0
  %696 = vmatprep.subr.bf16.mxu0 0
  %697 = vmatpush1.bf16.msra.mxu0 0
  %698 = vmatprep.subr.bf16.mxu0 0
  %699 = vmatpush1.bf16.msra.mxu0 0
  %700 = vmatprep.subr.bf16.mxu0 0
  %701 = vmatpush1.bf16.msra.mxu0 0
  %702 = vmatprep.subr.bf16.mxu0 0
  %703 = vmatpush1.bf16.msra.mxu0 0
  %704 = vmatprep.subr.bf16.mxu0 0
  %705 = vmatpush1.bf16.msra.mxu0 0
  %706 = vmatprep.subr.bf16.mxu0 0
  %707 = vmatpush1.bf16.msra.mxu0 0
  %708 = vmatprep.subr.bf16.mxu0 0
  %709 = vmatpush1.bf16.msra.mxu0 0
  %710 = vmatprep.subr.bf16.mxu0 0
  %711 = vmatpush1.bf16.msra.mxu0 0
  %712 = vmatprep.subr.bf16.mxu0 0
  %713 = vmatpush1.bf16.msra.mxu0 0
  %714 = vmatprep.subr.bf16.mxu0 0
  %715 = vmatpush1.bf16.msra.mxu0 0
  %716 = vmatprep.subr.bf16.mxu0 0
  %717 = vmatpush1.bf16.msra.mxu0 0
  %718 = vmatprep.subr.bf16.mxu0 0
  %719 = vmatpush1.bf16.msra.mxu0 0
  %720 = vmatprep.mubr.bf16.mxu0 0
  %721 = vmatmul.mubr.bf16.gmra.mrb[0].mxu0 %v683
  %v722 = vpop.f32.mrb[0].mxu0
  %v723 = vadd.f32 0.0, %v722
  %v724 = vpop.f32.mrb[0].mxu0
  %v725 = vpop.f32.mrb[0].mxu0
  %v726 = vadd.f32 0.0, %v725
  %v727 = vpop.f32.mrb[0].mxu0
  %728 = vdwg.mxu0
  %v732 = vunpack.c.l.b16 %v676
  %v733 = vunpack.c.l.b16 %v677
  %v734 = vunpack.c.l.b16 %v678
  %v735 = vpack.c.b16 %v733, %v732
  %v736 = vpack.c.b16 %v734, %v734
  %vm738 = vcmask 154624
  %v740 = vsel %vm738, %v679, 0
  %vm742 = vcmask 1040384
  %vm743 = vcmask 1041408
  %v744 = vsel %vm742, 4294967295, 65535
  %v745 = vsel %vm743, %v744, 0
  %v747 = vand.u32 %v736, %v745
  %749 = vmatprep.subr.bf16.mxu0 0
  %750 = vmatpush1.bf16.msra.mxu0 %v735
  %751 = vmatprep.subr.bf16.mxu0 0
  %752 = vmatpush1.bf16.msra.mxu0 %v747
  %753 = vmatprep.subr.bf16.mxu0 0
  %754 = vmatpush1.bf16.msra.mxu0 0
  %755 = vmatprep.subr.bf16.mxu0 0
  %756 = vmatpush1.bf16.msra.mxu0 0
  %757 = vmatprep.subr.bf16.mxu0 0
  %758 = vmatpush1.bf16.msra.mxu0 0
  %759 = vmatprep.subr.bf16.mxu0 0
  %760 = vmatpush1.bf16.msra.mxu0 0
  %761 = vmatprep.subr.bf16.mxu0 0
  %762 = vmatpush1.bf16.msra.mxu0 0
  %763 = vmatprep.subr.bf16.mxu0 0
  %764 = vmatpush1.bf16.msra.mxu0 0
  %765 = vmatprep.subr.bf16.mxu0 0
  %766 = vmatpush1.bf16.msra.mxu0 0
  %767 = vmatprep.subr.bf16.mxu0 0
  %768 = vmatpush1.bf16.msra.mxu0 0
  %769 = vmatprep.subr.bf16.mxu0 0
  %770 = vmatpush1.bf16.msra.mxu0 0
  %771 = vmatprep.subr.bf16.mxu0 0
  %772 = vmatpush1.bf16.msra.mxu0 0
  %773 = vmatprep.subr.bf16.mxu0 0
  %774 = vmatpush1.bf16.msra.mxu0 0
  %775 = vmatprep.subr.bf16.mxu0 0
  %776 = vmatpush1.bf16.msra.mxu0 0
  %777 = vmatprep.subr.bf16.mxu0 0
  %778 = vmatpush1.bf16.msra.mxu0 0
  %779 = vmatprep.subr.bf16.mxu0 0
  %780 = vmatpush1.bf16.msra.mxu0 0
  %781 = vmatprep.mubr.bf16.mxu0 0
  %782 = vmatmul.mubr.bf16.gmra.mrb[0].mxu0 %v740
  %v783 = vpop.f32.mrb[0].mxu0
  %v784 = vadd.f32 %v723, %v783
  %v785 = vpop.f32.mrb[0].mxu0
  %v786 = vpop.f32.mrb[0].mxu0
  %v787 = vadd.f32 %v726, %v786
  %v788 = vpop.f32.mrb[0].mxu0
  %789 = vdwg.mxu0
  %v790 = vld [vmem:[%s27] sm:$0xf]
  %v791 = vpack.c.bf16 %v673, %v672
  %v793 = vsel %vm249, %v791, 0
  %v796 = vsel %vm262, %v790, 0
  %798 = vmatprep.subr.bf16.mxu0 0
  %799 = vmatpush1.bf16.msra.mxu0 %v796
  %800 = vmatprep.subr.bf16.mxu0 0
  %801 = vmatpush1.bf16.msra.mxu0 0
  %802 = vmatprep.subr.bf16.mxu0 0
  %803 = vmatpush1.bf16.msra.mxu0 0
  %804 = vmatprep.subr.bf16.mxu0 0
  %805 = vmatpush1.bf16.msra.mxu0 0
  %806 = vmatprep.subr.bf16.mxu0 0
  %807 = vmatpush1.bf16.msra.mxu0 0
  %808 = vmatprep.subr.bf16.mxu0 0
  %809 = vmatpush1.bf16.msra.mxu0 0
  %810 = vmatprep.subr.bf16.mxu0 0
  %811 = vmatpush1.bf16.msra.mxu0 0
  %812 = vmatprep.subr.bf16.mxu0 0
  %813 = vmatpush1.bf16.msra.mxu0 0
  %814 = vmatprep.subr.bf16.mxu0 0
  %815 = vmatpush1.bf16.msra.mxu0 0
  %816 = vmatprep.subr.bf16.mxu0 0
  %817 = vmatpush1.bf16.msra.mxu0 0
  %818 = vmatprep.subr.bf16.mxu0 0
  %819 = vmatpush1.bf16.msra.mxu0 0
  %820 = vmatprep.subr.bf16.mxu0 0
  %821 = vmatpush1.bf16.msra.mxu0 0
  %822 = vmatprep.subr.bf16.mxu0 0
  %823 = vmatpush1.bf16.msra.mxu0 0
  %824 = vmatprep.subr.bf16.mxu0 0
  %825 = vmatpush1.bf16.msra.mxu0 0
  %826 = vmatprep.subr.bf16.mxu0 0
  %827 = vmatpush1.bf16.msra.mxu0 0
  %828 = vmatprep.subr.bf16.mxu0 0
  %829 = vmatpush1.bf16.msra.mxu0 0
  %830 = vmatprep.mubr.bf16.mxu0 0
  %831 = vmatmul.mubr.bf16.gmra.mrb[0].mxu0 %v793
  %v832 = vpop.f32.mrb[0].mxu0
  %v833 = vadd.f32 0.0, %v832
  %v834 = vpop.f32.mrb[0].mxu0
  %v835 = vpop.f32.mrb[0].mxu0
  %v836 = vadd.f32 0.0, %v835
  %v837 = vpop.f32.mrb[0].mxu0
  %838 = vdwg.mxu0
  %v839 = vadd.f32 %v784, %v833
  %v840 = vadd.f32 %v787, %v836
  %v841 = vld [vmem:[%s31] sm:$0x1]
  %v843 = vlaneseq
  %v844 = vshrl.u32 %v843, 7
  %v845 = vsub.s32 0, %v844
  %v846 = vrot.slane %v841, %v845
  %v848 = vadd.f32 %v839, %v846
  %v849 = vadd.f32 %v840, %v846
  %v850 = vld [vmem:[%s33] sm:$0xf]
  %v851 = vld [vmem:[%s33 + $0x4] sm:$0xf]
  %v852 = vld [vmem:[%s33 + $0x8] sm:$0x3]
  %v853 = vld [vmem:[%s35] sm:$0xf]
  %v855 = vsel %vm262, %v853, 0
  %857 = vmatprep.subr.bf16.mxu0 0
  %858 = vmatpush1.bf16.msra.mxu0 %v855
  %859 = vmatprep.subr.bf16.mxu0 0
  %860 = vmatpush1.bf16.msra.mxu0 0
  %861 = vmatprep.subr.bf16.mxu0 0
  %862 = vmatpush1.bf16.msra.mxu0 0
  %863 = vmatprep.subr.bf16.mxu0 0
  %864 = vmatpush1.bf16.msra.mxu0 0
  %865 = vmatprep.subr.bf16.mxu0 0
  %866 = vmatpush1.bf16.msra.mxu0 0
  %867 = vmatprep.subr.bf16.mxu0 0
  %868 = vmatpush1.bf16.msra.mxu0 0
  %869 = vmatprep.subr.bf16.mxu0 0
  %870 = vmatpush1.bf16.msra.mxu0 0
  %871 = vmatprep.subr.bf16.mxu0 0
  %872 = vmatpush1.bf16.msra.mxu0 0
  %873 = vmatprep.subr.bf16.mxu0 0
  %874 = vmatpush1.bf16.msra.mxu0 0
  %875 = vmatprep.subr.bf16.mxu0 0
  %876 = vmatpush1.bf16.msra.mxu0 0
  %877 = vmatprep.subr.bf16.mxu0 0
  %878 = vmatpush1.bf16.msra.mxu0 0
  %879 = vmatprep.subr.bf16.mxu0 0
  %880 = vmatpush1.bf16.msra.mxu0 0
  %881 = vmatprep.subr.bf16.mxu0 0
  %882 = vmatpush1.bf16.msra.mxu0 0
  %883 = vmatprep.subr.bf16.mxu0 0
  %884 = vmatpush1.bf16.msra.mxu0 0
  %885 = vmatprep.subr.bf16.mxu0 0
  %886 = vmatpush1.bf16.msra.mxu0 0
  %887 = vmatprep.subr.bf16.mxu0 0
  %888 = vmatpush1.bf16.msra.mxu0 0
  %889 = vmatprep.mubr.bf16.mxu0 0
  %890 = vmatmul.mubr.bf16.gmra.mrb[0].mxu0 %v683
  %v891 = vpop.f32.mrb[0].mxu0
  %v892 = vadd.f32 0.0, %v891
  %v893 = vpop.f32.mrb[0].mxu0
  %v894 = vpop.f32.mrb[0].mxu0
  %v895 = vadd.f32 0.0, %v894
  %v896 = vpop.f32.mrb[0].mxu0
  %897 = vdwg.mxu0
  %v901 = vunpack.c.l.b16 %v850
  %v902 = vunpack.c.l.b16 %v851
  %v903 = vunpack.c.l.b16 %v852
  %v904 = vpack.c.b16 %v902, %v901
  %v905 = vpack.c.b16 %v903, %v903
  %v908 = vand.u32 %v905, %v745
  %910 = vmatprep.subr.bf16.mxu0 0
  %911 = vmatpush1.bf16.msra.mxu0 %v904
  %912 = vmatprep.subr.bf16.mxu0 0
  %913 = vmatpush1.bf16.msra.mxu0 %v908
  %914 = vmatprep.subr.bf16.mxu0 0
  %915 = vmatpush1.bf16.msra.mxu0 0
  %916 = vmatprep.subr.bf16.mxu0 0
  %917 = vmatpush1.bf16.msra.mxu0 0
  %918 = vmatprep.subr.bf16.mxu0 0
  %919 = vmatpush1.bf16.msra.mxu0 0
  %920 = vmatprep.subr.bf16.mxu0 0
  %921 = vmatpush1.bf16.msra.mxu0 0
  %922 = vmatprep.subr.bf16.mxu0 0
  %923 = vmatpush1.bf16.msra.mxu0 0
  %924 = vmatprep.subr.bf16.mxu0 0
  %925 = vmatpush1.bf16.msra.mxu0 0
  %926 = vmatprep.subr.bf16.mxu0 0
  %927 = vmatpush1.bf16.msra.mxu0 0
  %928 = vmatprep.subr.bf16.mxu0 0
  %929 = vmatpush1.bf16.msra.mxu0 0
  %930 = vmatprep.subr.bf16.mxu0 0
  %931 = vmatpush1.bf16.msra.mxu0 0
  %932 = vmatprep.subr.bf16.mxu0 0
  %933 = vmatpush1.bf16.msra.mxu0 0
  %934 = vmatprep.subr.bf16.mxu0 0
  %935 = vmatpush1.bf16.msra.mxu0 0
  %936 = vmatprep.subr.bf16.mxu0 0
  %937 = vmatpush1.bf16.msra.mxu0 0
  %938 = vmatprep.subr.bf16.mxu0 0
  %939 = vmatpush1.bf16.msra.mxu0 0
  %940 = vmatprep.subr.bf16.mxu0 0
  %941 = vmatpush1.bf16.msra.mxu0 0
  %942 = vmatprep.mubr.bf16.mxu0 0
  %943 = vmatmul.mubr.bf16.gmra.mrb[0].mxu0 %v740
  %v944 = vpop.f32.mrb[0].mxu0
  %v945 = vadd.f32 %v892, %v944
  %v946 = vpop.f32.mrb[0].mxu0
  %v947 = vpop.f32.mrb[0].mxu0
  %v948 = vadd.f32 %v895, %v947
  %v949 = vpop.f32.mrb[0].mxu0
  %950 = vdwg.mxu0
  %v951 = vld [vmem:[%s37] sm:$0xf]
  %v953 = vsel %vm262, %v951, 0
  %955 = vmatprep.subr.bf16.mxu0 0
  %956 = vmatpush1.bf16.msra.mxu0 %v953
  %957 = vmatprep.subr.bf16.mxu0 0
  %958 = vmatpush1.bf16.msra.mxu0 0
  %959 = vmatprep.subr.bf16.mxu0 0
  %960 = vmatpush1.bf16.msra.mxu0 0
  %961 = vmatprep.subr.bf16.mxu0 0
  %962 = vmatpush1.bf16.msra.mxu0 0
  %963 = vmatprep.subr.bf16.mxu0 0
  %964 = vmatpush1.bf16.msra.mxu0 0
  %965 = vmatprep.subr.bf16.mxu0 0
  %966 = vmatpush1.bf16.msra.mxu0 0
  %967 = vmatprep.subr.bf16.mxu0 0
  %968 = vmatpush1.bf16.msra.mxu0 0
  %969 = vmatprep.subr.bf16.mxu0 0
  %970 = vmatpush1.bf16.msra.mxu0 0
  %971 = vmatprep.subr.bf16.mxu0 0
  %972 = vmatpush1.bf16.msra.mxu0 0
  %973 = vmatprep.subr.bf16.mxu0 0
  %974 = vmatpush1.bf16.msra.mxu0 0
  %975 = vmatprep.subr.bf16.mxu0 0
  %976 = vmatpush1.bf16.msra.mxu0 0
  %977 = vmatprep.subr.bf16.mxu0 0
  %978 = vmatpush1.bf16.msra.mxu0 0
  %979 = vmatprep.subr.bf16.mxu0 0
  %980 = vmatpush1.bf16.msra.mxu0 0
  %981 = vmatprep.subr.bf16.mxu0 0
  %982 = vmatpush1.bf16.msra.mxu0 0
  %983 = vmatprep.subr.bf16.mxu0 0
  %984 = vmatpush1.bf16.msra.mxu0 0
  %985 = vmatprep.subr.bf16.mxu0 0
  %986 = vmatpush1.bf16.msra.mxu0 0
  %987 = vmatprep.mubr.bf16.mxu0 0
  %988 = vmatmul.mubr.bf16.gmra.mrb[0].mxu0 %v793
  %v989 = vpop.f32.mrb[0].mxu0
  %v990 = vadd.f32 0.0, %v989
  %v991 = vpop.f32.mrb[0].mxu0
  %v992 = vpop.f32.mrb[0].mxu0
  %v993 = vadd.f32 0.0, %v992
  %v994 = vpop.f32.mrb[0].mxu0
  %995 = vdwg.mxu0
  %v996 = vadd.f32 %v945, %v990
  %v997 = vadd.f32 %v948, %v993
  %v998 = vld [vmem:[%s41] sm:$0x1]
  %v1000 = vlaneseq
  %v1001 = vshrl.u32 %v1000, 7
  %v1002 = vsub.s32 0, %v1001
  %v1003 = vrot.slane %v998, %v1002
  %v1005 = vadd.f32 %v996, %v1003
  %v1006 = vadd.f32 %v997, %v1003
  %v1007 = vld [vmem:[%s17] sm:$0xff]
  %v1008 = vld [vmem:[%s17 + $0x8] sm:$0xff]
  %v1009 = vld [vmem:[%s29] sm:$0xf]
  %v1010 = vld [vmem:[%s29 + $0x4] sm:$0xf]
  %v1013 = vunpack.c.l.b16 %v1009
  %v1014 = vunpack.c.l.b16 %v1010
  %v1015 = vpack.c.b16 %v1014, %v1013
  %vm1017 = vcmask 130048
  %v1019 = vsel %vm1017, 0, 0
  %1021 = vmatprep.subr.bf16.mxu0 0
  %1022 = vmatpush1.bf16.msra.mxu0 %v1015
  %1023 = vmatprep.subr.bf16.mxu0 0
  %1024 = vmatpush1.bf16.msra.mxu0 0
  %1025 = vmatprep.subr.bf16.mxu0 0
  %1026 = vmatpush1.bf16.msra.mxu0 0
  %1027 = vmatprep.subr.bf16.mxu0 0
  %1028 = vmatpush1.bf16.msra.mxu0 0
  %1029 = vmatprep.subr.bf16.mxu0 0
  %1030 = vmatpush1.bf16.msra.mxu0 0
  %1031 = vmatprep.subr.bf16.mxu0 0
  %1032 = vmatpush1.bf16.msra.mxu0 0
  %1033 = vmatprep.subr.bf16.mxu0 0
  %1034 = vmatpush1.bf16.msra.mxu0 0
  %1035 = vmatprep.subr.bf16.mxu0 0
  %1036 = vmatpush1.bf16.msra.mxu0 0
  %1037 = vmatprep.subr.bf16.mxu0 0
  %1038 = vmatpush1.bf16.msra.mxu0 0
  %1039 = vmatprep.subr.bf16.mxu0 0
  %1040 = vmatpush1.bf16.msra.mxu0 0
  %1041 = vmatprep.subr.bf16.mxu0 0
  %1042 = vmatpush1.bf16.msra.mxu0 0
  %1043 = vmatprep.subr.bf16.mxu0 0
  %1044 = vmatpush1.bf16.msra.mxu0 0
  %1045 = vmatprep.subr.bf16.mxu0 0
  %1046 = vmatpush1.bf16.msra.mxu0 0
  %1047 = vmatprep.subr.bf16.mxu0 0
  %1048 = vmatpush1.bf16.msra.mxu0 0
  %1049 = vmatprep.subr.bf16.mxu0 0
  %1050 = vmatpush1.bf16.msra.mxu0 0
  %1051 = vmatprep.subr.bf16.mxu0 0
  %1052 = vmatpush1.bf16.msra.mxu0 0
  %1053 = vmatprep.mubr.bf16.mxu0 0
  %1054 = vmatmul.mubr.bf16.gmra.mrb[0].mxu0 %v1019
  %v1055 = vpop.f32.mrb[0].mxu0
  %v1056 = vadd.f32 0.0, %v1055
  %v1057 = vpop.f32.mrb[0].mxu0
  %v1058 = vpop.f32.mrb[0].mxu0
  %v1059 = vpop.f32.mrb[0].mxu0
  %1060 = vdwg.mxu0
  %v1061 = vadd.f32 %v848, %v1056
  %v1062 = vxor.u32 %v1061, 2147483648
  %v1063 = vmul.f32 %v1062, 1.442695
  %v1064 = vpow.pop %v1063
  %v1065 = vadd.f32 %v1064, 1.0
  %v1066 = vrcp.pop %v1065
  %v1067 = vmul.f32 1.0, %v1066
  %v1068 = vtanh.pop %v1061
  %v1069 = vmul.f32 %v1067, 0.0
  %1071 = vrot.lane.b32.xlu0 %v1068, 96
  %v1072 = vpop.permute.xlu0 %1071
  %v1074 = vmul.f32 %v1067, %v1072
  %1076 = vrot.lane.b32.xlu0 %v1074, 16
  %v1077 = vpop.permute.xlu0 %1076
  %v1079 = vadd.f32 %v1069, %v1077
  %v1080 = vtanh.pop %v1079
  %1082 = vrot.lane.b32.xlu0 %v1080, 32
  %v1083 = vpop.permute.xlu0 %1082
  %v1085 = vmul.f32 %v1067, %v1083
  %1087 = vset.pattern.permute.xlu0 0
  %1088 = vperm.xlu0 %1087, %v1007
  %v1089 = vpop.permute.xlu0 %1088
  %v1091 = vmul.f32 %v1089, %v1085
  %v1092 = vsub.f32 1.0, %v1007
  %1094 = vset.pattern.permute.xlu0 0
  %1095 = vperm.xlu0 %1094, %v1092
  %v1096 = vpop.permute.xlu0 %1095
  %v1098 = vmul.f32 %v1096, 0.0
  %v1099 = vadd.f32 %v1091, %v1098
  %v1100 = vmul.f32 %v1089, %v1079
  %v1101 = vadd.f32 %v1100, %v1098
  %v1102 = vmul.f32 %v1099, %v1089
  %v1103 = vpack.c.bf16 %v1099, %v1099
  %1105 = vrot.lane.b32.xlu0 %v1103, 80
  %v1106 = vpop.permute.xlu0 %1105
  %v1108 = vsel %vm1017, %v1106, 0
  %1110 = vmatprep.subr.bf16.mxu0 0
  %1111 = vmatpush1.bf16.msra.mxu0 %v1015
  %1112 = vmatprep.subr.bf16.mxu0 0
  %1113 = vmatpush1.bf16.msra.mxu0 0
  %1114 = vmatprep.subr.bf16.mxu0 0
  %1115 = vmatpush1.bf16.msra.mxu0 0
  %1116 = vmatprep.subr.bf16.mxu0 0
  %1117 = vmatpush1.bf16.msra.mxu0 0
  %1118 = vmatprep.subr.bf16.mxu0 0
  %1119 = vmatpush1.bf16.msra.mxu0 0
  %1120 = vmatprep.subr.bf16.mxu0 0
  %1121 = vmatpush1.bf16.msra.mxu0 0
  %1122 = vmatprep.subr.bf16.mxu0 0
  %1123 = vmatpush1.bf16.msra.mxu0 0
  %1124 = vmatprep.subr.bf16.mxu0 0
  %1125 = vmatpush1.bf16.msra.mxu0 0
  %1126 = vmatprep.subr.bf16.mxu0 0
  %1127 = vmatpush1.bf16.msra.mxu0 0
  %1128 = vmatprep.subr.bf16.mxu0 0
  %1129 = vmatpush1.bf16.msra.mxu0 0
  %1130 = vmatprep.subr.bf16.mxu0 0
  %1131 = vmatpush1.bf16.msra.mxu0 0
  %1132 = vmatprep.subr.bf16.mxu0 0
  %1133 = vmatpush1.bf16.msra.mxu0 0
  %1134 = vmatprep.subr.bf16.mxu0 0
  %1135 = vmatpush1.bf16.msra.mxu0 0
  %1136 = vmatprep.subr.bf16.mxu0 0
  %1137 = vmatpush1.bf16.msra.mxu0 0
  %1138 = vmatprep.subr.bf16.mxu0 0
  %1139 = vmatpush1.bf16.msra.mxu0 0
  %1140 = vmatprep.subr.bf16.mxu0 0
  %1141 = vmatpush1.bf16.msra.mxu0 0
  %1142 = vmatprep.mubr.bf16.mxu0 0
  %1143 = vmatmul.mubr.bf16.gmra.mrb[0].mxu0 %v1108
  %v1144 = vpop.f32.mrb[0].mxu0
  %v1145 = vadd.f32 0.0, %v1144
  %v1146 = vpop.f32.mrb[0].mxu0
  %v1147 = vpop.f32.mrb[0].mxu0
  %v1148 = vpop.f32.mrb[0].mxu0
  %1149 = vdwg.mxu0
  %v1151 = vrot.slane %v1145, 6
  %v1153 = vadd.f32 %v848, %v1151
  %v1154 = vxor.u32 %v1153, 2147483648
  %v1155 = vmul.f32 %v1154, 1.442695
  %v1156 = vpow.pop %v1155
  %v1157 = vadd.f32 %v1156, 1.0
  %v1158 = vrcp.pop %v1157
  %v1159 = vmul.f32 1.0, %v1158
  %v1160 = vtanh.pop %v1153
  %v1162 = vrot.slane %v1101, 6
  %v1164 = vmul.f32 %v1159, %v1162
  %1166 = vrot.lane.b32.xlu0 %v1160, 96
  %v1167 = vpop.permute.xlu0 %1166
  %v1169 = vmul.f32 %v1159, %v1167
  %1171 = vrot.lane.b32.xlu0 %v1169, 16
  %v1172 = vpop.permute.xlu0 %1171
  %v1174 = vadd.f32 %v1164, %v1172
  %v1175 = vtanh.pop %v1174
  %1177 = vrot.lane.b32.xlu0 %v1175, 32
  %v1178 = vpop.permute.xlu0 %1177
  %v1180 = vmul.f32 %v1159, %v1178
  %v1181 = vmul.f32 %v1089, %v1180
  %v1183 = vrot.slane %v1099, 6
  %1184 = vrot.lane.b32.xlu0 %v1183, 80
  %v1185 = vpop.permute.xlu0 %1184
  %v1187 = vmul.f32 %v1096, %v1185
  %1189 = vrot.lane.b32.xlu0 %v1187, 48
  %v1190 = vpop.permute.xlu0 %1189
  %v1192 = vadd.f32 %v1181, %v1190
  %v1193 = vmul.f32 %v1089, %v1174
  %1194 = vrot.lane.b32.xlu0 %v1162, 112
  %v1195 = vpop.permute.xlu0 %1194
  %v1197 = vmul.f32 %v1096, %v1195
  %1199 = vrot.lane.b32.xlu0 %v1197, 16
  %v1200 = vpop.permute.xlu0 %1199
  %v1202 = vadd.f32 %v1193, %v1200
  %v1203 = vmul.f32 %v1192, %v1089
  %v1204 = vpack.c.bf16 %v1192, %v1192
  %v1206 = vrot.slane %v1204, 1
  %1207 = vrot.lane.b32.xlu0 %v1206, 80
  %v1208 = vpop.permute.xlu0 %1207
  %v1210 = vsel %vm1017, %v1208, 0
  %1212 = vmatprep.subr.bf16.mxu0 0
  %1213 = vmatpush1.bf16.msra.mxu0 %v1015
  %1214 = vmatprep.subr.bf16.mxu0 0
  %1215 = vmatpush1.bf16.msra.mxu0 0
  %1216 = vmatprep.subr.bf16.mxu0 0
  %1217 = vmatpush1.bf16.msra.mxu0 0
  %1218 = vmatprep.subr.bf16.mxu0 0
  %1219 = vmatpush1.bf16.msra.mxu0 0
  %1220 = vmatprep.subr.bf16.mxu0 0
  %1221 = vmatpush1.bf16.msra.mxu0 0
  %1222 = vmatprep.subr.bf16.mxu0 0
  %1223 = vmatpush1.bf16.msra.mxu0 0
  %1224 = vmatprep.subr.bf16.mxu0 0
  %1225 = vmatpush1.bf16.msra.mxu0 0
  %1226 = vmatprep.subr.bf16.mxu0 0
  %1227 = vmatpush1.bf16.msra.mxu0 0
  %1228 = vmatprep.subr.bf16.mxu0 0
  %1229 = vmatpush1.bf16.msra.mxu0 0
  %1230 = vmatprep.subr.bf16.mxu0 0
  %1231 = vmatpush1.bf16.msra.mxu0 0
  %1232 = vmatprep.subr.bf16.mxu0 0
  %1233 = vmatpush1.bf16.msra.mxu0 0
  %1234 = vmatprep.subr.bf16.mxu0 0
  %1235 = vmatpush1.bf16.msra.mxu0 0
  %1236 = vmatprep.subr.bf16.mxu0 0
  %1237 = vmatpush1.bf16.msra.mxu0 0
  %1238 = vmatprep.subr.bf16.mxu0 0
  %1239 = vmatpush1.bf16.msra.mxu0 0
  %1240 = vmatprep.subr.bf16.mxu0 0
  %1241 = vmatpush1.bf16.msra.mxu0 0
  %1242 = vmatprep.subr.bf16.mxu0 0
  %1243 = vmatpush1.bf16.msra.mxu0 0
  %1244 = vmatprep.mubr.bf16.mxu0 0
  %1245 = vmatmul.mubr.bf16.gmra.mrb[0].mxu0 %v1210
  %v1246 = vpop.f32.mrb[0].mxu0
  %v1247 = vadd.f32 0.0, %v1246
  %v1248 = vpop.f32.mrb[0].mxu0
  %v1249 = vpop.f32.mrb[0].mxu0
  %v1250 = vpop.f32.mrb[0].mxu0
  %1251 = vdwg.mxu0
  %v1253 = vrot.slane %v1247, 4
  %v1255 = vadd.f32 %v848, %v1253
  %v1256 = vxor.u32 %v1255, 2147483648
  %v1257 = vmul.f32 %v1256, 1.442695
  %v1258 = vpow.pop %v1257
  %v1259 = vadd.f32 %v1258, 1.0
  %v1260 = vrcp.pop %v1259
  %v1261 = vmul.f32 1.0, %v1260
  %v1262 = vtanh.pop %v1255
  %v1264 = vrot.slane %v1202, 6
  %v1266 = vmul.f32 %v1261, %v1264
  %1268 = vrot.lane.b32.xlu0 %v1262, 96
  %v1269 = vpop.permute.xlu0 %1268
  %v1271 = vmul.f32 %v1261, %v1269
  %1273 = vrot.lane.b32.xlu0 %v1271, 16
  %v1274 = vpop.permute.xlu0 %1273
  %v1276 = vadd.f32 %v1266, %v1274
  %v1277 = vtanh.pop %v1276
  %1279 = vrot.lane.b32.xlu0 %v1277, 32
  %v1280 = vpop.permute.xlu0 %1279
  %v1282 = vmul.f32 %v1261, %v1280
  %v1283 = vmul.f32 %v1089, %v1282
  %v1285 = vrot.slane %v1192, 6
  %1286 = vrot.lane.b32.xlu0 %v1285, 80
  %v1287 = vpop.permute.xlu0 %1286
  %v1289 = vmul.f32 %v1096, %v1287
  %1291 = vrot.lane.b32.xlu0 %v1289, 48
  %v1292 = vpop.permute.xlu0 %1291
  %v1294 = vadd.f32 %v1283, %v1292
  %v1295 = vmul.f32 %v1089, %v1276
  %1296 = vrot.lane.b32.xlu0 %v1264, 112
  %v1297 = vpop.permute.xlu0 %1296
  %v1299 = vmul.f32 %v1096, %v1297
  %1301 = vrot.lane.b32.xlu0 %v1299, 16
  %v1302 = vpop.permute.xlu0 %1301
  %v1304 = vadd.f32 %v1295, %v1302
  %v1305 = vmul.f32 %v1294, %v1089
  %v1306 = vpack.c.bf16 %v1294, %v1294
  %v1308 = vrot.slane %v1306, 2
  %1309 = vrot.lane.b32.xlu0 %v1308, 80
  %v1310 = vpop.permute.xlu0 %1309
  %v1312 = vsel %vm1017, %v1310, 0
  %1314 = vmatprep.subr.bf16.mxu0 0
  %1315 = vmatpush1.bf16.msra.mxu0 %v1015
  %1316 = vmatprep.subr.bf16.mxu0 0
  %1317 = vmatpush1.bf16.msra.mxu0 0
  %1318 = vmatprep.subr.bf16.mxu0 0
  %1319 = vmatpush1.bf16.msra.mxu0 0
  %1320 = vmatprep.subr.bf16.mxu0 0
  %1321 = vmatpush1.bf16.msra.mxu0 0
  %1322 = vmatprep.subr.bf16.mxu0 0
  %1323 = vmatpush1.bf16.msra.mxu0 0
  %1324 = vmatprep.subr.bf16.mxu0 0
  %1325 = vmatpush1.bf16.msra.mxu0 0
  %1326 = vmatprep.subr.bf16.mxu0 0
  %1327 = vmatpush1.bf16.msra.mxu0 0
  %1328 = vmatprep.subr.bf16.mxu0 0
  %1329 = vmatpush1.bf16.msra.mxu0 0
  %1330 = vmatprep.subr.bf16.mxu0 0
  %1331 = vmatpush1.bf16.msra.mxu0 0
  %1332 = vmatprep.subr.bf16.mxu0 0
  %1333 = vmatpush1.bf16.msra.mxu0 0
  %1334 = vmatprep.subr.bf16.mxu0 0
  %1335 = vmatpush1.bf16.msra.mxu0 0
  %1336 = vmatprep.subr.bf16.mxu0 0
  %1337 = vmatpush1.bf16.msra.mxu0 0
  %1338 = vmatprep.subr.bf16.mxu0 0
  %1339 = vmatpush1.bf16.msra.mxu0 0
  %1340 = vmatprep.subr.bf16.mxu0 0
  %1341 = vmatpush1.bf16.msra.mxu0 0
  %1342 = vmatprep.subr.bf16.mxu0 0
  %1343 = vmatpush1.bf16.msra.mxu0 0
  %1344 = vmatprep.subr.bf16.mxu0 0
  %1345 = vmatpush1.bf16.msra.mxu0 0
  %1346 = vmatprep.mubr.bf16.mxu0 0
  %1347 = vmatmul.mubr.bf16.gmra.mrb[0].mxu0 %v1312
  %v1348 = vpop.f32.mrb[0].mxu0
  %v1349 = vadd.f32 0.0, %v1348
  %v1350 = vpop.f32.mrb[0].mxu0
  %v1351 = vpop.f32.mrb[0].mxu0
  %v1352 = vpop.f32.mrb[0].mxu0
  %1353 = vdwg.mxu0
  %v1355 = vrot.slane %v1349, 2
  %v1357 = vadd.f32 %v848, %v1355
  %v1358 = vxor.u32 %v1357, 2147483648
  %v1359 = vmul.f32 %v1358, 1.442695
  %v1360 = vpow.pop %v1359
  %v1361 = vadd.f32 %v1360, 1.0
  %v1362 = vrcp.pop %v1361
  %v1363 = vmul.f32 1.0, %v1362
  %v1364 = vtanh.pop %v1357
  %v1366 = vrot.slane %v1304, 6
  %v1368 = vmul.f32 %v1363, %v1366
  %1370 = vrot.lane.b32.xlu0 %v1364, 96
  %v1371 = vpop.permute.xlu0 %1370
  %v1373 = vmul.f32 %v1363, %v1371
  %1375 = vrot.lane.b32.xlu0 %v1373, 16
  %v1376 = vpop.permute.xlu0 %1375
  %v1378 = vadd.f32 %v1368, %v1376
  %v1379 = vtanh.pop %v1378
  %1381 = vrot.lane.b32.xlu0 %v1379, 32
  %v1382 = vpop.permute.xlu0 %1381
  %v1384 = vmul.f32 %v1363, %v1382
  %v1385 = vmul.f32 %v1089, %v1384
  %v1387 = vrot.slane %v1294, 6
  %1388 = vrot.lane.b32.xlu0 %v1387, 80
  %v1389 = vpop.permute.xlu0 %1388
  %v1391 = vmul.f32 %v1096, %v1389
  %1393 = vrot.lane.b32.xlu0 %v1391, 48
  %v1394 = vpop.permute.xlu0 %1393
  %v1396 = vadd.f32 %v1385, %v1394
  %v1397 = vmul.f32 %v1089, %v1378
  %1398 = vrot.lane.b32.xlu0 %v1366, 112
  %v1399 = vpop.permute.xlu0 %1398
  %v1401 = vmul.f32 %v1096, %v1399
  %1403 = vrot.lane.b32.xlu0 %v1401, 16
  %v1404 = vpop.permute.xlu0 %1403
  %v1406 = vadd.f32 %v1397, %v1404
  %v1407 = vmul.f32 %v1396, %v1089
  %v1408 = vpack.c.bf16 %v1396, %v1396
  %v1410 = vrot.slane %v1408, 3
  %1411 = vrot.lane.b32.xlu0 %v1410, 80
  %v1412 = vpop.permute.xlu0 %1411
  %v1414 = vsel %vm1017, %v1412, 0
  %1416 = vmatprep.subr.bf16.mxu0 0
  %1417 = vmatpush1.bf16.msra.mxu0 %v1015
  %1418 = vmatprep.subr.bf16.mxu0 0
  %1419 = vmatpush1.bf16.msra.mxu0 0
  %1420 = vmatprep.subr.bf16.mxu0 0
  %1421 = vmatpush1.bf16.msra.mxu0 0
  %1422 = vmatprep.subr.bf16.mxu0 0
  %1423 = vmatpush1.bf16.msra.mxu0 0
  %1424 = vmatprep.subr.bf16.mxu0 0
  %1425 = vmatpush1.bf16.msra.mxu0 0
  %1426 = vmatprep.subr.bf16.mxu0 0
  %1427 = vmatpush1.bf16.msra.mxu0 0
  %1428 = vmatprep.subr.bf16.mxu0 0
  %1429 = vmatpush1.bf16.msra.mxu0 0
  %1430 = vmatprep.subr.bf16.mxu0 0
  %1431 = vmatpush1.bf16.msra.mxu0 0
  %1432 = vmatprep.subr.bf16.mxu0 0
  %1433 = vmatpush1.bf16.msra.mxu0 0
  %1434 = vmatprep.subr.bf16.mxu0 0
  %1435 = vmatpush1.bf16.msra.mxu0 0
  %1436 = vmatprep.subr.bf16.mxu0 0
  %1437 = vmatpush1.bf16.msra.mxu0 0
  %1438 = vmatprep.subr.bf16.mxu0 0
  %1439 = vmatpush1.bf16.msra.mxu0 0
  %1440 = vmatprep.subr.bf16.mxu0 0
  %1441 = vmatpush1.bf16.msra.mxu0 0
  %1442 = vmatprep.subr.bf16.mxu0 0
  %1443 = vmatpush1.bf16.msra.mxu0 0
  %1444 = vmatprep.subr.bf16.mxu0 0
  %1445 = vmatpush1.bf16.msra.mxu0 0
  %1446 = vmatprep.subr.bf16.mxu0 0
  %1447 = vmatpush1.bf16.msra.mxu0 0
  %1448 = vmatprep.mubr.bf16.mxu0 0
  %1449 = vmatmul.mubr.bf16.gmra.mrb[0].mxu0 %v1414
  %v1450 = vpop.f32.mrb[0].mxu0
  %v1451 = vadd.f32 0.0, %v1450
  %v1452 = vpop.f32.mrb[0].mxu0
  %v1453 = vpop.f32.mrb[0].mxu0
  %v1454 = vpop.f32.mrb[0].mxu0
  %1455 = vdwg.mxu0
  %v1456 = vadd.f32 %v849, %v1451
  %v1457 = vxor.u32 %v1456, 2147483648
  %v1458 = vmul.f32 %v1457, 1.442695
  %v1459 = vpow.pop %v1458
  %v1460 = vadd.f32 %v1459, 1.0
  %v1461 = vrcp.pop %v1460
  %v1462 = vmul.f32 1.0, %v1461
  %v1463 = vtanh.pop %v1456
  %v1465 = vrot.slane %v1406, 6
  %v1467 = vmul.f32 %v1462, %v1465
  %1469 = vrot.lane.b32.xlu0 %v1463, 96
  %v1470 = vpop.permute.xlu0 %1469
  %v1472 = vmul.f32 %v1462, %v1470
  %1474 = vrot.lane.b32.xlu0 %v1472, 16
  %v1475 = vpop.permute.xlu0 %1474
  %v1477 = vadd.f32 %v1467, %v1475
  %v1478 = vtanh.pop %v1477
  %1480 = vrot.lane.b32.xlu0 %v1478, 32
  %v1481 = vpop.permute.xlu0 %1480
  %v1483 = vmul.f32 %v1462, %v1481
  %1485 = vset.pattern.permute.xlu0 0
  %1486 = vperm.xlu0 %1485, %v1008
  %v1487 = vpop.permute.xlu0 %1486
  %v1489 = vmul.f32 %v1487, %v1483
  %v1490 = vsub.f32 1.0, %v1008
  %1492 = vset.pattern.permute.xlu0 0
  %1493 = vperm.xlu0 %1492, %v1490
  %v1494 = vpop.permute.xlu0 %1493
  %v1497 = vrot.slane %v1396, 6
  %1498 = vrot.lane.b32.xlu0 %v1497, 80
  %v1499 = vpop.permute.xlu0 %1498
  %v1501 = vmul.f32 %v1494, %v1499
  %1503 = vrot.lane.b32.xlu0 %v1501, 48
  %v1504 = vpop.permute.xlu0 %1503
  %v1506 = vadd.f32 %v1489, %v1504
  %v1507 = vmul.f32 %v1487, %v1477
  %1508 = vrot.lane.b32.xlu0 %v1465, 112
  %v1509 = vpop.permute.xlu0 %1508
  %v1511 = vmul.f32 %v1494, %v1509
  %1513 = vrot.lane.b32.xlu0 %v1511, 16
  %v1514 = vpop.permute.xlu0 %1513
  %v1516 = vadd.f32 %v1507, %v1514
  %v1517 = vmul.f32 %v1506, %v1487
  %v1518 = vpack.c.bf16 %v1506, %v1506
  %1520 = vrot.lane.b32.xlu0 %v1518, 80
  %v1521 = vpop.permute.xlu0 %1520
  %v1523 = vsel %vm1017, %v1521, 0
  %1525 = vmatprep.subr.bf16.mxu0 0
  %1526 = vmatpush1.bf16.msra.mxu0 %v1015
  %1527 = vmatprep.subr.bf16.mxu0 0
  %1528 = vmatpush1.bf16.msra.mxu0 0
  %1529 = vmatprep.subr.bf16.mxu0 0
  %1530 = vmatpush1.bf16.msra.mxu0 0
  %1531 = vmatprep.subr.bf16.mxu0 0
  %1532 = vmatpush1.bf16.msra.mxu0 0
  %1533 = vmatprep.subr.bf16.mxu0 0
  %1534 = vmatpush1.bf16.msra.mxu0 0
  %1535 = vmatprep.subr.bf16.mxu0 0
  %1536 = vmatpush1.bf16.msra.mxu0 0
  %1537 = vmatprep.subr.bf16.mxu0 0
  %1538 = vmatpush1.bf16.msra.mxu0 0
  %1539 = vmatprep.subr.bf16.mxu0 0
  %1540 = vmatpush1.bf16.msra.mxu0 0
  %1541 = vmatprep.subr.bf16.mxu0 0
  %1542 = vmatpush1.bf16.msra.mxu0 0
  %1543 = vmatprep.subr.bf16.mxu0 0
  %1544 = vmatpush1.bf16.msra.mxu0 0
  %1545 = vmatprep.subr.bf16.mxu0 0
  %1546 = vmatpush1.bf16.msra.mxu0 0
  %1547 = vmatprep.subr.bf16.mxu0 0
  %1548 = vmatpush1.bf16.msra.mxu0 0
  %1549 = vmatprep.subr.bf16.mxu0 0
  %1550 = vmatpush1.bf16.msra.mxu0 0
  %1551 = vmatprep.subr.bf16.mxu0 0
  %1552 = vmatpush1.bf16.msra.mxu0 0
  %1553 = vmatprep.subr.bf16.mxu0 0
  %1554 = vmatpush1.bf16.msra.mxu0 0
  %1555 = vmatprep.subr.bf16.mxu0 0
  %1556 = vmatpush1.bf16.msra.mxu0 0
  %1557 = vmatprep.mubr.bf16.mxu0 0
  %1558 = vmatmul.mubr.bf16.gmra.mrb[0].mxu0 %v1523
  %v1559 = vpop.f32.mrb[0].mxu0
  %v1560 = vadd.f32 0.0, %v1559
  %v1561 = vpop.f32.mrb[0].mxu0
  %v1562 = vpop.f32.mrb[0].mxu0
  %v1563 = vpop.f32.mrb[0].mxu0
  %1564 = vdwg.mxu0
  %v1566 = vrot.slane %v1560, 6
  %v1568 = vadd.f32 %v849, %v1566
  %v1569 = vxor.u32 %v1568, 2147483648
  %v1570 = vmul.f32 %v1569, 1.442695
  %v1571 = vpow.pop %v1570
  %v1572 = vadd.f32 %v1571, 1.0
  %v1573 = vrcp.pop %v1572
  %v1574 = vmul.f32 1.0, %v1573
  %v1575 = vtanh.pop %v1568
  %v1577 = vrot.slane %v1516, 6
  %v1579 = vmul.f32 %v1574, %v1577
  %1581 = vrot.lane.b32.xlu0 %v1575, 96
  %v1582 = vpop.permute.xlu0 %1581
  %v1584 = vmul.f32 %v1574, %v1582
  %1586 = vrot.lane.b32.xlu0 %v1584, 16
  %v1587 = vpop.permute.xlu0 %1586
  %v1589 = vadd.f32 %v1579, %v1587
  %v1590 = vtanh.pop %v1589
  %1592 = vrot.lane.b32.xlu0 %v1590, 32
  %v1593 = vpop.permute.xlu0 %1592
  %v1595 = vmul.f32 %v1574, %v1593
  %v1596 = vmul.f32 %v1487, %v1595
  %v1598 = vrot.slane %v1506, 6
  %1599 = vrot.lane.b32.xlu0 %v1598, 80
  %v1600 = vpop.permute.xlu0 %1599
  %v1602 = vmul.f32 %v1494, %v1600
  %1604 = vrot.lane.b32.xlu0 %v1602, 48
  %v1605 = vpop.permute.xlu0 %1604
  %v1607 = vadd.f32 %v1596, %v1605
  %v1608 = vmul.f32 %v1487, %v1589
  %1609 = vrot.lane.b32.xlu0 %v1577, 112
  %v1610 = vpop.permute.xlu0 %1609
  %v1612 = vmul.f32 %v1494, %v1610
  %1614 = vrot.lane.b32.xlu0 %v1612, 16
  %v1615 = vpop.permute.xlu0 %1614
  %v1617 = vadd.f32 %v1608, %v1615
  %v1618 = vmul.f32 %v1607, %v1487
  %v1619 = vpack.c.bf16 %v1607, %v1607
  %v1621 = vrot.slane %v1619, 1
  %1622 = vrot.lane.b32.xlu0 %v1621, 80
  %v1623 = vpop.permute.xlu0 %1622
  %v1625 = vsel %vm1017, %v1623, 0
  %1627 = vmatprep.subr.bf16.mxu0 0
  %1628 = vmatpush1.bf16.msra.mxu0 %v1015
  %1629 = vmatprep.subr.bf16.mxu0 0
  %1630 = vmatpush1.bf16.msra.mxu0 0
  %1631 = vmatprep.subr.bf16.mxu0 0
  %1632 = vmatpush1.bf16.msra.mxu0 0
  %1633 = vmatprep.subr.bf16.mxu0 0
  %1634 = vmatpush1.bf16.msra.mxu0 0
  %1635 = vmatprep.subr.bf16.mxu0 0
  %1636 = vmatpush1.bf16.msra.mxu0 0
  %1637 = vmatprep.subr.bf16.mxu0 0
  %1638 = vmatpush1.bf16.msra.mxu0 0
  %1639 = vmatprep.subr.bf16.mxu0 0
  %1640 = vmatpush1.bf16.msra.mxu0 0
  %1641 = vmatprep.subr.bf16.mxu0 0
  %1642 = vmatpush1.bf16.msra.mxu0 0
  %1643 = vmatprep.subr.bf16.mxu0 0
  %1644 = vmatpush1.bf16.msra.mxu0 0
  %1645 = vmatprep.subr.bf16.mxu0 0
  %1646 = vmatpush1.bf16.msra.mxu0 0
  %1647 = vmatprep.subr.bf16.mxu0 0
  %1648 = vmatpush1.bf16.msra.mxu0 0
  %1649 = vmatprep.subr.bf16.mxu0 0
  %1650 = vmatpush1.bf16.msra.mxu0 0
  %1651 = vmatprep.subr.bf16.mxu0 0
  %1652 = vmatpush1.bf16.msra.mxu0 0
  %1653 = vmatprep.subr.bf16.mxu0 0
  %1654 = vmatpush1.bf16.msra.mxu0 0
  %1655 = vmatprep.subr.bf16.mxu0 0
  %1656 = vmatpush1.bf16.msra.mxu0 0
  %1657 = vmatprep.subr.bf16.mxu0 0
  %1658 = vmatpush1.bf16.msra.mxu0 0
  %1659 = vmatprep.mubr.bf16.mxu0 0
  %1660 = vmatmul.mubr.bf16.gmra.mrb[0].mxu0 %v1625
  %v1661 = vpop.f32.mrb[0].mxu0
  %v1662 = vadd.f32 0.0, %v1661
  %v1663 = vpop.f32.mrb[0].mxu0
  %v1664 = vpop.f32.mrb[0].mxu0
  %v1665 = vpop.f32.mrb[0].mxu0
  %1666 = vdwg.mxu0
  %v1668 = vrot.slane %v1662, 4
  %v1670 = vadd.f32 %v849, %v1668
  %v1671 = vxor.u32 %v1670, 2147483648
  %v1672 = vmul.f32 %v1671, 1.442695
  %v1673 = vpow.pop %v1672
  %v1674 = vadd.f32 %v1673, 1.0
  %v1675 = vrcp.pop %v1674
  %v1676 = vmul.f32 1.0, %v1675
  %v1677 = vtanh.pop %v1670
  %v1679 = vrot.slane %v1617, 6
  %v1681 = vmul.f32 %v1676, %v1679
  %1683 = vrot.lane.b32.xlu0 %v1677, 96
  %v1684 = vpop.permute.xlu0 %1683
  %v1686 = vmul.f32 %v1676, %v1684
  %1688 = vrot.lane.b32.xlu0 %v1686, 16
  %v1689 = vpop.permute.xlu0 %1688
  %v1691 = vadd.f32 %v1681, %v1689
  %v1692 = vtanh.pop %v1691
  %1694 = vrot.lane.b32.xlu0 %v1692, 32
  %v1695 = vpop.permute.xlu0 %1694
  %v1697 = vmul.f32 %v1676, %v1695
  %v1698 = vmul.f32 %v1487, %v1697
  %v1700 = vrot.slane %v1607, 6
  %1701 = vrot.lane.b32.xlu0 %v1700, 80
  %v1702 = vpop.permute.xlu0 %1701
  %v1704 = vmul.f32 %v1494, %v1702
  %1706 = vrot.lane.b32.xlu0 %v1704, 48
  %v1707 = vpop.permute.xlu0 %1706
  %v1709 = vadd.f32 %v1698, %v1707
  %v1710 = vmul.f32 %v1487, %v1691
  %1711 = vrot.lane.b32.xlu0 %v1679, 112
  %v1712 = vpop.permute.xlu0 %1711
  %v1714 = vmul.f32 %v1494, %v1712
  %1716 = vrot.lane.b32.xlu0 %v1714, 16
  %v1717 = vpop.permute.xlu0 %1716
  %v1719 = vadd.f32 %v1710, %v1717
  %v1720 = vmul.f32 %v1709, %v1487
  %v1721 = vpack.c.bf16 %v1709, %v1709
  %v1723 = vrot.slane %v1721, 2
  %1724 = vrot.lane.b32.xlu0 %v1723, 80
  %v1725 = vpop.permute.xlu0 %1724
  %v1727 = vsel %vm1017, %v1725, 0
  %1729 = vmatprep.subr.bf16.mxu0 0
  %1730 = vmatpush1.bf16.msra.mxu0 %v1015
  %1731 = vmatprep.subr.bf16.mxu0 0
  %1732 = vmatpush1.bf16.msra.mxu0 0
  %1733 = vmatprep.subr.bf16.mxu0 0
  %1734 = vmatpush1.bf16.msra.mxu0 0
  %1735 = vmatprep.subr.bf16.mxu0 0
  %1736 = vmatpush1.bf16.msra.mxu0 0
  %1737 = vmatprep.subr.bf16.mxu0 0
  %1738 = vmatpush1.bf16.msra.mxu0 0
  %1739 = vmatprep.subr.bf16.mxu0 0
  %1740 = vmatpush1.bf16.msra.mxu0 0
  %1741 = vmatprep.subr.bf16.mxu0 0
  %1742 = vmatpush1.bf16.msra.mxu0 0
  %1743 = vmatprep.subr.bf16.mxu0 0
  %1744 = vmatpush1.bf16.msra.mxu0 0
  %1745 = vmatprep.subr.bf16.mxu0 0
  %1746 = vmatpush1.bf16.msra.mxu0 0
  %1747 = vmatprep.subr.bf16.mxu0 0
  %1748 = vmatpush1.bf16.msra.mxu0 0
  %1749 = vmatprep.subr.bf16.mxu0 0
  %1750 = vmatpush1.bf16.msra.mxu0 0
  %1751 = vmatprep.subr.bf16.mxu0 0
  %1752 = vmatpush1.bf16.msra.mxu0 0
  %1753 = vmatprep.subr.bf16.mxu0 0
  %1754 = vmatpush1.bf16.msra.mxu0 0
  %1755 = vmatprep.subr.bf16.mxu0 0
  %1756 = vmatpush1.bf16.msra.mxu0 0
  %1757 = vmatprep.subr.bf16.mxu0 0
  %1758 = vmatpush1.bf16.msra.mxu0 0
  %1759 = vmatprep.subr.bf16.mxu0 0
  %1760 = vmatpush1.bf16.msra.mxu0 0
  %1761 = vmatprep.mubr.bf16.mxu0 0
  %1762 = vmatmul.mubr.bf16.gmra.mrb[0].mxu0 %v1727
  %v1763 = vpop.f32.mrb[0].mxu0
  %v1764 = vadd.f32 0.0, %v1763
  %v1765 = vpop.f32.mrb[0].mxu0
  %v1766 = vpop.f32.mrb[0].mxu0
  %v1767 = vpop.f32.mrb[0].mxu0
  %1768 = vdwg.mxu0
  %v1770 = vrot.slane %v1764, 2
  %v1772 = vadd.f32 %v849, %v1770
  %v1773 = vxor.u32 %v1772, 2147483648
  %v1774 = vmul.f32 %v1773, 1.442695
  %v1775 = vpow.pop %v1774
  %v1776 = vadd.f32 %v1775, 1.0
  %v1777 = vrcp.pop %v1776
  %v1778 = vmul.f32 1.0, %v1777
  %v1779 = vtanh.pop %v1772
  %v1781 = vrot.slane %v1719, 6
  %v1783 = vmul.f32 %v1778, %v1781
  %1785 = vrot.lane.b32.xlu0 %v1779, 96
  %v1786 = vpop.permute.xlu0 %1785
  %v1788 = vmul.f32 %v1778, %v1786
  %1790 = vrot.lane.b32.xlu0 %v1788, 16
  %v1791 = vpop.permute.xlu0 %1790
  %v1793 = vadd.f32 %v1783, %v1791
  %v1794 = vtanh.pop %v1793
  %1796 = vrot.lane.b32.xlu0 %v1794, 32
  %v1797 = vpop.permute.xlu0 %1796
  %v1799 = vmul.f32 %v1778, %v1797
  %v1800 = vmul.f32 %v1487, %v1799
  %v1802 = vrot.slane %v1709, 6
  %1803 = vrot.lane.b32.xlu0 %v1802, 80
  %v1804 = vpop.permute.xlu0 %1803
  %v1806 = vmul.f32 %v1494, %v1804
  %1808 = vrot.lane.b32.xlu0 %v1806, 48
  %v1809 = vpop.permute.xlu0 %1808
  %v1811 = vadd.f32 %v1800, %v1809
  %v1812 = vmul.f32 %v1487, %v1793
  %1813 = vrot.lane.b32.xlu0 %v1781, 112
  %v1814 = vpop.permute.xlu0 %1813
  %v1816 = vmul.f32 %v1494, %v1814
  %1818 = vrot.lane.b32.xlu0 %v1816, 16
  %v1819 = vpop.permute.xlu0 %1818
  %v1821 = vadd.f32 %v1812, %v1819
  %v1822 = vmul.f32 %v1811, %v1487
  %v1823 = vld [vmem:[%s39] sm:$0xf]
  %v1824 = vld [vmem:[%s39 + $0x4] sm:$0xf]
  %v1827 = vunpack.c.l.b16 %v1823
  %v1828 = vunpack.c.l.b16 %v1824
  %v1829 = vpack.c.b16 %v1828, %v1827
  %1831 = vmatprep.subr.bf16.mxu0 0
  %1832 = vmatpush1.bf16.msra.mxu0 %v1829
  %1833 = vmatprep.subr.bf16.mxu0 0
  %1834 = vmatpush1.bf16.msra.mxu0 0
  %1835 = vmatprep.subr.bf16.mxu0 0
  %1836 = vmatpush1.bf16.msra.mxu0 0
  %1837 = vmatprep.subr.bf16.mxu0 0
  %1838 = vmatpush1.bf16.msra.mxu0 0
  %1839 = vmatprep.subr.bf16.mxu0 0
  %1840 = vmatpush1.bf16.msra.mxu0 0
  %1841 = vmatprep.subr.bf16.mxu0 0
  %1842 = vmatpush1.bf16.msra.mxu0 0
  %1843 = vmatprep.subr.bf16.mxu0 0
  %1844 = vmatpush1.bf16.msra.mxu0 0
  %1845 = vmatprep.subr.bf16.mxu0 0
  %1846 = vmatpush1.bf16.msra.mxu0 0
  %1847 = vmatprep.subr.bf16.mxu0 0
  %1848 = vmatpush1.bf16.msra.mxu0 0
  %1849 = vmatprep.subr.bf16.mxu0 0
  %1850 = vmatpush1.bf16.msra.mxu0 0
  %1851 = vmatprep.subr.bf16.mxu0 0
  %1852 = vmatpush1.bf16.msra.mxu0 0
  %1853 = vmatprep.subr.bf16.mxu0 0
  %1854 = vmatpush1.bf16.msra.mxu0 0
  %1855 = vmatprep.subr.bf16.mxu0 0
  %1856 = vmatpush1.bf16.msra.mxu0 0
  %1857 = vmatprep.subr.bf16.mxu0 0
  %1858 = vmatpush1.bf16.msra.mxu0 0
  %1859 = vmatprep.subr.bf16.mxu0 0
  %1860 = vmatpush1.bf16.msra.mxu0 0
  %1861 = vmatprep.subr.bf16.mxu0 0
  %1862 = vmatpush1.bf16.msra.mxu0 0
  %1863 = vmatprep.mubr.bf16.mxu0 0
  %1864 = vmatmul.mubr.bf16.gmra.mrb[0].mxu0 %v1019
  %v1865 = vpop.f32.mrb[0].mxu0
  %v1866 = vadd.f32 0.0, %v1865
  %v1867 = vpop.f32.mrb[0].mxu0
  %v1868 = vpop.f32.mrb[0].mxu0
  %v1869 = vpop.f32.mrb[0].mxu0
  %1870 = vdwg.mxu0
  %v1872 = vrot.slane %v1866, 2
  %v1874 = vadd.f32 %v1006, %v1872
  %v1875 = vxor.u32 %v1874, 2147483648
  %v1876 = vmul.f32 %v1875, 1.442695
  %v1877 = vpow.pop %v1876
  %v1878 = vadd.f32 %v1877, 1.0
  %v1879 = vrcp.pop %v1878
  %v1880 = vmul.f32 1.0, %v1879
  %v1881 = vtanh.pop %v1874
  %v1882 = vmul.f32 %v1880, 0.0
  %1884 = vrot.lane.b32.xlu0 %v1881, 96
  %v1885 = vpop.permute.xlu0 %1884
  %v1887 = vmul.f32 %v1880, %v1885
  %1889 = vrot.lane.b32.xlu0 %v1887, 16
  %v1890 = vpop.permute.xlu0 %1889
  %v1892 = vadd.f32 %v1882, %v1890
  %v1893 = vtanh.pop %v1892
  %1895 = vrot.lane.b32.xlu0 %v1893, 32
  %v1896 = vpop.permute.xlu0 %1895
  %v1898 = vmul.f32 %v1880, %v1896
  %v1899 = vmul.f32 %v1487, %v1898
  %v1900 = vmul.f32 %v1494, 0.0
  %v1901 = vadd.f32 %v1899, %v1900
  %v1902 = vmul.f32 %v1487, %v1892
  %v1903 = vadd.f32 %v1902, %v1900
  %v1904 = vmul.f32 %v1901, %v1487
  %v1905 = vpack.c.bf16 %v1901, %v1901
  %v1907 = vrot.slane %v1905, 3
  %1908 = vrot.lane.b32.xlu0 %v1907, 80
  %v1909 = vpop.permute.xlu0 %1908
  %v1911 = vsel %vm1017, %v1909, 0
  %1913 = vmatprep.subr.bf16.mxu0 0
  %1914 = vmatpush1.bf16.msra.mxu0 %v1829
  %1915 = vmatprep.subr.bf16.mxu0 0
  %1916 = vmatpush1.bf16.msra.mxu0 0
  %1917 = vmatprep.subr.bf16.mxu0 0
  %1918 = vmatpush1.bf16.msra.mxu0 0
  %1919 = vmatprep.subr.bf16.mxu0 0
  %1920 = vmatpush1.bf16.msra.mxu0 0
  %1921 = vmatprep.subr.bf16.mxu0 0
  %1922 = vmatpush1.bf16.msra.mxu0 0
  %1923 = vmatprep.subr.bf16.mxu0 0
  %1924 = vmatpush1.bf16.msra.mxu0 0
  %1925 = vmatprep.subr.bf16.mxu0 0
  %1926 = vmatpush1.bf16.msra.mxu0 0
  %1927 = vmatprep.subr.bf16.mxu0 0
  %1928 = vmatpush1.bf16.msra.mxu0 0
  %1929 = vmatprep.subr.bf16.mxu0 0
  %1930 = vmatpush1.bf16.msra.mxu0 0
  %1931 = vmatprep.subr.bf16.mxu0 0
  %1932 = vmatpush1.bf16.msra.mxu0 0
  %1933 = vmatprep.subr.bf16.mxu0 0
  %1934 = vmatpush1.bf16.msra.mxu0 0
  %1935 = vmatprep.subr.bf16.mxu0 0
  %1936 = vmatpush1.bf16.msra.mxu0 0
  %1937 = vmatprep.subr.bf16.mxu0 0
  %1938 = vmatpush1.bf16.msra.mxu0 0
  %1939 = vmatprep.subr.bf16.mxu0 0
  %1940 = vmatpush1.bf16.msra.mxu0 0
  %1941 = vmatprep.subr.bf16.mxu0 0
  %1942 = vmatpush1.bf16.msra.mxu0 0
  %1943 = vmatprep.subr.bf16.mxu0 0
  %1944 = vmatpush1.bf16.msra.mxu0 0
  %1945 = vmatprep.mubr.bf16.mxu0 0
  %1946 = vmatmul.mubr.bf16.gmra.mrb[0].mxu0 %v1911
  %v1947 = vpop.f32.mrb[0].mxu0
  %v1948 = vadd.f32 0.0, %v1947
  %v1949 = vpop.f32.mrb[0].mxu0
  %v1950 = vpop.f32.mrb[0].mxu0
  %v1951 = vpop.f32.mrb[0].mxu0
  %1952 = vdwg.mxu0
  %v1954 = vrot.slane %v1948, 4
  %v1956 = vadd.f32 %v1006, %v1954
  %v1957 = vxor.u32 %v1956, 2147483648
  %v1958 = vmul.f32 %v1957, 1.442695
  %v1959 = vpow.pop %v1958
  %v1960 = vadd.f32 %v1959, 1.0
  %v1961 = vrcp.pop %v1960
  %v1962 = vmul.f32 1.0, %v1961
  %v1963 = vtanh.pop %v1956
  %v1965 = vrot.slane %v1903, 2
  %v1967 = vmul.f32 %v1962, %v1965
  %1969 = vrot.lane.b32.xlu0 %v1963, 96
  %v1970 = vpop.permute.xlu0 %1969
  %v1972 = vmul.f32 %v1962, %v1970
  %1974 = vrot.lane.b32.xlu0 %v1972, 16
  %v1975 = vpop.permute.xlu0 %1974
  %v1977 = vadd.f32 %v1967, %v1975
  %v1978 = vtanh.pop %v1977
  %1980 = vrot.lane.b32.xlu0 %v1978, 32
  %v1981 = vpop.permute.xlu0 %1980
  %v1983 = vmul.f32 %v1962, %v1981
  %v1984 = vmul.f32 %v1487, %v1983
  %v1986 = vrot.slane %v1901, 2
  %1987 = vrot.lane.b32.xlu0 %v1986, 80
  %v1988 = vpop.permute.xlu0 %1987
  %v1990 = vmul.f32 %v1494, %v1988
  %1992 = vrot.lane.b32.xlu0 %v1990, 48
  %v1993 = vpop.permute.xlu0 %1992
  %v1995 = vadd.f32 %v1984, %v1993
  %v1996 = vmul.f32 %v1487, %v1977
  %1997 = vrot.lane.b32.xlu0 %v1965, 112
  %v1998 = vpop.permute.xlu0 %1997
  %v2000 = vmul.f32 %v1494, %v1998
  %2002 = vrot.lane.b32.xlu0 %v2000, 16
  %v2003 = vpop.permute.xlu0 %2002
  %v2005 = vadd.f32 %v1996, %v2003
  %v2006 = vmul.f32 %v1995, %v1487
  %v2007 = vpack.c.bf16 %v1995, %v1995
  %v2009 = vrot.slane %v2007, 2
  %2010 = vrot.lane.b32.xlu0 %v2009, 80
  %v2011 = vpop.permute.xlu0 %2010
  %v2013 = vsel %vm1017, %v2011, 0
  %2015 = vmatprep.subr.bf16.mxu0 0
  %2016 = vmatpush1.bf16.msra.mxu0 %v1829
  %2017 = vmatprep.subr.bf16.mxu0 0
  %2018 = vmatpush1.bf16.msra.mxu0 0
  %2019 = vmatprep.subr.bf16.mxu0 0
  %2020 = vmatpush1.bf16.msra.mxu0 0
  %2021 = vmatprep.subr.bf16.mxu0 0
  %2022 = vmatpush1.bf16.msra.mxu0 0
  %2023 = vmatprep.subr.bf16.mxu0 0
  %2024 = vmatpush1.bf16.msra.mxu0 0
  %2025 = vmatprep.subr.bf16.mxu0 0
  %2026 = vmatpush1.bf16.msra.mxu0 0
  %2027 = vmatprep.subr.bf16.mxu0 0
  %2028 = vmatpush1.bf16.msra.mxu0 0
  %2029 = vmatprep.subr.bf16.mxu0 0
  %2030 = vmatpush1.bf16.msra.mxu0 0
  %2031 = vmatprep.subr.bf16.mxu0 0
  %2032 = vmatpush1.bf16.msra.mxu0 0
  %2033 = vmatprep.subr.bf16.mxu0 0
  %2034 = vmatpush1.bf16.msra.mxu0 0
  %2035 = vmatprep.subr.bf16.mxu0 0
  %2036 = vmatpush1.bf16.msra.mxu0 0
  %2037 = vmatprep.subr.bf16.mxu0 0
  %2038 = vmatpush1.bf16.msra.mxu0 0
  %2039 = vmatprep.subr.bf16.mxu0 0
  %2040 = vmatpush1.bf16.msra.mxu0 0
  %2041 = vmatprep.subr.bf16.mxu0 0
  %2042 = vmatpush1.bf16.msra.mxu0 0
  %2043 = vmatprep.subr.bf16.mxu0 0
  %2044 = vmatpush1.bf16.msra.mxu0 0
  %2045 = vmatprep.subr.bf16.mxu0 0
  %2046 = vmatpush1.bf16.msra.mxu0 0
  %2047 = vmatprep.mubr.bf16.mxu0 0
  %2048 = vmatmul.mubr.bf16.gmra.mrb[0].mxu0 %v2013
  %v2049 = vpop.f32.mrb[0].mxu0
  %v2050 = vadd.f32 0.0, %v2049
  %v2051 = vpop.f32.mrb[0].mxu0
  %v2052 = vpop.f32.mrb[0].mxu0
  %v2053 = vpop.f32.mrb[0].mxu0
  %2054 = vdwg.mxu0
  %v2056 = vrot.slane %v2050, 6
  %v2058 = vadd.f32 %v1006, %v2056
  %v2059 = vxor.u32 %v2058, 2147483648
  %v2060 = vmul.f32 %v2059, 1.442695
  %v2061 = vpow.pop %v2060
  %v2062 = vadd.f32 %v2061, 1.0
  %v2063 = vrcp.pop %v2062
  %v2064 = vmul.f32 1.0, %v2063
  %v2065 = vtanh.pop %v2058
  %v2067 = vrot.slane %v2005, 2
  %v2069 = vmul.f32 %v2064, %v2067
  %2071 = vrot.lane.b32.xlu0 %v2065, 96
  %v2072 = vpop.permute.xlu0 %2071
  %v2074 = vmul.f32 %v2064, %v2072
  %2076 = vrot.lane.b32.xlu0 %v2074, 16
  %v2077 = vpop.permute.xlu0 %2076
  %v2079 = vadd.f32 %v2069, %v2077
  %v2080 = vtanh.pop %v2079
  %2082 = vrot.lane.b32.xlu0 %v2080, 32
  %v2083 = vpop.permute.xlu0 %2082
  %v2085 = vmul.f32 %v2064, %v2083
  %v2086 = vmul.f32 %v1487, %v2085
  %v2088 = vrot.slane %v1995, 2
  %2089 = vrot.lane.b32.xlu0 %v2088, 80
  %v2090 = vpop.permute.xlu0 %2089
  %v2092 = vmul.f32 %v1494, %v2090
  %2094 = vrot.lane.b32.xlu0 %v2092, 48
  %v2095 = vpop.permute.xlu0 %2094
  %v2097 = vadd.f32 %v2086, %v2095
  %v2098 = vmul.f32 %v1487, %v2079
  %2099 = vrot.lane.b32.xlu0 %v2067, 112
  %v2100 = vpop.permute.xlu0 %2099
  %v2102 = vmul.f32 %v1494, %v2100
  %2104 = vrot.lane.b32.xlu0 %v2102, 16
  %v2105 = vpop.permute.xlu0 %2104
  %v2107 = vadd.f32 %v2098, %v2105
  %v2108 = vmul.f32 %v2097, %v1487
  %v2109 = vpack.c.bf16 %v2097, %v2097
  %v2111 = vrot.slane %v2109, 1
  %2112 = vrot.lane.b32.xlu0 %v2111, 80
  %v2113 = vpop.permute.xlu0 %2112
  %v2115 = vsel %vm1017, %v2113, 0
  %2117 = vmatprep.subr.bf16.mxu0 0
  %2118 = vmatpush1.bf16.msra.mxu0 %v1829
  %2119 = vmatprep.subr.bf16.mxu0 0
  %2120 = vmatpush1.bf16.msra.mxu0 0
  %2121 = vmatprep.subr.bf16.mxu0 0
  %2122 = vmatpush1.bf16.msra.mxu0 0
  %2123 = vmatprep.subr.bf16.mxu0 0
  %2124 = vmatpush1.bf16.msra.mxu0 0
  %2125 = vmatprep.subr.bf16.mxu0 0
  %2126 = vmatpush1.bf16.msra.mxu0 0
  %2127 = vmatprep.subr.bf16.mxu0 0
  %2128 = vmatpush1.bf16.msra.mxu0 0
  %2129 = vmatprep.subr.bf16.mxu0 0
  %2130 = vmatpush1.bf16.msra.mxu0 0
  %2131 = vmatprep.subr.bf16.mxu0 0
  %2132 = vmatpush1.bf16.msra.mxu0 0
  %2133 = vmatprep.subr.bf16.mxu0 0
  %2134 = vmatpush1.bf16.msra.mxu0 0
  %2135 = vmatprep.subr.bf16.mxu0 0
  %2136 = vmatpush1.bf16.msra.mxu0 0
  %2137 = vmatprep.subr.bf16.mxu0 0
  %2138 = vmatpush1.bf16.msra.mxu0 0
  %2139 = vmatprep.subr.bf16.mxu0 0
  %2140 = vmatpush1.bf16.msra.mxu0 0
  %2141 = vmatprep.subr.bf16.mxu0 0
  %2142 = vmatpush1.bf16.msra.mxu0 0
  %2143 = vmatprep.subr.bf16.mxu0 0
  %2144 = vmatpush1.bf16.msra.mxu0 0
  %2145 = vmatprep.subr.bf16.mxu0 0
  %2146 = vmatpush1.bf16.msra.mxu0 0
  %2147 = vmatprep.subr.bf16.mxu0 0
  %2148 = vmatpush1.bf16.msra.mxu0 0
  %2149 = vmatprep.mubr.bf16.mxu0 0
  %2150 = vmatmul.mubr.bf16.gmra.mrb[0].mxu0 %v2115
  %v2151 = vpop.f32.mrb[0].mxu0
  %v2152 = vadd.f32 0.0, %v2151
  %v2153 = vpop.f32.mrb[0].mxu0
  %v2154 = vpop.f32.mrb[0].mxu0
  %v2155 = vpop.f32.mrb[0].mxu0
  %2156 = vdwg.mxu0
  %v2157 = vadd.f32 %v1006, %v2152
  %v2158 = vxor.u32 %v2157, 2147483648
  %v2159 = vmul.f32 %v2158, 1.442695
  %v2160 = vpow.pop %v2159
  %v2161 = vadd.f32 %v2160, 1.0
  %v2162 = vrcp.pop %v2161
  %v2163 = vmul.f32 1.0, %v2162
  %v2164 = vtanh.pop %v2157
  %v2166 = vrot.slane %v2107, 2
  %v2168 = vmul.f32 %v2163, %v2166
  %2170 = vrot.lane.b32.xlu0 %v2164, 96
  %v2171 = vpop.permute.xlu0 %2170
  %v2173 = vmul.f32 %v2163, %v2171
  %2175 = vrot.lane.b32.xlu0 %v2173, 16
  %v2176 = vpop.permute.xlu0 %2175
  %v2178 = vadd.f32 %v2168, %v2176
  %v2179 = vtanh.pop %v2178
  %2181 = vrot.lane.b32.xlu0 %v2179, 32
  %v2182 = vpop.permute.xlu0 %2181
  %v2184 = vmul.f32 %v2163, %v2182
  %v2185 = vmul.f32 %v1487, %v2184
  %v2187 = vrot.slane %v2097, 2
  %2188 = vrot.lane.b32.xlu0 %v2187, 80
  %v2189 = vpop.permute.xlu0 %2188
  %v2191 = vmul.f32 %v1494, %v2189
  %2193 = vrot.lane.b32.xlu0 %v2191, 48
  %v2194 = vpop.permute.xlu0 %2193
  %v2196 = vadd.f32 %v2185, %v2194
  %v2197 = vmul.f32 %v1487, %v2178
  %2198 = vrot.lane.b32.xlu0 %v2166, 112
  %v2199 = vpop.permute.xlu0 %2198
  %v2201 = vmul.f32 %v1494, %v2199
  %2203 = vrot.lane.b32.xlu0 %v2201, 16
  %v2204 = vpop.permute.xlu0 %2203
  %v2206 = vadd.f32 %v2197, %v2204
  %v2207 = vmul.f32 %v2196, %v1487
  %v2208 = vpack.c.bf16 %v2196, %v2196
  %2210 = vrot.lane.b32.xlu0 %v2208, 80
  %v2211 = vpop.permute.xlu0 %2210
  %v2213 = vsel %vm1017, %v2211, 0
  %2215 = vmatprep.subr.bf16.mxu0 0
  %2216 = vmatpush1.bf16.msra.mxu0 %v1829
  %2217 = vmatprep.subr.bf16.mxu0 0
  %2218 = vmatpush1.bf16.msra.mxu0 0
  %2219 = vmatprep.subr.bf16.mxu0 0
  %2220 = vmatpush1.bf16.msra.mxu0 0
  %2221 = vmatprep.subr.bf16.mxu0 0
  %2222 = vmatpush1.bf16.msra.mxu0 0
  %2223 = vmatprep.subr.bf16.mxu0 0
  %2224 = vmatpush1.bf16.msra.mxu0 0
  %2225 = vmatprep.subr.bf16.mxu0 0
  %2226 = vmatpush1.bf16.msra.mxu0 0
  %2227 = vmatprep.subr.bf16.mxu0 0
  %2228 = vmatpush1.bf16.msra.mxu0 0
  %2229 = vmatprep.subr.bf16.mxu0 0
  %2230 = vmatpush1.bf16.msra.mxu0 0
  %2231 = vmatprep.subr.bf16.mxu0 0
  %2232 = vmatpush1.bf16.msra.mxu0 0
  %2233 = vmatprep.subr.bf16.mxu0 0
  %2234 = vmatpush1.bf16.msra.mxu0 0
  %2235 = vmatprep.subr.bf16.mxu0 0
  %2236 = vmatpush1.bf16.msra.mxu0 0
  %2237 = vmatprep.subr.bf16.mxu0 0
  %2238 = vmatpush1.bf16.msra.mxu0 0
  %2239 = vmatprep.subr.bf16.mxu0 0
  %2240 = vmatpush1.bf16.msra.mxu0 0
  %2241 = vmatprep.subr.bf16.mxu0 0
  %2242 = vmatpush1.bf16.msra.mxu0 0
  %2243 = vmatprep.subr.bf16.mxu0 0
  %2244 = vmatpush1.bf16.msra.mxu0 0
  %2245 = vmatprep.subr.bf16.mxu0 0
  %2246 = vmatpush1.bf16.msra.mxu0 0
  %2247 = vmatprep.mubr.bf16.mxu0 0
  %2248 = vmatmul.mubr.bf16.gmra.mrb[0].mxu0 %v2213
  %v2249 = vpop.f32.mrb[0].mxu0
  %v2250 = vadd.f32 0.0, %v2249
  %v2251 = vpop.f32.mrb[0].mxu0
  %v2252 = vpop.f32.mrb[0].mxu0
  %v2253 = vpop.f32.mrb[0].mxu0
  %2254 = vdwg.mxu0
  %v2256 = vrot.slane %v2250, 2
  %v2258 = vadd.f32 %v1005, %v2256
  %v2259 = vxor.u32 %v2258, 2147483648
  %v2260 = vmul.f32 %v2259, 1.442695
  %v2261 = vpow.pop %v2260
  %v2262 = vadd.f32 %v2261, 1.0
  %v2263 = vrcp.pop %v2262
  %v2264 = vmul.f32 1.0, %v2263
  %v2265 = vtanh.pop %v2258
  %v2267 = vrot.slane %v2206, 2
  %v2269 = vmul.f32 %v2264, %v2267
  %2271 = vrot.lane.b32.xlu0 %v2265, 96
  %v2272 = vpop.permute.xlu0 %2271
  %v2274 = vmul.f32 %v2264, %v2272
  %2276 = vrot.lane.b32.xlu0 %v2274, 16
  %v2277 = vpop.permute.xlu0 %2276
  %v2279 = vadd.f32 %v2269, %v2277
  %v2280 = vtanh.pop %v2279
  %2282 = vrot.lane.b32.xlu0 %v2280, 32
  %v2283 = vpop.permute.xlu0 %2282
  %v2285 = vmul.f32 %v2264, %v2283
  %v2286 = vmul.f32 %v1089, %v2285
  %v2288 = vrot.slane %v2196, 2
  %2289 = vrot.lane.b32.xlu0 %v2288, 80
  %v2290 = vpop.permute.xlu0 %2289
  %v2292 = vmul.f32 %v1096, %v2290
  %2294 = vrot.lane.b32.xlu0 %v2292, 48
  %v2295 = vpop.permute.xlu0 %2294
  %v2297 = vadd.f32 %v2286, %v2295
  %v2298 = vmul.f32 %v1089, %v2279
  %2299 = vrot.lane.b32.xlu0 %v2267, 112
  %v2300 = vpop.permute.xlu0 %2299
  %v2302 = vmul.f32 %v1096, %v2300
  %2304 = vrot.lane.b32.xlu0 %v2302, 16
  %v2305 = vpop.permute.xlu0 %2304
  %v2307 = vadd.f32 %v2298, %v2305
  %v2308 = vmul.f32 %v2297, %v1089
  %v2309 = vpack.c.bf16 %v2297, %v2297
  %v2311 = vrot.slane %v2309, 3
  %2312 = vrot.lane.b32.xlu0 %v2311, 80
  %v2313 = vpop.permute.xlu0 %2312
  %v2315 = vsel %vm1017, %v2313, 0
  %2317 = vmatprep.subr.bf16.mxu0 0
  %2318 = vmatpush1.bf16.msra.mxu0 %v1829
  %2319 = vmatprep.subr.bf16.mxu0 0
  %2320 = vmatpush1.bf16.msra.mxu0 0
  %2321 = vmatprep.subr.bf16.mxu0 0
  %2322 = vmatpush1.bf16.msra.mxu0 0
  %2323 = vmatprep.subr.bf16.mxu0 0
  %2324 = vmatpush1.bf16.msra.mxu0 0
  %2325 = vmatprep.subr.bf16.mxu0 0
  %2326 = vmatpush1.bf16.msra.mxu0 0
  %2327 = vmatprep.subr.bf16.mxu0 0
  %2328 = vmatpush1.bf16.msra.mxu0 0
  %2329 = vmatprep.subr.bf16.mxu0 0
  %2330 = vmatpush1.bf16.msra.mxu0 0
  %2331 = vmatprep.subr.bf16.mxu0 0
  %2332 = vmatpush1.bf16.msra.mxu0 0
  %2333 = vmatprep.subr.bf16.mxu0 0
  %2334 = vmatpush1.bf16.msra.mxu0 0
  %2335 = vmatprep.subr.bf16.mxu0 0
  %2336 = vmatpush1.bf16.msra.mxu0 0
  %2337 = vmatprep.subr.bf16.mxu0 0
  %2338 = vmatpush1.bf16.msra.mxu0 0
  %2339 = vmatprep.subr.bf16.mxu0 0
  %2340 = vmatpush1.bf16.msra.mxu0 0
  %2341 = vmatprep.subr.bf16.mxu0 0
  %2342 = vmatpush1.bf16.msra.mxu0 0
  %2343 = vmatprep.subr.bf16.mxu0 0
  %2344 = vmatpush1.bf16.msra.mxu0 0
  %2345 = vmatprep.subr.bf16.mxu0 0
  %2346 = vmatpush1.bf16.msra.mxu0 0
  %2347 = vmatprep.subr.bf16.mxu0 0
  %2348 = vmatpush1.bf16.msra.mxu0 0
  %2349 = vmatprep.mubr.bf16.mxu0 0
  %2350 = vmatmul.mubr.bf16.gmra.mrb[0].mxu0 %v2315
  %v2351 = vpop.f32.mrb[0].mxu0
  %v2352 = vadd.f32 0.0, %v2351
  %v2353 = vpop.f32.mrb[0].mxu0
  %v2354 = vpop.f32.mrb[0].mxu0
  %v2355 = vpop.f32.mrb[0].mxu0
  %2356 = vdwg.mxu0
  %v2358 = vrot.slane %v2352, 4
  %v2360 = vadd.f32 %v1005, %v2358
  %v2361 = vxor.u32 %v2360, 2147483648
  %v2362 = vmul.f32 %v2361, 1.442695
  %v2363 = vpow.pop %v2362
  %v2364 = vadd.f32 %v2363, 1.0
  %v2365 = vrcp.pop %v2364
  %v2366 = vmul.f32 1.0, %v2365
  %v2367 = vtanh.pop %v2360
  %v2369 = vrot.slane %v2307, 2
  %v2371 = vmul.f32 %v2366, %v2369
  %2373 = vrot.lane.b32.xlu0 %v2367, 96
  %v2374 = vpop.permute.xlu0 %2373
  %v2376 = vmul.f32 %v2366, %v2374
  %2378 = vrot.lane.b32.xlu0 %v2376, 16
  %v2379 = vpop.permute.xlu0 %2378
  %v2381 = vadd.f32 %v2371, %v2379
  %v2382 = vtanh.pop %v2381
  %2384 = vrot.lane.b32.xlu0 %v2382, 32
  %v2385 = vpop.permute.xlu0 %2384
  %v2387 = vmul.f32 %v2366, %v2385
  %v2388 = vmul.f32 %v1089, %v2387
  %v2390 = vrot.slane %v2297, 2
  %2391 = vrot.lane.b32.xlu0 %v2390, 80
  %v2392 = vpop.permute.xlu0 %2391
  %v2394 = vmul.f32 %v1096, %v2392
  %2396 = vrot.lane.b32.xlu0 %v2394, 48
  %v2397 = vpop.permute.xlu0 %2396
  %v2399 = vadd.f32 %v2388, %v2397
  %v2400 = vmul.f32 %v1089, %v2381
  %2401 = vrot.lane.b32.xlu0 %v2369, 112
  %v2402 = vpop.permute.xlu0 %2401
  %v2404 = vmul.f32 %v1096, %v2402
  %2406 = vrot.lane.b32.xlu0 %v2404, 16
  %v2407 = vpop.permute.xlu0 %2406
  %v2409 = vadd.f32 %v2400, %v2407
  %v2410 = vmul.f32 %v2399, %v1089
  %v2411 = vpack.c.bf16 %v2399, %v2399
  %v2413 = vrot.slane %v2411, 2
  %2414 = vrot.lane.b32.xlu0 %v2413, 80
  %v2415 = vpop.permute.xlu0 %2414
  %v2417 = vsel %vm1017, %v2415, 0
  %2419 = vmatprep.subr.bf16.mxu0 0
  %2420 = vmatpush1.bf16.msra.mxu0 %v1829
  %2421 = vmatprep.subr.bf16.mxu0 0
  %2422 = vmatpush1.bf16.msra.mxu0 0
  %2423 = vmatprep.subr.bf16.mxu0 0
  %2424 = vmatpush1.bf16.msra.mxu0 0
  %2425 = vmatprep.subr.bf16.mxu0 0
  %2426 = vmatpush1.bf16.msra.mxu0 0
  %2427 = vmatprep.subr.bf16.mxu0 0
  %2428 = vmatpush1.bf16.msra.mxu0 0
  %2429 = vmatprep.subr.bf16.mxu0 0
  %2430 = vmatpush1.bf16.msra.mxu0 0
  %2431 = vmatprep.subr.bf16.mxu0 0
  %2432 = vmatpush1.bf16.msra.mxu0 0
  %2433 = vmatprep.subr.bf16.mxu0 0
  %2434 = vmatpush1.bf16.msra.mxu0 0
  %2435 = vmatprep.subr.bf16.mxu0 0
  %2436 = vmatpush1.bf16.msra.mxu0 0
  %2437 = vmatprep.subr.bf16.mxu0 0
  %2438 = vmatpush1.bf16.msra.mxu0 0
  %2439 = vmatprep.subr.bf16.mxu0 0
  %2440 = vmatpush1.bf16.msra.mxu0 0
  %2441 = vmatprep.subr.bf16.mxu0 0
  %2442 = vmatpush1.bf16.msra.mxu0 0
  %2443 = vmatprep.subr.bf16.mxu0 0
  %2444 = vmatpush1.bf16.msra.mxu0 0
  %2445 = vmatprep.subr.bf16.mxu0 0
  %2446 = vmatpush1.bf16.msra.mxu0 0
  %2447 = vmatprep.subr.bf16.mxu0 0
  %2448 = vmatpush1.bf16.msra.mxu0 0
  %2449 = vmatprep.subr.bf16.mxu0 0
  %2450 = vmatpush1.bf16.msra.mxu0 0
  %2451 = vmatprep.mubr.bf16.mxu0 0
  %2452 = vmatmul.mubr.bf16.gmra.mrb[0].mxu0 %v2417
  %v2453 = vpop.f32.mrb[0].mxu0
  %v2454 = vadd.f32 0.0, %v2453
  %v2455 = vpop.f32.mrb[0].mxu0
  %v2456 = vpop.f32.mrb[0].mxu0
  %v2457 = vpop.f32.mrb[0].mxu0
  %2458 = vdwg.mxu0
  %v2460 = vrot.slane %v2454, 6
  %v2462 = vadd.f32 %v1005, %v2460
  %v2463 = vxor.u32 %v2462, 2147483648
  %v2464 = vmul.f32 %v2463, 1.442695
  %v2465 = vpow.pop %v2464
  %v2466 = vadd.f32 %v2465, 1.0
  %v2467 = vrcp.pop %v2466
  %v2468 = vmul.f32 1.0, %v2467
  %v2469 = vtanh.pop %v2462
  %v2471 = vrot.slane %v2409, 2
  %v2473 = vmul.f32 %v2468, %v2471
  %2475 = vrot.lane.b32.xlu0 %v2469, 96
  %v2476 = vpop.permute.xlu0 %2475
  %v2478 = vmul.f32 %v2468, %v2476
  %2480 = vrot.lane.b32.xlu0 %v2478, 16
  %v2481 = vpop.permute.xlu0 %2480
  %v2483 = vadd.f32 %v2473, %v2481
  %v2484 = vtanh.pop %v2483
  %2486 = vrot.lane.b32.xlu0 %v2484, 32
  %v2487 = vpop.permute.xlu0 %2486
  %v2489 = vmul.f32 %v2468, %v2487
  %v2490 = vmul.f32 %v1089, %v2489
  %v2492 = vrot.slane %v2399, 2
  %2493 = vrot.lane.b32.xlu0 %v2492, 80
  %v2494 = vpop.permute.xlu0 %2493
  %v2496 = vmul.f32 %v1096, %v2494
  %2498 = vrot.lane.b32.xlu0 %v2496, 48
  %v2499 = vpop.permute.xlu0 %2498
  %v2501 = vadd.f32 %v2490, %v2499
  %v2502 = vmul.f32 %v1089, %v2483
  %2503 = vrot.lane.b32.xlu0 %v2471, 112
  %v2504 = vpop.permute.xlu0 %2503
  %v2506 = vmul.f32 %v1096, %v2504
  %2508 = vrot.lane.b32.xlu0 %v2506, 16
  %v2509 = vpop.permute.xlu0 %2508
  %v2511 = vadd.f32 %v2502, %v2509
  %v2512 = vmul.f32 %v2501, %v1089
  %v2513 = vpack.c.bf16 %v2501, %v2501
  %v2515 = vrot.slane %v2513, 1
  %2516 = vrot.lane.b32.xlu0 %v2515, 80
  %v2517 = vpop.permute.xlu0 %2516
  %v2519 = vsel %vm1017, %v2517, 0
  %2521 = vmatprep.subr.bf16.mxu0 0
  %2522 = vmatpush1.bf16.msra.mxu0 %v1829
  %2523 = vmatprep.subr.bf16.mxu0 0
  %2524 = vmatpush1.bf16.msra.mxu0 0
  %2525 = vmatprep.subr.bf16.mxu0 0
  %2526 = vmatpush1.bf16.msra.mxu0 0
  %2527 = vmatprep.subr.bf16.mxu0 0
  %2528 = vmatpush1.bf16.msra.mxu0 0
  %2529 = vmatprep.subr.bf16.mxu0 0
  %2530 = vmatpush1.bf16.msra.mxu0 0
  %2531 = vmatprep.subr.bf16.mxu0 0
  %2532 = vmatpush1.bf16.msra.mxu0 0
  %2533 = vmatprep.subr.bf16.mxu0 0
  %2534 = vmatpush1.bf16.msra.mxu0 0
  %2535 = vmatprep.subr.bf16.mxu0 0
  %2536 = vmatpush1.bf16.msra.mxu0 0
  %2537 = vmatprep.subr.bf16.mxu0 0
  %2538 = vmatpush1.bf16.msra.mxu0 0
  %2539 = vmatprep.subr.bf16.mxu0 0
  %2540 = vmatpush1.bf16.msra.mxu0 0
  %2541 = vmatprep.subr.bf16.mxu0 0
  %2542 = vmatpush1.bf16.msra.mxu0 0
  %2543 = vmatprep.subr.bf16.mxu0 0
  %2544 = vmatpush1.bf16.msra.mxu0 0
  %2545 = vmatprep.subr.bf16.mxu0 0
  %2546 = vmatpush1.bf16.msra.mxu0 0
  %2547 = vmatprep.subr.bf16.mxu0 0
  %2548 = vmatpush1.bf16.msra.mxu0 0
  %2549 = vmatprep.subr.bf16.mxu0 0
  %2550 = vmatpush1.bf16.msra.mxu0 0
  %2551 = vmatprep.subr.bf16.mxu0 0
  %2552 = vmatpush1.bf16.msra.mxu0 0
  %2553 = vmatprep.mubr.bf16.mxu0 0
  %2554 = vmatmul.mubr.bf16.gmra.mrb[0].mxu0 %v2519
  %v2555 = vpop.f32.mrb[0].mxu0
  %v2556 = vadd.f32 0.0, %v2555
  %v2557 = vpop.f32.mrb[0].mxu0
  %v2558 = vpop.f32.mrb[0].mxu0
  %v2559 = vpop.f32.mrb[0].mxu0
  %2560 = vdwg.mxu0
  %v2561 = vadd.f32 %v1005, %v2556
  %v2562 = vxor.u32 %v2561, 2147483648
  %v2563 = vmul.f32 %v2562, 1.442695
  %v2564 = vpow.pop %v2563
  %v2565 = vadd.f32 %v2564, 1.0
  %v2566 = vrcp.pop %v2565
  %v2567 = vmul.f32 1.0, %v2566
  %v2568 = vtanh.pop %v2561
  %v2570 = vrot.slane %v2511, 2
  %v2572 = vmul.f32 %v2567, %v2570
  %2574 = vrot.lane.b32.xlu0 %v2568, 96
  %v2575 = vpop.permute.xlu0 %2574
  %v2577 = vmul.f32 %v2567, %v2575
  %2579 = vrot.lane.b32.xlu0 %v2577, 16
  %v2580 = vpop.permute.xlu0 %2579
  %v2582 = vadd.f32 %v2572, %v2580
  %v2583 = vtanh.pop %v2582
  %2585 = vrot.lane.b32.xlu0 %v2583, 32
  %v2586 = vpop.permute.xlu0 %2585
  %v2588 = vmul.f32 %v2567, %v2586
  %v2589 = vmul.f32 %v1089, %v2588
  %v2591 = vrot.slane %v2501, 2
  %2592 = vrot.lane.b32.xlu0 %v2591, 80
  %v2593 = vpop.permute.xlu0 %2592
  %v2595 = vmul.f32 %v1096, %v2593
  %2597 = vrot.lane.b32.xlu0 %v2595, 48
  %v2598 = vpop.permute.xlu0 %2597
  %v2600 = vadd.f32 %v2589, %v2598
  %v2601 = vmul.f32 %v1089, %v2582
  %2602 = vrot.lane.b32.xlu0 %v2570, 112
  %v2603 = vpop.permute.xlu0 %2602
  %v2605 = vmul.f32 %v1096, %v2603
  %2607 = vrot.lane.b32.xlu0 %v2605, 16
  %v2608 = vpop.permute.xlu0 %2607
  %v2610 = vadd.f32 %v2601, %v2608
  %v2611 = vmul.f32 %v2600, %v1089
  %v2612 = vsel %vm743, %v1102, %v1203
  %v2613 = vsel %vm262, %v2612, %v1305
  %vm2614 = vcmask 1045504
  %v2615 = vsel %vm2614, %v2613, %v1407
  %v2616 = vsel %vm743, %v1517, %v1618
  %v2617 = vsel %vm262, %v2616, %v1720
  %v2618 = vsel %vm2614, %v2617, %v1822
  %v2619 = vsel %vm743, %v2611, %v2512
  %v2620 = vsel %vm262, %v2619, %v2410
  %v2621 = vsel %vm2614, %v2620, %v2308
  %v2622 = vsel %vm743, %v2207, %v2108
  %v2623 = vsel %vm262, %v2622, %v2006
  %v2624 = vsel %vm2614, %v2623, %v1904
  %v2625 = vld [vmem:[%s43] sm:$0xf]
  %v2626 = vld [vmem:[%s43 + $0x4] sm:$0xf]
  %v2627 = vpack.c.bf16 %v2618, %v2615
  %v2628 = vld [vmem:[%s45] sm:$0xf]
  %v2629 = vld [vmem:[%s45 + $0x4] sm:$0xf]
  %v2630 = vpack.c.bf16 %v2624, %v2621
  %2632 = vrot.lane.b32.xlu0 %v2630, 80
  %v2633 = vpop.permute.xlu0 %2632
  %v2636 = vunpack.c.l.b16 %v2628
  %v2637 = vunpack.c.l.b16 %v2629
  %v2638 = vpack.c.b16 %v2637, %v2636
  %v2641 = vsel %vm1017, %v2633, 0
  %2643 = vmatprep.subr.bf16.mxu0 0
  %2644 = vmatpush1.bf16.msra.mxu0 %v2638
  %2645 = vmatprep.subr.bf16.mxu0 0
  %2646 = vmatpush1.bf16.msra.mxu0 0
  %2647 = vmatprep.subr.bf16.mxu0 0
  %2648 = vmatpush1.bf16.msra.mxu0 0
  %2649 = vmatprep.subr.bf16.mxu0 0
  %2650 = vmatpush1.bf16.msra.mxu0 0
  %2651 = vmatprep.subr.bf16.mxu0 0
  %2652 = vmatpush1.bf16.msra.mxu0 0
  %2653 = vmatprep.subr.bf16.mxu0 0
  %2654 = vmatpush1.bf16.msra.mxu0 0
  %2655 = vmatprep.subr.bf16.mxu0 0
  %2656 = vmatpush1.bf16.msra.mxu0 0
  %2657 = vmatprep.subr.bf16.mxu0 0
  %2658 = vmatpush1.bf16.msra.mxu0 0
  %2659 = vmatprep.subr.bf16.mxu0 0
  %2660 = vmatpush1.bf16.msra.mxu0 0
  %2661 = vmatprep.subr.bf16.mxu0 0
  %2662 = vmatpush1.bf16.msra.mxu0 0
  %2663 = vmatprep.subr.bf16.mxu0 0
  %2664 = vmatpush1.bf16.msra.mxu0 0
  %2665 = vmatprep.subr.bf16.mxu0 0
  %2666 = vmatpush1.bf16.msra.mxu0 0
  %2667 = vmatprep.subr.bf16.mxu0 0
  %2668 = vmatpush1.bf16.msra.mxu0 0
  %2669 = vmatprep.subr.bf16.mxu0 0
  %2670 = vmatpush1.bf16.msra.mxu0 0
  %2671 = vmatprep.subr.bf16.mxu0 0
  %2672 = vmatpush1.bf16.msra.mxu0 0
  %2673 = vmatprep.subr.bf16.mxu0 0
  %2674 = vmatpush1.bf16.msra.mxu0 0
  %2675 = vmatprep.mubr.bf16.mxu0 0
  %2676 = vmatmul.mubr.bf16.gmra.mrb[0].mxu0 %v2641
  %v2677 = vpop.f32.mrb[0].mxu0
  %v2678 = vadd.f32 0.0, %v2677
  %v2679 = vpop.f32.mrb[0].mxu0
  %v2680 = vpop.f32.mrb[0].mxu0
  %v2681 = vadd.f32 0.0, %v2680
  %v2682 = vpop.f32.mrb[0].mxu0
  %2683 = vdwg.mxu0
  %2685 = vrot.lane.b32.xlu0 %v2627, 80
  %v2686 = vpop.permute.xlu0 %2685
  %v2689 = vunpack.c.l.b16 %v2625
  %v2690 = vunpack.c.l.b16 %v2626
  %v2691 = vpack.c.b16 %v2690, %v2689
  %v2694 = vsel %vm1017, %v2686, 0
  %2696 = vmatprep.subr.bf16.mxu0 0
  %2697 = vmatpush1.bf16.msra.mxu0 %v2691
  %2698 = vmatprep.subr.bf16.mxu0 0
  %2699 = vmatpush1.bf16.msra.mxu0 0
  %2700 = vmatprep.subr.bf16.mxu0 0
  %2701 = vmatpush1.bf16.msra.mxu0 0
  %2702 = vmatprep.subr.bf16.mxu0 0
  %2703 = vmatpush1.bf16.msra.mxu0 0
  %2704 = vmatprep.subr.bf16.mxu0 0
  %2705 = vmatpush1.bf16.msra.mxu0 0
  %2706 = vmatprep.subr.bf16.mxu0 0
  %2707 = vmatpush1.bf16.msra.mxu0 0
  %2708 = vmatprep.subr.bf16.mxu0 0
  %2709 = vmatpush1.bf16.msra.mxu0 0
  %2710 = vmatprep.subr.bf16.mxu0 0
  %2711 = vmatpush1.bf16.msra.mxu0 0
  %2712 = vmatprep.subr.bf16.mxu0 0
  %2713 = vmatpush1.bf16.msra.mxu0 0
  %2714 = vmatprep.subr.bf16.mxu0 0
  %2715 = vmatpush1.bf16.msra.mxu0 0
  %2716 = vmatprep.subr.bf16.mxu0 0
  %2717 = vmatpush1.bf16.msra.mxu0 0
  %2718 = vmatprep.subr.bf16.mxu0 0
  %2719 = vmatpush1.bf16.msra.mxu0 0
  %2720 = vmatprep.subr.bf16.mxu0 0
  %2721 = vmatpush1.bf16.msra.mxu0 0
  %2722 = vmatprep.subr.bf16.mxu0 0
  %2723 = vmatpush1.bf16.msra.mxu0 0
  %2724 = vmatprep.subr.bf16.mxu0 0
  %2725 = vmatpush1.bf16.msra.mxu0 0
  %2726 = vmatprep.subr.bf16.mxu0 0
  %2727 = vmatpush1.bf16.msra.mxu0 0
  %2728 = vmatprep.mubr.bf16.mxu0 0
  %2729 = vmatmul.mubr.bf16.gmra.mrb[0].mxu0 %v2694
  %v2730 = vpop.f32.mrb[0].mxu0
  %v2731 = vadd.f32 %v2678, %v2730
  %v2732 = vpop.f32.mrb[0].mxu0
  %v2733 = vpop.f32.mrb[0].mxu0
  %v2734 = vadd.f32 %v2681, %v2733
  %v2735 = vpop.f32.mrb[0].mxu0
  %2736 = vdwg.mxu0
  %v2737 = vld [vmem:[%s49] sm:$0x1]
  %v2739 = vlaneseq
  %v2740 = vshrl.u32 %v2739, 7
  %v2741 = vsub.s32 0, %v2740
  %v2742 = vrot.slane %v2737, %v2741
  %v2744 = vadd.f32 %v2731, %v2742
  %v2745 = vadd.f32 %v2734, %v2742
  %v2746 = vld [vmem:[%s51] sm:$0xf]
  %v2747 = vld [vmem:[%s51 + $0x4] sm:$0xf]
  %v2748 = vld [vmem:[%s53] sm:$0xf]
  %v2749 = vld [vmem:[%s53 + $0x4] sm:$0xf]
  %v2752 = vunpack.c.l.b16 %v2748
  %v2753 = vunpack.c.l.b16 %v2749
  %v2754 = vpack.c.b16 %v2753, %v2752
  %2756 = vmatprep.subr.bf16.mxu0 0
  %2757 = vmatpush1.bf16.msra.mxu0 %v2754
  %2758 = vmatprep.subr.bf16.mxu0 0
  %2759 = vmatpush1.bf16.msra.mxu0 0
  %2760 = vmatprep.subr.bf16.mxu0 0
  %2761 = vmatpush1.bf16.msra.mxu0 0
  %2762 = vmatprep.subr.bf16.mxu0 0
  %2763 = vmatpush1.bf16.msra.mxu0 0
  %2764 = vmatprep.subr.bf16.mxu0 0
  %2765 = vmatpush1.bf16.msra.mxu0 0
  %2766 = vmatprep.subr.bf16.mxu0 0
  %2767 = vmatpush1.bf16.msra.mxu0 0
  %2768 = vmatprep.subr.bf16.mxu0 0
  %2769 = vmatpush1.bf16.msra.mxu0 0
  %2770 = vmatprep.subr.bf16.mxu0 0
  %2771 = vmatpush1.bf16.msra.mxu0 0
  %2772 = vmatprep.subr.bf16.mxu0 0
  %2773 = vmatpush1.bf16.msra.mxu0 0
  %2774 = vmatprep.subr.bf16.mxu0 0
  %2775 = vmatpush1.bf16.msra.mxu0 0
  %2776 = vmatprep.subr.bf16.mxu0 0
  %2777 = vmatpush1.bf16.msra.mxu0 0
  %2778 = vmatprep.subr.bf16.mxu0 0
  %2779 = vmatpush1.bf16.msra.mxu0 0
  %2780 = vmatprep.subr.bf16.mxu0 0
  %2781 = vmatpush1.bf16.msra.mxu0 0
  %2782 = vmatprep.subr.bf16.mxu0 0
  %2783 = vmatpush1.bf16.msra.mxu0 0
  %2784 = vmatprep.subr.bf16.mxu0 0
  %2785 = vmatpush1.bf16.msra.mxu0 0
  %2786 = vmatprep.subr.bf16.mxu0 0
  %2787 = vmatpush1.bf16.msra.mxu0 0
  %2788 = vmatprep.mubr.bf16.mxu0 0
  %2789 = vmatmul.mubr.bf16.gmra.mrb[0].mxu0 %v2641
  %v2790 = vpop.f32.mrb[0].mxu0
  %v2791 = vadd.f32 0.0, %v2790
  %v2792 = vpop.f32.mrb[0].mxu0
  %v2793 = vpop.f32.mrb[0].mxu0
  %v2794 = vadd.f32 0.0, %v2793
  %v2795 = vpop.f32.mrb[0].mxu0
  %2796 = vdwg.mxu0
  %v2799 = vunpack.c.l.b16 %v2746
  %v2800 = vunpack.c.l.b16 %v2747
  %v2801 = vpack.c.b16 %v2800, %v2799
  %2803 = vmatprep.subr.bf16.mxu0 0
  %2804 = vmatpush1.bf16.msra.mxu0 %v2801
  %2805 = vmatprep.subr.bf16.mxu0 0
  %2806 = vmatpush1.bf16.msra.mxu0 0
  %2807 = vmatprep.subr.bf16.mxu0 0
  %2808 = vmatpush1.bf16.msra.mxu0 0
  %2809 = vmatprep.subr.bf16.mxu0 0
  %2810 = vmatpush1.bf16.msra.mxu0 0
  %2811 = vmatprep.subr.bf16.mxu0 0
  %2812 = vmatpush1.bf16.msra.mxu0 0
  %2813 = vmatprep.subr.bf16.mxu0 0
  %2814 = vmatpush1.bf16.msra.mxu0 0
  %2815 = vmatprep.subr.bf16.mxu0 0
  %2816 = vmatpush1.bf16.msra.mxu0 0
  %2817 = vmatprep.subr.bf16.mxu0 0
  %2818 = vmatpush1.bf16.msra.mxu0 0
  %2819 = vmatprep.subr.bf16.mxu0 0
  %2820 = vmatpush1.bf16.msra.mxu0 0
  %2821 = vmatprep.subr.bf16.mxu0 0
  %2822 = vmatpush1.bf16.msra.mxu0 0
  %2823 = vmatprep.subr.bf16.mxu0 0
  %2824 = vmatpush1.bf16.msra.mxu0 0
  %2825 = vmatprep.subr.bf16.mxu0 0
  %2826 = vmatpush1.bf16.msra.mxu0 0
  %2827 = vmatprep.subr.bf16.mxu0 0
  %2828 = vmatpush1.bf16.msra.mxu0 0
  %2829 = vmatprep.subr.bf16.mxu0 0
  %2830 = vmatpush1.bf16.msra.mxu0 0
  %2831 = vmatprep.subr.bf16.mxu0 0
  %2832 = vmatpush1.bf16.msra.mxu0 0
  %2833 = vmatprep.subr.bf16.mxu0 0
  %2834 = vmatpush1.bf16.msra.mxu0 0
  %2835 = vmatprep.mubr.bf16.mxu0 0
  %2836 = vmatmul.mubr.bf16.gmra.mrb[0].mxu0 %v2694
  %v2837 = vpop.f32.mrb[0].mxu0
  %v2838 = vadd.f32 %v2791, %v2837
  %v2839 = vpop.f32.mrb[0].mxu0
  %v2840 = vpop.f32.mrb[0].mxu0
  %v2841 = vadd.f32 %v2794, %v2840
  %v2842 = vpop.f32.mrb[0].mxu0
  %2843 = vdwg.mxu0
  %v2844 = vld [vmem:[%s57] sm:$0x1]
  %v2846 = vlaneseq
  %v2847 = vshrl.u32 %v2846, 7
  %v2848 = vsub.s32 0, %v2847
  %v2849 = vrot.slane %v2844, %v2848
  %v2851 = vadd.f32 %v2838, %v2849
  %v2852 = vadd.f32 %v2841, %v2849
  %v2853 = vld [vmem:[%s47] sm:$0xf]
  %v2854 = vld [vmem:[%s47 + $0x4] sm:$0xf]
  %v2857 = vunpack.c.l.b16 %v2853
  %v2858 = vunpack.c.l.b16 %v2854
  %v2859 = vpack.c.b16 %v2858, %v2857
  %2861 = vmatprep.subr.bf16.mxu0 0
  %2862 = vmatpush1.bf16.msra.mxu0 %v2859
  %2863 = vmatprep.subr.bf16.mxu0 0
  %2864 = vmatpush1.bf16.msra.mxu0 0
  %2865 = vmatprep.subr.bf16.mxu0 0
  %2866 = vmatpush1.bf16.msra.mxu0 0
  %2867 = vmatprep.subr.bf16.mxu0 0
  %2868 = vmatpush1.bf16.msra.mxu0 0
  %2869 = vmatprep.subr.bf16.mxu0 0
  %2870 = vmatpush1.bf16.msra.mxu0 0
  %2871 = vmatprep.subr.bf16.mxu0 0
  %2872 = vmatpush1.bf16.msra.mxu0 0
  %2873 = vmatprep.subr.bf16.mxu0 0
  %2874 = vmatpush1.bf16.msra.mxu0 0
  %2875 = vmatprep.subr.bf16.mxu0 0
  %2876 = vmatpush1.bf16.msra.mxu0 0
  %2877 = vmatprep.subr.bf16.mxu0 0
  %2878 = vmatpush1.bf16.msra.mxu0 0
  %2879 = vmatprep.subr.bf16.mxu0 0
  %2880 = vmatpush1.bf16.msra.mxu0 0
  %2881 = vmatprep.subr.bf16.mxu0 0
  %2882 = vmatpush1.bf16.msra.mxu0 0
  %2883 = vmatprep.subr.bf16.mxu0 0
  %2884 = vmatpush1.bf16.msra.mxu0 0
  %2885 = vmatprep.subr.bf16.mxu0 0
  %2886 = vmatpush1.bf16.msra.mxu0 0
  %2887 = vmatprep.subr.bf16.mxu0 0
  %2888 = vmatpush1.bf16.msra.mxu0 0
  %2889 = vmatprep.subr.bf16.mxu0 0
  %2890 = vmatpush1.bf16.msra.mxu0 0
  %2891 = vmatprep.subr.bf16.mxu0 0
  %2892 = vmatpush1.bf16.msra.mxu0 0
  %2893 = vmatprep.mubr.bf16.mxu0 0
  %2894 = vmatmul.mubr.bf16.gmra.mrb[0].mxu0 %v1019
  %v2895 = vpop.f32.mrb[0].mxu0
  %v2896 = vadd.f32 0.0, %v2895
  %v2897 = vpop.f32.mrb[0].mxu0
  %v2898 = vpop.f32.mrb[0].mxu0
  %v2899 = vpop.f32.mrb[0].mxu0
  %2900 = vdwg.mxu0
  %v2901 = vadd.f32 %v2744, %v2896
  %v2902 = vxor.u32 %v2901, 2147483648
  %v2903 = vmul.f32 %v2902, 1.442695
  %v2904 = vpow.pop %v2903
  %v2905 = vadd.f32 %v2904, 1.0
  %v2906 = vrcp.pop %v2905
  %v2907 = vmul.f32 1.0, %v2906
  %v2908 = vtanh.pop %v2901
  %v2909 = vmul.f32 %v2907, 0.0
  %2911 = vrot.lane.b32.xlu0 %v2908, 96
  %v2912 = vpop.permute.xlu0 %2911
  %v2914 = vmul.f32 %v2907, %v2912
  %2916 = vrot.lane.b32.xlu0 %v2914, 16
  %v2917 = vpop.permute.xlu0 %2916
  %v2919 = vadd.f32 %v2909, %v2917
  %v2920 = vtanh.pop %v2919
  %2922 = vrot.lane.b32.xlu0 %v2920, 32
  %v2923 = vpop.permute.xlu0 %2922
  %v2925 = vmul.f32 %v2907, %v2923
  %v2926 = vmul.f32 %v1089, %v2925
  %v2927 = vadd.f32 %v2926, %v1098
  %v2928 = vmul.f32 %v1089, %v2919
  %v2929 = vadd.f32 %v2928, %v1098
  %v2930 = vmul.f32 %v2927, %v1089
  %v2931 = vpack.c.bf16 %v2927, %v2927
  %2933 = vrot.lane.b32.xlu0 %v2931, 80
  %v2934 = vpop.permute.xlu0 %2933
  %v2936 = vsel %vm1017, %v2934, 0
  %2938 = vmatprep.subr.bf16.mxu0 0
  %2939 = vmatpush1.bf16.msra.mxu0 %v2859
  %2940 = vmatprep.subr.bf16.mxu0 0
  %2941 = vmatpush1.bf16.msra.mxu0 0
  %2942 = vmatprep.subr.bf16.mxu0 0
  %2943 = vmatpush1.bf16.msra.mxu0 0
  %2944 = vmatprep.subr.bf16.mxu0 0
  %2945 = vmatpush1.bf16.msra.mxu0 0
  %2946 = vmatprep.subr.bf16.mxu0 0
  %2947 = vmatpush1.bf16.msra.mxu0 0
  %2948 = vmatprep.subr.bf16.mxu0 0
  %2949 = vmatpush1.bf16.msra.mxu0 0
  %2950 = vmatprep.subr.bf16.mxu0 0
  %2951 = vmatpush1.bf16.msra.mxu0 0
  %2952 = vmatprep.subr.bf16.mxu0 0
  %2953 = vmatpush1.bf16.msra.mxu0 0
  %2954 = vmatprep.subr.bf16.mxu0 0
  %2955 = vmatpush1.bf16.msra.mxu0 0
  %2956 = vmatprep.subr.bf16.mxu0 0
  %2957 = vmatpush1.bf16.msra.mxu0 0
  %2958 = vmatprep.subr.bf16.mxu0 0
  %2959 = vmatpush1.bf16.msra.mxu0 0
  %2960 = vmatprep.subr.bf16.mxu0 0
  %2961 = vmatpush1.bf16.msra.mxu0 0
  %2962 = vmatprep.subr.bf16.mxu0 0
  %2963 = vmatpush1.bf16.msra.mxu0 0
  %2964 = vmatprep.subr.bf16.mxu0 0
  %2965 = vmatpush1.bf16.msra.mxu0 0
  %2966 = vmatprep.subr.bf16.mxu0 0
  %2967 = vmatpush1.bf16.msra.mxu0 0
  %2968 = vmatprep.subr.bf16.mxu0 0
  %2969 = vmatpush1.bf16.msra.mxu0 0
  %2970 = vmatprep.mubr.bf16.mxu0 0
  %2971 = vmatmul.mubr.bf16.gmra.mrb[0].mxu0 %v2936
  %v2972 = vpop.f32.mrb[0].mxu0
  %v2973 = vadd.f32 0.0, %v2972
  %v2974 = vpop.f32.mrb[0].mxu0
  %v2975 = vpop.f32.mrb[0].mxu0
  %v2976 = vpop.f32.mrb[0].mxu0
  %2977 = vdwg.mxu0
  %v2979 = vrot.slane %v2973, 6
  %v2981 = vadd.f32 %v2744, %v2979
  %v2982 = vxor.u32 %v2981, 2147483648
  %v2983 = vmul.f32 %v2982, 1.442695
  %v2984 = vpow.pop %v2983
  %v2985 = vadd.f32 %v2984, 1.0
  %v2986 = vrcp.pop %v2985
  %v2987 = vmul.f32 1.0, %v2986
  %v2988 = vtanh.pop %v2981
  %v2990 = vrot.slane %v2929, 6
  %v2992 = vmul.f32 %v2987, %v2990
  %2994 = vrot.lane.b32.xlu0 %v2988, 96
  %v2995 = vpop.permute.xlu0 %2994
  %v2997 = vmul.f32 %v2987, %v2995
  %2999 = vrot.lane.b32.xlu0 %v2997, 16
  %v3000 = vpop.permute.xlu0 %2999
  %v3002 = vadd.f32 %v2992, %v3000
  %v3003 = vtanh.pop %v3002
  %3005 = vrot.lane.b32.xlu0 %v3003, 32
  %v3006 = vpop.permute.xlu0 %3005
  %v3008 = vmul.f32 %v2987, %v3006
  %v3009 = vmul.f32 %v1089, %v3008
  %v3011 = vrot.slane %v2927, 6
  %3012 = vrot.lane.b32.xlu0 %v3011, 80
  %v3013 = vpop.permute.xlu0 %3012
  %v3015 = vmul.f32 %v1096, %v3013
  %3017 = vrot.lane.b32.xlu0 %v3015, 48
  %v3018 = vpop.permute.xlu0 %3017
  %v3020 = vadd.f32 %v3009, %v3018
  %v3021 = vmul.f32 %v1089, %v3002
  %3022 = vrot.lane.b32.xlu0 %v2990, 112
  %v3023 = vpop.permute.xlu0 %3022
  %v3025 = vmul.f32 %v1096, %v3023
  %3027 = vrot.lane.b32.xlu0 %v3025, 16
  %v3028 = vpop.permute.xlu0 %3027
  %v3030 = vadd.f32 %v3021, %v3028
  %v3031 = vmul.f32 %v3020, %v1089
  %v3032 = vpack.c.bf16 %v3020, %v3020
  %v3034 = vrot.slane %v3032, 1
  %3035 = vrot.lane.b32.xlu0 %v3034, 80
  %v3036 = vpop.permute.xlu0 %3035
  %v3038 = vsel %vm1017, %v3036, 0
  %3040 = vmatprep.subr.bf16.mxu0 0
  %3041 = vmatpush1.bf16.msra.mxu0 %v2859
  %3042 = vmatprep.subr.bf16.mxu0 0
  %3043 = vmatpush1.bf16.msra.mxu0 0
  %3044 = vmatprep.subr.bf16.mxu0 0
  %3045 = vmatpush1.bf16.msra.mxu0 0
  %3046 = vmatprep.subr.bf16.mxu0 0
  %3047 = vmatpush1.bf16.msra.mxu0 0
  %3048 = vmatprep.subr.bf16.mxu0 0
  %3049 = vmatpush1.bf16.msra.mxu0 0
  %3050 = vmatprep.subr.bf16.mxu0 0
  %3051 = vmatpush1.bf16.msra.mxu0 0
  %3052 = vmatprep.subr.bf16.mxu0 0
  %3053 = vmatpush1.bf16.msra.mxu0 0
  %3054 = vmatprep.subr.bf16.mxu0 0
  %3055 = vmatpush1.bf16.msra.mxu0 0
  %3056 = vmatprep.subr.bf16.mxu0 0
  %3057 = vmatpush1.bf16.msra.mxu0 0
  %3058 = vmatprep.subr.bf16.mxu0 0
  %3059 = vmatpush1.bf16.msra.mxu0 0
  %3060 = vmatprep.subr.bf16.mxu0 0
  %3061 = vmatpush1.bf16.msra.mxu0 0
  %3062 = vmatprep.subr.bf16.mxu0 0
  %3063 = vmatpush1.bf16.msra.mxu0 0
  %3064 = vmatprep.subr.bf16.mxu0 0
  %3065 = vmatpush1.bf16.msra.mxu0 0
  %3066 = vmatprep.subr.bf16.mxu0 0
  %3067 = vmatpush1.bf16.msra.mxu0 0
  %3068 = vmatprep.subr.bf16.mxu0 0
  %3069 = vmatpush1.bf16.msra.mxu0 0
  %3070 = vmatprep.subr.bf16.mxu0 0
  %3071 = vmatpush1.bf16.msra.mxu0 0
  %3072 = vmatprep.mubr.bf16.mxu0 0
  %3073 = vmatmul.mubr.bf16.gmra.mrb[0].mxu0 %v3038
  %v3074 = vpop.f32.mrb[0].mxu0
  %v3075 = vadd.f32 0.0, %v3074
  %v3076 = vpop.f32.mrb[0].mxu0
  %v3077 = vpop.f32.mrb[0].mxu0
  %v3078 = vpop.f32.mrb[0].mxu0
  %3079 = vdwg.mxu0
  %v3081 = vrot.slane %v3075, 4
  %v3083 = vadd.f32 %v2744, %v3081
  %v3084 = vxor.u32 %v3083, 2147483648
  %v3085 = vmul.f32 %v3084, 1.442695
  %v3086 = vpow.pop %v3085
  %v3087 = vadd.f32 %v3086, 1.0
  %v3088 = vrcp.pop %v3087
  %v3089 = vmul.f32 1.0, %v3088
  %v3090 = vtanh.pop %v3083
  %v3092 = vrot.slane %v3030, 6
  %v3094 = vmul.f32 %v3089, %v3092
  %3096 = vrot.lane.b32.xlu0 %v3090, 96
  %v3097 = vpop.permute.xlu0 %3096
  %v3099 = vmul.f32 %v3089, %v3097
  %3101 = vrot.lane.b32.xlu0 %v3099, 16
  %v3102 = vpop.permute.xlu0 %3101
  %v3104 = vadd.f32 %v3094, %v3102
  %v3105 = vtanh.pop %v3104
  %3107 = vrot.lane.b32.xlu0 %v3105, 32
  %v3108 = vpop.permute.xlu0 %3107
  %v3110 = vmul.f32 %v3089, %v3108
  %v3111 = vmul.f32 %v1089, %v3110
  %v3113 = vrot.slane %v3020, 6
  %3114 = vrot.lane.b32.xlu0 %v3113, 80
  %v3115 = vpop.permute.xlu0 %3114
  %v3117 = vmul.f32 %v1096, %v3115
  %3119 = vrot.lane.b32.xlu0 %v3117, 48
  %v3120 = vpop.permute.xlu0 %3119
  %v3122 = vadd.f32 %v3111, %v3120
  %v3123 = vmul.f32 %v1089, %v3104
  %3124 = vrot.lane.b32.xlu0 %v3092, 112
  %v3125 = vpop.permute.xlu0 %3124
  %v3127 = vmul.f32 %v1096, %v3125
  %3129 = vrot.lane.b32.xlu0 %v3127, 16
  %v3130 = vpop.permute.xlu0 %3129
  %v3132 = vadd.f32 %v3123, %v3130
  %v3133 = vmul.f32 %v3122, %v1089
  %v3134 = vpack.c.bf16 %v3122, %v3122
  %v3136 = vrot.slane %v3134, 2
  %3137 = vrot.lane.b32.xlu0 %v3136, 80
  %v3138 = vpop.permute.xlu0 %3137
  %v3140 = vsel %vm1017, %v3138, 0
  %3142 = vmatprep.subr.bf16.mxu0 0
  %3143 = vmatpush1.bf16.msra.mxu0 %v2859
  %3144 = vmatprep.subr.bf16.mxu0 0
  %3145 = vmatpush1.bf16.msra.mxu0 0
  %3146 = vmatprep.subr.bf16.mxu0 0
  %3147 = vmatpush1.bf16.msra.mxu0 0
  %3148 = vmatprep.subr.bf16.mxu0 0
  %3149 = vmatpush1.bf16.msra.mxu0 0
  %3150 = vmatprep.subr.bf16.mxu0 0
  %3151 = vmatpush1.bf16.msra.mxu0 0
  %3152 = vmatprep.subr.bf16.mxu0 0
  %3153 = vmatpush1.bf16.msra.mxu0 0
  %3154 = vmatprep.subr.bf16.mxu0 0
  %3155 = vmatpush1.bf16.msra.mxu0 0
  %3156 = vmatprep.subr.bf16.mxu0 0
  %3157 = vmatpush1.bf16.msra.mxu0 0
  %3158 = vmatprep.subr.bf16.mxu0 0
  %3159 = vmatpush1.bf16.msra.mxu0 0
  %3160 = vmatprep.subr.bf16.mxu0 0
  %3161 = vmatpush1.bf16.msra.mxu0 0
  %3162 = vmatprep.subr.bf16.mxu0 0
  %3163 = vmatpush1.bf16.msra.mxu0 0
  %3164 = vmatprep.subr.bf16.mxu0 0
  %3165 = vmatpush1.bf16.msra.mxu0 0
  %3166 = vmatprep.subr.bf16.mxu0 0
  %3167 = vmatpush1.bf16.msra.mxu0 0
  %3168 = vmatprep.subr.bf16.mxu0 0
  %3169 = vmatpush1.bf16.msra.mxu0 0
  %3170 = vmatprep.subr.bf16.mxu0 0
  %3171 = vmatpush1.bf16.msra.mxu0 0
  %3172 = vmatprep.subr.bf16.mxu0 0
  %3173 = vmatpush1.bf16.msra.mxu0 0
  %3174 = vmatprep.mubr.bf16.mxu0 0
  %3175 = vmatmul.mubr.bf16.gmra.mrb[0].mxu0 %v3140
  %v3176 = vpop.f32.mrb[0].mxu0
  %v3177 = vadd.f32 0.0, %v3176
  %v3178 = vpop.f32.mrb[0].mxu0
  %v3179 = vpop.f32.mrb[0].mxu0
  %v3180 = vpop.f32.mrb[0].mxu0
  %3181 = vdwg.mxu0
  %v3183 = vrot.slane %v3177, 2
  %v3185 = vadd.f32 %v2744, %v3183
  %v3186 = vxor.u32 %v3185, 2147483648
  %v3187 = vmul.f32 %v3186, 1.442695
  %v3188 = vpow.pop %v3187
  %v3189 = vadd.f32 %v3188, 1.0
  %v3190 = vrcp.pop %v3189
  %v3191 = vmul.f32 1.0, %v3190
  %v3192 = vtanh.pop %v3185
  %v3194 = vrot.slane %v3132, 6
  %v3196 = vmul.f32 %v3191, %v3194
  %3198 = vrot.lane.b32.xlu0 %v3192, 96
  %v3199 = vpop.permute.xlu0 %3198
  %v3201 = vmul.f32 %v3191, %v3199
  %3203 = vrot.lane.b32.xlu0 %v3201, 16
  %v3204 = vpop.permute.xlu0 %3203
  %v3206 = vadd.f32 %v3196, %v3204
  %v3207 = vtanh.pop %v3206
  %3209 = vrot.lane.b32.xlu0 %v3207, 32
  %v3210 = vpop.permute.xlu0 %3209
  %v3212 = vmul.f32 %v3191, %v3210
  %v3213 = vmul.f32 %v1089, %v3212
  %v3215 = vrot.slane %v3122, 6
  %3216 = vrot.lane.b32.xlu0 %v3215, 80
  %v3217 = vpop.permute.xlu0 %3216
  %v3219 = vmul.f32 %v1096, %v3217
  %3221 = vrot.lane.b32.xlu0 %v3219, 48
  %v3222 = vpop.permute.xlu0 %3221
  %v3224 = vadd.f32 %v3213, %v3222
  %v3225 = vmul.f32 %v1089, %v3206
  %3226 = vrot.lane.b32.xlu0 %v3194, 112
  %v3227 = vpop.permute.xlu0 %3226
  %v3229 = vmul.f32 %v1096, %v3227
  %3231 = vrot.lane.b32.xlu0 %v3229, 16
  %v3232 = vpop.permute.xlu0 %3231
  %v3234 = vadd.f32 %v3225, %v3232
  %v3235 = vmul.f32 %v3224, %v1089
  %v3236 = vpack.c.bf16 %v3224, %v3224
  %v3238 = vrot.slane %v3236, 3
  %3239 = vrot.lane.b32.xlu0 %v3238, 80
  %v3240 = vpop.permute.xlu0 %3239
  %v3242 = vsel %vm1017, %v3240, 0
  %3244 = vmatprep.subr.bf16.mxu0 0
  %3245 = vmatpush1.bf16.msra.mxu0 %v2859
  %3246 = vmatprep.subr.bf16.mxu0 0
  %3247 = vmatpush1.bf16.msra.mxu0 0
  %3248 = vmatprep.subr.bf16.mxu0 0
  %3249 = vmatpush1.bf16.msra.mxu0 0
  %3250 = vmatprep.subr.bf16.mxu0 0
  %3251 = vmatpush1.bf16.msra.mxu0 0
  %3252 = vmatprep.subr.bf16.mxu0 0
  %3253 = vmatpush1.bf16.msra.mxu0 0
  %3254 = vmatprep.subr.bf16.mxu0 0
  %3255 = vmatpush1.bf16.msra.mxu0 0
  %3256 = vmatprep.subr.bf16.mxu0 0
  %3257 = vmatpush1.bf16.msra.mxu0 0
  %3258 = vmatprep.subr.bf16.mxu0 0
  %3259 = vmatpush1.bf16.msra.mxu0 0
  %3260 = vmatprep.subr.bf16.mxu0 0
  %3261 = vmatpush1.bf16.msra.mxu0 0
  %3262 = vmatprep.subr.bf16.mxu0 0
  %3263 = vmatpush1.bf16.msra.mxu0 0
  %3264 = vmatprep.subr.bf16.mxu0 0
  %3265 = vmatpush1.bf16.msra.mxu0 0
  %3266 = vmatprep.subr.bf16.mxu0 0
  %3267 = vmatpush1.bf16.msra.mxu0 0
  %3268 = vmatprep.subr.bf16.mxu0 0
  %3269 = vmatpush1.bf16.msra.mxu0 0
  %3270 = vmatprep.subr.bf16.mxu0 0
  %3271 = vmatpush1.bf16.msra.mxu0 0
  %3272 = vmatprep.subr.bf16.mxu0 0
  %3273 = vmatpush1.bf16.msra.mxu0 0
  %3274 = vmatprep.subr.bf16.mxu0 0
  %3275 = vmatpush1.bf16.msra.mxu0 0
  %3276 = vmatprep.mubr.bf16.mxu0 0
  %3277 = vmatmul.mubr.bf16.gmra.mrb[0].mxu0 %v3242
  %v3278 = vpop.f32.mrb[0].mxu0
  %v3279 = vadd.f32 0.0, %v3278
  %v3280 = vpop.f32.mrb[0].mxu0
  %v3281 = vpop.f32.mrb[0].mxu0
  %v3282 = vpop.f32.mrb[0].mxu0
  %3283 = vdwg.mxu0
  %v3284 = vadd.f32 %v2745, %v3279
  %v3285 = vxor.u32 %v3284, 2147483648
  %v3286 = vmul.f32 %v3285, 1.442695
  %v3287 = vpow.pop %v3286
  %v3288 = vadd.f32 %v3287, 1.0
  %v3289 = vrcp.pop %v3288
  %v3290 = vmul.f32 1.0, %v3289
  %v3291 = vtanh.pop %v3284
  %v3293 = vrot.slane %v3234, 6
  %v3295 = vmul.f32 %v3290, %v3293
  %3297 = vrot.lane.b32.xlu0 %v3291, 96
  %v3298 = vpop.permute.xlu0 %3297
  %v3300 = vmul.f32 %v3290, %v3298
  %3302 = vrot.lane.b32.xlu0 %v3300, 16
  %v3303 = vpop.permute.xlu0 %3302
  %v3305 = vadd.f32 %v3295, %v3303
  %v3306 = vtanh.pop %v3305
  %3308 = vrot.lane.b32.xlu0 %v3306, 32
  %v3309 = vpop.permute.xlu0 %3308
  %v3311 = vmul.f32 %v3290, %v3309
  %v3312 = vmul.f32 %v1487, %v3311
  %v3314 = vrot.slane %v3224, 6
  %3315 = vrot.lane.b32.xlu0 %v3314, 80
  %v3316 = vpop.permute.xlu0 %3315
  %v3318 = vmul.f32 %v1494, %v3316
  %3320 = vrot.lane.b32.xlu0 %v3318, 48
  %v3321 = vpop.permute.xlu0 %3320
  %v3323 = vadd.f32 %v3312, %v3321
  %v3324 = vmul.f32 %v1487, %v3305
  %3325 = vrot.lane.b32.xlu0 %v3293, 112
  %v3326 = vpop.permute.xlu0 %3325
  %v3328 = vmul.f32 %v1494, %v3326
  %3330 = vrot.lane.b32.xlu0 %v3328, 16
  %v3331 = vpop.permute.xlu0 %3330
  %v3333 = vadd.f32 %v3324, %v3331
  %v3334 = vmul.f32 %v3323, %v1487
  %v3335 = vpack.c.bf16 %v3323, %v3323
  %3337 = vrot.lane.b32.xlu0 %v3335, 80
  %v3338 = vpop.permute.xlu0 %3337
  %v3340 = vsel %vm1017, %v3338, 0
  %3342 = vmatprep.subr.bf16.mxu0 0
  %3343 = vmatpush1.bf16.msra.mxu0 %v2859
  %3344 = vmatprep.subr.bf16.mxu0 0
  %3345 = vmatpush1.bf16.msra.mxu0 0
  %3346 = vmatprep.subr.bf16.mxu0 0
  %3347 = vmatpush1.bf16.msra.mxu0 0
  %3348 = vmatprep.subr.bf16.mxu0 0
  %3349 = vmatpush1.bf16.msra.mxu0 0
  %3350 = vmatprep.subr.bf16.mxu0 0
  %3351 = vmatpush1.bf16.msra.mxu0 0
  %3352 = vmatprep.subr.bf16.mxu0 0
  %3353 = vmatpush1.bf16.msra.mxu0 0
  %3354 = vmatprep.subr.bf16.mxu0 0
  %3355 = vmatpush1.bf16.msra.mxu0 0
  %3356 = vmatprep.subr.bf16.mxu0 0
  %3357 = vmatpush1.bf16.msra.mxu0 0
  %3358 = vmatprep.subr.bf16.mxu0 0
  %3359 = vmatpush1.bf16.msra.mxu0 0
  %3360 = vmatprep.subr.bf16.mxu0 0
  %3361 = vmatpush1.bf16.msra.mxu0 0
  %3362 = vmatprep.subr.bf16.mxu0 0
  %3363 = vmatpush1.bf16.msra.mxu0 0
  %3364 = vmatprep.subr.bf16.mxu0 0
  %3365 = vmatpush1.bf16.msra.mxu0 0
  %3366 = vmatprep.subr.bf16.mxu0 0
  %3367 = vmatpush1.bf16.msra.mxu0 0
  %3368 = vmatprep.subr.bf16.mxu0 0
  %3369 = vmatpush1.bf16.msra.mxu0 0
  %3370 = vmatprep.subr.bf16.mxu0 0
  %3371 = vmatpush1.bf16.msra.mxu0 0
  %3372 = vmatprep.subr.bf16.mxu0 0
  %3373 = vmatpush1.bf16.msra.mxu0 0
  %3374 = vmatprep.mubr.bf16.mxu0 0
  %3375 = vmatmul.mubr.bf16.gmra.mrb[0].mxu0 %v3340
  %v3376 = vpop.f32.mrb[0].mxu0
  %v3377 = vadd.f32 0.0, %v3376
  %v3378 = vpop.f32.mrb[0].mxu0
  %v3379 = vpop.f32.mrb[0].mxu0
  %v3380 = vpop.f32.mrb[0].mxu0
  %3381 = vdwg.mxu0
  %v3383 = vrot.slane %v3377, 6
  %v3385 = vadd.f32 %v2745, %v3383
  %v3386 = vxor.u32 %v3385, 2147483648
  %v3387 = vmul.f32 %v3386, 1.442695
  %v3388 = vpow.pop %v3387
  %v3389 = vadd.f32 %v3388, 1.0
  %v3390 = vrcp.pop %v3389
  %v3391 = vmul.f32 1.0, %v3390
  %v3392 = vtanh.pop %v3385
  %v3394 = vrot.slane %v3333, 6
  %v3396 = vmul.f32 %v3391, %v3394
  %3398 = vrot.lane.b32.xlu0 %v3392, 96
  %v3399 = vpop.permute.xlu0 %3398
  %v3401 = vmul.f32 %v3391, %v3399
  %3403 = vrot.lane.b32.xlu0 %v3401, 16
  %v3404 = vpop.permute.xlu0 %3403
  %v3406 = vadd.f32 %v3396, %v3404
  %v3407 = vtanh.pop %v3406
  %3409 = vrot.lane.b32.xlu0 %v3407, 32
  %v3410 = vpop.permute.xlu0 %3409
  %v3412 = vmul.f32 %v3391, %v3410
  %v3413 = vmul.f32 %v1487, %v3412
  %v3415 = vrot.slane %v3323, 6
  %3416 = vrot.lane.b32.xlu0 %v3415, 80
  %v3417 = vpop.permute.xlu0 %3416
  %v3419 = vmul.f32 %v1494, %v3417
  %3421 = vrot.lane.b32.xlu0 %v3419, 48
  %v3422 = vpop.permute.xlu0 %3421
  %v3424 = vadd.f32 %v3413, %v3422
  %v3425 = vmul.f32 %v1487, %v3406
  %3426 = vrot.lane.b32.xlu0 %v3394, 112
  %v3427 = vpop.permute.xlu0 %3426
  %v3429 = vmul.f32 %v1494, %v3427
  %3431 = vrot.lane.b32.xlu0 %v3429, 16
  %v3432 = vpop.permute.xlu0 %3431
  %v3434 = vadd.f32 %v3425, %v3432
  %v3435 = vmul.f32 %v3424, %v1487
  %v3436 = vpack.c.bf16 %v3424, %v3424
  %v3438 = vrot.slane %v3436, 1
  %3439 = vrot.lane.b32.xlu0 %v3438, 80
  %v3440 = vpop.permute.xlu0 %3439
  %v3442 = vsel %vm1017, %v3440, 0
  %3444 = vmatprep.subr.bf16.mxu0 0
  %3445 = vmatpush1.bf16.msra.mxu0 %v2859
  %3446 = vmatprep.subr.bf16.mxu0 0
  %3447 = vmatpush1.bf16.msra.mxu0 0
  %3448 = vmatprep.subr.bf16.mxu0 0
  %3449 = vmatpush1.bf16.msra.mxu0 0
  %3450 = vmatprep.subr.bf16.mxu0 0
  %3451 = vmatpush1.bf16.msra.mxu0 0
  %3452 = vmatprep.subr.bf16.mxu0 0
  %3453 = vmatpush1.bf16.msra.mxu0 0
  %3454 = vmatprep.subr.bf16.mxu0 0
  %3455 = vmatpush1.bf16.msra.mxu0 0
  %3456 = vmatprep.subr.bf16.mxu0 0
  %3457 = vmatpush1.bf16.msra.mxu0 0
  %3458 = vmatprep.subr.bf16.mxu0 0
  %3459 = vmatpush1.bf16.msra.mxu0 0
  %3460 = vmatprep.subr.bf16.mxu0 0
  %3461 = vmatpush1.bf16.msra.mxu0 0
  %3462 = vmatprep.subr.bf16.mxu0 0
  %3463 = vmatpush1.bf16.msra.mxu0 0
  %3464 = vmatprep.subr.bf16.mxu0 0
  %3465 = vmatpush1.bf16.msra.mxu0 0
  %3466 = vmatprep.subr.bf16.mxu0 0
  %3467 = vmatpush1.bf16.msra.mxu0 0
  %3468 = vmatprep.subr.bf16.mxu0 0
  %3469 = vmatpush1.bf16.msra.mxu0 0
  %3470 = vmatprep.subr.bf16.mxu0 0
  %3471 = vmatpush1.bf16.msra.mxu0 0
  %3472 = vmatprep.subr.bf16.mxu0 0
  %3473 = vmatpush1.bf16.msra.mxu0 0
  %3474 = vmatprep.subr.bf16.mxu0 0
  %3475 = vmatpush1.bf16.msra.mxu0 0
  %3476 = vmatprep.mubr.bf16.mxu0 0
  %3477 = vmatmul.mubr.bf16.gmra.mrb[0].mxu0 %v3442
  %v3478 = vpop.f32.mrb[0].mxu0
  %v3479 = vadd.f32 0.0, %v3478
  %v3480 = vpop.f32.mrb[0].mxu0
  %v3481 = vpop.f32.mrb[0].mxu0
  %v3482 = vpop.f32.mrb[0].mxu0
  %3483 = vdwg.mxu0
  %v3485 = vrot.slane %v3479, 4
  %v3487 = vadd.f32 %v2745, %v3485
  %v3488 = vxor.u32 %v3487, 2147483648
  %v3489 = vmul.f32 %v3488, 1.442695
  %v3490 = vpow.pop %v3489
  %v3491 = vadd.f32 %v3490, 1.0
  %v3492 = vrcp.pop %v3491
  %v3493 = vmul.f32 1.0, %v3492
  %v3494 = vtanh.pop %v3487
  %v3496 = vrot.slane %v3434, 6
  %v3498 = vmul.f32 %v3493, %v3496
  %3500 = vrot.lane.b32.xlu0 %v3494, 96
  %v3501 = vpop.permute.xlu0 %3500
  %v3503 = vmul.f32 %v3493, %v3501
  %3505 = vrot.lane.b32.xlu0 %v3503, 16
  %v3506 = vpop.permute.xlu0 %3505
  %v3508 = vadd.f32 %v3498, %v3506
  %v3509 = vtanh.pop %v3508
  %3511 = vrot.lane.b32.xlu0 %v3509, 32
  %v3512 = vpop.permute.xlu0 %3511
  %v3514 = vmul.f32 %v3493, %v3512
  %v3515 = vmul.f32 %v1487, %v3514
  %v3517 = vrot.slane %v3424, 6
  %3518 = vrot.lane.b32.xlu0 %v3517, 80
  %v3519 = vpop.permute.xlu0 %3518
  %v3521 = vmul.f32 %v1494, %v3519
  %3523 = vrot.lane.b32.xlu0 %v3521, 48
  %v3524 = vpop.permute.xlu0 %3523
  %v3526 = vadd.f32 %v3515, %v3524
  %v3527 = vmul.f32 %v1487, %v3508
  %3528 = vrot.lane.b32.xlu0 %v3496, 112
  %v3529 = vpop.permute.xlu0 %3528
  %v3531 = vmul.f32 %v1494, %v3529
  %3533 = vrot.lane.b32.xlu0 %v3531, 16
  %v3534 = vpop.permute.xlu0 %3533
  %v3536 = vadd.f32 %v3527, %v3534
  %v3537 = vmul.f32 %v3526, %v1487
  %v3538 = vpack.c.bf16 %v3526, %v3526
  %v3540 = vrot.slane %v3538, 2
  %3541 = vrot.lane.b32.xlu0 %v3540, 80
  %v3542 = vpop.permute.xlu0 %3541
  %v3544 = vsel %vm1017, %v3542, 0
  %3546 = vmatprep.subr.bf16.mxu0 0
  %3547 = vmatpush1.bf16.msra.mxu0 %v2859
  %3548 = vmatprep.subr.bf16.mxu0 0
  %3549 = vmatpush1.bf16.msra.mxu0 0
  %3550 = vmatprep.subr.bf16.mxu0 0
  %3551 = vmatpush1.bf16.msra.mxu0 0
  %3552 = vmatprep.subr.bf16.mxu0 0
  %3553 = vmatpush1.bf16.msra.mxu0 0
  %3554 = vmatprep.subr.bf16.mxu0 0
  %3555 = vmatpush1.bf16.msra.mxu0 0
  %3556 = vmatprep.subr.bf16.mxu0 0
  %3557 = vmatpush1.bf16.msra.mxu0 0
  %3558 = vmatprep.subr.bf16.mxu0 0
  %3559 = vmatpush1.bf16.msra.mxu0 0
  %3560 = vmatprep.subr.bf16.mxu0 0
  %3561 = vmatpush1.bf16.msra.mxu0 0
  %3562 = vmatprep.subr.bf16.mxu0 0
  %3563 = vmatpush1.bf16.msra.mxu0 0
  %3564 = vmatprep.subr.bf16.mxu0 0
  %3565 = vmatpush1.bf16.msra.mxu0 0
  %3566 = vmatprep.subr.bf16.mxu0 0
  %3567 = vmatpush1.bf16.msra.mxu0 0
  %3568 = vmatprep.subr.bf16.mxu0 0
  %3569 = vmatpush1.bf16.msra.mxu0 0
  %3570 = vmatprep.subr.bf16.mxu0 0
  %3571 = vmatpush1.bf16.msra.mxu0 0
  %3572 = vmatprep.subr.bf16.mxu0 0
  %3573 = vmatpush1.bf16.msra.mxu0 0
  %3574 = vmatprep.subr.bf16.mxu0 0
  %3575 = vmatpush1.bf16.msra.mxu0 0
  %3576 = vmatprep.subr.bf16.mxu0 0
  %3577 = vmatpush1.bf16.msra.mxu0 0
  %3578 = vmatprep.mubr.bf16.mxu0 0
  %3579 = vmatmul.mubr.bf16.gmra.mrb[0].mxu0 %v3544
  %v3580 = vpop.f32.mrb[0].mxu0
  %v3581 = vadd.f32 0.0, %v3580
  %v3582 = vpop.f32.mrb[0].mxu0
  %v3583 = vpop.f32.mrb[0].mxu0
  %v3584 = vpop.f32.mrb[0].mxu0
  %3585 = vdwg.mxu0
  %v3587 = vrot.slane %v3581, 2
  %v3589 = vadd.f32 %v2745, %v3587
  %v3590 = vxor.u32 %v3589, 2147483648
  %v3591 = vmul.f32 %v3590, 1.442695
  %v3592 = vpow.pop %v3591
  %v3593 = vadd.f32 %v3592, 1.0
  %v3594 = vrcp.pop %v3593
  %v3595 = vmul.f32 1.0, %v3594
  %v3596 = vtanh.pop %v3589
  %v3598 = vrot.slane %v3536, 6
  %v3600 = vmul.f32 %v3595, %v3598
  %3602 = vrot.lane.b32.xlu0 %v3596, 96
  %v3603 = vpop.permute.xlu0 %3602
  %v3605 = vmul.f32 %v3595, %v3603
  %3607 = vrot.lane.b32.xlu0 %v3605, 16
  %v3608 = vpop.permute.xlu0 %3607
  %v3610 = vadd.f32 %v3600, %v3608
  %v3611 = vtanh.pop %v3610
  %3613 = vrot.lane.b32.xlu0 %v3611, 32
  %v3614 = vpop.permute.xlu0 %3613
  %v3616 = vmul.f32 %v3595, %v3614
  %v3617 = vmul.f32 %v1487, %v3616
  %v3619 = vrot.slane %v3526, 6
  %3620 = vrot.lane.b32.xlu0 %v3619, 80
  %v3621 = vpop.permute.xlu0 %3620
  %v3623 = vmul.f32 %v1494, %v3621
  %3625 = vrot.lane.b32.xlu0 %v3623, 48
  %v3626 = vpop.permute.xlu0 %3625
  %v3628 = vadd.f32 %v3617, %v3626
  %v3629 = vmul.f32 %v1487, %v3610
  %3630 = vrot.lane.b32.xlu0 %v3598, 112
  %v3631 = vpop.permute.xlu0 %3630
  %v3633 = vmul.f32 %v1494, %v3631
  %3635 = vrot.lane.b32.xlu0 %v3633, 16
  %v3636 = vpop.permute.xlu0 %3635
  %v3638 = vadd.f32 %v3629, %v3636
  %v3639 = vmul.f32 %v3628, %v1487
  %v3640 = vld [vmem:[%s55] sm:$0xf]
  %v3641 = vld [vmem:[%s55 + $0x4] sm:$0xf]
  %v3644 = vunpack.c.l.b16 %v3640
  %v3645 = vunpack.c.l.b16 %v3641
  %v3646 = vpack.c.b16 %v3645, %v3644
  %3648 = vmatprep.subr.bf16.mxu0 0
  %3649 = vmatpush1.bf16.msra.mxu0 %v3646
  %3650 = vmatprep.subr.bf16.mxu0 0
  %3651 = vmatpush1.bf16.msra.mxu0 0
  %3652 = vmatprep.subr.bf16.mxu0 0
  %3653 = vmatpush1.bf16.msra.mxu0 0
  %3654 = vmatprep.subr.bf16.mxu0 0
  %3655 = vmatpush1.bf16.msra.mxu0 0
  %3656 = vmatprep.subr.bf16.mxu0 0
  %3657 = vmatpush1.bf16.msra.mxu0 0
  %3658 = vmatprep.subr.bf16.mxu0 0
  %3659 = vmatpush1.bf16.msra.mxu0 0
  %3660 = vmatprep.subr.bf16.mxu0 0
  %3661 = vmatpush1.bf16.msra.mxu0 0
  %3662 = vmatprep.subr.bf16.mxu0 0
  %3663 = vmatpush1.bf16.msra.mxu0 0
  %3664 = vmatprep.subr.bf16.mxu0 0
  %3665 = vmatpush1.bf16.msra.mxu0 0
  %3666 = vmatprep.subr.bf16.mxu0 0
  %3667 = vmatpush1.bf16.msra.mxu0 0
  %3668 = vmatprep.subr.bf16.mxu0 0
  %3669 = vmatpush1.bf16.msra.mxu0 0
  %3670 = vmatprep.subr.bf16.mxu0 0
  %3671 = vmatpush1.bf16.msra.mxu0 0
  %3672 = vmatprep.subr.bf16.mxu0 0
  %3673 = vmatpush1.bf16.msra.mxu0 0
  %3674 = vmatprep.subr.bf16.mxu0 0
  %3675 = vmatpush1.bf16.msra.mxu0 0
  %3676 = vmatprep.subr.bf16.mxu0 0
  %3677 = vmatpush1.bf16.msra.mxu0 0
  %3678 = vmatprep.subr.bf16.mxu0 0
  %3679 = vmatpush1.bf16.msra.mxu0 0
  %3680 = vmatprep.mubr.bf16.mxu0 0
  %3681 = vmatmul.mubr.bf16.gmra.mrb[0].mxu0 %v1019
  %v3682 = vpop.f32.mrb[0].mxu0
  %v3683 = vadd.f32 0.0, %v3682
  %v3684 = vpop.f32.mrb[0].mxu0
  %v3685 = vpop.f32.mrb[0].mxu0
  %v3686 = vpop.f32.mrb[0].mxu0
  %3687 = vdwg.mxu0
  %v3689 = vrot.slane %v3683, 2
  %v3691 = vadd.f32 %v2852, %v3689
  %v3692 = vxor.u32 %v3691, 2147483648
  %v3693 = vmul.f32 %v3692, 1.442695
  %v3694 = vpow.pop %v3693
  %v3695 = vadd.f32 %v3694, 1.0
  %v3696 = vrcp.pop %v3695
  %v3697 = vmul.f32 1.0, %v3696
  %v3698 = vtanh.pop %v3691
  %v3699 = vmul.f32 %v3697, 0.0
  %3701 = vrot.lane.b32.xlu0 %v3698, 96
  %v3702 = vpop.permute.xlu0 %3701
  %v3704 = vmul.f32 %v3697, %v3702
  %3706 = vrot.lane.b32.xlu0 %v3704, 16
  %v3707 = vpop.permute.xlu0 %3706
  %v3709 = vadd.f32 %v3699, %v3707
  %v3710 = vtanh.pop %v3709
  %3712 = vrot.lane.b32.xlu0 %v3710, 32
  %v3713 = vpop.permute.xlu0 %3712
  %v3715 = vmul.f32 %v3697, %v3713
  %v3716 = vmul.f32 %v1487, %v3715
  %v3717 = vadd.f32 %v3716, %v1900
  %v3718 = vmul.f32 %v1487, %v3709
  %v3719 = vadd.f32 %v3718, %v1900
  %v3720 = vmul.f32 %v3717, %v1487
  %v3721 = vpack.c.bf16 %v3717, %v3717
  %v3723 = vrot.slane %v3721, 3
  %3724 = vrot.lane.b32.xlu0 %v3723, 80
  %v3725 = vpop.permute.xlu0 %3724
  %v3727 = vsel %vm1017, %v3725, 0
  %3729 = vmatprep.subr.bf16.mxu0 0
  %3730 = vmatpush1.bf16.msra.mxu0 %v3646
  %3731 = vmatprep.subr.bf16.mxu0 0
  %3732 = vmatpush1.bf16.msra.mxu0 0
  %3733 = vmatprep.subr.bf16.mxu0 0
  %3734 = vmatpush1.bf16.msra.mxu0 0
  %3735 = vmatprep.subr.bf16.mxu0 0
  %3736 = vmatpush1.bf16.msra.mxu0 0
  %3737 = vmatprep.subr.bf16.mxu0 0
  %3738 = vmatpush1.bf16.msra.mxu0 0
  %3739 = vmatprep.subr.bf16.mxu0 0
  %3740 = vmatpush1.bf16.msra.mxu0 0
  %3741 = vmatprep.subr.bf16.mxu0 0
  %3742 = vmatpush1.bf16.msra.mxu0 0
  %3743 = vmatprep.subr.bf16.mxu0 0
  %3744 = vmatpush1.bf16.msra.mxu0 0
  %3745 = vmatprep.subr.bf16.mxu0 0
  %3746 = vmatpush1.bf16.msra.mxu0 0
  %3747 = vmatprep.subr.bf16.mxu0 0
  %3748 = vmatpush1.bf16.msra.mxu0 0
  %3749 = vmatprep.subr.bf16.mxu0 0
  %3750 = vmatpush1.bf16.msra.mxu0 0
  %3751 = vmatprep.subr.bf16.mxu0 0
  %3752 = vmatpush1.bf16.msra.mxu0 0
  %3753 = vmatprep.subr.bf16.mxu0 0
  %3754 = vmatpush1.bf16.msra.mxu0 0
  %3755 = vmatprep.subr.bf16.mxu0 0
  %3756 = vmatpush1.bf16.msra.mxu0 0
  %3757 = vmatprep.subr.bf16.mxu0 0
  %3758 = vmatpush1.bf16.msra.mxu0 0
  %3759 = vmatprep.subr.bf16.mxu0 0
  %3760 = vmatpush1.bf16.msra.mxu0 0
  %3761 = vmatprep.mubr.bf16.mxu0 0
  %3762 = vmatmul.mubr.bf16.gmra.mrb[0].mxu0 %v3727
  %v3763 = vpop.f32.mrb[0].mxu0
  %v3764 = vadd.f32 0.0, %v3763
  %v3765 = vpop.f32.mrb[0].mxu0
  %v3766 = vpop.f32.mrb[0].mxu0
  %v3767 = vpop.f32.mrb[0].mxu0
  %3768 = vdwg.mxu0
  %v3770 = vrot.slane %v3764, 4
  %v3772 = vadd.f32 %v2852, %v3770
  %v3773 = vxor.u32 %v3772, 2147483648
  %v3774 = vmul.f32 %v3773, 1.442695
  %v3775 = vpow.pop %v3774
  %v3776 = vadd.f32 %v3775, 1.0
  %v3777 = vrcp.pop %v3776
  %v3778 = vmul.f32 1.0, %v3777
  %v3779 = vtanh.pop %v3772
  %v3781 = vrot.slane %v3719, 2
  %v3783 = vmul.f32 %v3778, %v3781
  %3785 = vrot.lane.b32.xlu0 %v3779, 96
  %v3786 = vpop.permute.xlu0 %3785
  %v3788 = vmul.f32 %v3778, %v3786
  %3790 = vrot.lane.b32.xlu0 %v3788, 16
  %v3791 = vpop.permute.xlu0 %3790
  %v3793 = vadd.f32 %v3783, %v3791
  %v3794 = vtanh.pop %v3793
  %3796 = vrot.lane.b32.xlu0 %v3794, 32
  %v3797 = vpop.permute.xlu0 %3796
  %v3799 = vmul.f32 %v3778, %v3797
  %v3800 = vmul.f32 %v1487, %v3799
  %v3802 = vrot.slane %v3717, 2
  %3803 = vrot.lane.b32.xlu0 %v3802, 80
  %v3804 = vpop.permute.xlu0 %3803
  %v3806 = vmul.f32 %v1494, %v3804
  %3808 = vrot.lane.b32.xlu0 %v3806, 48
  %v3809 = vpop.permute.xlu0 %3808
  %v3811 = vadd.f32 %v3800, %v3809
  %v3812 = vmul.f32 %v1487, %v3793
  %3813 = vrot.lane.b32.xlu0 %v3781, 112
  %v3814 = vpop.permute.xlu0 %3813
  %v3816 = vmul.f32 %v1494, %v3814
  %3818 = vrot.lane.b32.xlu0 %v3816, 16
  %v3819 = vpop.permute.xlu0 %3818
  %v3821 = vadd.f32 %v3812, %v3819
  %v3822 = vmul.f32 %v3811, %v1487
  %v3823 = vpack.c.bf16 %v3811, %v3811
  %v3825 = vrot.slane %v3823, 2
  %3826 = vrot.lane.b32.xlu0 %v3825, 80
  %v3827 = vpop.permute.xlu0 %3826
  %v3829 = vsel %vm1017, %v3827, 0
  %3831 = vmatprep.subr.bf16.mxu0 0
  %3832 = vmatpush1.bf16.msra.mxu0 %v3646
  %3833 = vmatprep.subr.bf16.mxu0 0
  %3834 = vmatpush1.bf16.msra.mxu0 0
  %3835 = vmatprep.subr.bf16.mxu0 0
  %3836 = vmatpush1.bf16.msra.mxu0 0
  %3837 = vmatprep.subr.bf16.mxu0 0
  %3838 = vmatpush1.bf16.msra.mxu0 0
  %3839 = vmatprep.subr.bf16.mxu0 0
  %3840 = vmatpush1.bf16.msra.mxu0 0
  %3841 = vmatprep.subr.bf16.mxu0 0
  %3842 = vmatpush1.bf16.msra.mxu0 0
  %3843 = vmatprep.subr.bf16.mxu0 0
  %3844 = vmatpush1.bf16.msra.mxu0 0
  %3845 = vmatprep.subr.bf16.mxu0 0
  %3846 = vmatpush1.bf16.msra.mxu0 0
  %3847 = vmatprep.subr.bf16.mxu0 0
  %3848 = vmatpush1.bf16.msra.mxu0 0
  %3849 = vmatprep.subr.bf16.mxu0 0
  %3850 = vmatpush1.bf16.msra.mxu0 0
  %3851 = vmatprep.subr.bf16.mxu0 0
  %3852 = vmatpush1.bf16.msra.mxu0 0
  %3853 = vmatprep.subr.bf16.mxu0 0
  %3854 = vmatpush1.bf16.msra.mxu0 0
  %3855 = vmatprep.subr.bf16.mxu0 0
  %3856 = vmatpush1.bf16.msra.mxu0 0
  %3857 = vmatprep.subr.bf16.mxu0 0
  %3858 = vmatpush1.bf16.msra.mxu0 0
  %3859 = vmatprep.subr.bf16.mxu0 0
  %3860 = vmatpush1.bf16.msra.mxu0 0
  %3861 = vmatprep.subr.bf16.mxu0 0
  %3862 = vmatpush1.bf16.msra.mxu0 0
  %3863 = vmatprep.mubr.bf16.mxu0 0
  %3864 = vmatmul.mubr.bf16.gmra.mrb[0].mxu0 %v3829
  %v3865 = vpop.f32.mrb[0].mxu0
  %v3866 = vadd.f32 0.0, %v3865
  %v3867 = vpop.f32.mrb[0].mxu0
  %v3868 = vpop.f32.mrb[0].mxu0
  %v3869 = vpop.f32.mrb[0].mxu0
  %3870 = vdwg.mxu0
  %v3872 = vrot.slane %v3866, 6
  %v3874 = vadd.f32 %v2852, %v3872
  %v3875 = vxor.u32 %v3874, 2147483648
  %v3876 = vmul.f32 %v3875, 1.442695
  %v3877 = vpow.pop %v3876
  %v3878 = vadd.f32 %v3877, 1.0
  %v3879 = vrcp.pop %v3878
  %v3880 = vmul.f32 1.0, %v3879
  %v3881 = vtanh.pop %v3874
  %v3883 = vrot.slane %v3821, 2
  %v3885 = vmul.f32 %v3880, %v3883
  %3887 = vrot.lane.b32.xlu0 %v3881, 96
  %v3888 = vpop.permute.xlu0 %3887
  %v3890 = vmul.f32 %v3880, %v3888
  %3892 = vrot.lane.b32.xlu0 %v3890, 16
  %v3893 = vpop.permute.xlu0 %3892
  %v3895 = vadd.f32 %v3885, %v3893
  %v3896 = vtanh.pop %v3895
  %3898 = vrot.lane.b32.xlu0 %v3896, 32
  %v3899 = vpop.permute.xlu0 %3898
  %v3901 = vmul.f32 %v3880, %v3899
  %v3902 = vmul.f32 %v1487, %v3901
  %v3904 = vrot.slane %v3811, 2
  %3905 = vrot.lane.b32.xlu0 %v3904, 80
  %v3906 = vpop.permute.xlu0 %3905
  %v3908 = vmul.f32 %v1494, %v3906
  %3910 = vrot.lane.b32.xlu0 %v3908, 48
  %v3911 = vpop.permute.xlu0 %3910
  %v3913 = vadd.f32 %v3902, %v3911
  %v3914 = vmul.f32 %v1487, %v3895
  %3915 = vrot.lane.b32.xlu0 %v3883, 112
  %v3916 = vpop.permute.xlu0 %3915
  %v3918 = vmul.f32 %v1494, %v3916
  %3920 = vrot.lane.b32.xlu0 %v3918, 16
  %v3921 = vpop.permute.xlu0 %3920
  %v3923 = vadd.f32 %v3914, %v3921
  %v3924 = vmul.f32 %v3913, %v1487
  %v3925 = vpack.c.bf16 %v3913, %v3913
  %v3927 = vrot.slane %v3925, 1
  %3928 = vrot.lane.b32.xlu0 %v3927, 80
  %v3929 = vpop.permute.xlu0 %3928
  %v3931 = vsel %vm1017, %v3929, 0
  %3933 = vmatprep.subr.bf16.mxu0 0
  %3934 = vmatpush1.bf16.msra.mxu0 %v3646
  %3935 = vmatprep.subr.bf16.mxu0 0
  %3936 = vmatpush1.bf16.msra.mxu0 0
  %3937 = vmatprep.subr.bf16.mxu0 0
  %3938 = vmatpush1.bf16.msra.mxu0 0
  %3939 = vmatprep.subr.bf16.mxu0 0
  %3940 = vmatpush1.bf16.msra.mxu0 0
  %3941 = vmatprep.subr.bf16.mxu0 0
  %3942 = vmatpush1.bf16.msra.mxu0 0
  %3943 = vmatprep.subr.bf16.mxu0 0
  %3944 = vmatpush1.bf16.msra.mxu0 0
  %3945 = vmatprep.subr.bf16.mxu0 0
  %3946 = vmatpush1.bf16.msra.mxu0 0
  %3947 = vmatprep.subr.bf16.mxu0 0
  %3948 = vmatpush1.bf16.msra.mxu0 0
  %3949 = vmatprep.subr.bf16.mxu0 0
  %3950 = vmatpush1.bf16.msra.mxu0 0
  %3951 = vmatprep.subr.bf16.mxu0 0
  %3952 = vmatpush1.bf16.msra.mxu0 0
  %3953 = vmatprep.subr.bf16.mxu0 0
  %3954 = vmatpush1.bf16.msra.mxu0 0
  %3955 = vmatprep.subr.bf16.mxu0 0
  %3956 = vmatpush1.bf16.msra.mxu0 0
  %3957 = vmatprep.subr.bf16.mxu0 0
  %3958 = vmatpush1.bf16.msra.mxu0 0
  %3959 = vmatprep.subr.bf16.mxu0 0
  %3960 = vmatpush1.bf16.msra.mxu0 0
  %3961 = vmatprep.subr.bf16.mxu0 0
  %3962 = vmatpush1.bf16.msra.mxu0 0
  %3963 = vmatprep.subr.bf16.mxu0 0
  %3964 = vmatpush1.bf16.msra.mxu0 0
  %3965 = vmatprep.mubr.bf16.mxu0 0
  %3966 = vmatmul.mubr.bf16.gmra.mrb[0].mxu0 %v3931
  %v3967 = vpop.f32.mrb[0].mxu0
  %v3968 = vadd.f32 0.0, %v3967
  %v3969 = vpop.f32.mrb[0].mxu0
  %v3970 = vpop.f32.mrb[0].mxu0
  %v3971 = vpop.f32.mrb[0].mxu0
  %3972 = vdwg.mxu0
  %v3973 = vadd.f32 %v2852, %v3968
  %v3974 = vxor.u32 %v3973, 2147483648
  %v3975 = vmul.f32 %v3974, 1.442695
  %v3976 = vpow.pop %v3975
  %v3977 = vadd.f32 %v3976, 1.0
  %v3978 = vrcp.pop %v3977
  %v3979 = vmul.f32 1.0, %v3978
  %v3980 = vtanh.pop %v3973
  %v3982 = vrot.slane %v3923, 2
  %v3984 = vmul.f32 %v3979, %v3982
  %3986 = vrot.lane.b32.xlu0 %v3980, 96
  %v3987 = vpop.permute.xlu0 %3986
  %v3989 = vmul.f32 %v3979, %v3987
  %3991 = vrot.lane.b32.xlu0 %v3989, 16
  %v3992 = vpop.permute.xlu0 %3991
  %v3994 = vadd.f32 %v3984, %v3992
  %v3995 = vtanh.pop %v3994
  %3997 = vrot.lane.b32.xlu0 %v3995, 32
  %v3998 = vpop.permute.xlu0 %3997
  %v4000 = vmul.f32 %v3979, %v3998
  %v4001 = vmul.f32 %v1487, %v4000
  %v4003 = vrot.slane %v3913, 2
  %4004 = vrot.lane.b32.xlu0 %v4003, 80
  %v4005 = vpop.permute.xlu0 %4004
  %v4007 = vmul.f32 %v1494, %v4005
  %4009 = vrot.lane.b32.xlu0 %v4007, 48
  %v4010 = vpop.permute.xlu0 %4009
  %v4012 = vadd.f32 %v4001, %v4010
  %v4013 = vmul.f32 %v1487, %v3994
  %4014 = vrot.lane.b32.xlu0 %v3982, 112
  %v4015 = vpop.permute.xlu0 %4014
  %v4017 = vmul.f32 %v1494, %v4015
  %4019 = vrot.lane.b32.xlu0 %v4017, 16
  %v4020 = vpop.permute.xlu0 %4019
  %v4022 = vadd.f32 %v4013, %v4020
  %v4023 = vmul.f32 %v4012, %v1487
  %v4024 = vpack.c.bf16 %v4012, %v4012
  %4026 = vrot.lane.b32.xlu0 %v4024, 80
  %v4027 = vpop.permute.xlu0 %4026
  %v4029 = vsel %vm1017, %v4027, 0
  %4031 = vmatprep.subr.bf16.mxu0 0
  %4032 = vmatpush1.bf16.msra.mxu0 %v3646
  %4033 = vmatprep.subr.bf16.mxu0 0
  %4034 = vmatpush1.bf16.msra.mxu0 0
  %4035 = vmatprep.subr.bf16.mxu0 0
  %4036 = vmatpush1.bf16.msra.mxu0 0
  %4037 = vmatprep.subr.bf16.mxu0 0
  %4038 = vmatpush1.bf16.msra.mxu0 0
  %4039 = vmatprep.subr.bf16.mxu0 0
  %4040 = vmatpush1.bf16.msra.mxu0 0
  %4041 = vmatprep.subr.bf16.mxu0 0
  %4042 = vmatpush1.bf16.msra.mxu0 0
  %4043 = vmatprep.subr.bf16.mxu0 0
  %4044 = vmatpush1.bf16.msra.mxu0 0
  %4045 = vmatprep.subr.bf16.mxu0 0
  %4046 = vmatpush1.bf16.msra.mxu0 0
  %4047 = vmatprep.subr.bf16.mxu0 0
  %4048 = vmatpush1.bf16.msra.mxu0 0
  %4049 = vmatprep.subr.bf16.mxu0 0
  %4050 = vmatpush1.bf16.msra.mxu0 0
  %4051 = vmatprep.subr.bf16.mxu0 0
  %4052 = vmatpush1.bf16.msra.mxu0 0
  %4053 = vmatprep.subr.bf16.mxu0 0
  %4054 = vmatpush1.bf16.msra.mxu0 0
  %4055 = vmatprep.subr.bf16.mxu0 0
  %4056 = vmatpush1.bf16.msra.mxu0 0
  %4057 = vmatprep.subr.bf16.mxu0 0
  %4058 = vmatpush1.bf16.msra.mxu0 0
  %4059 = vmatprep.subr.bf16.mxu0 0
  %4060 = vmatpush1.bf16.msra.mxu0 0
  %4061 = vmatprep.subr.bf16.mxu0 0
  %4062 = vmatpush1.bf16.msra.mxu0 0
  %4063 = vmatprep.mubr.bf16.mxu0 0
  %4064 = vmatmul.mubr.bf16.gmra.mrb[0].mxu0 %v4029
  %v4065 = vpop.f32.mrb[0].mxu0
  %v4066 = vadd.f32 0.0, %v4065
  %v4067 = vpop.f32.mrb[0].mxu0
  %v4068 = vpop.f32.mrb[0].mxu0
  %v4069 = vpop.f32.mrb[0].mxu0
  %4070 = vdwg.mxu0
  %v4072 = vrot.slane %v4066, 2
  %v4074 = vadd.f32 %v2851, %v4072
  %v4075 = vxor.u32 %v4074, 2147483648
  %v4076 = vmul.f32 %v4075, 1.442695
  %v4077 = vpow.pop %v4076
  %v4078 = vadd.f32 %v4077, 1.0
  %v4079 = vrcp.pop %v4078
  %v4080 = vmul.f32 1.0, %v4079
  %v4081 = vtanh.pop %v4074
  %v4083 = vrot.slane %v4022, 2
  %v4085 = vmul.f32 %v4080, %v4083
  %4087 = vrot.lane.b32.xlu0 %v4081, 96
  %v4088 = vpop.permute.xlu0 %4087
  %v4090 = vmul.f32 %v4080, %v4088
  %4092 = vrot.lane.b32.xlu0 %v4090, 16
  %v4093 = vpop.permute.xlu0 %4092
  %v4095 = vadd.f32 %v4085, %v4093
  %v4096 = vtanh.pop %v4095
  %4098 = vrot.lane.b32.xlu0 %v4096, 32
  %v4099 = vpop.permute.xlu0 %4098
  %v4101 = vmul.f32 %v4080, %v4099
  %v4102 = vmul.f32 %v1089, %v4101
  %v4104 = vrot.slane %v4012, 2
  %4105 = vrot.lane.b32.xlu0 %v4104, 80
  %v4106 = vpop.permute.xlu0 %4105
  %v4108 = vmul.f32 %v1096, %v4106
  %4110 = vrot.lane.b32.xlu0 %v4108, 48
  %v4111 = vpop.permute.xlu0 %4110
  %v4113 = vadd.f32 %v4102, %v4111
  %v4114 = vmul.f32 %v1089, %v4095
  %4115 = vrot.lane.b32.xlu0 %v4083, 112
  %v4116 = vpop.permute.xlu0 %4115
  %v4118 = vmul.f32 %v1096, %v4116
  %4120 = vrot.lane.b32.xlu0 %v4118, 16
  %v4121 = vpop.permute.xlu0 %4120
  %v4123 = vadd.f32 %v4114, %v4121
  %v4124 = vmul.f32 %v4113, %v1089
  %v4125 = vpack.c.bf16 %v4113, %v4113
  %v4127 = vrot.slane %v4125, 3
  %4128 = vrot.lane.b32.xlu0 %v4127, 80
  %v4129 = vpop.permute.xlu0 %4128
  %v4131 = vsel %vm1017, %v4129, 0
  %4133 = vmatprep.subr.bf16.mxu0 0
  %4134 = vmatpush1.bf16.msra.mxu0 %v3646
  %4135 = vmatprep.subr.bf16.mxu0 0
  %4136 = vmatpush1.bf16.msra.mxu0 0
  %4137 = vmatprep.subr.bf16.mxu0 0
  %4138 = vmatpush1.bf16.msra.mxu0 0
  %4139 = vmatprep.subr.bf16.mxu0 0
  %4140 = vmatpush1.bf16.msra.mxu0 0
  %4141 = vmatprep.subr.bf16.mxu0 0
  %4142 = vmatpush1.bf16.msra.mxu0 0
  %4143 = vmatprep.subr.bf16.mxu0 0
  %4144 = vmatpush1.bf16.msra.mxu0 0
  %4145 = vmatprep.subr.bf16.mxu0 0
  %4146 = vmatpush1.bf16.msra.mxu0 0
  %4147 = vmatprep.subr.bf16.mxu0 0
  %4148 = vmatpush1.bf16.msra.mxu0 0
  %4149 = vmatprep.subr.bf16.mxu0 0
  %4150 = vmatpush1.bf16.msra.mxu0 0
  %4151 = vmatprep.subr.bf16.mxu0 0
  %4152 = vmatpush1.bf16.msra.mxu0 0
  %4153 = vmatprep.subr.bf16.mxu0 0
  %4154 = vmatpush1.bf16.msra.mxu0 0
  %4155 = vmatprep.subr.bf16.mxu0 0
  %4156 = vmatpush1.bf16.msra.mxu0 0
  %4157 = vmatprep.subr.bf16.mxu0 0
  %4158 = vmatpush1.bf16.msra.mxu0 0
  %4159 = vmatprep.subr.bf16.mxu0 0
  %4160 = vmatpush1.bf16.msra.mxu0 0
  %4161 = vmatprep.subr.bf16.mxu0 0
  %4162 = vmatpush1.bf16.msra.mxu0 0
  %4163 = vmatprep.subr.bf16.mxu0 0
  %4164 = vmatpush1.bf16.msra.mxu0 0
  %4165 = vmatprep.mubr.bf16.mxu0 0
  %4166 = vmatmul.mubr.bf16.gmra.mrb[0].mxu0 %v4131
  %v4167 = vpop.f32.mrb[0].mxu0
  %v4168 = vadd.f32 0.0, %v4167
  %v4169 = vpop.f32.mrb[0].mxu0
  %v4170 = vpop.f32.mrb[0].mxu0
  %v4171 = vpop.f32.mrb[0].mxu0
  %4172 = vdwg.mxu0
  %v4174 = vrot.slane %v4168, 4
  %v4176 = vadd.f32 %v2851, %v4174
  %v4177 = vxor.u32 %v4176, 2147483648
  %v4178 = vmul.f32 %v4177, 1.442695
  %v4179 = vpow.pop %v4178
  %v4180 = vadd.f32 %v4179, 1.0
  %v4181 = vrcp.pop %v4180
  %v4182 = vmul.f32 1.0, %v4181
  %v4183 = vtanh.pop %v4176
  %v4185 = vrot.slane %v4123, 2
  %v4187 = vmul.f32 %v4182, %v4185
  %4189 = vrot.lane.b32.xlu0 %v4183, 96
  %v4190 = vpop.permute.xlu0 %4189
  %v4192 = vmul.f32 %v4182, %v4190
  %4194 = vrot.lane.b32.xlu0 %v4192, 16
  %v4195 = vpop.permute.xlu0 %4194
  %v4197 = vadd.f32 %v4187, %v4195
  %v4198 = vtanh.pop %v4197
  %4200 = vrot.lane.b32.xlu0 %v4198, 32
  %v4201 = vpop.permute.xlu0 %4200
  %v4203 = vmul.f32 %v4182, %v4201
  %v4204 = vmul.f32 %v1089, %v4203
  %v4206 = vrot.slane %v4113, 2
  %4207 = vrot.lane.b32.xlu0 %v4206, 80
  %v4208 = vpop.permute.xlu0 %4207
  %v4210 = vmul.f32 %v1096, %v4208
  %4212 = vrot.lane.b32.xlu0 %v4210, 48
  %v4213 = vpop.permute.xlu0 %4212
  %v4215 = vadd.f32 %v4204, %v4213
  %v4216 = vmul.f32 %v1089, %v4197
  %4217 = vrot.lane.b32.xlu0 %v4185, 112
  %v4218 = vpop.permute.xlu0 %4217
  %v4220 = vmul.f32 %v1096, %v4218
  %4222 = vrot.lane.b32.xlu0 %v4220, 16
  %v4223 = vpop.permute.xlu0 %4222
  %v4225 = vadd.f32 %v4216, %v4223
  %v4226 = vmul.f32 %v4215, %v1089
  %v4227 = vpack.c.bf16 %v4215, %v4215
  %v4229 = vrot.slane %v4227, 2
  %4230 = vrot.lane.b32.xlu0 %v4229, 80
  %v4231 = vpop.permute.xlu0 %4230
  %v4233 = vsel %vm1017, %v4231, 0
  %4235 = vmatprep.subr.bf16.mxu0 0
  %4236 = vmatpush1.bf16.msra.mxu0 %v3646
  %4237 = vmatprep.subr.bf16.mxu0 0
  %4238 = vmatpush1.bf16.msra.mxu0 0
  %4239 = vmatprep.subr.bf16.mxu0 0
  %4240 = vmatpush1.bf16.msra.mxu0 0
  %4241 = vmatprep.subr.bf16.mxu0 0
  %4242 = vmatpush1.bf16.msra.mxu0 0
  %4243 = vmatprep.subr.bf16.mxu0 0
  %4244 = vmatpush1.bf16.msra.mxu0 0
  %4245 = vmatprep.subr.bf16.mxu0 0
  %4246 = vmatpush1.bf16.msra.mxu0 0
  %4247 = vmatprep.subr.bf16.mxu0 0
  %4248 = vmatpush1.bf16.msra.mxu0 0
  %4249 = vmatprep.subr.bf16.mxu0 0
  %4250 = vmatpush1.bf16.msra.mxu0 0
  %4251 = vmatprep.subr.bf16.mxu0 0
  %4252 = vmatpush1.bf16.msra.mxu0 0
  %4253 = vmatprep.subr.bf16.mxu0 0
  %4254 = vmatpush1.bf16.msra.mxu0 0
  %4255 = vmatprep.subr.bf16.mxu0 0
  %4256 = vmatpush1.bf16.msra.mxu0 0
  %4257 = vmatprep.subr.bf16.mxu0 0
  %4258 = vmatpush1.bf16.msra.mxu0 0
  %4259 = vmatprep.subr.bf16.mxu0 0
  %4260 = vmatpush1.bf16.msra.mxu0 0
  %4261 = vmatprep.subr.bf16.mxu0 0
  %4262 = vmatpush1.bf16.msra.mxu0 0
  %4263 = vmatprep.subr.bf16.mxu0 0
  %4264 = vmatpush1.bf16.msra.mxu0 0
  %4265 = vmatprep.subr.bf16.mxu0 0
  %4266 = vmatpush1.bf16.msra.mxu0 0
  %4267 = vmatprep.mubr.bf16.mxu0 0
  %4268 = vmatmul.mubr.bf16.gmra.mrb[0].mxu0 %v4233
  %v4269 = vpop.f32.mrb[0].mxu0
  %v4270 = vadd.f32 0.0, %v4269
  %v4271 = vpop.f32.mrb[0].mxu0
  %v4272 = vpop.f32.mrb[0].mxu0
  %v4273 = vpop.f32.mrb[0].mxu0
  %4274 = vdwg.mxu0
  %v4276 = vrot.slane %v4270, 6
  %v4278 = vadd.f32 %v2851, %v4276
  %v4279 = vxor.u32 %v4278, 2147483648
  %v4280 = vmul.f32 %v4279, 1.442695
  %v4281 = vpow.pop %v4280
  %v4282 = vadd.f32 %v4281, 1.0
  %v4283 = vrcp.pop %v4282
  %v4284 = vmul.f32 1.0, %v4283
  %v4285 = vtanh.pop %v4278
  %v4287 = vrot.slane %v4225, 2
  %v4289 = vmul.f32 %v4284, %v4287
  %4291 = vrot.lane.b32.xlu0 %v4285, 96
  %v4292 = vpop.permute.xlu0 %4291
  %v4294 = vmul.f32 %v4284, %v4292
  %4296 = vrot.lane.b32.xlu0 %v4294, 16
  %v4297 = vpop.permute.xlu0 %4296
  %v4299 = vadd.f32 %v4289, %v4297
  %v4300 = vtanh.pop %v4299
  %4302 = vrot.lane.b32.xlu0 %v4300, 32
  %v4303 = vpop.permute.xlu0 %4302
  %v4305 = vmul.f32 %v4284, %v4303
  %v4306 = vmul.f32 %v1089, %v4305
  %v4308 = vrot.slane %v4215, 2
  %4309 = vrot.lane.b32.xlu0 %v4308, 80
  %v4310 = vpop.permute.xlu0 %4309
  %v4312 = vmul.f32 %v1096, %v4310
  %4314 = vrot.lane.b32.xlu0 %v4312, 48
  %v4315 = vpop.permute.xlu0 %4314
  %v4317 = vadd.f32 %v4306, %v4315
  %v4318 = vmul.f32 %v1089, %v4299
  %4319 = vrot.lane.b32.xlu0 %v4287, 112
  %v4320 = vpop.permute.xlu0 %4319
  %v4322 = vmul.f32 %v1096, %v4320
  %4324 = vrot.lane.b32.xlu0 %v4322, 16
  %v4325 = vpop.permute.xlu0 %4324
  %v4327 = vadd.f32 %v4318, %v4325
  %v4328 = vmul.f32 %v4317, %v1089
  %v4329 = vpack.c.bf16 %v4317, %v4317
  %v4331 = vrot.slane %v4329, 1
  %4332 = vrot.lane.b32.xlu0 %v4331, 80
  %v4333 = vpop.permute.xlu0 %4332
  %v4335 = vsel %vm1017, %v4333, 0
  %4337 = vmatprep.subr.bf16.mxu0 0
  %4338 = vmatpush1.bf16.msra.mxu0 %v3646
  %4339 = vmatprep.subr.bf16.mxu0 0
  %4340 = vmatpush1.bf16.msra.mxu0 0
  %4341 = vmatprep.subr.bf16.mxu0 0
  %4342 = vmatpush1.bf16.msra.mxu0 0
  %4343 = vmatprep.subr.bf16.mxu0 0
  %4344 = vmatpush1.bf16.msra.mxu0 0
  %4345 = vmatprep.subr.bf16.mxu0 0
  %4346 = vmatpush1.bf16.msra.mxu0 0
  %4347 = vmatprep.subr.bf16.mxu0 0
  %4348 = vmatpush1.bf16.msra.mxu0 0
  %4349 = vmatprep.subr.bf16.mxu0 0
  %4350 = vmatpush1.bf16.msra.mxu0 0
  %4351 = vmatprep.subr.bf16.mxu0 0
  %4352 = vmatpush1.bf16.msra.mxu0 0
  %4353 = vmatprep.subr.bf16.mxu0 0
  %4354 = vmatpush1.bf16.msra.mxu0 0
  %4355 = vmatprep.subr.bf16.mxu0 0
  %4356 = vmatpush1.bf16.msra.mxu0 0
  %4357 = vmatprep.subr.bf16.mxu0 0
  %4358 = vmatpush1.bf16.msra.mxu0 0
  %4359 = vmatprep.subr.bf16.mxu0 0
  %4360 = vmatpush1.bf16.msra.mxu0 0
  %4361 = vmatprep.subr.bf16.mxu0 0
  %4362 = vmatpush1.bf16.msra.mxu0 0
  %4363 = vmatprep.subr.bf16.mxu0 0
  %4364 = vmatpush1.bf16.msra.mxu0 0
  %4365 = vmatprep.subr.bf16.mxu0 0
  %4366 = vmatpush1.bf16.msra.mxu0 0
  %4367 = vmatprep.subr.bf16.mxu0 0
  %4368 = vmatpush1.bf16.msra.mxu0 0
  %4369 = vmatprep.mubr.bf16.mxu0 0
  %4370 = vmatmul.mubr.bf16.gmra.mrb[0].mxu0 %v4335
  %v4371 = vpop.f32.mrb[0].mxu0
  %v4372 = vadd.f32 0.0, %v4371
  %v4373 = vpop.f32.mrb[0].mxu0
  %v4374 = vpop.f32.mrb[0].mxu0
  %v4375 = vpop.f32.mrb[0].mxu0
  %4376 = vdwg.mxu0
  %v4377 = vadd.f32 %v2851, %v4372
  %v4378 = vxor.u32 %v4377, 2147483648
  %v4379 = vmul.f32 %v4378, 1.442695
  %v4380 = vpow.pop %v4379
  %v4381 = vadd.f32 %v4380, 1.0
  %v4382 = vrcp.pop %v4381
  %v4383 = vmul.f32 1.0, %v4382
  %v4384 = vtanh.pop %v4377
  %v4386 = vrot.slane %v4327, 2
  %v4388 = vmul.f32 %v4383, %v4386
  %4390 = vrot.lane.b32.xlu0 %v4384, 96
  %v4391 = vpop.permute.xlu0 %4390
  %v4393 = vmul.f32 %v4383, %v4391
  %4395 = vrot.lane.b32.xlu0 %v4393, 16
  %v4396 = vpop.permute.xlu0 %4395
  %v4398 = vadd.f32 %v4388, %v4396
  %v4399 = vtanh.pop %v4398
  %4401 = vrot.lane.b32.xlu0 %v4399, 32
  %v4402 = vpop.permute.xlu0 %4401
  %v4404 = vmul.f32 %v4383, %v4402
  %v4405 = vmul.f32 %v1089, %v4404
  %v4407 = vrot.slane %v4317, 2
  %4408 = vrot.lane.b32.xlu0 %v4407, 80
  %v4409 = vpop.permute.xlu0 %4408
  %v4411 = vmul.f32 %v1096, %v4409
  %4413 = vrot.lane.b32.xlu0 %v4411, 48
  %v4414 = vpop.permute.xlu0 %4413
  %v4416 = vadd.f32 %v4405, %v4414
  %v4417 = vmul.f32 %v1089, %v4398
  %4418 = vrot.lane.b32.xlu0 %v4386, 112
  %v4419 = vpop.permute.xlu0 %4418
  %v4421 = vmul.f32 %v1096, %v4419
  %4423 = vrot.lane.b32.xlu0 %v4421, 16
  %v4424 = vpop.permute.xlu0 %4423
  %v4426 = vadd.f32 %v4417, %v4424
  %v4427 = vmul.f32 %v4416, %v1089
  %4429 = vrot.lane.b32.xlu0 %v2930, 80
  %v4430 = vpop.permute.xlu0 %4429
  %4433 = vrot.lane.b32.xlu0 %v4427, 96
  %v4434 = vpop.permute.xlu0 %4433
  %v4436 = vsel %vm1017, %v4430, %v4434
  %4438 = vrot.lane.b32.xlu0 %v3031, 80
  %v4439 = vpop.permute.xlu0 %4438
  %4442 = vrot.lane.b32.xlu0 %v4328, 96
  %v4443 = vpop.permute.xlu0 %4442
  %v4445 = vsel %vm1017, %v4439, %v4443
  %4447 = vrot.lane.b32.xlu0 %v3133, 80
  %v4448 = vpop.permute.xlu0 %4447
  %4451 = vrot.lane.b32.xlu0 %v4226, 96
  %v4452 = vpop.permute.xlu0 %4451
  %v4454 = vsel %vm1017, %v4448, %v4452
  %4456 = vrot.lane.b32.xlu0 %v3235, 80
  %v4457 = vpop.permute.xlu0 %4456
  %4460 = vrot.lane.b32.xlu0 %v4124, 96
  %v4461 = vpop.permute.xlu0 %4460
  %v4463 = vsel %vm1017, %v4457, %v4461
  %4465 = vrot.lane.b32.xlu0 %v3334, 80
  %v4466 = vpop.permute.xlu0 %4465
  %4469 = vrot.lane.b32.xlu0 %v4023, 96
  %v4470 = vpop.permute.xlu0 %4469
  %v4472 = vsel %vm1017, %v4466, %v4470
  %4474 = vrot.lane.b32.xlu0 %v3435, 80
  %v4475 = vpop.permute.xlu0 %4474
  %4478 = vrot.lane.b32.xlu0 %v3924, 96
  %v4479 = vpop.permute.xlu0 %4478
  %v4481 = vsel %vm1017, %v4475, %v4479
  %4483 = vrot.lane.b32.xlu0 %v3537, 80
  %v4484 = vpop.permute.xlu0 %4483
  %4487 = vrot.lane.b32.xlu0 %v3822, 96
  %v4488 = vpop.permute.xlu0 %4487
  %v4490 = vsel %vm1017, %v4484, %v4488
  %4492 = vrot.lane.b32.xlu0 %v3639, 80
  %v4493 = vpop.permute.xlu0 %4492
  %4496 = vrot.lane.b32.xlu0 %v3720, 96
  %v4497 = vpop.permute.xlu0 %4496
  %v4499 = vsel %vm1017, %v4493, %v4497
  %v4500 = vsel %vm743, %v4436, %v4445
  %v4501 = vsel %vm262, %v4500, %v4454
  %v4502 = vsel %vm2614, %v4501, %v4463
  %v4503 = vsel %vm743, %v4472, %v4481
  %v4504 = vsel %vm262, %v4503, %v4490
  %v4505 = vsel %vm2614, %v4504, %v4499
  %v4506 = vld [vmem:[%s59] sm:$0xf]
  %v4507 = vld [vmem:[%s59 + $0x4] sm:$0xf]
  %v4508 = vld [vmem:[%s59 + $0x8] sm:$0xf]
  %v4509 = vld [vmem:[%s59 + $0xc] sm:$0xf]
  %v4510 = vpack.c.bf16 %v4505, %v4502
  %v4511 = vld [vmem:[%s61] sm:$0x1]
  %v4513 = vlaneseq
  %v4514 = vshrl.u32 %v4513, 7
  %v4515 = vsub.s32 0, %v4514
  %v4516 = vrot.slane %v4511, %v4515
  %v4522 = vunpack.c.l.b16 %v4506
  %v4523 = vunpack.c.l.b16 %v4507
  %v4524 = vunpack.c.l.b16 %v4508
  %v4525 = vunpack.c.l.b16 %v4509
  %v4526 = vpack.c.b16 %v4523, %v4522
  %v4527 = vpack.c.b16 %v4525, %v4524
  %vm4530 = vcmask 261120
  %v4532 = vsel %vm4530, %v4510, 0
  %4534 = vmatprep.subr.bf16.mxu0 0
  %4535 = vmatpush1.bf16.msra.mxu0 %v4526
  %4536 = vmatprep.subr.bf16.mxu0 0
  %4537 = vmatpush1.bf16.msra.mxu0 %v4527
  %4538 = vmatprep.subr.bf16.mxu0 0
  %4539 = vmatpush1.bf16.msra.mxu0 0
  %4540 = vmatprep.subr.bf16.mxu0 0
  %4541 = vmatpush1.bf16.msra.mxu0 0
  %4542 = vmatprep.subr.bf16.mxu0 0
  %4543 = vmatpush1.bf16.msra.mxu0 0
  %4544 = vmatprep.subr.bf16.mxu0 0
  %4545 = vmatpush1.bf16.msra.mxu0 0
  %4546 = vmatprep.subr.bf16.mxu0 0
  %4547 = vmatpush1.bf16.msra.mxu0 0
  %4548 = vmatprep.subr.bf16.mxu0 0
  %4549 = vmatpush1.bf16.msra.mxu0 0
  %4550 = vmatprep.subr.bf16.mxu0 0
  %4551 = vmatpush1.bf16.msra.mxu0 0
  %4552 = vmatprep.subr.bf16.mxu0 0
  %4553 = vmatpush1.bf16.msra.mxu0 0
  %4554 = vmatprep.subr.bf16.mxu0 0
  %4555 = vmatpush1.bf16.msra.mxu0 0
  %4556 = vmatprep.subr.bf16.mxu0 0
  %4557 = vmatpush1.bf16.msra.mxu0 0
  %4558 = vmatprep.subr.bf16.mxu0 0
  %4559 = vmatpush1.bf16.msra.mxu0 0
  %4560 = vmatprep.subr.bf16.mxu0 0
  %4561 = vmatpush1.bf16.msra.mxu0 0
  %4562 = vmatprep.subr.bf16.mxu0 0
  %4563 = vmatpush1.bf16.msra.mxu0 0
  %4564 = vmatprep.subr.bf16.mxu0 0
  %4565 = vmatpush1.bf16.msra.mxu0 0
  %4566 = vmatprep.mubr.bf16.mxu0 0
  %4567 = vmatmul.mubr.bf16.gmra.mrb[0].mxu0 %v4532
  %v4568 = vpop.f32.mrb[0].mxu0
  %v4569 = vadd.f32 %v4516, %v4568
  %v4570 = vpop.f32.mrb[0].mxu0
  %v4571 = vpop.f32.mrb[0].mxu0
  %v4572 = vadd.f32 %v4516, %v4571
  %v4573 = vpop.f32.mrb[0].mxu0
  %4574 = vdwg.mxu0
  %v4576 = vsel %vm4530, %v4502, 0
  %v4579 = vsel %vm4530, %v4505, 0
  %v4582 = vsel %vm4530, %v4569, 0
  %v4585 = vsel %vm4530, %v4572, 0
  %4587 = vmatprep.subr.mxu0 0.0
  %4588 = vmatpush1.xpose.msra.mxu0 %v4582
  %4589 = vmatprep.subr.mxu0 0.0
  %4590 = vmatpush1.xpose.msra.mxu0 %v4585
  %4591 = vmatprep.subr.mxu0 0.0
  %4592 = vmatpush1.xpose.msra.mxu0 0.0
  %4593 = vmatprep.subr.mxu0 0.0
  %4594 = vmatpush1.xpose.msra.mxu0 0.0
  %4595 = vmatprep.subr.mxu0 0.0
  %4596 = vmatpush1.xpose.msra.mxu0 0.0
  %4597 = vmatprep.subr.mxu0 0.0
  %4598 = vmatpush1.xpose.msra.mxu0 0.0
  %4599 = vmatprep.subr.mxu0 0.0
  %4600 = vmatpush1.xpose.msra.mxu0 0.0
  %4601 = vmatprep.subr.mxu0 0.0
  %4602 = vmatpush1.xpose.msra.mxu0 0.0
  %4603 = vmatprep.subr.mxu0 0.0
  %4604 = vmatpush1.xpose.msra.mxu0 0.0
  %4605 = vmatprep.subr.mxu0 0.0
  %4606 = vmatpush1.xpose.msra.mxu0 0.0
  %4607 = vmatprep.subr.mxu0 0.0
  %4608 = vmatpush1.xpose.msra.mxu0 0.0
  %4609 = vmatprep.subr.mxu0 0.0
  %4610 = vmatpush1.xpose.msra.mxu0 0.0
  %4611 = vmatprep.subr.mxu0 0.0
  %4612 = vmatpush1.xpose.msra.mxu0 0.0
  %4613 = vmatprep.subr.mxu0 0.0
  %4614 = vmatpush1.xpose.msra.mxu0 0.0
  %4615 = vmatprep.subr.mxu0 0.0
  %4616 = vmatpush1.xpose.msra.mxu0 0.0
  %4617 = vmatprep.subr.mxu0 0.0
  %4618 = vmatpush1.xpose.msra.mxu0 0.0
  %4619 = vmatprep.subr.mxu0 0.0
  %4620 = vmatpush1.xpose.msra.mxu0 0.0
  %4621 = vmatprep.subr.mxu0 0.0
  %4622 = vmatpush1.xpose.msra.mxu0 0.0
  %4623 = vmatprep.subr.mxu0 0.0
  %4624 = vmatpush1.xpose.msra.mxu0 0.0
  %4625 = vmatprep.subr.mxu0 0.0
  %4626 = vmatpush1.xpose.msra.mxu0 0.0
  %4627 = vmatprep.subr.mxu0 0.0
  %4628 = vmatpush1.xpose.msra.mxu0 0.0
  %4629 = vmatprep.subr.mxu0 0.0
  %4630 = vmatpush1.xpose.msra.mxu0 0.0
  %4631 = vmatprep.subr.mxu0 0.0
  %4632 = vmatpush1.xpose.msra.mxu0 0.0
  %4633 = vmatprep.subr.mxu0 0.0
  %4634 = vmatpush1.xpose.msra.mxu0 0.0
  %4635 = vmatprep.subr.mxu0 0.0
  %4636 = vmatpush1.xpose.msra.mxu0 0.0
  %4637 = vmatprep.subr.mxu0 0.0
  %4638 = vmatpush1.xpose.msra.mxu0 0.0
  %4639 = vmatprep.subr.mxu0 0.0
  %4640 = vmatpush1.xpose.msra.mxu0 0.0
  %4641 = vmatprep.subr.mxu0 0.0
  %4642 = vmatpush1.xpose.msra.mxu0 0.0
  %4643 = vmatprep.subr.mxu0 0.0
  %4644 = vmatpush1.xpose.msra.mxu0 0.0
  %4645 = vmatprep.subr.mxu0 0.0
  %4646 = vmatpush1.xpose.msra.mxu0 0.0
  %4647 = vmatprep.subr.mxu0 0.0
  %4648 = vmatpush1.xpose.msra.mxu0 0.0
  %4649 = vmatprep.subr.mxu0 0.0
  %4650 = vmatpush1.xpose.msra.mxu0 0.0
  %4651 = vmatprep.mubr.f32.mxu0 0.0
  %4652 = vmatmul.mubr.f32.gmra.mrb[0].mxu0 %v4576
  %v4653 = vpop.f32.mrb[0].mxu0
  %v4654 = vadd.f32 0.0, %v4653
  %v4655 = vpop.f32.mrb[0].mxu0
  %4656 = vmatprep.mubr.f32.mxu0 0.0
  %4657 = vmatmul.mubr.f32.gmra.mrb[0].mxu0 %v4579
  %v4658 = vpop.f32.mrb[0].mxu0
  %v4659 = vadd.f32 0.0, %v4658
  %v4660 = vpop.f32.mrb[0].mxu0
  %4661 = vdwg.mxu0
  %v4662 = vld [vmem:[%s19] sm:$0xff]
  %v4663 = vld [vmem:[%s19 + $0x8] sm:$0xff]
  %vm4664 = vcmp.eq.f32.partialorder %v4662, 0.0
  %vm4665 = vcmp.eq.f32.partialorder %v4663, 0.0
  %v4666 = vsel %vm4664, -1e+12, %v4654
  %v4667 = vsel %vm4665, -1e+12, %v4659
  %v4668 = vsel %vm1017, %v4666, -inf
  %4669 = vmax.xlane.f32.xlu0 %v4668
  %v4670 = vpop.xlane.xlu0 %4669
  %v4671 = vsel %vm1017, %v4667, -inf
  %4672 = vmax.xlane.f32.xlu0 %v4671
  %v4673 = vpop.xlane.xlu0 %4672
  %v4674 = vsub.f32 %v4666, %v4670
  %v4675 = vsub.f32 %v4667, %v4673
  %v4676 = vmul.f32 %v4674, 1.442695
  %v4677 = vpow.pop %v4676
  %v4678 = vmul.f32 %v4675, 1.442695
  %v4679 = vpow.pop %v4678
  %v4680 = vsel %vm1017, %v4677, 0.0
  %4681 = vadd.xlane.f32.xlu0 %v4680
  %v4682 = vpop.xlane.xlu0 %4681
  %v4683 = vsel %vm1017, %v4679, 0.0
  %4684 = vadd.xlane.f32.xlu0 %v4683
  %v4685 = vpop.xlane.xlu0 %4684
  %v4686 = vrcp.pop %v4682
  %v4687 = vrcp.pop %v4685
  %v4688 = vmul.f32 %v4677, %v4686
  %v4689 = vmul.f32 %v4679, %v4687
  %v4691 = vsel %vm1017, %v4688, 0
  %v4694 = vsel %vm1017, %v4689, 0
  %4696 = vmatprep.subr.mxu0 0.0
  %4697 = vmatpush1.msra.mxu0 %v4502
  %4698 = vmatprep.subr.mxu0 0.0
  %4699 = vmatpush1.msra.mxu0 %v4505
  %4700 = vmatprep.subr.mxu0 0.0
  %4701 = vmatpush1.msra.mxu0 0.0
  %4702 = vmatprep.subr.mxu0 0.0
  %4703 = vmatpush1.msra.mxu0 0.0
  %4704 = vmatprep.subr.mxu0 0.0
  %4705 = vmatpush1.msra.mxu0 0.0
  %4706 = vmatprep.subr.mxu0 0.0
  %4707 = vmatpush1.msra.mxu0 0.0
  %4708 = vmatprep.subr.mxu0 0.0
  %4709 = vmatpush1.msra.mxu0 0.0
  %4710 = vmatprep.subr.mxu0 0.0
  %4711 = vmatpush1.msra.mxu0 0.0
  %4712 = vmatprep.subr.mxu0 0.0
  %4713 = vmatpush1.msra.mxu0 0.0
  %4714 = vmatprep.subr.mxu0 0.0
  %4715 = vmatpush1.msra.mxu0 0.0
  %4716 = vmatprep.subr.mxu0 0.0
  %4717 = vmatpush1.msra.mxu0 0.0
  %4718 = vmatprep.subr.mxu0 0.0
  %4719 = vmatpush1.msra.mxu0 0.0
  %4720 = vmatprep.subr.mxu0 0.0
  %4721 = vmatpush1.msra.mxu0 0.0
  %4722 = vmatprep.subr.mxu0 0.0
  %4723 = vmatpush1.msra.mxu0 0.0
  %4724 = vmatprep.subr.mxu0 0.0
  %4725 = vmatpush1.msra.mxu0 0.0
  %4726 = vmatprep.subr.mxu0 0.0
  %4727 = vmatpush1.msra.mxu0 0.0
  %4728 = vmatprep.subr.mxu0 0.0
  %4729 = vmatpush1.msra.mxu0 0.0
  %4730 = vmatprep.subr.mxu0 0.0
  %4731 = vmatpush1.msra.mxu0 0.0
  %4732 = vmatprep.subr.mxu0 0.0
  %4733 = vmatpush1.msra.mxu0 0.0
  %4734 = vmatprep.subr.mxu0 0.0
  %4735 = vmatpush1.msra.mxu0 0.0
  %4736 = vmatprep.subr.mxu0 0.0
  %4737 = vmatpush1.msra.mxu0 0.0
  %4738 = vmatprep.subr.mxu0 0.0
  %4739 = vmatpush1.msra.mxu0 0.0
  %4740 = vmatprep.subr.mxu0 0.0
  %4741 = vmatpush1.msra.mxu0 0.0
  %4742 = vmatprep.subr.mxu0 0.0
  %4743 = vmatpush1.msra.mxu0 0.0
  %4744 = vmatprep.subr.mxu0 0.0
  %4745 = vmatpush1.msra.mxu0 0.0
  %4746 = vmatprep.subr.mxu0 0.0
  %4747 = vmatpush1.msra.mxu0 0.0
  %4748 = vmatprep.subr.mxu0 0.0
  %4749 = vmatpush1.msra.mxu0 0.0
  %4750 = vmatprep.subr.mxu0 0.0
  %4751 = vmatpush1.msra.mxu0 0.0
  %4752 = vmatprep.subr.mxu0 0.0
  %4753 = vmatpush1.msra.mxu0 0.0
  %4754 = vmatprep.subr.mxu0 0.0
  %4755 = vmatpush1.msra.mxu0 0.0
  %4756 = vmatprep.subr.mxu0 0.0
  %4757 = vmatpush1.msra.mxu0 0.0
  %4758 = vmatprep.subr.mxu0 0.0
  %4759 = vmatpush1.msra.mxu0 0.0
  %4760 = vmatprep.mubr.f32.mxu0 0.0
  %4761 = vmatmul.mubr.f32.gmra.mrb[0].mxu0 %v4691
  %v4762 = vpop.f32.mrb[0].mxu0
  %v4763 = vadd.f32 0.0, %v4762
  %v4764 = vpop.f32.mrb[0].mxu0
  %4765 = vmatprep.mubr.f32.mxu0 0.0
  %4766 = vmatmul.mubr.f32.gmra.mrb[0].mxu0 %v4694
  %v4767 = vpop.f32.mrb[0].mxu0
  %v4768 = vadd.f32 0.0, %v4767
  %v4769 = vpop.f32.mrb[0].mxu0
  %4770 = vdwg.mxu0
  %v4771 = vld [vmem:[%s63] sm:$0xf]
  %v4772 = vld [vmem:[%s63 + $0x4] sm:$0xf]
  %v4773 = vld [vmem:[%s63 + $0x8] sm:$0xf]
  %v4774 = vld [vmem:[%s63 + $0xc] sm:$0xf]
  %v4775 = vld [vmem:[%s65] sm:$0xf]
  %v4776 = vld [vmem:[%s65 + $0x4] sm:$0xf]
  %v4777 = vld [vmem:[%s65 + $0x8] sm:$0xf]
  %v4778 = vld [vmem:[%s65 + $0xc] sm:$0xf]
  %v4779 = vpack.c.bf16 %v4768, %v4763
  %v4784 = vunpack.c.l.b16 %v4775
  %v4785 = vunpack.c.l.b16 %v4776
  %v4786 = vunpack.c.l.b16 %v4777
  %v4787 = vunpack.c.l.b16 %v4778
  %v4788 = vpack.c.b16 %v4785, %v4784
  %v4789 = vpack.c.b16 %v4787, %v4786
  %v4793 = vsel %vm4530, %v4779, 0
  %4795 = vmatprep.subr.bf16.mxu0 0
  %4796 = vmatpush1.bf16.msra.mxu0 %v4788
  %4797 = vmatprep.subr.bf16.mxu0 0
  %4798 = vmatpush1.bf16.msra.mxu0 %v4789
  %4799 = vmatprep.subr.bf16.mxu0 0
  %4800 = vmatpush1.bf16.msra.mxu0 0
  %4801 = vmatprep.subr.bf16.mxu0 0
  %4802 = vmatpush1.bf16.msra.mxu0 0
  %4803 = vmatprep.subr.bf16.mxu0 0
  %4804 = vmatpush1.bf16.msra.mxu0 0
  %4805 = vmatprep.subr.bf16.mxu0 0
  %4806 = vmatpush1.bf16.msra.mxu0 0
  %4807 = vmatprep.subr.bf16.mxu0 0
  %4808 = vmatpush1.bf16.msra.mxu0 0
  %4809 = vmatprep.subr.bf16.mxu0 0
  %4810 = vmatpush1.bf16.msra.mxu0 0
  %4811 = vmatprep.subr.bf16.mxu0 0
  %4812 = vmatpush1.bf16.msra.mxu0 0
  %4813 = vmatprep.subr.bf16.mxu0 0
  %4814 = vmatpush1.bf16.msra.mxu0 0
  %4815 = vmatprep.subr.bf16.mxu0 0
  %4816 = vmatpush1.bf16.msra.mxu0 0
  %4817 = vmatprep.subr.bf16.mxu0 0
  %4818 = vmatpush1.bf16.msra.mxu0 0
  %4819 = vmatprep.subr.bf16.mxu0 0
  %4820 = vmatpush1.bf16.msra.mxu0 0
  %4821 = vmatprep.subr.bf16.mxu0 0
  %4822 = vmatpush1.bf16.msra.mxu0 0
  %4823 = vmatprep.subr.bf16.mxu0 0
  %4824 = vmatpush1.bf16.msra.mxu0 0
  %4825 = vmatprep.subr.bf16.mxu0 0
  %4826 = vmatpush1.bf16.msra.mxu0 0
  %4827 = vmatprep.mubr.bf16.mxu0 0
  %4828 = vmatmul.mubr.bf16.gmra.mrb[0].mxu0 %v4793
  %v4829 = vpop.f32.mrb[0].mxu0
  %v4830 = vadd.f32 0.0, %v4829
  %v4831 = vpop.f32.mrb[0].mxu0
  %v4832 = vpop.f32.mrb[0].mxu0
  %v4833 = vadd.f32 0.0, %v4832
  %v4834 = vpop.f32.mrb[0].mxu0
  %4835 = vdwg.mxu0
  %v4840 = vunpack.c.l.b16 %v4771
  %v4841 = vunpack.c.l.b16 %v4772
  %v4842 = vunpack.c.l.b16 %v4773
  %v4843 = vunpack.c.l.b16 %v4774
  %v4844 = vpack.c.b16 %v4841, %v4840
  %v4845 = vpack.c.b16 %v4843, %v4842
  %4848 = vmatprep.subr.bf16.mxu0 0
  %4849 = vmatpush1.bf16.msra.mxu0 %v4844
  %4850 = vmatprep.subr.bf16.mxu0 0
  %4851 = vmatpush1.bf16.msra.mxu0 %v4845
  %4852 = vmatprep.subr.bf16.mxu0 0
  %4853 = vmatpush1.bf16.msra.mxu0 0
  %4854 = vmatprep.subr.bf16.mxu0 0
  %4855 = vmatpush1.bf16.msra.mxu0 0
  %4856 = vmatprep.subr.bf16.mxu0 0
  %4857 = vmatpush1.bf16.msra.mxu0 0
  %4858 = vmatprep.subr.bf16.mxu0 0
  %4859 = vmatpush1.bf16.msra.mxu0 0
  %4860 = vmatprep.subr.bf16.mxu0 0
  %4861 = vmatpush1.bf16.msra.mxu0 0
  %4862 = vmatprep.subr.bf16.mxu0 0
  %4863 = vmatpush1.bf16.msra.mxu0 0
  %4864 = vmatprep.subr.bf16.mxu0 0
  %4865 = vmatpush1.bf16.msra.mxu0 0
  %4866 = vmatprep.subr.bf16.mxu0 0
  %4867 = vmatpush1.bf16.msra.mxu0 0
  %4868 = vmatprep.subr.bf16.mxu0 0
  %4869 = vmatpush1.bf16.msra.mxu0 0
  %4870 = vmatprep.subr.bf16.mxu0 0
  %4871 = vmatpush1.bf16.msra.mxu0 0
  %4872 = vmatprep.subr.bf16.mxu0 0
  %4873 = vmatpush1.bf16.msra.mxu0 0
  %4874 = vmatprep.subr.bf16.mxu0 0
  %4875 = vmatpush1.bf16.msra.mxu0 0
  %4876 = vmatprep.subr.bf16.mxu0 0
  %4877 = vmatpush1.bf16.msra.mxu0 0
  %4878 = vmatprep.subr.bf16.mxu0 0
  %4879 = vmatpush1.bf16.msra.mxu0 0
  %4880 = vmatprep.mubr.bf16.mxu0 0
  %4881 = vmatmul.mubr.bf16.gmra.mrb[0].mxu0 %v4532
  %v4882 = vpop.f32.mrb[0].mxu0
  %v4883 = vadd.f32 %v4830, %v4882
  %v4884 = vpop.f32.mrb[0].mxu0
  %v4885 = vpop.f32.mrb[0].mxu0
  %v4886 = vadd.f32 %v4833, %v4885
  %v4887 = vpop.f32.mrb[0].mxu0
  %4888 = vdwg.mxu0
  %v4889 = vtanh.pop %v4883
  %v4890 = vtanh.pop %v4886
  %v4891 = vld [vmem:[%s67] sm:$0xf]
  %v4892 = vld [vmem:[%s67 + $0x4] sm:$0xf]
  %v4893 = vld [vmem:[%s67 + $0x8] sm:$0xf]
  %v4894 = vld [vmem:[%s67 + $0xc] sm:$0xf]
  %v4895 = vld [vmem:[%s69] sm:$0xf]
  %v4896 = vld [vmem:[%s69 + $0x4] sm:$0xf]
  %v4897 = vld [vmem:[%s69 + $0x8] sm:$0xf]
  %v4898 = vld [vmem:[%s69 + $0xc] sm:$0xf]
  %v4903 = vunpack.c.l.b16 %v4895
  %v4904 = vunpack.c.l.b16 %v4896
  %v4905 = vunpack.c.l.b16 %v4897
  %v4906 = vunpack.c.l.b16 %v4898
  %v4907 = vpack.c.b16 %v4904, %v4903
  %v4908 = vpack.c.b16 %v4906, %v4905
  %4911 = vmatprep.subr.bf16.mxu0 0
  %4912 = vmatpush1.bf16.msra.mxu0 %v4907
  %4913 = vmatprep.subr.bf16.mxu0 0
  %4914 = vmatpush1.bf16.msra.mxu0 %v4908
  %4915 = vmatprep.subr.bf16.mxu0 0
  %4916 = vmatpush1.bf16.msra.mxu0 0
  %4917 = vmatprep.subr.bf16.mxu0 0
  %4918 = vmatpush1.bf16.msra.mxu0 0
  %4919 = vmatprep.subr.bf16.mxu0 0
  %4920 = vmatpush1.bf16.msra.mxu0 0
  %4921 = vmatprep.subr.bf16.mxu0 0
  %4922 = vmatpush1.bf16.msra.mxu0 0
  %4923 = vmatprep.subr.bf16.mxu0 0
  %4924 = vmatpush1.bf16.msra.mxu0 0
  %4925 = vmatprep.subr.bf16.mxu0 0
  %4926 = vmatpush1.bf16.msra.mxu0 0
  %4927 = vmatprep.subr.bf16.mxu0 0
  %4928 = vmatpush1.bf16.msra.mxu0 0
  %4929 = vmatprep.subr.bf16.mxu0 0
  %4930 = vmatpush1.bf16.msra.mxu0 0
  %4931 = vmatprep.subr.bf16.mxu0 0
  %4932 = vmatpush1.bf16.msra.mxu0 0
  %4933 = vmatprep.subr.bf16.mxu0 0
  %4934 = vmatpush1.bf16.msra.mxu0 0
  %4935 = vmatprep.subr.bf16.mxu0 0
  %4936 = vmatpush1.bf16.msra.mxu0 0
  %4937 = vmatprep.subr.bf16.mxu0 0
  %4938 = vmatpush1.bf16.msra.mxu0 0
  %4939 = vmatprep.subr.bf16.mxu0 0
  %4940 = vmatpush1.bf16.msra.mxu0 0
  %4941 = vmatprep.subr.bf16.mxu0 0
  %4942 = vmatpush1.bf16.msra.mxu0 0
  %4943 = vmatprep.mubr.bf16.mxu0 0
  %4944 = vmatmul.mubr.bf16.gmra.mrb[0].mxu0 %v4793
  %v4945 = vpop.f32.mrb[0].mxu0
  %v4946 = vadd.f32 0.0, %v4945
  %v4947 = vpop.f32.mrb[0].mxu0
  %v4948 = vpop.f32.mrb[0].mxu0
  %v4949 = vadd.f32 0.0, %v4948
  %v4950 = vpop.f32.mrb[0].mxu0
  %4951 = vdwg.mxu0
  %v4956 = vunpack.c.l.b16 %v4891
  %v4957 = vunpack.c.l.b16 %v4892
  %v4958 = vunpack.c.l.b16 %v4893
  %v4959 = vunpack.c.l.b16 %v4894
  %v4960 = vpack.c.b16 %v4957, %v4956
  %v4961 = vpack.c.b16 %v4959, %v4958
  %4964 = vmatprep.subr.bf16.mxu0 0
  %4965 = vmatpush1.bf16.msra.mxu0 %v4960
  %4966 = vmatprep.subr.bf16.mxu0 0
  %4967 = vmatpush1.bf16.msra.mxu0 %v4961
  %4968 = vmatprep.subr.bf16.mxu0 0
  %4969 = vmatpush1.bf16.msra.mxu0 0
  %4970 = vmatprep.subr.bf16.mxu0 0
  %4971 = vmatpush1.bf16.msra.mxu0 0
  %4972 = vmatprep.subr.bf16.mxu0 0
  %4973 = vmatpush1.bf16.msra.mxu0 0
  %4974 = vmatprep.subr.bf16.mxu0 0
  %4975 = vmatpush1.bf16.msra.mxu0 0
  %4976 = vmatprep.subr.bf16.mxu0 0
  %4977 = vmatpush1.bf16.msra.mxu0 0
  %4978 = vmatprep.subr.bf16.mxu0 0
  %4979 = vmatpush1.bf16.msra.mxu0 0
  %4980 = vmatprep.subr.bf16.mxu0 0
  %4981 = vmatpush1.bf16.msra.mxu0 0
  %4982 = vmatprep.subr.bf16.mxu0 0
  %4983 = vmatpush1.bf16.msra.mxu0 0
  %4984 = vmatprep.subr.bf16.mxu0 0
  %4985 = vmatpush1.bf16.msra.mxu0 0
  %4986 = vmatprep.subr.bf16.mxu0 0
  %4987 = vmatpush1.bf16.msra.mxu0 0
  %4988 = vmatprep.subr.bf16.mxu0 0
  %4989 = vmatpush1.bf16.msra.mxu0 0
  %4990 = vmatprep.subr.bf16.mxu0 0
  %4991 = vmatpush1.bf16.msra.mxu0 0
  %4992 = vmatprep.subr.bf16.mxu0 0
  %4993 = vmatpush1.bf16.msra.mxu0 0
  %4994 = vmatprep.subr.bf16.mxu0 0
  %4995 = vmatpush1.bf16.msra.mxu0 0
  %4996 = vmatprep.mubr.bf16.mxu0 0
  %4997 = vmatmul.mubr.bf16.gmra.mrb[0].mxu0 %v4532
  %v4998 = vpop.f32.mrb[0].mxu0
  %v4999 = vadd.f32 %v4946, %v4998
  %v5000 = vpop.f32.mrb[0].mxu0
  %v5001 = vpop.f32.mrb[0].mxu0
  %v5002 = vadd.f32 %v4949, %v5001
  %v5003 = vpop.f32.mrb[0].mxu0
  %5004 = vdwg.mxu0
  %v5005 = vxor.u32 %v4999, 2147483648
  %v5006 = vxor.u32 %v5002, 2147483648
  %v5007 = vmul.f32 %v5005, 1.442695
  %v5008 = vpow.pop %v5007
  %v5009 = vmul.f32 %v5006, 1.442695
  %v5010 = vpow.pop %v5009
  %v5011 = vadd.f32 %v5008, 1.0
  %v5012 = vadd.f32 %v5010, 1.0
  %v5013 = vrcp.pop %v5011
  %v5014 = vmul.f32 1.0, %v5013
  %v5015 = vrcp.pop %v5012
  %v5016 = vmul.f32 1.0, %v5015
  %v5017 = vmul.f32 %v5014, %v4889
  %v5018 = vmul.f32 %v5016, %v4890
  %v5019 = vsub.f32 1.0, %v5014
  %v5020 = vsub.f32 1.0, %v5016
  %v5021 = vmul.f32 %v5019, %v4502
  %v5022 = vmul.f32 %v5020, %v4505
  %v5023 = vadd.f32 %v5017, %v5021
  %v5024 = vadd.f32 %v5018, %v5022
  %v5025 = vld [vmem:[%s71] sm:$0xf]
  %v5026 = vld [vmem:[%s71 + $0x4] sm:$0xf]
  %v5027 = vld [vmem:[%s71 + $0x8] sm:$0xf]
  %v5028 = vld [vmem:[%s71 + $0xc] sm:$0xf]
  %v5029 = vpack.c.bf16 %v5024, %v5023
  %v5030 = vld [vmem:[%s73] sm:$0x1]
  %v5032 = vlaneseq
  %v5033 = vshrl.u32 %v5032, 7
  %v5034 = vsub.s32 0, %v5033
  %v5035 = vrot.slane %v5030, %v5034
  %v5041 = vunpack.c.l.b16 %v5025
  %v5042 = vunpack.c.l.b16 %v5026
  %v5043 = vunpack.c.l.b16 %v5027
  %v5044 = vunpack.c.l.b16 %v5028
  %v5045 = vpack.c.b16 %v5042, %v5041
  %v5046 = vpack.c.b16 %v5044, %v5043
  %v5050 = vsel %vm4530, %v5029, 0
  %5052 = vmatprep.subr.bf16.mxu0 0
  %5053 = vmatpush1.bf16.msra.mxu0 %v5045
  %5054 = vmatprep.subr.bf16.mxu0 0
  %5055 = vmatpush1.bf16.msra.mxu0 %v5046
  %5056 = vmatprep.subr.bf16.mxu0 0
  %5057 = vmatpush1.bf16.msra.mxu0 0
  %5058 = vmatprep.subr.bf16.mxu0 0
  %5059 = vmatpush1.bf16.msra.mxu0 0
  %5060 = vmatprep.subr.bf16.mxu0 0
  %5061 = vmatpush1.bf16.msra.mxu0 0
  %5062 = vmatprep.subr.bf16.mxu0 0
  %5063 = vmatpush1.bf16.msra.mxu0 0
  %5064 = vmatprep.subr.bf16.mxu0 0
  %5065 = vmatpush1.bf16.msra.mxu0 0
  %5066 = vmatprep.subr.bf16.mxu0 0
  %5067 = vmatpush1.bf16.msra.mxu0 0
  %5068 = vmatprep.subr.bf16.mxu0 0
  %5069 = vmatpush1.bf16.msra.mxu0 0
  %5070 = vmatprep.subr.bf16.mxu0 0
  %5071 = vmatpush1.bf16.msra.mxu0 0
  %5072 = vmatprep.subr.bf16.mxu0 0
  %5073 = vmatpush1.bf16.msra.mxu0 0
  %5074 = vmatprep.subr.bf16.mxu0 0
  %5075 = vmatpush1.bf16.msra.mxu0 0
  %5076 = vmatprep.subr.bf16.mxu0 0
  %5077 = vmatpush1.bf16.msra.mxu0 0
  %5078 = vmatprep.subr.bf16.mxu0 0
  %5079 = vmatpush1.bf16.msra.mxu0 0
  %5080 = vmatprep.subr.bf16.mxu0 0
  %5081 = vmatpush1.bf16.msra.mxu0 0
  %5082 = vmatprep.subr.bf16.mxu0 0
  %5083 = vmatpush1.bf16.msra.mxu0 0
  %5084 = vmatprep.mubr.bf16.mxu0 0
  %5085 = vmatmul.mubr.bf16.gmra.mrb[0].mxu0 %v5050
  %v5086 = vpop.f32.mrb[0].mxu0
  %v5087 = vadd.f32 %v5035, %v5086
  %v5088 = vpop.f32.mrb[0].mxu0
  %v5089 = vpop.f32.mrb[0].mxu0
  %v5090 = vadd.f32 %v5035, %v5089
  %v5091 = vpop.f32.mrb[0].mxu0
  %5092 = vdwg.mxu0
  %v5093 = vld [vmem:[%s75] sm:$0xff]
  %v5094 = vld [vmem:[%s75 + $0x8] sm:$0x3]
  %v5095 = vld [vmem:[%s77] sm:$0xf]
  %v5096 = vld [vmem:[%s77 + $0x4] sm:$0xf]
  %v5097 = vpack.c.bf16 %v5094, %v5093
  %v5098 = vld [vmem:[%s81] sm:$0x1]
  %v5100 = vlaneseq
  %v5101 = vshrl.u32 %v5100, 7
  %v5102 = vsub.s32 0, %v5101
  %v5103 = vrot.slane %v5098, %v5102
  %v5107 = vunpack.c.l.b16 %v5095
  %v5108 = vunpack.c.l.b16 %v5096
  %v5109 = vpack.c.b16 %v5108, %v5107
  %v5112 = vsel %vm1017, %v5097, 0
  %5114 = vmatprep.subr.bf16.mxu0 0
  %5115 = vmatpush1.bf16.msra.mxu0 %v5109
  %5116 = vmatprep.subr.bf16.mxu0 0
  %5117 = vmatpush1.bf16.msra.mxu0 0
  %5118 = vmatprep.subr.bf16.mxu0 0
  %5119 = vmatpush1.bf16.msra.mxu0 0
  %5120 = vmatprep.subr.bf16.mxu0 0
  %5121 = vmatpush1.bf16.msra.mxu0 0
  %5122 = vmatprep.subr.bf16.mxu0 0
  %5123 = vmatpush1.bf16.msra.mxu0 0
  %5124 = vmatprep.subr.bf16.mxu0 0
  %5125 = vmatpush1.bf16.msra.mxu0 0
  %5126 = vmatprep.subr.bf16.mxu0 0
  %5127 = vmatpush1.bf16.msra.mxu0 0
  %5128 = vmatprep.subr.bf16.mxu0 0
  %5129 = vmatpush1.bf16.msra.mxu0 0
  %5130 = vmatprep.subr.bf16.mxu0 0
  %5131 = vmatpush1.bf16.msra.mxu0 0
  %5132 = vmatprep.subr.bf16.mxu0 0
  %5133 = vmatpush1.bf16.msra.mxu0 0
  %5134 = vmatprep.subr.bf16.mxu0 0
  %5135 = vmatpush1.bf16.msra.mxu0 0
  %5136 = vmatprep.subr.bf16.mxu0 0
  %5137 = vmatpush1.bf16.msra.mxu0 0
  %5138 = vmatprep.subr.bf16.mxu0 0
  %5139 = vmatpush1.bf16.msra.mxu0 0
  %5140 = vmatprep.subr.bf16.mxu0 0
  %5141 = vmatpush1.bf16.msra.mxu0 0
  %5142 = vmatprep.subr.bf16.mxu0 0
  %5143 = vmatpush1.bf16.msra.mxu0 0
  %5144 = vmatprep.subr.bf16.mxu0 0
  %5145 = vmatpush1.bf16.msra.mxu0 0
  %5146 = vmatprep.mubr.bf16.mxu0 0
  %5147 = vmatmul.mubr.bf16.gmra.mrb[0].mxu0 %v5112
  %v5148 = vpop.f32.mrb[0].mxu0
  %v5149 = vadd.f32 %v5103, %v5148
  %v5150 = vpop.f32.mrb[0].mxu0
  %v5151 = vpop.f32.mrb[0].mxu0
  %v5152 = vadd.f32 %v5103, %v5151
  %v5153 = vpop.f32.mrb[0].mxu0
  %5154 = vdwg.mxu0
  %v5155 = vld [vmem:[%s21] sm:$0x3]
  %v5156 = vld [vmem:[%s79] sm:$0xf]
  %v5157 = vld [vmem:[%s79 + $0x4] sm:$0xf]
  %v5158 = vld [vmem:[%s79 + $0x8] sm:$0xf]
  %v5159 = vld [vmem:[%s79 + $0xc] sm:$0xf]
  %v5160 = vld [vmem:[%s83] sm:$0xf]
  %v5161 = vld [vmem:[%s83 + $0x4] sm:$0xf]
  %v5162 = vld [vmem:[%s85] sm:$0xf]
  %v5163 = vld [vmem:[%s85 + $0x4] sm:$0xf]
  %v5164 = vld [vmem:[%s85 + $0x8] sm:$0xf]
  %v5165 = vld [vmem:[%s85 + $0xc] sm:$0xf]
  %v5166 = vld [vmem:[%s89] sm:$0xf]
  %v5167 = vld [vmem:[%s89 + $0x4] sm:$0xf]
  %v5168 = vld [vmem:[%s89 + $0x8] sm:$0xf]
  %v5169 = vld [vmem:[%s89 + $0xc] sm:$0xf]
  %v5170 = vld [vmem:[%s91] sm:$0xf]
  %v5171 = vld [vmem:[%s91 + $0x4] sm:$0xf]
  %v5172 = vld [vmem:[%s91 + $0x8] sm:$0xf]
  %v5173 = vld [vmem:[%s91 + $0xc] sm:$0xf]
  %v5174 = vld [vmem:[%s87] sm:$0x1]
  %v5176 = vlaneseq
  %v5177 = vshrl.u32 %v5176, 7
  %v5178 = vsub.s32 0, %v5177
  %v5179 = vrot.slane %v5174, %v5178
  %v5181 = vld [vmem:[%s93] sm:$0x1]
  %v5183 = vlaneseq
  %v5184 = vshrl.u32 %v5183, 7
  %v5185 = vsub.s32 0, %v5184
  %v5186 = vrot.slane %v5181, %v5185
  %5189 = vrot.lane.b32.xlu0 %v1811, 80
  %v5190 = vpop.permute.xlu0 %5189
  %v5193 = vrot.slane %v2600, 2
  %5194 = vrot.lane.b32.xlu0 %v5193, 96
  %v5195 = vpop.permute.xlu0 %5194
  %v5197 = vsel %vm1017, %v5190, %v5195
  %5199 = vrot.lane.b32.xlu0 %v3628, 80
  %v5200 = vpop.permute.xlu0 %5199
  %v5203 = vrot.slane %v4416, 2
  %5204 = vrot.lane.b32.xlu0 %v5203, 96
  %v5205 = vpop.permute.xlu0 %5204
  %v5207 = vsel %vm1017, %v5200, %v5205
  %5209 = vrot.lane.b32.xlu0 %v1821, 112
  %v5210 = vpop.permute.xlu0 %5209
  %v5213 = vrot.slane %v2610, 2
  %v5215 = vsel %vm1017, %v5210, %v5213
  %5217 = vrot.lane.b32.xlu0 %v3638, 112
  %v5218 = vpop.permute.xlu0 %5217
  %v5221 = vrot.slane %v4426, 2
  %v5223 = vsel %vm1017, %v5218, %v5221
  %v5228 = vunpack.c.l.b16 %v5156
  %v5229 = vunpack.c.l.b16 %v5157
  %v5230 = vunpack.c.l.b16 %v5158
  %v5231 = vunpack.c.l.b16 %v5159
  %v5232 = vpack.c.b16 %v5229, %v5228
  %v5233 = vpack.c.b16 %v5231, %v5230
  %v5236 = vsel %vm4530, 0, 0
  %5238 = vmatprep.subr.bf16.mxu0 0
  %5239 = vmatpush1.bf16.msra.mxu0 %v5232
  %5240 = vmatprep.subr.bf16.mxu0 0
  %5241 = vmatpush1.bf16.msra.mxu0 %v5233
  %5242 = vmatprep.subr.bf16.mxu0 0
  %5243 = vmatpush1.bf16.msra.mxu0 0
  %5244 = vmatprep.subr.bf16.mxu0 0
  %5245 = vmatpush1.bf16.msra.mxu0 0
  %5246 = vmatprep.subr.bf16.mxu0 0
  %5247 = vmatpush1.bf16.msra.mxu0 0
  %5248 = vmatprep.subr.bf16.mxu0 0
  %5249 = vmatpush1.bf16.msra.mxu0 0
  %5250 = vmatprep.subr.bf16.mxu0 0
  %5251 = vmatpush1.bf16.msra.mxu0 0
  %5252 = vmatprep.subr.bf16.mxu0 0
  %5253 = vmatpush1.bf16.msra.mxu0 0
  %5254 = vmatprep.subr.bf16.mxu0 0
  %5255 = vmatpush1.bf16.msra.mxu0 0
  %5256 = vmatprep.subr.bf16.mxu0 0
  %5257 = vmatpush1.bf16.msra.mxu0 0
  %5258 = vmatprep.subr.bf16.mxu0 0
  %5259 = vmatpush1.bf16.msra.mxu0 0
  %5260 = vmatprep.subr.bf16.mxu0 0
  %5261 = vmatpush1.bf16.msra.mxu0 0
  %5262 = vmatprep.subr.bf16.mxu0 0
  %5263 = vmatpush1.bf16.msra.mxu0 0
  %5264 = vmatprep.subr.bf16.mxu0 0
  %5265 = vmatpush1.bf16.msra.mxu0 0
  %5266 = vmatprep.subr.bf16.mxu0 0
  %5267 = vmatpush1.bf16.msra.mxu0 0
  %5268 = vmatprep.subr.bf16.mxu0 0
  %5269 = vmatpush1.bf16.msra.mxu0 0
  %5270 = vmatprep.mubr.bf16.mxu0 0
  %5271 = vmatmul.mubr.bf16.gmra.mrb[0].mxu0 %v5236
  %v5272 = vpop.f32.mrb[0].mxu0
  %v5273 = vadd.f32 0.0, %v5272
  %v5274 = vpop.f32.mrb[0].mxu0
  %v5275 = vpop.f32.mrb[0].mxu0
  %v5276 = vpop.f32.mrb[0].mxu0
  %5277 = vdwg.mxu0
  %v5278 = vadd.f32 %v5149, %v5273
  %v5279 = vpack.c.bf16 %v5278, %v5278
  %v5280 = vpack.c.bf16 %v5197, %v5197
  %v5282 = vrot.slane %v5280, 3
  %v5287 = vunpack.c.l.b16 %v5162
  %v5288 = vunpack.c.l.b16 %v5163
  %v5289 = vunpack.c.l.b16 %v5164
  %v5290 = vunpack.c.l.b16 %v5165
  %v5291 = vpack.c.b16 %v5288, %v5287
  %v5292 = vpack.c.b16 %v5290, %v5289
  %v5296 = vsel %vm4530, %v5282, 0
  %5298 = vmatprep.subr.bf16.mxu0 0
  %5299 = vmatpush1.bf16.msra.mxu0 %v5291
  %5300 = vmatprep.subr.bf16.mxu0 0
  %5301 = vmatpush1.bf16.msra.mxu0 %v5292
  %5302 = vmatprep.subr.bf16.mxu0 0
  %5303 = vmatpush1.bf16.msra.mxu0 0
  %5304 = vmatprep.subr.bf16.mxu0 0
  %5305 = vmatpush1.bf16.msra.mxu0 0
  %5306 = vmatprep.subr.bf16.mxu0 0
  %5307 = vmatpush1.bf16.msra.mxu0 0
  %5308 = vmatprep.subr.bf16.mxu0 0
  %5309 = vmatpush1.bf16.msra.mxu0 0
  %5310 = vmatprep.subr.bf16.mxu0 0
  %5311 = vmatpush1.bf16.msra.mxu0 0
  %5312 = vmatprep.subr.bf16.mxu0 0
  %5313 = vmatpush1.bf16.msra.mxu0 0
  %5314 = vmatprep.subr.bf16.mxu0 0
  %5315 = vmatpush1.bf16.msra.mxu0 0
  %5316 = vmatprep.subr.bf16.mxu0 0
  %5317 = vmatpush1.bf16.msra.mxu0 0
  %5318 = vmatprep.subr.bf16.mxu0 0
  %5319 = vmatpush1.bf16.msra.mxu0 0
  %5320 = vmatprep.subr.bf16.mxu0 0
  %5321 = vmatpush1.bf16.msra.mxu0 0
  %5322 = vmatprep.subr.bf16.mxu0 0
  %5323 = vmatpush1.bf16.msra.mxu0 0
  %5324 = vmatprep.subr.bf16.mxu0 0
  %5325 = vmatpush1.bf16.msra.mxu0 0
  %5326 = vmatprep.subr.bf16.mxu0 0
  %5327 = vmatpush1.bf16.msra.mxu0 0
  %5328 = vmatprep.subr.bf16.mxu0 0
  %5329 = vmatpush1.bf16.msra.mxu0 0
  %5330 = vmatprep.mubr.bf16.mxu0 0
  %5331 = vmatmul.mubr.bf16.gmra.mrb[0].mxu0 %v5296
  %v5332 = vpop.f32.mrb[0].mxu0
  %v5333 = vadd.f32 0.0, %v5332
  %v5334 = vpop.f32.mrb[0].mxu0
  %v5335 = vpop.f32.mrb[0].mxu0
  %v5336 = vpop.f32.mrb[0].mxu0
  %5337 = vdwg.mxu0
  %v5340 = vunpack.c.l.b16 %v5160
  %v5341 = vunpack.c.l.b16 %v5161
  %v5342 = vpack.c.b16 %v5341, %v5340
  %v5345 = vsel %vm1017, %v5279, 0
  %5347 = vmatprep.subr.bf16.mxu0 0
  %5348 = vmatpush1.bf16.msra.mxu0 %v5342
  %5349 = vmatprep.subr.bf16.mxu0 0
  %5350 = vmatpush1.bf16.msra.mxu0 0
  %5351 = vmatprep.subr.bf16.mxu0 0
  %5352 = vmatpush1.bf16.msra.mxu0 0
  %5353 = vmatprep.subr.bf16.mxu0 0
  %5354 = vmatpush1.bf16.msra.mxu0 0
  %5355 = vmatprep.subr.bf16.mxu0 0
  %5356 = vmatpush1.bf16.msra.mxu0 0
  %5357 = vmatprep.subr.bf16.mxu0 0
  %5358 = vmatpush1.bf16.msra.mxu0 0
  %5359 = vmatprep.subr.bf16.mxu0 0
  %5360 = vmatpush1.bf16.msra.mxu0 0
  %5361 = vmatprep.subr.bf16.mxu0 0
  %5362 = vmatpush1.bf16.msra.mxu0 0
  %5363 = vmatprep.subr.bf16.mxu0 0
  %5364 = vmatpush1.bf16.msra.mxu0 0
  %5365 = vmatprep.subr.bf16.mxu0 0
  %5366 = vmatpush1.bf16.msra.mxu0 0
  %5367 = vmatprep.subr.bf16.mxu0 0
  %5368 = vmatpush1.bf16.msra.mxu0 0
  %5369 = vmatprep.subr.bf16.mxu0 0
  %5370 = vmatpush1.bf16.msra.mxu0 0
  %5371 = vmatprep.subr.bf16.mxu0 0
  %5372 = vmatpush1.bf16.msra.mxu0 0
  %5373 = vmatprep.subr.bf16.mxu0 0
  %5374 = vmatpush1.bf16.msra.mxu0 0
  %5375 = vmatprep.subr.bf16.mxu0 0
  %5376 = vmatpush1.bf16.msra.mxu0 0
  %5377 = vmatprep.subr.bf16.mxu0 0
  %5378 = vmatpush1.bf16.msra.mxu0 0
  %5379 = vmatprep.mubr.bf16.mxu0 0
  %5380 = vmatmul.mubr.bf16.gmra.mrb[0].mxu0 %v5345
  %v5381 = vpop.f32.mrb[0].mxu0
  %v5382 = vadd.f32 %v5333, %v5381
  %v5383 = vpop.f32.mrb[0].mxu0
  %v5384 = vpop.f32.mrb[0].mxu0
  %v5385 = vpop.f32.mrb[0].mxu0
  %5386 = vdwg.mxu0
  %v5387 = vadd.f32 %v5382, %v5179
  %v5388 = vxor.u32 %v5387, 2147483648
  %v5389 = vmul.f32 %v5388, 1.442695
  %v5390 = vpow.pop %v5389
  %v5391 = vadd.f32 %v5390, 1.0
  %v5392 = vrcp.pop %v5391
  %v5393 = vmul.f32 1.0, %v5392
  %v5394 = vtanh.pop %v5387
  %v5396 = vrot.slane %v5215, 6
  %5397 = vrot.lane.b32.xlu0 %v5396, 32
  %v5398 = vpop.permute.xlu0 %5397
  %v5400 = vmul.f32 %v5393, %v5398
  %5402 = vrot.lane.b32.xlu0 %v5394, 64
  %v5403 = vpop.permute.xlu0 %5402
  %v5405 = vmul.f32 %v5393, %v5403
  %5407 = vrot.lane.b32.xlu0 %v5405, 32
  %v5408 = vpop.permute.xlu0 %5407
  %v5410 = vadd.f32 %v5400, %v5408
  %v5411 = vtanh.pop %v5410
  %5413 = vrot.lane.b32.xlu0 %v5411, 64
  %v5414 = vpop.permute.xlu0 %5413
  %v5416 = vmul.f32 %v5393, %v5414
  %v5417 = vpack.c.bf16 %v5416, %v5416
  %v5418 = vpack.c.bf16 %v5207, %v5207
  %v5420 = vrot.slane %v5418, 3
  %v5425 = vunpack.c.l.b16 %v5170
  %v5426 = vunpack.c.l.b16 %v5171
  %v5427 = vunpack.c.l.b16 %v5172
  %v5428 = vunpack.c.l.b16 %v5173
  %v5429 = vpack.c.b16 %v5426, %v5425
  %v5430 = vpack.c.b16 %v5428, %v5427
  %v5434 = vsel %vm4530, %v5420, 0
  %5436 = vmatprep.subr.bf16.mxu0 0
  %5437 = vmatpush1.bf16.msra.mxu0 %v5429
  %5438 = vmatprep.subr.bf16.mxu0 0
  %5439 = vmatpush1.bf16.msra.mxu0 %v5430
  %5440 = vmatprep.subr.bf16.mxu0 0
  %5441 = vmatpush1.bf16.msra.mxu0 0
  %5442 = vmatprep.subr.bf16.mxu0 0
  %5443 = vmatpush1.bf16.msra.mxu0 0
  %5444 = vmatprep.subr.bf16.mxu0 0
  %5445 = vmatpush1.bf16.msra.mxu0 0
  %5446 = vmatprep.subr.bf16.mxu0 0
  %5447 = vmatpush1.bf16.msra.mxu0 0
  %5448 = vmatprep.subr.bf16.mxu0 0
  %5449 = vmatpush1.bf16.msra.mxu0 0
  %5450 = vmatprep.subr.bf16.mxu0 0
  %5451 = vmatpush1.bf16.msra.mxu0 0
  %5452 = vmatprep.subr.bf16.mxu0 0
  %5453 = vmatpush1.bf16.msra.mxu0 0
  %5454 = vmatprep.subr.bf16.mxu0 0
  %5455 = vmatpush1.bf16.msra.mxu0 0
  %5456 = vmatprep.subr.bf16.mxu0 0
  %5457 = vmatpush1.bf16.msra.mxu0 0
  %5458 = vmatprep.subr.bf16.mxu0 0
  %5459 = vmatpush1.bf16.msra.mxu0 0
  %5460 = vmatprep.subr.bf16.mxu0 0
  %5461 = vmatpush1.bf16.msra.mxu0 0
  %5462 = vmatprep.subr.bf16.mxu0 0
  %5463 = vmatpush1.bf16.msra.mxu0 0
  %5464 = vmatprep.subr.bf16.mxu0 0
  %5465 = vmatpush1.bf16.msra.mxu0 0
  %5466 = vmatprep.subr.bf16.mxu0 0
  %5467 = vmatpush1.bf16.msra.mxu0 0
  %5468 = vmatprep.mubr.bf16.mxu0 0
  %5469 = vmatmul.mubr.bf16.gmra.mrb[0].mxu0 %v5434
  %v5470 = vpop.f32.mrb[0].mxu0
  %v5471 = vadd.f32 0.0, %v5470
  %v5472 = vpop.f32.mrb[0].mxu0
  %v5473 = vpop.f32.mrb[0].mxu0
  %v5474 = vpop.f32.mrb[0].mxu0
  %5475 = vdwg.mxu0
  %5477 = vrot.lane.b32.xlu0 %v5417, 32
  %v5478 = vpop.permute.xlu0 %5477
  %v5483 = vunpack.c.l.b16 %v5166
  %v5484 = vunpack.c.l.b16 %v5167
  %v5485 = vunpack.c.l.b16 %v5168
  %v5486 = vunpack.c.l.b16 %v5169
  %v5487 = vpack.c.b16 %v5484, %v5483
  %v5488 = vpack.c.b16 %v5486, %v5485
  %v5492 = vsel %vm4530, %v5478, 0
  %5494 = vmatprep.subr.bf16.mxu0 0
  %5495 = vmatpush1.bf16.msra.mxu0 %v5487
  %5496 = vmatprep.subr.bf16.mxu0 0
  %5497 = vmatpush1.bf16.msra.mxu0 %v5488
  %5498 = vmatprep.subr.bf16.mxu0 0
  %5499 = vmatpush1.bf16.msra.mxu0 0
  %5500 = vmatprep.subr.bf16.mxu0 0
  %5501 = vmatpush1.bf16.msra.mxu0 0
  %5502 = vmatprep.subr.bf16.mxu0 0
  %5503 = vmatpush1.bf16.msra.mxu0 0
  %5504 = vmatprep.subr.bf16.mxu0 0
  %5505 = vmatpush1.bf16.msra.mxu0 0
  %5506 = vmatprep.subr.bf16.mxu0 0
  %5507 = vmatpush1.bf16.msra.mxu0 0
  %5508 = vmatprep.subr.bf16.mxu0 0
  %5509 = vmatpush1.bf16.msra.mxu0 0
  %5510 = vmatprep.subr.bf16.mxu0 0
  %5511 = vmatpush1.bf16.msra.mxu0 0
  %5512 = vmatprep.subr.bf16.mxu0 0
  %5513 = vmatpush1.bf16.msra.mxu0 0
  %5514 = vmatprep.subr.bf16.mxu0 0
  %5515 = vmatpush1.bf16.msra.mxu0 0
  %5516 = vmatprep.subr.bf16.mxu0 0
  %5517 = vmatpush1.bf16.msra.mxu0 0
  %5518 = vmatprep.subr.bf16.mxu0 0
  %5519 = vmatpush1.bf16.msra.mxu0 0
  %5520 = vmatprep.subr.bf16.mxu0 0
  %5521 = vmatpush1.bf16.msra.mxu0 0
  %5522 = vmatprep.subr.bf16.mxu0 0
  %5523 = vmatpush1.bf16.msra.mxu0 0
  %5524 = vmatprep.subr.bf16.mxu0 0
  %5525 = vmatpush1.bf16.msra.mxu0 0
  %5526 = vmatprep.mubr.bf16.mxu0 0
  %5527 = vmatmul.mubr.bf16.gmra.mrb[0].mxu0 %v5492
  %v5528 = vpop.f32.mrb[0].mxu0
  %v5529 = vadd.f32 %v5471, %v5528
  %v5530 = vpop.f32.mrb[0].mxu0
  %v5531 = vpop.f32.mrb[0].mxu0
  %v5532 = vpop.f32.mrb[0].mxu0
  %5533 = vdwg.mxu0
  %v5534 = vadd.f32 %v5529, %v5186
  %v5535 = vxor.u32 %v5534, 2147483648
  %v5536 = vmul.f32 %v5535, 1.442695
  %v5537 = vpow.pop %v5536
  %v5538 = vadd.f32 %v5537, 1.0
  %v5539 = vrcp.pop %v5538
  %v5540 = vmul.f32 1.0, %v5539
  %v5541 = vtanh.pop %v5534
  %v5543 = vrot.slane %v5223, 6
  %5544 = vrot.lane.b32.xlu0 %v5543, 32
  %v5545 = vpop.permute.xlu0 %5544
  %v5547 = vmul.f32 %v5540, %v5545
  %5549 = vrot.lane.b32.xlu0 %v5541, 64
  %v5550 = vpop.permute.xlu0 %5549
  %v5552 = vmul.f32 %v5540, %v5550
  %5554 = vrot.lane.b32.xlu0 %v5552, 32
  %v5555 = vpop.permute.xlu0 %5554
  %v5557 = vadd.f32 %v5547, %v5555
  %v5558 = vtanh.pop %v5557
  %5560 = vrot.lane.b32.xlu0 %v5558, 64
  %v5561 = vpop.permute.xlu0 %5560
  %v5563 = vmul.f32 %v5540, %v5561
  %5565 = vrot.lane.b32.xlu0 %v5563, 32
  %v5566 = vpop.permute.xlu0 %5565
  %v5567 = vsel %vm4530, %v5566, 0
  %v5570 = vsel %vm4530, %v5087, 0
  %v5573 = vsel %vm4530, %v5090, 0
  %5575 = vmatprep.subr.mxu0 0.0
  %5576 = vmatpush1.xpose.msra.mxu0 %v5570
  %5577 = vmatprep.subr.mxu0 0.0
  %5578 = vmatpush1.xpose.msra.mxu0 %v5573
  %5579 = vmatprep.subr.mxu0 0.0
  %5580 = vmatpush1.xpose.msra.mxu0 0.0
  %5581 = vmatprep.subr.mxu0 0.0
  %5582 = vmatpush1.xpose.msra.mxu0 0.0
  %5583 = vmatprep.subr.mxu0 0.0
  %5584 = vmatpush1.xpose.msra.mxu0 0.0
  %5585 = vmatprep.subr.mxu0 0.0
  %5586 = vmatpush1.xpose.msra.mxu0 0.0
  %5587 = vmatprep.subr.mxu0 0.0
  %5588 = vmatpush1.xpose.msra.mxu0 0.0
  %5589 = vmatprep.subr.mxu0 0.0
  %5590 = vmatpush1.xpose.msra.mxu0 0.0
  %5591 = vmatprep.subr.mxu0 0.0
  %5592 = vmatpush1.xpose.msra.mxu0 0.0
  %5593 = vmatprep.subr.mxu0 0.0
  %5594 = vmatpush1.xpose.msra.mxu0 0.0
  %5595 = vmatprep.subr.mxu0 0.0
  %5596 = vmatpush1.xpose.msra.mxu0 0.0
  %5597 = vmatprep.subr.mxu0 0.0
  %5598 = vmatpush1.xpose.msra.mxu0 0.0
  %5599 = vmatprep.subr.mxu0 0.0
  %5600 = vmatpush1.xpose.msra.mxu0 0.0
  %5601 = vmatprep.subr.mxu0 0.0
  %5602 = vmatpush1.xpose.msra.mxu0 0.0
  %5603 = vmatprep.subr.mxu0 0.0
  %5604 = vmatpush1.xpose.msra.mxu0 0.0
  %5605 = vmatprep.subr.mxu0 0.0
  %5606 = vmatpush1.xpose.msra.mxu0 0.0
  %5607 = vmatprep.subr.mxu0 0.0
  %5608 = vmatpush1.xpose.msra.mxu0 0.0
  %5609 = vmatprep.subr.mxu0 0.0
  %5610 = vmatpush1.xpose.msra.mxu0 0.0
  %5611 = vmatprep.subr.mxu0 0.0
  %5612 = vmatpush1.xpose.msra.mxu0 0.0
  %5613 = vmatprep.subr.mxu0 0.0
  %5614 = vmatpush1.xpose.msra.mxu0 0.0
  %5615 = vmatprep.subr.mxu0 0.0
  %5616 = vmatpush1.xpose.msra.mxu0 0.0
  %5617 = vmatprep.subr.mxu0 0.0
  %5618 = vmatpush1.xpose.msra.mxu0 0.0
  %5619 = vmatprep.subr.mxu0 0.0
  %5620 = vmatpush1.xpose.msra.mxu0 0.0
  %5621 = vmatprep.subr.mxu0 0.0
  %5622 = vmatpush1.xpose.msra.mxu0 0.0
  %5623 = vmatprep.subr.mxu0 0.0
  %5624 = vmatpush1.xpose.msra.mxu0 0.0
  %5625 = vmatprep.subr.mxu0 0.0
  %5626 = vmatpush1.xpose.msra.mxu0 0.0
  %5627 = vmatprep.subr.mxu0 0.0
  %5628 = vmatpush1.xpose.msra.mxu0 0.0
  %5629 = vmatprep.subr.mxu0 0.0
  %5630 = vmatpush1.xpose.msra.mxu0 0.0
  %5631 = vmatprep.subr.mxu0 0.0
  %5632 = vmatpush1.xpose.msra.mxu0 0.0
  %5633 = vmatprep.subr.mxu0 0.0
  %5634 = vmatpush1.xpose.msra.mxu0 0.0
  %5635 = vmatprep.subr.mxu0 0.0
  %5636 = vmatpush1.xpose.msra.mxu0 0.0
  %5637 = vmatprep.subr.mxu0 0.0
  %5638 = vmatpush1.xpose.msra.mxu0 0.0
  %5639 = vmatprep.mubr.f32.mxu0 0.0
  %5640 = vmatmul.mubr.f32.gmra.mrb[0].mxu0 %v5567
  %v5641 = vpop.f32.mrb[0].mxu0
  %v5642 = vadd.f32 0.0, %v5641
  %v5643 = vpop.f32.mrb[0].mxu0
  %5644 = vdwg.mxu0
  %vm5645 = vcmp.eq.f32.partialorder %v5155, 0.0
  %v5646 = vsel %vm5645, -1e+12, %v5642
  %vm5647 = vcmask 123904
  %v5648 = vsel %vm5647, %v5646, -inf
  %5649 = vmax.xlane.f32.xlu0 %v5648
  %v5650 = vpop.xlane.xlu0 %5649
  %v5651 = vsub.f32 %v5646, %v5650
  %v5652 = vmul.f32 %v5651, 1.442695
  %v5653 = vpow.pop %v5652
  %v5654 = vsel %vm5647, %v5653, 0.0
  %5655 = vadd.xlane.f32.xlu0 %v5654
  %v5656 = vpop.xlane.xlu0 %5655
  %v5657 = vrcp.pop %v5656
  %v5658 = vmul.f32 %v5653, %v5657
  %v5660 = vsel %vm1017, %v5658, 0
  %5662 = vmatprep.subr.mxu0 0.0
  %5663 = vmatpush1.msra.mxu0 %v5087
  %5664 = vmatprep.subr.mxu0 0.0
  %5665 = vmatpush1.msra.mxu0 %v5090
  %5666 = vmatprep.subr.mxu0 0.0
  %5667 = vmatpush1.msra.mxu0 0.0
  %5668 = vmatprep.subr.mxu0 0.0
  %5669 = vmatpush1.msra.mxu0 0.0
  %5670 = vmatprep.subr.mxu0 0.0
  %5671 = vmatpush1.msra.mxu0 0.0
  %5672 = vmatprep.subr.mxu0 0.0
  %5673 = vmatpush1.msra.mxu0 0.0
  %5674 = vmatprep.subr.mxu0 0.0
  %5675 = vmatpush1.msra.mxu0 0.0
  %5676 = vmatprep.subr.mxu0 0.0
  %5677 = vmatpush1.msra.mxu0 0.0
  %5678 = vmatprep.subr.mxu0 0.0
  %5679 = vmatpush1.msra.mxu0 0.0
  %5680 = vmatprep.subr.mxu0 0.0
  %5681 = vmatpush1.msra.mxu0 0.0
  %5682 = vmatprep.subr.mxu0 0.0
  %5683 = vmatpush1.msra.mxu0 0.0
  %5684 = vmatprep.subr.mxu0 0.0
  %5685 = vmatpush1.msra.mxu0 0.0
  %5686 = vmatprep.subr.mxu0 0.0
  %5687 = vmatpush1.msra.mxu0 0.0
  %5688 = vmatprep.subr.mxu0 0.0
  %5689 = vmatpush1.msra.mxu0 0.0
  %5690 = vmatprep.subr.mxu0 0.0
  %5691 = vmatpush1.msra.mxu0 0.0
  %5692 = vmatprep.subr.mxu0 0.0
  %5693 = vmatpush1.msra.mxu0 0.0
  %5694 = vmatprep.subr.mxu0 0.0
  %5695 = vmatpush1.msra.mxu0 0.0
  %5696 = vmatprep.subr.mxu0 0.0
  %5697 = vmatpush1.msra.mxu0 0.0
  %5698 = vmatprep.subr.mxu0 0.0
  %5699 = vmatpush1.msra.mxu0 0.0
  %5700 = vmatprep.subr.mxu0 0.0
  %5701 = vmatpush1.msra.mxu0 0.0
  %5702 = vmatprep.subr.mxu0 0.0
  %5703 = vmatpush1.msra.mxu0 0.0
  %5704 = vmatprep.subr.mxu0 0.0
  %5705 = vmatpush1.msra.mxu0 0.0
  %5706 = vmatprep.subr.mxu0 0.0
  %5707 = vmatpush1.msra.mxu0 0.0
  %5708 = vmatprep.subr.mxu0 0.0
  %5709 = vmatpush1.msra.mxu0 0.0
  %5710 = vmatprep.subr.mxu0 0.0
  %5711 = vmatpush1.msra.mxu0 0.0
  %5712 = vmatprep.subr.mxu0 0.0
  %5713 = vmatpush1.msra.mxu0 0.0
  %5714 = vmatprep.subr.mxu0 0.0
  %5715 = vmatpush1.msra.mxu0 0.0
  %5716 = vmatprep.subr.mxu0 0.0
  %5717 = vmatpush1.msra.mxu0 0.0
  %5718 = vmatprep.subr.mxu0 0.0
  %5719 = vmatpush1.msra.mxu0 0.0
  %5720 = vmatprep.subr.mxu0 0.0
  %5721 = vmatpush1.msra.mxu0 0.0
  %5722 = vmatprep.subr.mxu0 0.0
  %5723 = vmatpush1.msra.mxu0 0.0
  %5724 = vmatprep.subr.mxu0 0.0
  %5725 = vmatpush1.msra.mxu0 0.0
  %5726 = vmatprep.mubr.f32.mxu0 0.0
  %5727 = vmatmul.mubr.f32.gmra.mrb[0].mxu0 %v5660
  %v5728 = vpop.f32.mrb[0].mxu0
  %v5729 = vadd.f32 0.0, %v5728
  %v5730 = vpop.f32.mrb[0].mxu0
  %5731 = vdwg.mxu0
  %v5732 = vpack.c.bf16 %v5729, %v5729
  %v5734 = vsel %vm4530, %v5732, 0
  %5736 = vmatprep.subr.bf16.mxu0 0
  %5737 = vmatpush1.bf16.msra.mxu0 %v5232
  %5738 = vmatprep.subr.bf16.mxu0 0
  %5739 = vmatpush1.bf16.msra.mxu0 %v5233
  %5740 = vmatprep.subr.bf16.mxu0 0
  %5741 = vmatpush1.bf16.msra.mxu0 0
  %5742 = vmatprep.subr.bf16.mxu0 0
  %5743 = vmatpush1.bf16.msra.mxu0 0
  %5744 = vmatprep.subr.bf16.mxu0 0
  %5745 = vmatpush1.bf16.msra.mxu0 0
  %5746 = vmatprep.subr.bf16.mxu0 0
  %5747 = vmatpush1.bf16.msra.mxu0 0
  %5748 = vmatprep.subr.bf16.mxu0 0
  %5749 = vmatpush1.bf16.msra.mxu0 0
  %5750 = vmatprep.subr.bf16.mxu0 0
  %5751 = vmatpush1.bf16.msra.mxu0 0
  %5752 = vmatprep.subr.bf16.mxu0 0
  %5753 = vmatpush1.bf16.msra.mxu0 0
  %5754 = vmatprep.subr.bf16.mxu0 0
  %5755 = vmatpush1.bf16.msra.mxu0 0
  %5756 = vmatprep.subr.bf16.mxu0 0
  %5757 = vmatpush1.bf16.msra.mxu0 0
  %5758 = vmatprep.subr.bf16.mxu0 0
  %5759 = vmatpush1.bf16.msra.mxu0 0
  %5760 = vmatprep.subr.bf16.mxu0 0
  %5761 = vmatpush1.bf16.msra.mxu0 0
  %5762 = vmatprep.subr.bf16.mxu0 0
  %5763 = vmatpush1.bf16.msra.mxu0 0
  %5764 = vmatprep.subr.bf16.mxu0 0
  %5765 = vmatpush1.bf16.msra.mxu0 0
  %5766 = vmatprep.subr.bf16.mxu0 0
  %5767 = vmatpush1.bf16.msra.mxu0 0
  %5768 = vmatprep.mubr.bf16.mxu0 0
  %5769 = vmatmul.mubr.bf16.gmra.mrb[0].mxu0 %v5734
  %v5770 = vpop.f32.mrb[0].mxu0
  %v5771 = vadd.f32 0.0, %v5770
  %v5772 = vpop.f32.mrb[0].mxu0
  %v5773 = vpop.f32.mrb[0].mxu0
  %v5774 = vpop.f32.mrb[0].mxu0
  %5775 = vdwg.mxu0
  %v5777 = vrot.slane %v5771, 6
  %v5779 = vadd.f32 %v5149, %v5777
  %v5780 = vpack.c.bf16 %v5779, %v5779
  %5781 = vmatprep.subr.bf16.mxu0 0
  %5782 = vmatpush1.bf16.msra.mxu0 %v5291
  %5783 = vmatprep.subr.bf16.mxu0 0
  %5784 = vmatpush1.bf16.msra.mxu0 %v5292
  %5785 = vmatprep.subr.bf16.mxu0 0
  %5786 = vmatpush1.bf16.msra.mxu0 0
  %5787 = vmatprep.subr.bf16.mxu0 0
  %5788 = vmatpush1.bf16.msra.mxu0 0
  %5789 = vmatprep.subr.bf16.mxu0 0
  %5790 = vmatpush1.bf16.msra.mxu0 0
  %5791 = vmatprep.subr.bf16.mxu0 0
  %5792 = vmatpush1.bf16.msra.mxu0 0
  %5793 = vmatprep.subr.bf16.mxu0 0
  %5794 = vmatpush1.bf16.msra.mxu0 0
  %5795 = vmatprep.subr.bf16.mxu0 0
  %5796 = vmatpush1.bf16.msra.mxu0 0
  %5797 = vmatprep.subr.bf16.mxu0 0
  %5798 = vmatpush1.bf16.msra.mxu0 0
  %5799 = vmatprep.subr.bf16.mxu0 0
  %5800 = vmatpush1.bf16.msra.mxu0 0
  %5801 = vmatprep.subr.bf16.mxu0 0
  %5802 = vmatpush1.bf16.msra.mxu0 0
  %5803 = vmatprep.subr.bf16.mxu0 0
  %5804 = vmatpush1.bf16.msra.mxu0 0
  %5805 = vmatprep.subr.bf16.mxu0 0
  %5806 = vmatpush1.bf16.msra.mxu0 0
  %5807 = vmatprep.subr.bf16.mxu0 0
  %5808 = vmatpush1.bf16.msra.mxu0 0
  %5809 = vmatprep.subr.bf16.mxu0 0
  %5810 = vmatpush1.bf16.msra.mxu0 0
  %5811 = vmatprep.subr.bf16.mxu0 0
  %5812 = vmatpush1.bf16.msra.mxu0 0
  %5813 = vmatprep.mubr.bf16.mxu0 0
  %5814 = vmatmul.mubr.bf16.gmra.mrb[0].mxu0 %v5492
  %v5815 = vpop.f32.mrb[0].mxu0
  %v5816 = vadd.f32 0.0, %v5815
  %v5817 = vpop.f32.mrb[0].mxu0
  %v5818 = vpop.f32.mrb[0].mxu0
  %v5819 = vpop.f32.mrb[0].mxu0
  %5820 = vdwg.mxu0
  %v5822 = vrot.slane %v5780, 1
  %v5824 = vsel %vm1017, %v5822, 0
  %5826 = vmatprep.subr.bf16.mxu0 0
  %5827 = vmatpush1.bf16.msra.mxu0 %v5342
  %5828 = vmatprep.subr.bf16.mxu0 0
  %5829 = vmatpush1.bf16.msra.mxu0 0
  %5830 = vmatprep.subr.bf16.mxu0 0
  %5831 = vmatpush1.bf16.msra.mxu0 0
  %5832 = vmatprep.subr.bf16.mxu0 0
  %5833 = vmatpush1.bf16.msra.mxu0 0
  %5834 = vmatprep.subr.bf16.mxu0 0
  %5835 = vmatpush1.bf16.msra.mxu0 0
  %5836 = vmatprep.subr.bf16.mxu0 0
  %5837 = vmatpush1.bf16.msra.mxu0 0
  %5838 = vmatprep.subr.bf16.mxu0 0
  %5839 = vmatpush1.bf16.msra.mxu0 0
  %5840 = vmatprep.subr.bf16.mxu0 0
  %5841 = vmatpush1.bf16.msra.mxu0 0
  %5842 = vmatprep.subr.bf16.mxu0 0
  %5843 = vmatpush1.bf16.msra.mxu0 0
  %5844 = vmatprep.subr.bf16.mxu0 0
  %5845 = vmatpush1.bf16.msra.mxu0 0
  %5846 = vmatprep.subr.bf16.mxu0 0
  %5847 = vmatpush1.bf16.msra.mxu0 0
  %5848 = vmatprep.subr.bf16.mxu0 0
  %5849 = vmatpush1.bf16.msra.mxu0 0
  %5850 = vmatprep.subr.bf16.mxu0 0
  %5851 = vmatpush1.bf16.msra.mxu0 0
  %5852 = vmatprep.subr.bf16.mxu0 0
  %5853 = vmatpush1.bf16.msra.mxu0 0
  %5854 = vmatprep.subr.bf16.mxu0 0
  %5855 = vmatpush1.bf16.msra.mxu0 0
  %5856 = vmatprep.subr.bf16.mxu0 0
  %5857 = vmatpush1.bf16.msra.mxu0 0
  %5858 = vmatprep.mubr.bf16.mxu0 0
  %5859 = vmatmul.mubr.bf16.gmra.mrb[0].mxu0 %v5824
  %v5860 = vpop.f32.mrb[0].mxu0
  %v5861 = vadd.f32 %v5816, %v5860
  %v5862 = vpop.f32.mrb[0].mxu0
  %v5863 = vpop.f32.mrb[0].mxu0
  %v5864 = vpop.f32.mrb[0].mxu0
  %5865 = vdwg.mxu0
  %v5866 = vadd.f32 %v5861, %v5179
  %v5867 = vxor.u32 %v5866, 2147483648
  %v5868 = vmul.f32 %v5867, 1.442695
  %v5869 = vpow.pop %v5868
  %v5870 = vadd.f32 %v5869, 1.0
  %v5871 = vrcp.pop %v5870
  %v5872 = vmul.f32 1.0, %v5871
  %v5873 = vtanh.pop %v5866
  %v5874 = vmul.f32 %v5872, %v5410
  %5876 = vrot.lane.b32.xlu0 %v5873, 64
  %v5877 = vpop.permute.xlu0 %5876
  %v5879 = vmul.f32 %v5872, %v5877
  %5881 = vrot.lane.b32.xlu0 %v5879, 32
  %v5882 = vpop.permute.xlu0 %5881
  %v5884 = vadd.f32 %v5874, %v5882
  %v5885 = vtanh.pop %v5884
  %5887 = vrot.lane.b32.xlu0 %v5885, 64
  %v5888 = vpop.permute.xlu0 %5887
  %v5890 = vmul.f32 %v5872, %v5888
  %v5891 = vpack.c.bf16 %v5890, %v5890
  %v5892 = vpack.c.bf16 %v5563, %v5563
  %5894 = vrot.lane.b32.xlu0 %v5892, 32
  %v5895 = vpop.permute.xlu0 %5894
  %v5897 = vsel %vm4530, %v5895, 0
  %5899 = vmatprep.subr.bf16.mxu0 0
  %5900 = vmatpush1.bf16.msra.mxu0 %v5429
  %5901 = vmatprep.subr.bf16.mxu0 0
  %5902 = vmatpush1.bf16.msra.mxu0 %v5430
  %5903 = vmatprep.subr.bf16.mxu0 0
  %5904 = vmatpush1.bf16.msra.mxu0 0
  %5905 = vmatprep.subr.bf16.mxu0 0
  %5906 = vmatpush1.bf16.msra.mxu0 0
  %5907 = vmatprep.subr.bf16.mxu0 0
  %5908 = vmatpush1.bf16.msra.mxu0 0
  %5909 = vmatprep.subr.bf16.mxu0 0
  %5910 = vmatpush1.bf16.msra.mxu0 0
  %5911 = vmatprep.subr.bf16.mxu0 0
  %5912 = vmatpush1.bf16.msra.mxu0 0
  %5913 = vmatprep.subr.bf16.mxu0 0
  %5914 = vmatpush1.bf16.msra.mxu0 0
  %5915 = vmatprep.subr.bf16.mxu0 0
  %5916 = vmatpush1.bf16.msra.mxu0 0
  %5917 = vmatprep.subr.bf16.mxu0 0
  %5918 = vmatpush1.bf16.msra.mxu0 0
  %5919 = vmatprep.subr.bf16.mxu0 0
  %5920 = vmatpush1.bf16.msra.mxu0 0
  %5921 = vmatprep.subr.bf16.mxu0 0
  %5922 = vmatpush1.bf16.msra.mxu0 0
  %5923 = vmatprep.subr.bf16.mxu0 0
  %5924 = vmatpush1.bf16.msra.mxu0 0
  %5925 = vmatprep.subr.bf16.mxu0 0
  %5926 = vmatpush1.bf16.msra.mxu0 0
  %5927 = vmatprep.subr.bf16.mxu0 0
  %5928 = vmatpush1.bf16.msra.mxu0 0
  %5929 = vmatprep.subr.bf16.mxu0 0
  %5930 = vmatpush1.bf16.msra.mxu0 0
  %5931 = vmatprep.mubr.bf16.mxu0 0
  %5932 = vmatmul.mubr.bf16.gmra.mrb[0].mxu0 %v5897
  %v5933 = vpop.f32.mrb[0].mxu0
  %v5934 = vadd.f32 0.0, %v5933
  %v5935 = vpop.f32.mrb[0].mxu0
  %v5936 = vpop.f32.mrb[0].mxu0
  %v5937 = vpop.f32.mrb[0].mxu0
  %5938 = vdwg.mxu0
  %5940 = vrot.lane.b32.xlu0 %v5891, 32
  %v5941 = vpop.permute.xlu0 %5940
  %v5943 = vsel %vm4530, %v5941, 0
  %5945 = vmatprep.subr.bf16.mxu0 0
  %5946 = vmatpush1.bf16.msra.mxu0 %v5487
  %5947 = vmatprep.subr.bf16.mxu0 0
  %5948 = vmatpush1.bf16.msra.mxu0 %v5488
  %5949 = vmatprep.subr.bf16.mxu0 0
  %5950 = vmatpush1.bf16.msra.mxu0 0
  %5951 = vmatprep.subr.bf16.mxu0 0
  %5952 = vmatpush1.bf16.msra.mxu0 0
  %5953 = vmatprep.subr.bf16.mxu0 0
  %5954 = vmatpush1.bf16.msra.mxu0 0
  %5955 = vmatprep.subr.bf16.mxu0 0
  %5956 = vmatpush1.bf16.msra.mxu0 0
  %5957 = vmatprep.subr.bf16.mxu0 0
  %5958 = vmatpush1.bf16.msra.mxu0 0
  %5959 = vmatprep.subr.bf16.mxu0 0
  %5960 = vmatpush1.bf16.msra.mxu0 0
  %5961 = vmatprep.subr.bf16.mxu0 0
  %5962 = vmatpush1.bf16.msra.mxu0 0
  %5963 = vmatprep.subr.bf16.mxu0 0
  %5964 = vmatpush1.bf16.msra.mxu0 0
  %5965 = vmatprep.subr.bf16.mxu0 0
  %5966 = vmatpush1.bf16.msra.mxu0 0
  %5967 = vmatprep.subr.bf16.mxu0 0
  %5968 = vmatpush1.bf16.msra.mxu0 0
  %5969 = vmatprep.subr.bf16.mxu0 0
  %5970 = vmatpush1.bf16.msra.mxu0 0
  %5971 = vmatprep.subr.bf16.mxu0 0
  %5972 = vmatpush1.bf16.msra.mxu0 0
  %5973 = vmatprep.subr.bf16.mxu0 0
  %5974 = vmatpush1.bf16.msra.mxu0 0
  %5975 = vmatprep.subr.bf16.mxu0 0
  %5976 = vmatpush1.bf16.msra.mxu0 0
  %5977 = vmatprep.mubr.bf16.mxu0 0
  %5978 = vmatmul.mubr.bf16.gmra.mrb[0].mxu0 %v5943
  %v5979 = vpop.f32.mrb[0].mxu0
  %v5980 = vadd.f32 %v5934, %v5979
  %v5981 = vpop.f32.mrb[0].mxu0
  %v5982 = vpop.f32.mrb[0].mxu0
  %v5983 = vpop.f32.mrb[0].mxu0
  %5984 = vdwg.mxu0
  %v5985 = vadd.f32 %v5980, %v5186
  %v5986 = vxor.u32 %v5985, 2147483648
  %v5987 = vmul.f32 %v5986, 1.442695
  %v5988 = vpow.pop %v5987
  %v5989 = vadd.f32 %v5988, 1.0
  %v5990 = vrcp.pop %v5989
  %v5991 = vmul.f32 1.0, %v5990
  %v5992 = vtanh.pop %v5985
  %v5993 = vmul.f32 %v5991, %v5557
  %5995 = vrot.lane.b32.xlu0 %v5992, 64
  %v5996 = vpop.permute.xlu0 %5995
  %v5998 = vmul.f32 %v5991, %v5996
  %6000 = vrot.lane.b32.xlu0 %v5998, 32
  %v6001 = vpop.permute.xlu0 %6000
  %v6003 = vadd.f32 %v5993, %v6001
  %v6004 = vtanh.pop %v6003
  %6006 = vrot.lane.b32.xlu0 %v6004, 64
  %v6007 = vpop.permute.xlu0 %6006
  %v6009 = vmul.f32 %v5991, %v6007
  %6011 = vrot.lane.b32.xlu0 %v6009, 32
  %v6012 = vpop.permute.xlu0 %6011
  %v6013 = vsel %vm4530, %v6012, 0
  %6015 = vmatprep.subr.mxu0 0.0
  %6016 = vmatpush1.xpose.msra.mxu0 %v5570
  %6017 = vmatprep.subr.mxu0 0.0
  %6018 = vmatpush1.xpose.msra.mxu0 %v5573
  %6019 = vmatprep.subr.mxu0 0.0
  %6020 = vmatpush1.xpose.msra.mxu0 0.0
  %6021 = vmatprep.subr.mxu0 0.0
  %6022 = vmatpush1.xpose.msra.mxu0 0.0
  %6023 = vmatprep.subr.mxu0 0.0
  %6024 = vmatpush1.xpose.msra.mxu0 0.0
  %6025 = vmatprep.subr.mxu0 0.0
  %6026 = vmatpush1.xpose.msra.mxu0 0.0
  %6027 = vmatprep.subr.mxu0 0.0
  %6028 = vmatpush1.xpose.msra.mxu0 0.0
  %6029 = vmatprep.subr.mxu0 0.0
  %6030 = vmatpush1.xpose.msra.mxu0 0.0
  %6031 = vmatprep.subr.mxu0 0.0
  %6032 = vmatpush1.xpose.msra.mxu0 0.0
  %6033 = vmatprep.subr.mxu0 0.0
  %6034 = vmatpush1.xpose.msra.mxu0 0.0
  %6035 = vmatprep.subr.mxu0 0.0
  %6036 = vmatpush1.xpose.msra.mxu0 0.0
  %6037 = vmatprep.subr.mxu0 0.0
  %6038 = vmatpush1.xpose.msra.mxu0 0.0
  %6039 = vmatprep.subr.mxu0 0.0
  %6040 = vmatpush1.xpose.msra.mxu0 0.0
  %6041 = vmatprep.subr.mxu0 0.0
  %6042 = vmatpush1.xpose.msra.mxu0 0.0
  %6043 = vmatprep.subr.mxu0 0.0
  %6044 = vmatpush1.xpose.msra.mxu0 0.0
  %6045 = vmatprep.subr.mxu0 0.0
  %6046 = vmatpush1.xpose.msra.mxu0 0.0
  %6047 = vmatprep.subr.mxu0 0.0
  %6048 = vmatpush1.xpose.msra.mxu0 0.0
  %6049 = vmatprep.subr.mxu0 0.0
  %6050 = vmatpush1.xpose.msra.mxu0 0.0
  %6051 = vmatprep.subr.mxu0 0.0
  %6052 = vmatpush1.xpose.msra.mxu0 0.0
  %6053 = vmatprep.subr.mxu0 0.0
  %6054 = vmatpush1.xpose.msra.mxu0 0.0
  %6055 = vmatprep.subr.mxu0 0.0
  %6056 = vmatpush1.xpose.msra.mxu0 0.0
  %6057 = vmatprep.subr.mxu0 0.0
  %6058 = vmatpush1.xpose.msra.mxu0 0.0
  %6059 = vmatprep.subr.mxu0 0.0
  %6060 = vmatpush1.xpose.msra.mxu0 0.0
  %6061 = vmatprep.subr.mxu0 0.0
  %6062 = vmatpush1.xpose.msra.mxu0 0.0
  %6063 = vmatprep.subr.mxu0 0.0
  %6064 = vmatpush1.xpose.msra.mxu0 0.0
  %6065 = vmatprep.subr.mxu0 0.0
  %6066 = vmatpush1.xpose.msra.mxu0 0.0
  %6067 = vmatprep.subr.mxu0 0.0
  %6068 = vmatpush1.xpose.msra.mxu0 0.0
  %6069 = vmatprep.subr.mxu0 0.0
  %6070 = vmatpush1.xpose.msra.mxu0 0.0
  %6071 = vmatprep.subr.mxu0 0.0
  %6072 = vmatpush1.xpose.msra.mxu0 0.0
  %6073 = vmatprep.subr.mxu0 0.0
  %6074 = vmatpush1.xpose.msra.mxu0 0.0
  %6075 = vmatprep.subr.mxu0 0.0
  %6076 = vmatpush1.xpose.msra.mxu0 0.0
  %6077 = vmatprep.subr.mxu0 0.0
  %6078 = vmatpush1.xpose.msra.mxu0 0.0
  %6079 = vmatprep.mubr.f32.mxu0 0.0
  %6080 = vmatmul.mubr.f32.gmra.mrb[0].mxu0 %v6013
  %v6081 = vpop.f32.mrb[0].mxu0
  %v6082 = vadd.f32 0.0, %v6081
  %v6083 = vpop.f32.mrb[0].mxu0
  %6084 = vdwg.mxu0
  %v6085 = vsel %vm5645, -1e+12, %v6082
  %v6086 = vsel %vm5647, %v6085, -inf
  %6087 = vmax.xlane.f32.xlu0 %v6086
  %v6088 = vpop.xlane.xlu0 %6087
  %v6089 = vsub.f32 %v6085, %v6088
  %v6090 = vmul.f32 %v6089, 1.442695
  %v6091 = vpow.pop %v6090
  %v6092 = vsel %vm5647, %v6091, 0.0
  %6093 = vadd.xlane.f32.xlu0 %v6092
  %v6094 = vpop.xlane.xlu0 %6093
  %v6095 = vrcp.pop %v6094
  %v6096 = vmul.f32 %v6091, %v6095
  %v6098 = vsel %vm1017, %v6096, 0
  %6100 = vmatprep.subr.mxu0 0.0
  %6101 = vmatpush1.msra.mxu0 %v5087
  %6102 = vmatprep.subr.mxu0 0.0
  %6103 = vmatpush1.msra.mxu0 %v5090
  %6104 = vmatprep.subr.mxu0 0.0
  %6105 = vmatpush1.msra.mxu0 0.0
  %6106 = vmatprep.subr.mxu0 0.0
  %6107 = vmatpush1.msra.mxu0 0.0
  %6108 = vmatprep.subr.mxu0 0.0
  %6109 = vmatpush1.msra.mxu0 0.0
  %6110 = vmatprep.subr.mxu0 0.0
  %6111 = vmatpush1.msra.mxu0 0.0
  %6112 = vmatprep.subr.mxu0 0.0
  %6113 = vmatpush1.msra.mxu0 0.0
  %6114 = vmatprep.subr.mxu0 0.0
  %6115 = vmatpush1.msra.mxu0 0.0
  %6116 = vmatprep.subr.mxu0 0.0
  %6117 = vmatpush1.msra.mxu0 0.0
  %6118 = vmatprep.subr.mxu0 0.0
  %6119 = vmatpush1.msra.mxu0 0.0
  %6120 = vmatprep.subr.mxu0 0.0
  %6121 = vmatpush1.msra.mxu0 0.0
  %6122 = vmatprep.subr.mxu0 0.0
  %6123 = vmatpush1.msra.mxu0 0.0
  %6124 = vmatprep.subr.mxu0 0.0
  %6125 = vmatpush1.msra.mxu0 0.0
  %6126 = vmatprep.subr.mxu0 0.0
  %6127 = vmatpush1.msra.mxu0 0.0
  %6128 = vmatprep.subr.mxu0 0.0
  %6129 = vmatpush1.msra.mxu0 0.0
  %6130 = vmatprep.subr.mxu0 0.0
  %6131 = vmatpush1.msra.mxu0 0.0
  %6132 = vmatprep.subr.mxu0 0.0
  %6133 = vmatpush1.msra.mxu0 0.0
  %6134 = vmatprep.subr.mxu0 0.0
  %6135 = vmatpush1.msra.mxu0 0.0
  %6136 = vmatprep.subr.mxu0 0.0
  %6137 = vmatpush1.msra.mxu0 0.0
  %6138 = vmatprep.subr.mxu0 0.0
  %6139 = vmatpush1.msra.mxu0 0.0
  %6140 = vmatprep.subr.mxu0 0.0
  %6141 = vmatpush1.msra.mxu0 0.0
  %6142 = vmatprep.subr.mxu0 0.0
  %6143 = vmatpush1.msra.mxu0 0.0
  %6144 = vmatprep.subr.mxu0 0.0
  %6145 = vmatpush1.msra.mxu0 0.0
  %6146 = vmatprep.subr.mxu0 0.0
  %6147 = vmatpush1.msra.mxu0 0.0
  %6148 = vmatprep.subr.mxu0 0.0
  %6149 = vmatpush1.msra.mxu0 0.0
  %6150 = vmatprep.subr.mxu0 0.0
  %6151 = vmatpush1.msra.mxu0 0.0
  %6152 = vmatprep.subr.mxu0 0.0
  %6153 = vmatpush1.msra.mxu0 0.0
  %6154 = vmatprep.subr.mxu0 0.0
  %6155 = vmatpush1.msra.mxu0 0.0
  %6156 = vmatprep.subr.mxu0 0.0
  %6157 = vmatpush1.msra.mxu0 0.0
  %6158 = vmatprep.subr.mxu0 0.0
  %6159 = vmatpush1.msra.mxu0 0.0
  %6160 = vmatprep.subr.mxu0 0.0
  %6161 = vmatpush1.msra.mxu0 0.0
  %6162 = vmatprep.subr.mxu0 0.0
  %6163 = vmatpush1.msra.mxu0 0.0
  %6164 = vmatprep.mubr.f32.mxu0 0.0
  %6165 = vmatmul.mubr.f32.gmra.mrb[0].mxu0 %v6098
  %v6166 = vpop.f32.mrb[0].mxu0
  %v6167 = vadd.f32 0.0, %v6166
  %v6168 = vpop.f32.mrb[0].mxu0
  %6169 = vdwg.mxu0
  %v6170 = vpack.c.bf16 %v6167, %v6167
  %v6172 = vsel %vm4530, %v6170, 0
  %6174 = vmatprep.subr.bf16.mxu0 0
  %6175 = vmatpush1.bf16.msra.mxu0 %v5232
  %6176 = vmatprep.subr.bf16.mxu0 0
  %6177 = vmatpush1.bf16.msra.mxu0 %v5233
  %6178 = vmatprep.subr.bf16.mxu0 0
  %6179 = vmatpush1.bf16.msra.mxu0 0
  %6180 = vmatprep.subr.bf16.mxu0 0
  %6181 = vmatpush1.bf16.msra.mxu0 0
  %6182 = vmatprep.subr.bf16.mxu0 0
  %6183 = vmatpush1.bf16.msra.mxu0 0
  %6184 = vmatprep.subr.bf16.mxu0 0
  %6185 = vmatpush1.bf16.msra.mxu0 0
  %6186 = vmatprep.subr.bf16.mxu0 0
  %6187 = vmatpush1.bf16.msra.mxu0 0
  %6188 = vmatprep.subr.bf16.mxu0 0
  %6189 = vmatpush1.bf16.msra.mxu0 0
  %6190 = vmatprep.subr.bf16.mxu0 0
  %6191 = vmatpush1.bf16.msra.mxu0 0
  %6192 = vmatprep.subr.bf16.mxu0 0
  %6193 = vmatpush1.bf16.msra.mxu0 0
  %6194 = vmatprep.subr.bf16.mxu0 0
  %6195 = vmatpush1.bf16.msra.mxu0 0
  %6196 = vmatprep.subr.bf16.mxu0 0
  %6197 = vmatpush1.bf16.msra.mxu0 0
  %6198 = vmatprep.subr.bf16.mxu0 0
  %6199 = vmatpush1.bf16.msra.mxu0 0
  %6200 = vmatprep.subr.bf16.mxu0 0
  %6201 = vmatpush1.bf16.msra.mxu0 0
  %6202 = vmatprep.subr.bf16.mxu0 0
  %6203 = vmatpush1.bf16.msra.mxu0 0
  %6204 = vmatprep.subr.bf16.mxu0 0
  %6205 = vmatpush1.bf16.msra.mxu0 0
  %6206 = vmatprep.mubr.bf16.mxu0 0
  %6207 = vmatmul.mubr.bf16.gmra.mrb[0].mxu0 %v6172
  %v6208 = vpop.f32.mrb[0].mxu0
  %v6209 = vadd.f32 0.0, %v6208
  %v6210 = vpop.f32.mrb[0].mxu0
  %v6211 = vpop.f32.mrb[0].mxu0
  %v6212 = vpop.f32.mrb[0].mxu0
  %6213 = vdwg.mxu0
  %v6215 = vrot.slane %v6209, 4
  %v6217 = vadd.f32 %v5149, %v6215
  %v6218 = vpack.c.bf16 %v6217, %v6217
  %6219 = vmatprep.subr.bf16.mxu0 0
  %6220 = vmatpush1.bf16.msra.mxu0 %v5291
  %6221 = vmatprep.subr.bf16.mxu0 0
  %6222 = vmatpush1.bf16.msra.mxu0 %v5292
  %6223 = vmatprep.subr.bf16.mxu0 0
  %6224 = vmatpush1.bf16.msra.mxu0 0
  %6225 = vmatprep.subr.bf16.mxu0 0
  %6226 = vmatpush1.bf16.msra.mxu0 0
  %6227 = vmatprep.subr.bf16.mxu0 0
  %6228 = vmatpush1.bf16.msra.mxu0 0
  %6229 = vmatprep.subr.bf16.mxu0 0
  %6230 = vmatpush1.bf16.msra.mxu0 0
  %6231 = vmatprep.subr.bf16.mxu0 0
  %6232 = vmatpush1.bf16.msra.mxu0 0
  %6233 = vmatprep.subr.bf16.mxu0 0
  %6234 = vmatpush1.bf16.msra.mxu0 0
  %6235 = vmatprep.subr.bf16.mxu0 0
  %6236 = vmatpush1.bf16.msra.mxu0 0
  %6237 = vmatprep.subr.bf16.mxu0 0
  %6238 = vmatpush1.bf16.msra.mxu0 0
  %6239 = vmatprep.subr.bf16.mxu0 0
  %6240 = vmatpush1.bf16.msra.mxu0 0
  %6241 = vmatprep.subr.bf16.mxu0 0
  %6242 = vmatpush1.bf16.msra.mxu0 0
  %6243 = vmatprep.subr.bf16.mxu0 0
  %6244 = vmatpush1.bf16.msra.mxu0 0
  %6245 = vmatprep.subr.bf16.mxu0 0
  %6246 = vmatpush1.bf16.msra.mxu0 0
  %6247 = vmatprep.subr.bf16.mxu0 0
  %6248 = vmatpush1.bf16.msra.mxu0 0
  %6249 = vmatprep.subr.bf16.mxu0 0
  %6250 = vmatpush1.bf16.msra.mxu0 0
  %6251 = vmatprep.mubr.bf16.mxu0 0
  %6252 = vmatmul.mubr.bf16.gmra.mrb[0].mxu0 %v5943
  %v6253 = vpop.f32.mrb[0].mxu0
  %v6254 = vadd.f32 0.0, %v6253
  %v6255 = vpop.f32.mrb[0].mxu0
  %v6256 = vpop.f32.mrb[0].mxu0
  %v6257 = vpop.f32.mrb[0].mxu0
  %6258 = vdwg.mxu0
  %v6260 = vrot.slane %v6218, 2
  %v6262 = vsel %vm1017, %v6260, 0
  %6264 = vmatprep.subr.bf16.mxu0 0
  %6265 = vmatpush1.bf16.msra.mxu0 %v5342
  %6266 = vmatprep.subr.bf16.mxu0 0
  %6267 = vmatpush1.bf16.msra.mxu0 0
  %6268 = vmatprep.subr.bf16.mxu0 0
  %6269 = vmatpush1.bf16.msra.mxu0 0
  %6270 = vmatprep.subr.bf16.mxu0 0
  %6271 = vmatpush1.bf16.msra.mxu0 0
  %6272 = vmatprep.subr.bf16.mxu0 0
  %6273 = vmatpush1.bf16.msra.mxu0 0
  %6274 = vmatprep.subr.bf16.mxu0 0
  %6275 = vmatpush1.bf16.msra.mxu0 0
  %6276 = vmatprep.subr.bf16.mxu0 0
  %6277 = vmatpush1.bf16.msra.mxu0 0
  %6278 = vmatprep.subr.bf16.mxu0 0
  %6279 = vmatpush1.bf16.msra.mxu0 0
  %6280 = vmatprep.subr.bf16.mxu0 0
  %6281 = vmatpush1.bf16.msra.mxu0 0
  %6282 = vmatprep.subr.bf16.mxu0 0
  %6283 = vmatpush1.bf16.msra.mxu0 0
  %6284 = vmatprep.subr.bf16.mxu0 0
  %6285 = vmatpush1.bf16.msra.mxu0 0
  %6286 = vmatprep.subr.bf16.mxu0 0
  %6287 = vmatpush1.bf16.msra.mxu0 0
  %6288 = vmatprep.subr.bf16.mxu0 0
  %6289 = vmatpush1.bf16.msra.mxu0 0
  %6290 = vmatprep.subr.bf16.mxu0 0
  %6291 = vmatpush1.bf16.msra.mxu0 0
  %6292 = vmatprep.subr.bf16.mxu0 0
  %6293 = vmatpush1.bf16.msra.mxu0 0
  %6294 = vmatprep.subr.bf16.mxu0 0
  %6295 = vmatpush1.bf16.msra.mxu0 0
  %6296 = vmatprep.mubr.bf16.mxu0 0
  %6297 = vmatmul.mubr.bf16.gmra.mrb[0].mxu0 %v6262
  %v6298 = vpop.f32.mrb[0].mxu0
  %v6299 = vadd.f32 %v6254, %v6298
  %v6300 = vpop.f32.mrb[0].mxu0
  %v6301 = vpop.f32.mrb[0].mxu0
  %v6302 = vpop.f32.mrb[0].mxu0
  %6303 = vdwg.mxu0
  %v6304 = vadd.f32 %v6299, %v5179
  %v6305 = vxor.u32 %v6304, 2147483648
  %v6306 = vmul.f32 %v6305, 1.442695
  %v6307 = vpow.pop %v6306
  %v6308 = vadd.f32 %v6307, 1.0
  %v6309 = vrcp.pop %v6308
  %v6310 = vmul.f32 1.0, %v6309
  %v6311 = vtanh.pop %v6304
  %v6312 = vmul.f32 %v6310, %v5884
  %6314 = vrot.lane.b32.xlu0 %v6311, 64
  %v6315 = vpop.permute.xlu0 %6314
  %v6317 = vmul.f32 %v6310, %v6315
  %6319 = vrot.lane.b32.xlu0 %v6317, 32
  %v6320 = vpop.permute.xlu0 %6319
  %v6322 = vadd.f32 %v6312, %v6320
  %v6323 = vtanh.pop %v6322
  %6325 = vrot.lane.b32.xlu0 %v6323, 64
  %v6326 = vpop.permute.xlu0 %6325
  %v6328 = vmul.f32 %v6310, %v6326
  %v6329 = vpack.c.bf16 %v6328, %v6328
  %v6330 = vpack.c.bf16 %v6009, %v6009
  %6332 = vrot.lane.b32.xlu0 %v6330, 32
  %v6333 = vpop.permute.xlu0 %6332
  %v6335 = vsel %vm4530, %v6333, 0
  %6337 = vmatprep.subr.bf16.mxu0 0
  %6338 = vmatpush1.bf16.msra.mxu0 %v5429
  %6339 = vmatprep.subr.bf16.mxu0 0
  %6340 = vmatpush1.bf16.msra.mxu0 %v5430
  %6341 = vmatprep.subr.bf16.mxu0 0
  %6342 = vmatpush1.bf16.msra.mxu0 0
  %6343 = vmatprep.subr.bf16.mxu0 0
  %6344 = vmatpush1.bf16.msra.mxu0 0
  %6345 = vmatprep.subr.bf16.mxu0 0
  %6346 = vmatpush1.bf16.msra.mxu0 0
  %6347 = vmatprep.subr.bf16.mxu0 0
  %6348 = vmatpush1.bf16.msra.mxu0 0
  %6349 = vmatprep.subr.bf16.mxu0 0
  %6350 = vmatpush1.bf16.msra.mxu0 0
  %6351 = vmatprep.subr.bf16.mxu0 0
  %6352 = vmatpush1.bf16.msra.mxu0 0
  %6353 = vmatprep.subr.bf16.mxu0 0
  %6354 = vmatpush1.bf16.msra.mxu0 0
  %6355 = vmatprep.subr.bf16.mxu0 0
  %6356 = vmatpush1.bf16.msra.mxu0 0
  %6357 = vmatprep.subr.bf16.mxu0 0
  %6358 = vmatpush1.bf16.msra.mxu0 0
  %6359 = vmatprep.subr.bf16.mxu0 0
  %6360 = vmatpush1.bf16.msra.mxu0 0
  %6361 = vmatprep.subr.bf16.mxu0 0
  %6362 = vmatpush1.bf16.msra.mxu0 0
  %6363 = vmatprep.subr.bf16.mxu0 0
  %6364 = vmatpush1.bf16.msra.mxu0 0
  %6365 = vmatprep.subr.bf16.mxu0 0
  %6366 = vmatpush1.bf16.msra.mxu0 0
  %6367 = vmatprep.subr.bf16.mxu0 0
  %6368 = vmatpush1.bf16.msra.mxu0 0
  %6369 = vmatprep.mubr.bf16.mxu0 0
  %6370 = vmatmul.mubr.bf16.gmra.mrb[0].mxu0 %v6335
  %v6371 = vpop.f32.mrb[0].mxu0
  %v6372 = vadd.f32 0.0, %v6371
  %v6373 = vpop.f32.mrb[0].mxu0
  %v6374 = vpop.f32.mrb[0].mxu0
  %v6375 = vpop.f32.mrb[0].mxu0
  %6376 = vdwg.mxu0
  %6378 = vrot.lane.b32.xlu0 %v6329, 32
  %v6379 = vpop.permute.xlu0 %6378
  %v6381 = vsel %vm4530, %v6379, 0
  %6383 = vmatprep.subr.bf16.mxu0 0
  %6384 = vmatpush1.bf16.msra.mxu0 %v5487
  %6385 = vmatprep.subr.bf16.mxu0 0
  %6386 = vmatpush1.bf16.msra.mxu0 %v5488
  %6387 = vmatprep.subr.bf16.mxu0 0
  %6388 = vmatpush1.bf16.msra.mxu0 0
  %6389 = vmatprep.subr.bf16.mxu0 0
  %6390 = vmatpush1.bf16.msra.mxu0 0
  %6391 = vmatprep.subr.bf16.mxu0 0
  %6392 = vmatpush1.bf16.msra.mxu0 0
  %6393 = vmatprep.subr.bf16.mxu0 0
  %6394 = vmatpush1.bf16.msra.mxu0 0
  %6395 = vmatprep.subr.bf16.mxu0 0
  %6396 = vmatpush1.bf16.msra.mxu0 0
  %6397 = vmatprep.subr.bf16.mxu0 0
  %6398 = vmatpush1.bf16.msra.mxu0 0
  %6399 = vmatprep.subr.bf16.mxu0 0
  %6400 = vmatpush1.bf16.msra.mxu0 0
  %6401 = vmatprep.subr.bf16.mxu0 0
  %6402 = vmatpush1.bf16.msra.mxu0 0
  %6403 = vmatprep.subr.bf16.mxu0 0
  %6404 = vmatpush1.bf16.msra.mxu0 0
  %6405 = vmatprep.subr.bf16.mxu0 0
  %6406 = vmatpush1.bf16.msra.mxu0 0
  %6407 = vmatprep.subr.bf16.mxu0 0
  %6408 = vmatpush1.bf16.msra.mxu0 0
  %6409 = vmatprep.subr.bf16.mxu0 0
  %6410 = vmatpush1.bf16.msra.mxu0 0
  %6411 = vmatprep.subr.bf16.mxu0 0
  %6412 = vmatpush1.bf16.msra.mxu0 0
  %6413 = vmatprep.subr.bf16.mxu0 0
  %6414 = vmatpush1.bf16.msra.mxu0 0
  %6415 = vmatprep.mubr.bf16.mxu0 0
  %6416 = vmatmul.mubr.bf16.gmra.mrb[0].mxu0 %v6381
  %v6417 = vpop.f32.mrb[0].mxu0
  %v6418 = vadd.f32 %v6372, %v6417
  %v6419 = vpop.f32.mrb[0].mxu0
  %v6420 = vpop.f32.mrb[0].mxu0
  %v6421 = vpop.f32.mrb[0].mxu0
  %6422 = vdwg.mxu0
  %v6423 = vadd.f32 %v6418, %v5186
  %v6424 = vxor.u32 %v6423, 2147483648
  %v6425 = vmul.f32 %v6424, 1.442695
  %v6426 = vpow.pop %v6425
  %v6427 = vadd.f32 %v6426, 1.0
  %v6428 = vrcp.pop %v6427
  %v6429 = vmul.f32 1.0, %v6428
  %v6430 = vtanh.pop %v6423
  %v6431 = vmul.f32 %v6429, %v6003
  %6433 = vrot.lane.b32.xlu0 %v6430, 64
  %v6434 = vpop.permute.xlu0 %6433
  %v6436 = vmul.f32 %v6429, %v6434
  %6438 = vrot.lane.b32.xlu0 %v6436, 32
  %v6439 = vpop.permute.xlu0 %6438
  %v6441 = vadd.f32 %v6431, %v6439
  %v6442 = vtanh.pop %v6441
  %6444 = vrot.lane.b32.xlu0 %v6442, 64
  %v6445 = vpop.permute.xlu0 %6444
  %v6447 = vmul.f32 %v6429, %v6445
  %6449 = vrot.lane.b32.xlu0 %v6447, 32
  %v6450 = vpop.permute.xlu0 %6449
  %v6451 = vsel %vm4530, %v6450, 0
  %6453 = vmatprep.subr.mxu0 0.0
  %6454 = vmatpush1.xpose.msra.mxu0 %v5570
  %6455 = vmatprep.subr.mxu0 0.0
  %6456 = vmatpush1.xpose.msra.mxu0 %v5573
  %6457 = vmatprep.subr.mxu0 0.0
  %6458 = vmatpush1.xpose.msra.mxu0 0.0
  %6459 = vmatprep.subr.mxu0 0.0
  %6460 = vmatpush1.xpose.msra.mxu0 0.0
  %6461 = vmatprep.subr.mxu0 0.0
  %6462 = vmatpush1.xpose.msra.mxu0 0.0
  %6463 = vmatprep.subr.mxu0 0.0
  %6464 = vmatpush1.xpose.msra.mxu0 0.0
  %6465 = vmatprep.subr.mxu0 0.0
  %6466 = vmatpush1.xpose.msra.mxu0 0.0
  %6467 = vmatprep.subr.mxu0 0.0
  %6468 = vmatpush1.xpose.msra.mxu0 0.0
  %6469 = vmatprep.subr.mxu0 0.0
  %6470 = vmatpush1.xpose.msra.mxu0 0.0
  %6471 = vmatprep.subr.mxu0 0.0
  %6472 = vmatpush1.xpose.msra.mxu0 0.0
  %6473 = vmatprep.subr.mxu0 0.0
  %6474 = vmatpush1.xpose.msra.mxu0 0.0
  %6475 = vmatprep.subr.mxu0 0.0
  %6476 = vmatpush1.xpose.msra.mxu0 0.0
  %6477 = vmatprep.subr.mxu0 0.0
  %6478 = vmatpush1.xpose.msra.mxu0 0.0
  %6479 = vmatprep.subr.mxu0 0.0
  %6480 = vmatpush1.xpose.msra.mxu0 0.0
  %6481 = vmatprep.subr.mxu0 0.0
  %6482 = vmatpush1.xpose.msra.mxu0 0.0
  %6483 = vmatprep.subr.mxu0 0.0
  %6484 = vmatpush1.xpose.msra.mxu0 0.0
  %6485 = vmatprep.subr.mxu0 0.0
  %6486 = vmatpush1.xpose.msra.mxu0 0.0
  %6487 = vmatprep.subr.mxu0 0.0
  %6488 = vmatpush1.xpose.msra.mxu0 0.0
  %6489 = vmatprep.subr.mxu0 0.0
  %6490 = vmatpush1.xpose.msra.mxu0 0.0
  %6491 = vmatprep.subr.mxu0 0.0
  %6492 = vmatpush1.xpose.msra.mxu0 0.0
  %6493 = vmatprep.subr.mxu0 0.0
  %6494 = vmatpush1.xpose.msra.mxu0 0.0
  %6495 = vmatprep.subr.mxu0 0.0
  %6496 = vmatpush1.xpose.msra.mxu0 0.0
  %6497 = vmatprep.subr.mxu0 0.0
  %6498 = vmatpush1.xpose.msra.mxu0 0.0
  %6499 = vmatprep.subr.mxu0 0.0
  %6500 = vmatpush1.xpose.msra.mxu0 0.0
  %6501 = vmatprep.subr.mxu0 0.0
  %6502 = vmatpush1.xpose.msra.mxu0 0.0
  %6503 = vmatprep.subr.mxu0 0.0
  %6504 = vmatpush1.xpose.msra.mxu0 0.0
  %6505 = vmatprep.subr.mxu0 0.0
  %6506 = vmatpush1.xpose.msra.mxu0 0.0
  %6507 = vmatprep.subr.mxu0 0.0
  %6508 = vmatpush1.xpose.msra.mxu0 0.0
  %6509 = vmatprep.subr.mxu0 0.0
  %6510 = vmatpush1.xpose.msra.mxu0 0.0
  %6511 = vmatprep.subr.mxu0 0.0
  %6512 = vmatpush1.xpose.msra.mxu0 0.0
  %6513 = vmatprep.subr.mxu0 0.0
  %6514 = vmatpush1.xpose.msra.mxu0 0.0
  %6515 = vmatprep.subr.mxu0 0.0
  %6516 = vmatpush1.xpose.msra.mxu0 0.0
  %6517 = vmatprep.mubr.f32.mxu0 0.0
  %6518 = vmatmul.mubr.f32.gmra.mrb[0].mxu0 %v6451
  %v6519 = vpop.f32.mrb[0].mxu0
  %v6520 = vadd.f32 0.0, %v6519
  %v6521 = vpop.f32.mrb[0].mxu0
  %6522 = vdwg.mxu0
  %v6523 = vsel %vm5645, -1e+12, %v6520
  %v6524 = vsel %vm5647, %v6523, -inf
  %6525 = vmax.xlane.f32.xlu0 %v6524
  %v6526 = vpop.xlane.xlu0 %6525
  %v6527 = vsub.f32 %v6523, %v6526
  %v6528 = vmul.f32 %v6527, 1.442695
  %v6529 = vpow.pop %v6528
  %v6530 = vsel %vm5647, %v6529, 0.0
  %6531 = vadd.xlane.f32.xlu0 %v6530
  %v6532 = vpop.xlane.xlu0 %6531
  %v6533 = vrcp.pop %v6532
  %v6534 = vmul.f32 %v6529, %v6533
  %v6536 = vsel %vm1017, %v6534, 0
  %6538 = vmatprep.subr.mxu0 0.0
  %6539 = vmatpush1.msra.mxu0 %v5087
  %6540 = vmatprep.subr.mxu0 0.0
  %6541 = vmatpush1.msra.mxu0 %v5090
  %6542 = vmatprep.subr.mxu0 0.0
  %6543 = vmatpush1.msra.mxu0 0.0
  %6544 = vmatprep.subr.mxu0 0.0
  %6545 = vmatpush1.msra.mxu0 0.0
  %6546 = vmatprep.subr.mxu0 0.0
  %6547 = vmatpush1.msra.mxu0 0.0
  %6548 = vmatprep.subr.mxu0 0.0
  %6549 = vmatpush1.msra.mxu0 0.0
  %6550 = vmatprep.subr.mxu0 0.0
  %6551 = vmatpush1.msra.mxu0 0.0
  %6552 = vmatprep.subr.mxu0 0.0
  %6553 = vmatpush1.msra.mxu0 0.0
  %6554 = vmatprep.subr.mxu0 0.0
  %6555 = vmatpush1.msra.mxu0 0.0
  %6556 = vmatprep.subr.mxu0 0.0
  %6557 = vmatpush1.msra.mxu0 0.0
  %6558 = vmatprep.subr.mxu0 0.0
  %6559 = vmatpush1.msra.mxu0 0.0
  %6560 = vmatprep.subr.mxu0 0.0
  %6561 = vmatpush1.msra.mxu0 0.0
  %6562 = vmatprep.subr.mxu0 0.0
  %6563 = vmatpush1.msra.mxu0 0.0
  %6564 = vmatprep.subr.mxu0 0.0
  %6565 = vmatpush1.msra.mxu0 0.0
  %6566 = vmatprep.subr.mxu0 0.0
  %6567 = vmatpush1.msra.mxu0 0.0
  %6568 = vmatprep.subr.mxu0 0.0
  %6569 = vmatpush1.msra.mxu0 0.0
  %6570 = vmatprep.subr.mxu0 0.0
  %6571 = vmatpush1.msra.mxu0 0.0
  %6572 = vmatprep.subr.mxu0 0.0
  %6573 = vmatpush1.msra.mxu0 0.0
  %6574 = vmatprep.subr.mxu0 0.0
  %6575 = vmatpush1.msra.mxu0 0.0
  %6576 = vmatprep.subr.mxu0 0.0
  %6577 = vmatpush1.msra.mxu0 0.0
  %6578 = vmatprep.subr.mxu0 0.0
  %6579 = vmatpush1.msra.mxu0 0.0
  %6580 = vmatprep.subr.mxu0 0.0
  %6581 = vmatpush1.msra.mxu0 0.0
  %6582 = vmatprep.subr.mxu0 0.0
  %6583 = vmatpush1.msra.mxu0 0.0
  %6584 = vmatprep.subr.mxu0 0.0
  %6585 = vmatpush1.msra.mxu0 0.0
  %6586 = vmatprep.subr.mxu0 0.0
  %6587 = vmatpush1.msra.mxu0 0.0
  %6588 = vmatprep.subr.mxu0 0.0
  %6589 = vmatpush1.msra.mxu0 0.0
  %6590 = vmatprep.subr.mxu0 0.0
  %6591 = vmatpush1.msra.mxu0 0.0
  %6592 = vmatprep.subr.mxu0 0.0
  %6593 = vmatpush1.msra.mxu0 0.0
  %6594 = vmatprep.subr.mxu0 0.0
  %6595 = vmatpush1.msra.mxu0 0.0
  %6596 = vmatprep.subr.mxu0 0.0
  %6597 = vmatpush1.msra.mxu0 0.0
  %6598 = vmatprep.subr.mxu0 0.0
  %6599 = vmatpush1.msra.mxu0 0.0
  %6600 = vmatprep.subr.mxu0 0.0
  %6601 = vmatpush1.msra.mxu0 0.0
  %6602 = vmatprep.mubr.f32.mxu0 0.0
  %6603 = vmatmul.mubr.f32.gmra.mrb[0].mxu0 %v6536
  %v6604 = vpop.f32.mrb[0].mxu0
  %v6605 = vadd.f32 0.0, %v6604
  %v6606 = vpop.f32.mrb[0].mxu0
  %6607 = vdwg.mxu0
  %v6608 = vpack.c.bf16 %v6605, %v6605
  %v6610 = vsel %vm4530, %v6608, 0
  %6612 = vmatprep.subr.bf16.mxu0 0
  %6613 = vmatpush1.bf16.msra.mxu0 %v5232
  %6614 = vmatprep.subr.bf16.mxu0 0
  %6615 = vmatpush1.bf16.msra.mxu0 %v5233
  %6616 = vmatprep.subr.bf16.mxu0 0
  %6617 = vmatpush1.bf16.msra.mxu0 0
  %6618 = vmatprep.subr.bf16.mxu0 0
  %6619 = vmatpush1.bf16.msra.mxu0 0
  %6620 = vmatprep.subr.bf16.mxu0 0
  %6621 = vmatpush1.bf16.msra.mxu0 0
  %6622 = vmatprep.subr.bf16.mxu0 0
  %6623 = vmatpush1.bf16.msra.mxu0 0
  %6624 = vmatprep.subr.bf16.mxu0 0
  %6625 = vmatpush1.bf16.msra.mxu0 0
  %6626 = vmatprep.subr.bf16.mxu0 0
  %6627 = vmatpush1.bf16.msra.mxu0 0
  %6628 = vmatprep.subr.bf16.mxu0 0
  %6629 = vmatpush1.bf16.msra.mxu0 0
  %6630 = vmatprep.subr.bf16.mxu0 0
  %6631 = vmatpush1.bf16.msra.mxu0 0
  %6632 = vmatprep.subr.bf16.mxu0 0
  %6633 = vmatpush1.bf16.msra.mxu0 0
  %6634 = vmatprep.subr.bf16.mxu0 0
  %6635 = vmatpush1.bf16.msra.mxu0 0
  %6636 = vmatprep.subr.bf16.mxu0 0
  %6637 = vmatpush1.bf16.msra.mxu0 0
  %6638 = vmatprep.subr.bf16.mxu0 0
  %6639 = vmatpush1.bf16.msra.mxu0 0
  %6640 = vmatprep.subr.bf16.mxu0 0
  %6641 = vmatpush1.bf16.msra.mxu0 0
  %6642 = vmatprep.subr.bf16.mxu0 0
  %6643 = vmatpush1.bf16.msra.mxu0 0
  %6644 = vmatprep.mubr.bf16.mxu0 0
  %6645 = vmatmul.mubr.bf16.gmra.mrb[0].mxu0 %v6610
  %v6646 = vpop.f32.mrb[0].mxu0
  %v6647 = vadd.f32 0.0, %v6646
  %v6648 = vpop.f32.mrb[0].mxu0
  %v6649 = vpop.f32.mrb[0].mxu0
  %v6650 = vpop.f32.mrb[0].mxu0
  %6651 = vdwg.mxu0
  %v6653 = vrot.slane %v6647, 2
  %v6655 = vadd.f32 %v5149, %v6653
  %v6656 = vpack.c.bf16 %v6655, %v6655
  %6657 = vmatprep.subr.bf16.mxu0 0
  %6658 = vmatpush1.bf16.msra.mxu0 %v5291
  %6659 = vmatprep.subr.bf16.mxu0 0
  %6660 = vmatpush1.bf16.msra.mxu0 %v5292
  %6661 = vmatprep.subr.bf16.mxu0 0
  %6662 = vmatpush1.bf16.msra.mxu0 0
  %6663 = vmatprep.subr.bf16.mxu0 0
  %6664 = vmatpush1.bf16.msra.mxu0 0
  %6665 = vmatprep.subr.bf16.mxu0 0
  %6666 = vmatpush1.bf16.msra.mxu0 0
  %6667 = vmatprep.subr.bf16.mxu0 0
  %6668 = vmatpush1.bf16.msra.mxu0 0
  %6669 = vmatprep.subr.bf16.mxu0 0
  %6670 = vmatpush1.bf16.msra.mxu0 0
  %6671 = vmatprep.subr.bf16.mxu0 0
  %6672 = vmatpush1.bf16.msra.mxu0 0
  %6673 = vmatprep.subr.bf16.mxu0 0
  %6674 = vmatpush1.bf16.msra.mxu0 0
  %6675 = vmatprep.subr.bf16.mxu0 0
  %6676 = vmatpush1.bf16.msra.mxu0 0
  %6677 = vmatprep.subr.bf16.mxu0 0
  %6678 = vmatpush1.bf16.msra.mxu0 0
  %6679 = vmatprep.subr.bf16.mxu0 0
  %6680 = vmatpush1.bf16.msra.mxu0 0
  %6681 = vmatprep.subr.bf16.mxu0 0
  %6682 = vmatpush1.bf16.msra.mxu0 0
  %6683 = vmatprep.subr.bf16.mxu0 0
  %6684 = vmatpush1.bf16.msra.mxu0 0
  %6685 = vmatprep.subr.bf16.mxu0 0
  %6686 = vmatpush1.bf16.msra.mxu0 0
  %6687 = vmatprep.subr.bf16.mxu0 0
  %6688 = vmatpush1.bf16.msra.mxu0 0
  %6689 = vmatprep.mubr.bf16.mxu0 0
  %6690 = vmatmul.mubr.bf16.gmra.mrb[0].mxu0 %v6381
  %v6691 = vpop.f32.mrb[0].mxu0
  %v6692 = vadd.f32 0.0, %v6691
  %v6693 = vpop.f32.mrb[0].mxu0
  %v6694 = vpop.f32.mrb[0].mxu0
  %v6695 = vpop.f32.mrb[0].mxu0
  %6696 = vdwg.mxu0
  %v6698 = vrot.slane %v6656, 3
  %v6700 = vsel %vm1017, %v6698, 0
  %6702 = vmatprep.subr.bf16.mxu0 0
  %6703 = vmatpush1.bf16.msra.mxu0 %v5342
  %6704 = vmatprep.subr.bf16.mxu0 0
  %6705 = vmatpush1.bf16.msra.mxu0 0
  %6706 = vmatprep.subr.bf16.mxu0 0
  %6707 = vmatpush1.bf16.msra.mxu0 0
  %6708 = vmatprep.subr.bf16.mxu0 0
  %6709 = vmatpush1.bf16.msra.mxu0 0
  %6710 = vmatprep.subr.bf16.mxu0 0
  %6711 = vmatpush1.bf16.msra.mxu0 0
  %6712 = vmatprep.subr.bf16.mxu0 0
  %6713 = vmatpush1.bf16.msra.mxu0 0
  %6714 = vmatprep.subr.bf16.mxu0 0
  %6715 = vmatpush1.bf16.msra.mxu0 0
  %6716 = vmatprep.subr.bf16.mxu0 0
  %6717 = vmatpush1.bf16.msra.mxu0 0
  %6718 = vmatprep.subr.bf16.mxu0 0
  %6719 = vmatpush1.bf16.msra.mxu0 0
  %6720 = vmatprep.subr.bf16.mxu0 0
  %6721 = vmatpush1.bf16.msra.mxu0 0
  %6722 = vmatprep.subr.bf16.mxu0 0
  %6723 = vmatpush1.bf16.msra.mxu0 0
  %6724 = vmatprep.subr.bf16.mxu0 0
  %6725 = vmatpush1.bf16.msra.mxu0 0
  %6726 = vmatprep.subr.bf16.mxu0 0
  %6727 = vmatpush1.bf16.msra.mxu0 0
  %6728 = vmatprep.subr.bf16.mxu0 0
  %6729 = vmatpush1.bf16.msra.mxu0 0
  %6730 = vmatprep.subr.bf16.mxu0 0
  %6731 = vmatpush1.bf16.msra.mxu0 0
  %6732 = vmatprep.subr.bf16.mxu0 0
  %6733 = vmatpush1.bf16.msra.mxu0 0
  %6734 = vmatprep.mubr.bf16.mxu0 0
  %6735 = vmatmul.mubr.bf16.gmra.mrb[0].mxu0 %v6700
  %v6736 = vpop.f32.mrb[0].mxu0
  %v6737 = vadd.f32 %v6692, %v6736
  %v6738 = vpop.f32.mrb[0].mxu0
  %v6739 = vpop.f32.mrb[0].mxu0
  %v6740 = vpop.f32.mrb[0].mxu0
  %6741 = vdwg.mxu0
  %v6742 = vadd.f32 %v6737, %v5179
  %v6743 = vxor.u32 %v6742, 2147483648
  %v6744 = vmul.f32 %v6743, 1.442695
  %v6745 = vpow.pop %v6744
  %v6746 = vadd.f32 %v6745, 1.0
  %v6747 = vrcp.pop %v6746
  %v6748 = vmul.f32 1.0, %v6747
  %v6749 = vtanh.pop %v6742
  %v6750 = vmul.f32 %v6748, %v6322
  %6752 = vrot.lane.b32.xlu0 %v6749, 64
  %v6753 = vpop.permute.xlu0 %6752
  %v6755 = vmul.f32 %v6748, %v6753
  %6757 = vrot.lane.b32.xlu0 %v6755, 32
  %v6758 = vpop.permute.xlu0 %6757
  %v6760 = vadd.f32 %v6750, %v6758
  %v6761 = vtanh.pop %v6760
  %6763 = vrot.lane.b32.xlu0 %v6761, 64
  %v6764 = vpop.permute.xlu0 %6763
  %v6766 = vmul.f32 %v6748, %v6764
  %v6767 = vpack.c.bf16 %v6766, %v6766
  %v6768 = vpack.c.bf16 %v6447, %v6447
  %6770 = vrot.lane.b32.xlu0 %v6768, 32
  %v6771 = vpop.permute.xlu0 %6770
  %v6773 = vsel %vm4530, %v6771, 0
  %6775 = vmatprep.subr.bf16.mxu0 0
  %6776 = vmatpush1.bf16.msra.mxu0 %v5429
  %6777 = vmatprep.subr.bf16.mxu0 0
  %6778 = vmatpush1.bf16.msra.mxu0 %v5430
  %6779 = vmatprep.subr.bf16.mxu0 0
  %6780 = vmatpush1.bf16.msra.mxu0 0
  %6781 = vmatprep.subr.bf16.mxu0 0
  %6782 = vmatpush1.bf16.msra.mxu0 0
  %6783 = vmatprep.subr.bf16.mxu0 0
  %6784 = vmatpush1.bf16.msra.mxu0 0
  %6785 = vmatprep.subr.bf16.mxu0 0
  %6786 = vmatpush1.bf16.msra.mxu0 0
  %6787 = vmatprep.subr.bf16.mxu0 0
  %6788 = vmatpush1.bf16.msra.mxu0 0
  %6789 = vmatprep.subr.bf16.mxu0 0
  %6790 = vmatpush1.bf16.msra.mxu0 0
  %6791 = vmatprep.subr.bf16.mxu0 0
  %6792 = vmatpush1.bf16.msra.mxu0 0
  %6793 = vmatprep.subr.bf16.mxu0 0
  %6794 = vmatpush1.bf16.msra.mxu0 0
  %6795 = vmatprep.subr.bf16.mxu0 0
  %6796 = vmatpush1.bf16.msra.mxu0 0
  %6797 = vmatprep.subr.bf16.mxu0 0
  %6798 = vmatpush1.bf16.msra.mxu0 0
  %6799 = vmatprep.subr.bf16.mxu0 0
  %6800 = vmatpush1.bf16.msra.mxu0 0
  %6801 = vmatprep.subr.bf16.mxu0 0
  %6802 = vmatpush1.bf16.msra.mxu0 0
  %6803 = vmatprep.subr.bf16.mxu0 0
  %6804 = vmatpush1.bf16.msra.mxu0 0
  %6805 = vmatprep.subr.bf16.mxu0 0
  %6806 = vmatpush1.bf16.msra.mxu0 0
  %6807 = vmatprep.mubr.bf16.mxu0 0
  %6808 = vmatmul.mubr.bf16.gmra.mrb[0].mxu0 %v6773
  %v6809 = vpop.f32.mrb[0].mxu0
  %v6810 = vadd.f32 0.0, %v6809
  %v6811 = vpop.f32.mrb[0].mxu0
  %v6812 = vpop.f32.mrb[0].mxu0
  %v6813 = vpop.f32.mrb[0].mxu0
  %6814 = vdwg.mxu0
  %6816 = vrot.lane.b32.xlu0 %v6767, 32
  %v6817 = vpop.permute.xlu0 %6816
  %v6819 = vsel %vm4530, %v6817, 0
  %6821 = vmatprep.subr.bf16.mxu0 0
  %6822 = vmatpush1.bf16.msra.mxu0 %v5487
  %6823 = vmatprep.subr.bf16.mxu0 0
  %6824 = vmatpush1.bf16.msra.mxu0 %v5488
  %6825 = vmatprep.subr.bf16.mxu0 0
  %6826 = vmatpush1.bf16.msra.mxu0 0
  %6827 = vmatprep.subr.bf16.mxu0 0
  %6828 = vmatpush1.bf16.msra.mxu0 0
  %6829 = vmatprep.subr.bf16.mxu0 0
  %6830 = vmatpush1.bf16.msra.mxu0 0
  %6831 = vmatprep.subr.bf16.mxu0 0
  %6832 = vmatpush1.bf16.msra.mxu0 0
  %6833 = vmatprep.subr.bf16.mxu0 0
  %6834 = vmatpush1.bf16.msra.mxu0 0
  %6835 = vmatprep.subr.bf16.mxu0 0
  %6836 = vmatpush1.bf16.msra.mxu0 0
  %6837 = vmatprep.subr.bf16.mxu0 0
  %6838 = vmatpush1.bf16.msra.mxu0 0
  %6839 = vmatprep.subr.bf16.mxu0 0
  %6840 = vmatpush1.bf16.msra.mxu0 0
  %6841 = vmatprep.subr.bf16.mxu0 0
  %6842 = vmatpush1.bf16.msra.mxu0 0
  %6843 = vmatprep.subr.bf16.mxu0 0
  %6844 = vmatpush1.bf16.msra.mxu0 0
  %6845 = vmatprep.subr.bf16.mxu0 0
  %6846 = vmatpush1.bf16.msra.mxu0 0
  %6847 = vmatprep.subr.bf16.mxu0 0
  %6848 = vmatpush1.bf16.msra.mxu0 0
  %6849 = vmatprep.subr.bf16.mxu0 0
  %6850 = vmatpush1.bf16.msra.mxu0 0
  %6851 = vmatprep.subr.bf16.mxu0 0
  %6852 = vmatpush1.bf16.msra.mxu0 0
  %6853 = vmatprep.mubr.bf16.mxu0 0
  %6854 = vmatmul.mubr.bf16.gmra.mrb[0].mxu0 %v6819
  %v6855 = vpop.f32.mrb[0].mxu0
  %v6856 = vadd.f32 %v6810, %v6855
  %v6857 = vpop.f32.mrb[0].mxu0
  %v6858 = vpop.f32.mrb[0].mxu0
  %v6859 = vpop.f32.mrb[0].mxu0
  %6860 = vdwg.mxu0
  %v6861 = vadd.f32 %v6856, %v5186
  %v6862 = vxor.u32 %v6861, 2147483648
  %v6863 = vmul.f32 %v6862, 1.442695
  %v6864 = vpow.pop %v6863
  %v6865 = vadd.f32 %v6864, 1.0
  %v6866 = vrcp.pop %v6865
  %v6867 = vmul.f32 1.0, %v6866
  %v6868 = vtanh.pop %v6861
  %v6869 = vmul.f32 %v6867, %v6441
  %6871 = vrot.lane.b32.xlu0 %v6868, 64
  %v6872 = vpop.permute.xlu0 %6871
  %v6874 = vmul.f32 %v6867, %v6872
  %6876 = vrot.lane.b32.xlu0 %v6874, 32
  %v6877 = vpop.permute.xlu0 %6876
  %v6879 = vadd.f32 %v6869, %v6877
  %v6880 = vtanh.pop %v6879
  %6882 = vrot.lane.b32.xlu0 %v6880, 64
  %v6883 = vpop.permute.xlu0 %6882
  %v6885 = vmul.f32 %v6867, %v6883
  %6887 = vrot.lane.b32.xlu0 %v6885, 32
  %v6888 = vpop.permute.xlu0 %6887
  %v6889 = vsel %vm4530, %v6888, 0
  %6891 = vmatprep.subr.mxu0 0.0
  %6892 = vmatpush1.xpose.msra.mxu0 %v5570
  %6893 = vmatprep.subr.mxu0 0.0
  %6894 = vmatpush1.xpose.msra.mxu0 %v5573
  %6895 = vmatprep.subr.mxu0 0.0
  %6896 = vmatpush1.xpose.msra.mxu0 0.0
  %6897 = vmatprep.subr.mxu0 0.0
  %6898 = vmatpush1.xpose.msra.mxu0 0.0
  %6899 = vmatprep.subr.mxu0 0.0
  %6900 = vmatpush1.xpose.msra.mxu0 0.0
  %6901 = vmatprep.subr.mxu0 0.0
  %6902 = vmatpush1.xpose.msra.mxu0 0.0
  %6903 = vmatprep.subr.mxu0 0.0
  %6904 = vmatpush1.xpose.msra.mxu0 0.0
  %6905 = vmatprep.subr.mxu0 0.0
  %6906 = vmatpush1.xpose.msra.mxu0 0.0
  %6907 = vmatprep.subr.mxu0 0.0
  %6908 = vmatpush1.xpose.msra.mxu0 0.0
  %6909 = vmatprep.subr.mxu0 0.0
  %6910 = vmatpush1.xpose.msra.mxu0 0.0
  %6911 = vmatprep.subr.mxu0 0.0
  %6912 = vmatpush1.xpose.msra.mxu0 0.0
  %6913 = vmatprep.subr.mxu0 0.0
  %6914 = vmatpush1.xpose.msra.mxu0 0.0
  %6915 = vmatprep.subr.mxu0 0.0
  %6916 = vmatpush1.xpose.msra.mxu0 0.0
  %6917 = vmatprep.subr.mxu0 0.0
  %6918 = vmatpush1.xpose.msra.mxu0 0.0
  %6919 = vmatprep.subr.mxu0 0.0
  %6920 = vmatpush1.xpose.msra.mxu0 0.0
  %6921 = vmatprep.subr.mxu0 0.0
  %6922 = vmatpush1.xpose.msra.mxu0 0.0
  %6923 = vmatprep.subr.mxu0 0.0
  %6924 = vmatpush1.xpose.msra.mxu0 0.0
  %6925 = vmatprep.subr.mxu0 0.0
  %6926 = vmatpush1.xpose.msra.mxu0 0.0
  %6927 = vmatprep.subr.mxu0 0.0
  %6928 = vmatpush1.xpose.msra.mxu0 0.0
  %6929 = vmatprep.subr.mxu0 0.0
  %6930 = vmatpush1.xpose.msra.mxu0 0.0
  %6931 = vmatprep.subr.mxu0 0.0
  %6932 = vmatpush1.xpose.msra.mxu0 0.0
  %6933 = vmatprep.subr.mxu0 0.0
  %6934 = vmatpush1.xpose.msra.mxu0 0.0
  %6935 = vmatprep.subr.mxu0 0.0
  %6936 = vmatpush1.xpose.msra.mxu0 0.0
  %6937 = vmatprep.subr.mxu0 0.0
  %6938 = vmatpush1.xpose.msra.mxu0 0.0
  %6939 = vmatprep.subr.mxu0 0.0
  %6940 = vmatpush1.xpose.msra.mxu0 0.0
  %6941 = vmatprep.subr.mxu0 0.0
  %6942 = vmatpush1.xpose.msra.mxu0 0.0
  %6943 = vmatprep.subr.mxu0 0.0
  %6944 = vmatpush1.xpose.msra.mxu0 0.0
  %6945 = vmatprep.subr.mxu0 0.0
  %6946 = vmatpush1.xpose.msra.mxu0 0.0
  %6947 = vmatprep.subr.mxu0 0.0
  %6948 = vmatpush1.xpose.msra.mxu0 0.0
  %6949 = vmatprep.subr.mxu0 0.0
  %6950 = vmatpush1.xpose.msra.mxu0 0.0
  %6951 = vmatprep.subr.mxu0 0.0
  %6952 = vmatpush1.xpose.msra.mxu0 0.0
  %6953 = vmatprep.subr.mxu0 0.0
  %6954 = vmatpush1.xpose.msra.mxu0 0.0
  %6955 = vmatprep.mubr.f32.mxu0 0.0
  %6956 = vmatmul.mubr.f32.gmra.mrb[0].mxu0 %v6889
  %v6957 = vpop.f32.mrb[0].mxu0
  %v6958 = vadd.f32 0.0, %v6957
  %v6959 = vpop.f32.mrb[0].mxu0
  %6960 = vdwg.mxu0
  %v6961 = vsel %vm5645, -1e+12, %v6958
  %v6962 = vsel %vm5647, %v6961, -inf
  %6963 = vmax.xlane.f32.xlu0 %v6962
  %v6964 = vpop.xlane.xlu0 %6963
  %v6965 = vsub.f32 %v6961, %v6964
  %v6966 = vmul.f32 %v6965, 1.442695
  %v6967 = vpow.pop %v6966
  %v6968 = vsel %vm5647, %v6967, 0.0
  %6969 = vadd.xlane.f32.xlu0 %v6968
  %v6970 = vpop.xlane.xlu0 %6969
  %v6971 = vrcp.pop %v6970
  %v6972 = vmul.f32 %v6967, %v6971
  %v6974 = vsel %vm1017, %v6972, 0
  %6976 = vmatprep.subr.mxu0 0.0
  %6977 = vmatpush1.msra.mxu0 %v5087
  %6978 = vmatprep.subr.mxu0 0.0
  %6979 = vmatpush1.msra.mxu0 %v5090
  %6980 = vmatprep.subr.mxu0 0.0
  %6981 = vmatpush1.msra.mxu0 0.0
  %6982 = vmatprep.subr.mxu0 0.0
  %6983 = vmatpush1.msra.mxu0 0.0
  %6984 = vmatprep.subr.mxu0 0.0
  %6985 = vmatpush1.msra.mxu0 0.0
  %6986 = vmatprep.subr.mxu0 0.0
  %6987 = vmatpush1.msra.mxu0 0.0
  %6988 = vmatprep.subr.mxu0 0.0
  %6989 = vmatpush1.msra.mxu0 0.0
  %6990 = vmatprep.subr.mxu0 0.0
  %6991 = vmatpush1.msra.mxu0 0.0
  %6992 = vmatprep.subr.mxu0 0.0
  %6993 = vmatpush1.msra.mxu0 0.0
  %6994 = vmatprep.subr.mxu0 0.0
  %6995 = vmatpush1.msra.mxu0 0.0
  %6996 = vmatprep.subr.mxu0 0.0
  %6997 = vmatpush1.msra.mxu0 0.0
  %6998 = vmatprep.subr.mxu0 0.0
  %6999 = vmatpush1.msra.mxu0 0.0
  %7000 = vmatprep.subr.mxu0 0.0
  %7001 = vmatpush1.msra.mxu0 0.0
  %7002 = vmatprep.subr.mxu0 0.0
  %7003 = vmatpush1.msra.mxu0 0.0
  %7004 = vmatprep.subr.mxu0 0.0
  %7005 = vmatpush1.msra.mxu0 0.0
  %7006 = vmatprep.subr.mxu0 0.0
  %7007 = vmatpush1.msra.mxu0 0.0
  %7008 = vmatprep.subr.mxu0 0.0
  %7009 = vmatpush1.msra.mxu0 0.0
  %7010 = vmatprep.subr.mxu0 0.0
  %7011 = vmatpush1.msra.mxu0 0.0
  %7012 = vmatprep.subr.mxu0 0.0
  %7013 = vmatpush1.msra.mxu0 0.0
  %7014 = vmatprep.subr.mxu0 0.0
  %7015 = vmatpush1.msra.mxu0 0.0
  %7016 = vmatprep.subr.mxu0 0.0
  %7017 = vmatpush1.msra.mxu0 0.0
  %7018 = vmatprep.subr.mxu0 0.0
  %7019 = vmatpush1.msra.mxu0 0.0
  %7020 = vmatprep.subr.mxu0 0.0
  %7021 = vmatpush1.msra.mxu0 0.0
  %7022 = vmatprep.subr.mxu0 0.0
  %7023 = vmatpush1.msra.mxu0 0.0
  %7024 = vmatprep.subr.mxu0 0.0
  %7025 = vmatpush1.msra.mxu0 0.0
  %7026 = vmatprep.subr.mxu0 0.0
  %7027 = vmatpush1.msra.mxu0 0.0
  %7028 = vmatprep.subr.mxu0 0.0
  %7029 = vmatpush1.msra.mxu0 0.0
  %7030 = vmatprep.subr.mxu0 0.0
  %7031 = vmatpush1.msra.mxu0 0.0
  %7032 = vmatprep.subr.mxu0 0.0
  %7033 = vmatpush1.msra.mxu0 0.0
  %7034 = vmatprep.subr.mxu0 0.0
  %7035 = vmatpush1.msra.mxu0 0.0
  %7036 = vmatprep.subr.mxu0 0.0
  %7037 = vmatpush1.msra.mxu0 0.0
  %7038 = vmatprep.subr.mxu0 0.0
  %7039 = vmatpush1.msra.mxu0 0.0
  %7040 = vmatprep.mubr.f32.mxu0 0.0
  %7041 = vmatmul.mubr.f32.gmra.mrb[0].mxu0 %v6974
  %v7042 = vpop.f32.mrb[0].mxu0
  %v7043 = vadd.f32 0.0, %v7042
  %v7044 = vpop.f32.mrb[0].mxu0
  %7045 = vdwg.mxu0
  %v7046 = vpack.c.bf16 %v7043, %v7043
  %v7048 = vsel %vm4530, %v7046, 0
  %7050 = vmatprep.subr.bf16.mxu0 0
  %7051 = vmatpush1.bf16.msra.mxu0 %v5232
  %7052 = vmatprep.subr.bf16.mxu0 0
  %7053 = vmatpush1.bf16.msra.mxu0 %v5233
  %7054 = vmatprep.subr.bf16.mxu0 0
  %7055 = vmatpush1.bf16.msra.mxu0 0
  %7056 = vmatprep.subr.bf16.mxu0 0
  %7057 = vmatpush1.bf16.msra.mxu0 0
  %7058 = vmatprep.subr.bf16.mxu0 0
  %7059 = vmatpush1.bf16.msra.mxu0 0
  %7060 = vmatprep.subr.bf16.mxu0 0
  %7061 = vmatpush1.bf16.msra.mxu0 0
  %7062 = vmatprep.subr.bf16.mxu0 0
  %7063 = vmatpush1.bf16.msra.mxu0 0
  %7064 = vmatprep.subr.bf16.mxu0 0
  %7065 = vmatpush1.bf16.msra.mxu0 0
  %7066 = vmatprep.subr.bf16.mxu0 0
  %7067 = vmatpush1.bf16.msra.mxu0 0
  %7068 = vmatprep.subr.bf16.mxu0 0
  %7069 = vmatpush1.bf16.msra.mxu0 0
  %7070 = vmatprep.subr.bf16.mxu0 0
  %7071 = vmatpush1.bf16.msra.mxu0 0
  %7072 = vmatprep.subr.bf16.mxu0 0
  %7073 = vmatpush1.bf16.msra.mxu0 0
  %7074 = vmatprep.subr.bf16.mxu0 0
  %7075 = vmatpush1.bf16.msra.mxu0 0
  %7076 = vmatprep.subr.bf16.mxu0 0
  %7077 = vmatpush1.bf16.msra.mxu0 0
  %7078 = vmatprep.subr.bf16.mxu0 0
  %7079 = vmatpush1.bf16.msra.mxu0 0
  %7080 = vmatprep.subr.bf16.mxu0 0
  %7081 = vmatpush1.bf16.msra.mxu0 0
  %7082 = vmatprep.mubr.bf16.mxu0 0
  %7083 = vmatmul.mubr.bf16.gmra.mrb[0].mxu0 %v7048
  %v7084 = vpop.f32.mrb[0].mxu0
  %v7085 = vadd.f32 0.0, %v7084
  %v7086 = vpop.f32.mrb[0].mxu0
  %v7087 = vpop.f32.mrb[0].mxu0
  %v7088 = vpop.f32.mrb[0].mxu0
  %7089 = vdwg.mxu0
  %v7090 = vadd.f32 %v5152, %v7085
  %v7091 = vpack.c.bf16 %v7090, %v7090
  %7092 = vmatprep.subr.bf16.mxu0 0
  %7093 = vmatpush1.bf16.msra.mxu0 %v5291
  %7094 = vmatprep.subr.bf16.mxu0 0
  %7095 = vmatpush1.bf16.msra.mxu0 %v5292
  %7096 = vmatprep.subr.bf16.mxu0 0
  %7097 = vmatpush1.bf16.msra.mxu0 0
  %7098 = vmatprep.subr.bf16.mxu0 0
  %7099 = vmatpush1.bf16.msra.mxu0 0
  %7100 = vmatprep.subr.bf16.mxu0 0
  %7101 = vmatpush1.bf16.msra.mxu0 0
  %7102 = vmatprep.subr.bf16.mxu0 0
  %7103 = vmatpush1.bf16.msra.mxu0 0
  %7104 = vmatprep.subr.bf16.mxu0 0
  %7105 = vmatpush1.bf16.msra.mxu0 0
  %7106 = vmatprep.subr.bf16.mxu0 0
  %7107 = vmatpush1.bf16.msra.mxu0 0
  %7108 = vmatprep.subr.bf16.mxu0 0
  %7109 = vmatpush1.bf16.msra.mxu0 0
  %7110 = vmatprep.subr.bf16.mxu0 0
  %7111 = vmatpush1.bf16.msra.mxu0 0
  %7112 = vmatprep.subr.bf16.mxu0 0
  %7113 = vmatpush1.bf16.msra.mxu0 0
  %7114 = vmatprep.subr.bf16.mxu0 0
  %7115 = vmatpush1.bf16.msra.mxu0 0
  %7116 = vmatprep.subr.bf16.mxu0 0
  %7117 = vmatpush1.bf16.msra.mxu0 0
  %7118 = vmatprep.subr.bf16.mxu0 0
  %7119 = vmatpush1.bf16.msra.mxu0 0
  %7120 = vmatprep.subr.bf16.mxu0 0
  %7121 = vmatpush1.bf16.msra.mxu0 0
  %7122 = vmatprep.subr.bf16.mxu0 0
  %7123 = vmatpush1.bf16.msra.mxu0 0
  %7124 = vmatprep.mubr.bf16.mxu0 0
  %7125 = vmatmul.mubr.bf16.gmra.mrb[0].mxu0 %v6819
  %v7126 = vpop.f32.mrb[0].mxu0
  %v7127 = vadd.f32 0.0, %v7126
  %v7128 = vpop.f32.mrb[0].mxu0
  %v7129 = vpop.f32.mrb[0].mxu0
  %v7130 = vpop.f32.mrb[0].mxu0
  %7131 = vdwg.mxu0
  %v7133 = vsel %vm1017, %v7091, 0
  %7135 = vmatprep.subr.bf16.mxu0 0
  %7136 = vmatpush1.bf16.msra.mxu0 %v5342
  %7137 = vmatprep.subr.bf16.mxu0 0
  %7138 = vmatpush1.bf16.msra.mxu0 0
  %7139 = vmatprep.subr.bf16.mxu0 0
  %7140 = vmatpush1.bf16.msra.mxu0 0
  %7141 = vmatprep.subr.bf16.mxu0 0
  %7142 = vmatpush1.bf16.msra.mxu0 0
  %7143 = vmatprep.subr.bf16.mxu0 0
  %7144 = vmatpush1.bf16.msra.mxu0 0
  %7145 = vmatprep.subr.bf16.mxu0 0
  %7146 = vmatpush1.bf16.msra.mxu0 0
  %7147 = vmatprep.subr.bf16.mxu0 0
  %7148 = vmatpush1.bf16.msra.mxu0 0
  %7149 = vmatprep.subr.bf16.mxu0 0
  %7150 = vmatpush1.bf16.msra.mxu0 0
  %7151 = vmatprep.subr.bf16.mxu0 0
  %7152 = vmatpush1.bf16.msra.mxu0 0
  %7153 = vmatprep.subr.bf16.mxu0 0
  %7154 = vmatpush1.bf16.msra.mxu0 0
  %7155 = vmatprep.subr.bf16.mxu0 0
  %7156 = vmatpush1.bf16.msra.mxu0 0
  %7157 = vmatprep.subr.bf16.mxu0 0
  %7158 = vmatpush1.bf16.msra.mxu0 0
  %7159 = vmatprep.subr.bf16.mxu0 0
  %7160 = vmatpush1.bf16.msra.mxu0 0
  %7161 = vmatprep.subr.bf16.mxu0 0
  %7162 = vmatpush1.bf16.msra.mxu0 0
  %7163 = vmatprep.subr.bf16.mxu0 0
  %7164 = vmatpush1.bf16.msra.mxu0 0
  %7165 = vmatprep.subr.bf16.mxu0 0
  %7166 = vmatpush1.bf16.msra.mxu0 0
  %7167 = vmatprep.mubr.bf16.mxu0 0
  %7168 = vmatmul.mubr.bf16.gmra.mrb[0].mxu0 %v7133
  %v7169 = vpop.f32.mrb[0].mxu0
  %v7170 = vadd.f32 %v7127, %v7169
  %v7171 = vpop.f32.mrb[0].mxu0
  %v7172 = vpop.f32.mrb[0].mxu0
  %v7173 = vpop.f32.mrb[0].mxu0
  %7174 = vdwg.mxu0
  %v7175 = vadd.f32 %v7170, %v5179
  %v7176 = vxor.u32 %v7175, 2147483648
  %v7177 = vmul.f32 %v7176, 1.442695
  %v7178 = vpow.pop %v7177
  %v7179 = vadd.f32 %v7178, 1.0
  %v7180 = vrcp.pop %v7179
  %v7181 = vmul.f32 1.0, %v7180
  %v7182 = vtanh.pop %v7175
  %v7183 = vmul.f32 %v7181, %v6760
  %7185 = vrot.lane.b32.xlu0 %v7182, 64
  %v7186 = vpop.permute.xlu0 %7185
  %v7188 = vmul.f32 %v7181, %v7186
  %7190 = vrot.lane.b32.xlu0 %v7188, 32
  %v7191 = vpop.permute.xlu0 %7190
  %v7193 = vadd.f32 %v7183, %v7191
  %v7194 = vtanh.pop %v7193
  %7196 = vrot.lane.b32.xlu0 %v7194, 64
  %v7197 = vpop.permute.xlu0 %7196
  %v7199 = vmul.f32 %v7181, %v7197
  %v7200 = vpack.c.bf16 %v7199, %v7199
  %v7201 = vpack.c.bf16 %v6885, %v6885
  %7203 = vrot.lane.b32.xlu0 %v7201, 32
  %v7204 = vpop.permute.xlu0 %7203
  %v7206 = vsel %vm4530, %v7204, 0
  %7208 = vmatprep.subr.bf16.mxu0 0
  %7209 = vmatpush1.bf16.msra.mxu0 %v5429
  %7210 = vmatprep.subr.bf16.mxu0 0
  %7211 = vmatpush1.bf16.msra.mxu0 %v5430
  %7212 = vmatprep.subr.bf16.mxu0 0
  %7213 = vmatpush1.bf16.msra.mxu0 0
  %7214 = vmatprep.subr.bf16.mxu0 0
  %7215 = vmatpush1.bf16.msra.mxu0 0
  %7216 = vmatprep.subr.bf16.mxu0 0
  %7217 = vmatpush1.bf16.msra.mxu0 0
  %7218 = vmatprep.subr.bf16.mxu0 0
  %7219 = vmatpush1.bf16.msra.mxu0 0
  %7220 = vmatprep.subr.bf16.mxu0 0
  %7221 = vmatpush1.bf16.msra.mxu0 0
  %7222 = vmatprep.subr.bf16.mxu0 0
  %7223 = vmatpush1.bf16.msra.mxu0 0
  %7224 = vmatprep.subr.bf16.mxu0 0
  %7225 = vmatpush1.bf16.msra.mxu0 0
  %7226 = vmatprep.subr.bf16.mxu0 0
  %7227 = vmatpush1.bf16.msra.mxu0 0
  %7228 = vmatprep.subr.bf16.mxu0 0
  %7229 = vmatpush1.bf16.msra.mxu0 0
  %7230 = vmatprep.subr.bf16.mxu0 0
  %7231 = vmatpush1.bf16.msra.mxu0 0
  %7232 = vmatprep.subr.bf16.mxu0 0
  %7233 = vmatpush1.bf16.msra.mxu0 0
  %7234 = vmatprep.subr.bf16.mxu0 0
  %7235 = vmatpush1.bf16.msra.mxu0 0
  %7236 = vmatprep.subr.bf16.mxu0 0
  %7237 = vmatpush1.bf16.msra.mxu0 0
  %7238 = vmatprep.subr.bf16.mxu0 0
  %7239 = vmatpush1.bf16.msra.mxu0 0
  %7240 = vmatprep.mubr.bf16.mxu0 0
  %7241 = vmatmul.mubr.bf16.gmra.mrb[0].mxu0 %v7206
  %v7242 = vpop.f32.mrb[0].mxu0
  %v7243 = vadd.f32 0.0, %v7242
  %v7244 = vpop.f32.mrb[0].mxu0
  %v7245 = vpop.f32.mrb[0].mxu0
  %v7246 = vpop.f32.mrb[0].mxu0
  %7247 = vdwg.mxu0
  %7249 = vrot.lane.b32.xlu0 %v7200, 32
  %v7250 = vpop.permute.xlu0 %7249
  %v7252 = vsel %vm4530, %v7250, 0
  %7254 = vmatprep.subr.bf16.mxu0 0
  %7255 = vmatpush1.bf16.msra.mxu0 %v5487
  %7256 = vmatprep.subr.bf16.mxu0 0
  %7257 = vmatpush1.bf16.msra.mxu0 %v5488
  %7258 = vmatprep.subr.bf16.mxu0 0
  %7259 = vmatpush1.bf16.msra.mxu0 0
  %7260 = vmatprep.subr.bf16.mxu0 0
  %7261 = vmatpush1.bf16.msra.mxu0 0
  %7262 = vmatprep.subr.bf16.mxu0 0
  %7263 = vmatpush1.bf16.msra.mxu0 0
  %7264 = vmatprep.subr.bf16.mxu0 0
  %7265 = vmatpush1.bf16.msra.mxu0 0
  %7266 = vmatprep.subr.bf16.mxu0 0
  %7267 = vmatpush1.bf16.msra.mxu0 0
  %7268 = vmatprep.subr.bf16.mxu0 0
  %7269 = vmatpush1.bf16.msra.mxu0 0
  %7270 = vmatprep.subr.bf16.mxu0 0
  %7271 = vmatpush1.bf16.msra.mxu0 0
  %7272 = vmatprep.subr.bf16.mxu0 0
  %7273 = vmatpush1.bf16.msra.mxu0 0
  %7274 = vmatprep.subr.bf16.mxu0 0
  %7275 = vmatpush1.bf16.msra.mxu0 0
  %7276 = vmatprep.subr.bf16.mxu0 0
  %7277 = vmatpush1.bf16.msra.mxu0 0
  %7278 = vmatprep.subr.bf16.mxu0 0
  %7279 = vmatpush1.bf16.msra.mxu0 0
  %7280 = vmatprep.subr.bf16.mxu0 0
  %7281 = vmatpush1.bf16.msra.mxu0 0
  %7282 = vmatprep.subr.bf16.mxu0 0
  %7283 = vmatpush1.bf16.msra.mxu0 0
  %7284 = vmatprep.subr.bf16.mxu0 0
  %7285 = vmatpush1.bf16.msra.mxu0 0
  %7286 = vmatprep.mubr.bf16.mxu0 0
  %7287 = vmatmul.mubr.bf16.gmra.mrb[0].mxu0 %v7252
  %v7288 = vpop.f32.mrb[0].mxu0
  %v7289 = vadd.f32 %v7243, %v7288
  %v7290 = vpop.f32.mrb[0].mxu0
  %v7291 = vpop.f32.mrb[0].mxu0
  %v7292 = vpop.f32.mrb[0].mxu0
  %7293 = vdwg.mxu0
  %v7294 = vadd.f32 %v7289, %v5186
  %v7295 = vxor.u32 %v7294, 2147483648
  %v7296 = vmul.f32 %v7295, 1.442695
  %v7297 = vpow.pop %v7296
  %v7298 = vadd.f32 %v7297, 1.0
  %v7299 = vrcp.pop %v7298
  %v7300 = vmul.f32 1.0, %v7299
  %v7301 = vtanh.pop %v7294
  %v7302 = vmul.f32 %v7300, %v6879
  %7304 = vrot.lane.b32.xlu0 %v7301, 64
  %v7305 = vpop.permute.xlu0 %7304
  %v7307 = vmul.f32 %v7300, %v7305
  %7309 = vrot.lane.b32.xlu0 %v7307, 32
  %v7310 = vpop.permute.xlu0 %7309
  %v7312 = vadd.f32 %v7302, %v7310
  %v7313 = vtanh.pop %v7312
  %7315 = vrot.lane.b32.xlu0 %v7313, 64
  %v7316 = vpop.permute.xlu0 %7315
  %v7318 = vmul.f32 %v7300, %v7316
  %7320 = vrot.lane.b32.xlu0 %v7318, 32
  %v7321 = vpop.permute.xlu0 %7320
  %v7322 = vsel %vm4530, %v7321, 0
  %7324 = vmatprep.subr.mxu0 0.0
  %7325 = vmatpush1.xpose.msra.mxu0 %v5570
  %7326 = vmatprep.subr.mxu0 0.0
  %7327 = vmatpush1.xpose.msra.mxu0 %v5573
  %7328 = vmatprep.subr.mxu0 0.0
  %7329 = vmatpush1.xpose.msra.mxu0 0.0
  %7330 = vmatprep.subr.mxu0 0.0
  %7331 = vmatpush1.xpose.msra.mxu0 0.0
  %7332 = vmatprep.subr.mxu0 0.0
  %7333 = vmatpush1.xpose.msra.mxu0 0.0
  %7334 = vmatprep.subr.mxu0 0.0
  %7335 = vmatpush1.xpose.msra.mxu0 0.0
  %7336 = vmatprep.subr.mxu0 0.0
  %7337 = vmatpush1.xpose.msra.mxu0 0.0
  %7338 = vmatprep.subr.mxu0 0.0
  %7339 = vmatpush1.xpose.msra.mxu0 0.0
  %7340 = vmatprep.subr.mxu0 0.0
  %7341 = vmatpush1.xpose.msra.mxu0 0.0
  %7342 = vmatprep.subr.mxu0 0.0
  %7343 = vmatpush1.xpose.msra.mxu0 0.0
  %7344 = vmatprep.subr.mxu0 0.0
  %7345 = vmatpush1.xpose.msra.mxu0 0.0
  %7346 = vmatprep.subr.mxu0 0.0
  %7347 = vmatpush1.xpose.msra.mxu0 0.0
  %7348 = vmatprep.subr.mxu0 0.0
  %7349 = vmatpush1.xpose.msra.mxu0 0.0
  %7350 = vmatprep.subr.mxu0 0.0
  %7351 = vmatpush1.xpose.msra.mxu0 0.0
  %7352 = vmatprep.subr.mxu0 0.0
  %7353 = vmatpush1.xpose.msra.mxu0 0.0
  %7354 = vmatprep.subr.mxu0 0.0
  %7355 = vmatpush1.xpose.msra.mxu0 0.0
  %7356 = vmatprep.subr.mxu0 0.0
  %7357 = vmatpush1.xpose.msra.mxu0 0.0
  %7358 = vmatprep.subr.mxu0 0.0
  %7359 = vmatpush1.xpose.msra.mxu0 0.0
  %7360 = vmatprep.subr.mxu0 0.0
  %7361 = vmatpush1.xpose.msra.mxu0 0.0
  %7362 = vmatprep.subr.mxu0 0.0
  %7363 = vmatpush1.xpose.msra.mxu0 0.0
  %7364 = vmatprep.subr.mxu0 0.0
  %7365 = vmatpush1.xpose.msra.mxu0 0.0
  %7366 = vmatprep.subr.mxu0 0.0
  %7367 = vmatpush1.xpose.msra.mxu0 0.0
  %7368 = vmatprep.subr.mxu0 0.0
  %7369 = vmatpush1.xpose.msra.mxu0 0.0
  %7370 = vmatprep.subr.mxu0 0.0
  %7371 = vmatpush1.xpose.msra.mxu0 0.0
  %7372 = vmatprep.subr.mxu0 0.0
  %7373 = vmatpush1.xpose.msra.mxu0 0.0
  %7374 = vmatprep.subr.mxu0 0.0
  %7375 = vmatpush1.xpose.msra.mxu0 0.0
  %7376 = vmatprep.subr.mxu0 0.0
  %7377 = vmatpush1.xpose.msra.mxu0 0.0
  %7378 = vmatprep.subr.mxu0 0.0
  %7379 = vmatpush1.xpose.msra.mxu0 0.0
  %7380 = vmatprep.subr.mxu0 0.0
  %7381 = vmatpush1.xpose.msra.mxu0 0.0
  %7382 = vmatprep.subr.mxu0 0.0
  %7383 = vmatpush1.xpose.msra.mxu0 0.0
  %7384 = vmatprep.subr.mxu0 0.0
  %7385 = vmatpush1.xpose.msra.mxu0 0.0
  %7386 = vmatprep.subr.mxu0 0.0
  %7387 = vmatpush1.xpose.msra.mxu0 0.0
  %7388 = vmatprep.mubr.f32.mxu0 0.0
  %7389 = vmatmul.mubr.f32.gmra.mrb[0].mxu0 %v7322
  %v7390 = vpop.f32.mrb[0].mxu0
  %v7391 = vadd.f32 0.0, %v7390
  %v7392 = vpop.f32.mrb[0].mxu0
  %7393 = vdwg.mxu0
  %v7394 = vsel %vm5645, -1e+12, %v7391
  %v7395 = vsel %vm5647, %v7394, -inf
  %7396 = vmax.xlane.f32.xlu0 %v7395
  %v7397 = vpop.xlane.xlu0 %7396
  %v7398 = vsub.f32 %v7394, %v7397
  %v7399 = vmul.f32 %v7398, 1.442695
  %v7400 = vpow.pop %v7399
  %v7401 = vsel %vm5647, %v7400, 0.0
  %7402 = vadd.xlane.f32.xlu0 %v7401
  %v7403 = vpop.xlane.xlu0 %7402
  %v7404 = vrcp.pop %v7403
  %v7405 = vmul.f32 %v7400, %v7404
  %v7407 = vsel %vm1017, %v7405, 0
  %7409 = vmatprep.subr.mxu0 0.0
  %7410 = vmatpush1.msra.mxu0 %v5087
  %7411 = vmatprep.subr.mxu0 0.0
  %7412 = vmatpush1.msra.mxu0 %v5090
  %7413 = vmatprep.subr.mxu0 0.0
  %7414 = vmatpush1.msra.mxu0 0.0
  %7415 = vmatprep.subr.mxu0 0.0
  %7416 = vmatpush1.msra.mxu0 0.0
  %7417 = vmatprep.subr.mxu0 0.0
  %7418 = vmatpush1.msra.mxu0 0.0
  %7419 = vmatprep.subr.mxu0 0.0
  %7420 = vmatpush1.msra.mxu0 0.0
  %7421 = vmatprep.subr.mxu0 0.0
  %7422 = vmatpush1.msra.mxu0 0.0
  %7423 = vmatprep.subr.mxu0 0.0
  %7424 = vmatpush1.msra.mxu0 0.0
  %7425 = vmatprep.subr.mxu0 0.0
  %7426 = vmatpush1.msra.mxu0 0.0
  %7427 = vmatprep.subr.mxu0 0.0
  %7428 = vmatpush1.msra.mxu0 0.0
  %7429 = vmatprep.subr.mxu0 0.0
  %7430 = vmatpush1.msra.mxu0 0.0
  %7431 = vmatprep.subr.mxu0 0.0
  %7432 = vmatpush1.msra.mxu0 0.0
  %7433 = vmatprep.subr.mxu0 0.0
  %7434 = vmatpush1.msra.mxu0 0.0
  %7435 = vmatprep.subr.mxu0 0.0
  %7436 = vmatpush1.msra.mxu0 0.0
  %7437 = vmatprep.subr.mxu0 0.0
  %7438 = vmatpush1.msra.mxu0 0.0
  %7439 = vmatprep.subr.mxu0 0.0
  %7440 = vmatpush1.msra.mxu0 0.0
  %7441 = vmatprep.subr.mxu0 0.0
  %7442 = vmatpush1.msra.mxu0 0.0
  %7443 = vmatprep.subr.mxu0 0.0
  %7444 = vmatpush1.msra.mxu0 0.0
  %7445 = vmatprep.subr.mxu0 0.0
  %7446 = vmatpush1.msra.mxu0 0.0
  %7447 = vmatprep.subr.mxu0 0.0
  %7448 = vmatpush1.msra.mxu0 0.0
  %7449 = vmatprep.subr.mxu0 0.0
  %7450 = vmatpush1.msra.mxu0 0.0
  %7451 = vmatprep.subr.mxu0 0.0
  %7452 = vmatpush1.msra.mxu0 0.0
  %7453 = vmatprep.subr.mxu0 0.0
  %7454 = vmatpush1.msra.mxu0 0.0
  %7455 = vmatprep.subr.mxu0 0.0
  %7456 = vmatpush1.msra.mxu0 0.0
  %7457 = vmatprep.subr.mxu0 0.0
  %7458 = vmatpush1.msra.mxu0 0.0
  %7459 = vmatprep.subr.mxu0 0.0
  %7460 = vmatpush1.msra.mxu0 0.0
  %7461 = vmatprep.subr.mxu0 0.0
  %7462 = vmatpush1.msra.mxu0 0.0
  %7463 = vmatprep.subr.mxu0 0.0
  %7464 = vmatpush1.msra.mxu0 0.0
  %7465 = vmatprep.subr.mxu0 0.0
  %7466 = vmatpush1.msra.mxu0 0.0
  %7467 = vmatprep.subr.mxu0 0.0
  %7468 = vmatpush1.msra.mxu0 0.0
  %7469 = vmatprep.subr.mxu0 0.0
  %7470 = vmatpush1.msra.mxu0 0.0
  %7471 = vmatprep.subr.mxu0 0.0
  %7472 = vmatpush1.msra.mxu0 0.0
  %7473 = vmatprep.mubr.f32.mxu0 0.0
  %7474 = vmatmul.mubr.f32.gmra.mrb[0].mxu0 %v7407
  %v7475 = vpop.f32.mrb[0].mxu0
  %v7476 = vadd.f32 0.0, %v7475
  %v7477 = vpop.f32.mrb[0].mxu0
  %7478 = vdwg.mxu0
  %v7479 = vrot.slane %v6009, 6
  %v7481 = vrot.slane %v6447, 4
  %v7483 = vrot.slane %v6885, 2
  %v7485 = vsel %vm743, %v5563, %v7479
  %v7486 = vsel %vm262, %v7485, %v7481
  %v7487 = vsel %vm2614, %v7486, %v7483
  %v7489 = vrot.slane %v6167, 6
  %v7492 = vrot.slane %v6605, 4
  %v7495 = vrot.slane %v7043, 2
  %v7497 = vsel %vm743, %v5729, %v7489
  %v7498 = vsel %vm262, %v7497, %v7492
  %v7499 = vsel %vm2614, %v7498, %v7495
  %v7500 = vld [vmem:[%s95] sm:$0xf]
  %v7501 = vld [vmem:[%s95 + $0x4] sm:$0xf]
  %v7502 = vld [vmem:[%s95 + $0x8] sm:$0xf]
  %v7503 = vld [vmem:[%s95 + $0xc] sm:$0xf]
  %v7504 = vpack.c.bf16 %v7318, %v7487
  %v7505 = vld [vmem:[%s97] sm:$0xf]
  %v7506 = vld [vmem:[%s97 + $0x4] sm:$0xf]
  %v7507 = vld [vmem:[%s97 + $0x8] sm:$0xf]
  %v7508 = vld [vmem:[%s97 + $0xc] sm:$0xf]
  %v7509 = vpack.c.bf16 %v7476, %v7499
  %v7514 = vunpack.c.l.b16 %v7505
  %v7515 = vunpack.c.l.b16 %v7506
  %v7516 = vunpack.c.l.b16 %v7507
  %v7517 = vunpack.c.l.b16 %v7508
  %v7518 = vpack.c.b16 %v7515, %v7514
  %v7519 = vpack.c.b16 %v7517, %v7516
  %v7523 = vsel %vm4530, %v7509, 0
  %7525 = vmatprep.subr.bf16.mxu0 0
  %7526 = vmatpush1.bf16.msra.mxu0 %v7518
  %7527 = vmatprep.subr.bf16.mxu0 0
  %7528 = vmatpush1.bf16.msra.mxu0 %v7519
  %7529 = vmatprep.subr.bf16.mxu0 0
  %7530 = vmatpush1.bf16.msra.mxu0 0
  %7531 = vmatprep.subr.bf16.mxu0 0
  %7532 = vmatpush1.bf16.msra.mxu0 0
  %7533 = vmatprep.subr.bf16.mxu0 0
  %7534 = vmatpush1.bf16.msra.mxu0 0
  %7535 = vmatprep.subr.bf16.mxu0 0
  %7536 = vmatpush1.bf16.msra.mxu0 0
  %7537 = vmatprep.subr.bf16.mxu0 0
  %7538 = vmatpush1.bf16.msra.mxu0 0
  %7539 = vmatprep.subr.bf16.mxu0 0
  %7540 = vmatpush1.bf16.msra.mxu0 0
  %7541 = vmatprep.subr.bf16.mxu0 0
  %7542 = vmatpush1.bf16.msra.mxu0 0
  %7543 = vmatprep.subr.bf16.mxu0 0
  %7544 = vmatpush1.bf16.msra.mxu0 0
  %7545 = vmatprep.subr.bf16.mxu0 0
  %7546 = vmatpush1.bf16.msra.mxu0 0
  %7547 = vmatprep.subr.bf16.mxu0 0
  %7548 = vmatpush1.bf16.msra.mxu0 0
  %7549 = vmatprep.subr.bf16.mxu0 0
  %7550 = vmatpush1.bf16.msra.mxu0 0
  %7551 = vmatprep.subr.bf16.mxu0 0
  %7552 = vmatpush1.bf16.msra.mxu0 0
  %7553 = vmatprep.subr.bf16.mxu0 0
  %7554 = vmatpush1.bf16.msra.mxu0 0
  %7555 = vmatprep.subr.bf16.mxu0 0
  %7556 = vmatpush1.bf16.msra.mxu0 0
  %7557 = vmatprep.mubr.bf16.mxu0 0
  %7558 = vmatmul.mubr.bf16.gmra.mrb[0].mxu0 %v7523
  %v7559 = vpop.f32.mrb[0].mxu0
  %v7560 = vadd.f32 0.0, %v7559
  %v7561 = vpop.f32.mrb[0].mxu0
  %v7562 = vpop.f32.mrb[0].mxu0
  %v7563 = vadd.f32 0.0, %v7562
  %v7564 = vpop.f32.mrb[0].mxu0
  %7565 = vdwg.mxu0
  %7567 = vrot.lane.b32.xlu0 %v7504, 32
  %v7568 = vpop.permute.xlu0 %7567
  %v7573 = vunpack.c.l.b16 %v7500
  %v7574 = vunpack.c.l.b16 %v7501
  %v7575 = vunpack.c.l.b16 %v7502
  %v7576 = vunpack.c.l.b16 %v7503
  %v7577 = vpack.c.b16 %v7574, %v7573
  %v7578 = vpack.c.b16 %v7576, %v7575
  %v7582 = vsel %vm4530, %v7568, 0
  %7584 = vmatprep.subr.bf16.mxu0 0
  %7585 = vmatpush1.bf16.msra.mxu0 %v7577
  %7586 = vmatprep.subr.bf16.mxu0 0
  %7587 = vmatpush1.bf16.msra.mxu0 %v7578
  %7588 = vmatprep.subr.bf16.mxu0 0
  %7589 = vmatpush1.bf16.msra.mxu0 0
  %7590 = vmatprep.subr.bf16.mxu0 0
  %7591 = vmatpush1.bf16.msra.mxu0 0
  %7592 = vmatprep.subr.bf16.mxu0 0
  %7593 = vmatpush1.bf16.msra.mxu0 0
  %7594 = vmatprep.subr.bf16.mxu0 0
  %7595 = vmatpush1.bf16.msra.mxu0 0
  %7596 = vmatprep.subr.bf16.mxu0 0
  %7597 = vmatpush1.bf16.msra.mxu0 0
  %7598 = vmatprep.subr.bf16.mxu0 0
  %7599 = vmatpush1.bf16.msra.mxu0 0
  %7600 = vmatprep.subr.bf16.mxu0 0
  %7601 = vmatpush1.bf16.msra.mxu0 0
  %7602 = vmatprep.subr.bf16.mxu0 0
  %7603 = vmatpush1.bf16.msra.mxu0 0
  %7604 = vmatprep.subr.bf16.mxu0 0
  %7605 = vmatpush1.bf16.msra.mxu0 0
  %7606 = vmatprep.subr.bf16.mxu0 0
  %7607 = vmatpush1.bf16.msra.mxu0 0
  %7608 = vmatprep.subr.bf16.mxu0 0
  %7609 = vmatpush1.bf16.msra.mxu0 0
  %7610 = vmatprep.subr.bf16.mxu0 0
  %7611 = vmatpush1.bf16.msra.mxu0 0
  %7612 = vmatprep.subr.bf16.mxu0 0
  %7613 = vmatpush1.bf16.msra.mxu0 0
  %7614 = vmatprep.subr.bf16.mxu0 0
  %7615 = vmatpush1.bf16.msra.mxu0 0
  %7616 = vmatprep.mubr.bf16.mxu0 0
  %7617 = vmatmul.mubr.bf16.gmra.mrb[0].mxu0 %v7582
  %v7618 = vpop.f32.mrb[0].mxu0
  %v7619 = vadd.f32 %v7560, %v7618
  %v7620 = vpop.f32.mrb[0].mxu0
  %v7621 = vpop.f32.mrb[0].mxu0
  %v7622 = vadd.f32 %v7563, %v7621
  %v7623 = vpop.f32.mrb[0].mxu0
  %7624 = vdwg.mxu0
  %v7625 = vld [vmem:[%s99] sm:$0x1]
  %v7627 = vlaneseq
  %v7628 = vshrl.u32 %v7627, 7
  %v7629 = vsub.s32 0, %v7628
  %v7630 = vrot.slane %v7625, %v7629
  %v7632 = vadd.f32 %v7619, %v7630
  %v7633 = vadd.f32 %v7622, %v7630
  %v7634 = vtanh.pop %v7632
  %v7635 = vtanh.pop %v7633
  %v7636 = vld [vmem:[%s101] sm:$0xf]
  %v7637 = vld [vmem:[%s101 + $0x4] sm:$0xf]
  %v7638 = vld [vmem:[%s101 + $0x8] sm:$0xf]
  %v7639 = vld [vmem:[%s101 + $0xc] sm:$0xf]
  %v7640 = vpack.c.bf16 %v7635, %v7634
  %v7641 = vld [vmem:[%s103] sm:$0x1]
  %v7643 = vlaneseq
  %v7644 = vshrl.u32 %v7643, 7
  %v7645 = vsub.s32 0, %v7644
  %v7646 = vrot.slane %v7641, %v7645
  %v7652 = vunpack.c.l.b16 %v7636
  %v7653 = vunpack.c.l.b16 %v7637
  %v7654 = vunpack.c.l.b16 %v7638
  %v7655 = vunpack.c.l.b16 %v7639
  %v7656 = vpack.c.b16 %v7653, %v7652
  %v7657 = vpack.c.b16 %v7655, %v7654
  %v7661 = vsel %vm4530, %v7640, 0
  %7663 = vmatprep.subr.bf16.mxu0 0
  %7664 = vmatpush1.bf16.msra.mxu0 %v7656
  %7665 = vmatprep.subr.bf16.mxu0 0
  %7666 = vmatpush1.bf16.msra.mxu0 %v7657
  %7667 = vmatprep.subr.bf16.mxu0 0
  %7668 = vmatpush1.bf16.msra.mxu0 0
  %7669 = vmatprep.subr.bf16.mxu0 0
  %7670 = vmatpush1.bf16.msra.mxu0 0
  %7671 = vmatprep.subr.bf16.mxu0 0
  %7672 = vmatpush1.bf16.msra.mxu0 0
  %7673 = vmatprep.subr.bf16.mxu0 0
  %7674 = vmatpush1.bf16.msra.mxu0 0
  %7675 = vmatprep.subr.bf16.mxu0 0
  %7676 = vmatpush1.bf16.msra.mxu0 0
  %7677 = vmatprep.subr.bf16.mxu0 0
  %7678 = vmatpush1.bf16.msra.mxu0 0
  %7679 = vmatprep.subr.bf16.mxu0 0
  %7680 = vmatpush1.bf16.msra.mxu0 0
  %7681 = vmatprep.subr.bf16.mxu0 0
  %7682 = vmatpush1.bf16.msra.mxu0 0
  %7683 = vmatprep.subr.bf16.mxu0 0
  %7684 = vmatpush1.bf16.msra.mxu0 0
  %7685 = vmatprep.subr.bf16.mxu0 0
  %7686 = vmatpush1.bf16.msra.mxu0 0
  %7687 = vmatprep.subr.bf16.mxu0 0
  %7688 = vmatpush1.bf16.msra.mxu0 0
  %7689 = vmatprep.subr.bf16.mxu0 0
  %7690 = vmatpush1.bf16.msra.mxu0 0
  %7691 = vmatprep.subr.bf16.mxu0 0
  %7692 = vmatpush1.bf16.msra.mxu0 0
  %7693 = vmatprep.subr.bf16.mxu0 0
  %7694 = vmatpush1.bf16.msra.mxu0 0
  %7695 = vmatprep.mubr.bf16.mxu0 0
  %7696 = vmatmul.mubr.bf16.gmra.mrb[0].mxu0 %v7661
  %v7697 = vpop.f32.mrb[0].mxu0
  %v7698 = vadd.f32 %v7646, %v7697
  %v7699 = vpop.f32.mrb[0].mxu0
  %v7700 = vpop.f32.mrb[0].mxu0
  %v7701 = vadd.f32 %v7646, %v7700
  %v7702 = vpop.f32.mrb[0].mxu0
  %7703 = vdwg.mxu0
  %7704 = vst.msk [vmem:[%s105] sm:$0xff] %vm4530, %v7698
  %vm7705 = vcmask 254976
  %7706 = vst.msk [vmem:[%s105 + $0x8] sm:$0x3] %vm7705, %v7701
  // Predicated region
  $region210: #{seq2seq_forward.1} parent=0 // pred_check
    _
  $region211: #{seq2seq_forward.1} parent=0 // pred_check_branch
    %7708 = sbr.rel (0) target = $region213
  $region212: #{seq2seq_forward.1} parent=0 // pred_region
    _
  $region213: #{seq2seq_forward.1} parent=0 // pred_fallthru
    _
  // Predicated region
  $region214: #{seq2seq_forward.1} parent=0 // pred_check
    _
  $region215: #{seq2seq_forward.1} parent=0 // pred_check_branch
    %7710 = sbr.rel (0) target = $region217
  $region216: #{seq2seq_forward.1} parent=0 // pred_region
    _
  $region217: #{seq2seq_forward.1} parent=0 // pred_fallthru
    _

</llo_original>
